<compile_context>
chip_gen: v6e
topology: v6e:2x2x1
jax: 0.10.0
libtpu: 0.0.40
codegen_flags: <defaults>
</compile_context>

<pallas_src>
import math

import numpy as np
import jax
import jax.numpy as jnp
from jax.experimental import pallas as pl
from jax.experimental.pallas import tpu as pltpu


# ----------------------------- model config (scaled-down) -------------------
KERNEL_T = 9                      # temporal_conv
PAD = (KERNEL_T - 1) // 2         # = 4 (tcn0 / downt hard-code this too)
BASE = 16                         # scaled from 64
NUM_ACTION = 10                   # scaled from 60
BN_EPS = 1e-5

# (in_feats, out_feats, stride) -- same topology as the original backbone_config
BACKBONE = [
    (BASE, BASE, 1), (BASE, BASE, 1), (BASE, BASE, 1),
    (BASE, 2 * BASE, 2), (2 * BASE, 2 * BASE, 1), (2 * BASE, 2 * BASE, 1),
    (2 * BASE, 4 * BASE, 2), (4 * BASE, 4 * BASE, 1), (4 * BASE, 4 * BASE, 1),
]


# ----------------------------- host-side operator construction ---------------
def build_ahat_np(V):
    """Chain skeleton 0-1-...-(V-1) + self loops, A_hat = D^-1/2 (A+I) D^-1/2."""
    A = np.eye(V, dtype=np.float32)
    i = np.arange(V - 1)
    A[i, i + 1] = 1.0
    A[i + 1, i] = 1.0
    dinv = 1.0 / np.sqrt(A.sum(axis=1))
    return dinv[:, None] * A * dinv[None, :]


def gcn_operator(w, b, T):
    """GCN weight as a lane operator: kron(I_T, W) and the bias tiled over t."""
    w = np.asarray(w, np.float32)
    b = np.asarray(b, np.float32)
    wk = np.kron(np.eye(T, dtype=np.float32), w)       # (T*Cin, T*Cout)
    brow = np.tile(b, T)[None, :]                       # (1, T*Cout)
    return wk, brow


def temporal_operator(w, b, T, stride, k=KERNEL_T, pad=PAD):
    """Dense operator folding pad + im2col + stride + conv weight + BN scale.

    out[(m,v), t_o*Cout+co] = sum_{t_i,ci} h[(m,v), t_i*Cin+ci] * M[t_i*Cin+ci, t_o*Cout+co]
    with M[t_i*Cin+ci, t_o*Cout+co] = sum_j 1[t_i == t_o*stride + j - pad] W[j,ci,co] * s_bn
    """
    w = np.asarray(w, np.float32)
    b = np.asarray(b, np.float32)
    k_, cin, cout = w.shape
    t_out = (T + 2 * pad - k_) // stride + 1
    s_bn = 1.0 / math.sqrt(1.0 + BN_EPS)                # eval-mode BN scale, folded in
    op = np.zeros((T * cin, t_out * cout), np.float32)
    for to in range(t_out):
        for j in range(k_):
            ti = to * stride + j - pad
            if 0 <= ti < T:
                op[ti * cin:(ti + 1) * cin, to * cout:(to + 1) * cout] += w[j] * s_bn
    shift = np.tile(b * s_bn, t_out)[None, :]           # (1, T_out*Cout)
    return op, shift, t_out


# ----------------------------- parameter init ---------------------------------
def make_tcn_weights(key, cin, cout, k=KERNEL_T):
    kw, kb = jax.random.split(key)
    # conv_init: normal(0, sqrt(2 / (out_channels * prod(kernel_size))))
    w = jax.random.normal(kw, (k, cin, cout), jnp.float32) * math.sqrt(2.0 / (cout * k))
    b = jax.random.normal(kb, (cout,), jnp.float32) * 0.01
    return {"w": w, "b": b}


def init_params(key, C_in):
    keys = iter(jax.random.split(key, 4 + 4 * len(BACKBONE)))
    p = {}
    p["gcn0_w"] = jax.random.normal(next(keys), (C_in, BASE), jnp.float32) * math.sqrt(2.0 / C_in)
    p["gcn0_b"] = jnp.zeros((BASE,), jnp.float32)
    p["tcn0"] = make_tcn_weights(next(keys), BASE, BASE)
    blocks = []
    for cin, cout, stride in BACKBONE:
        blk = {
            "cin": cin, "cout": cout, "stride": stride,
            "gcn_w": jax.random.normal(next(keys), (cin, cout), jnp.float32) * math.sqrt(2.0 / cin),
            "gcn_b": jnp.zeros((cout,), jnp.float32),
            "tcn": make_tcn_weights(next(keys), cout, cout),
            # reference hard-codes downt = TCN(stride=2, kernel=9, padding=4)
            "down": (make_tcn_weights(next(keys), cin, cout)
                     if (cin != cout or stride != 1) else None),
        }
        blocks.append(blk)
    p["blocks"] = blocks
    c_last = BACKBONE[-1][1]
    p["fcn_w"] = jax.random.normal(next(keys), (c_last, NUM_ACTION), jnp.float32) * math.sqrt(2.0 / NUM_ACTION)
    p["fcn_b"] = jnp.zeros((NUM_ACTION,), jnp.float32)
    return p


# ----------------------------- flatten params into kernel operands ------------
def build_operands(params, M, V, T, C):
    """Returns (tuple_of_operands, static_plan).

    Operand order (all 2-D, rows=(m,v) layout, lanes=(t,c)):
      [dbn_scale, dbn_shift, a_op,
       gcn0_wk, gcn0_b, tcn0_op, tcn0_shift,
       per block: gcn_wk, gcn_b, tcn_op, tcn_shift, (down_op, down_shift),
       pool, head_w, head_b]
    """
    ahat = build_ahat_np(V)
    a_op = np.kron(np.eye(M, dtype=np.float32), ahat)           # (M*V, M*V)

    # data_bn (BatchNorm1d over M*C*V channels), eval-mode init stats -> affine
    sc = np.full((M, C, V), 1.0 / math.sqrt(1.0 + BN_EPS), np.float32)
    sh = np.zeros((M, C, V), np.float32)

    def to_layout(a):                                            # (M,C,V) -> (M*V, T*C)
        a = np.transpose(a, (0, 2, 1))                           # (M, V, C)
        a = np.tile(a[:, :, None, :], (1, 1, T, 1))              # (M, V, T, C)
        return a.reshape(M * V, T * C)

    operands = [jnp.asarray(to_layout(sc), jnp.float32),
                jnp.asarray(to_layout(sh), jnp.float32),
                jnp.asarray(a_op, jnp.bfloat16)]
    plan = []
    t_cur = T

    def push_gcn(w, b, t):
        wk, brow = gcn_operator(w, b, t)
        operands.append(jnp.asarray(wk, jnp.bfloat16))
        operands.append(jnp.asarray(brow, jnp.float32))

    def push_tcn(w, b, t, stride):
        op, shift, t_out = temporal_operator(w, b, t, stride)
        operands.append(jnp.asarray(op, jnp.bfloat16))
        operands.append(jnp.asarray(shift, jnp.float32))
        return t_out

    # gcn0 + tcn0
    push_gcn(params["gcn0_w"], params["gcn0_b"], t_cur)
    plan.append(("gcn",))
    t_cur = push_tcn(params["tcn0"]["w"], params["tcn0"]["b"], t_cur, 1)
    plan.append(("tcn",))

    # backbone GTCN blocks
    for blk in params["blocks"]:
        has_down = blk["down"] is not None
        push_gcn(blk["gcn_w"], blk["gcn_b"], t_cur)
        t_new = push_tcn(blk["tcn"]["w"], blk["tcn"]["b"], t_cur, blk["stride"])
        if has_down:
            t_dn = push_tcn(blk["down"]["w"], blk["down"]["b"], t_cur, 2)  # ref hard-codes stride 2
            assert t_dn == t_new
        plan.append(("block", has_down))
        t_cur = t_new

    # head: mean over (m, v) rows, mean over t folded into fcn, padded lane-dense
    c_last = params["blocks"][-1]["cout"]
    pool = np.zeros((8, M * V), np.float32)
    pool[0, :] = 1.0 / (M * V)                                   # row 0 = mean over (m, v)
    hw = np.zeros((t_cur * c_last, 128), np.float32)
    fw = np.asarray(params["fcn_w"], np.float32)
    for t in range(t_cur):
        hw[t * c_last:(t + 1) * c_last, :NUM_ACTION] = fw / t_cur
    hb = np.zeros((1, 128), np.float32)
    hb[0, :NUM_ACTION] = np.asarray(params["fcn_b"], np.float32)
    operands += [jnp.asarray(pool, jnp.bfloat16),
                 jnp.asarray(hw, jnp.bfloat16),
                 jnp.asarray(hb, jnp.float32)]
    return tuple(operands), tuple(plan)


# ----------------------------- the fused Pallas kernel ------------------------
def make_kernel(plan):
    bf16, f32 = jnp.bfloat16, jnp.float32

    def mm(a, b):
        # bf16 MXU operands, f32 accumulation; epilogues stay f32.
        return jnp.dot(a.astype(bf16), b.astype(bf16), preferred_element_type=f32)

    def kernel(*refs):
        o_ref = refs[-1]
        pool = refs[-4][...]
        head_w = refs[-3][...]
        head_b = refs[-2][...]
        x_ref, dbs_ref, dbt_ref, a_ref = refs[0], refs[1], refs[2], refs[3]
        a_op = a_ref[...]                                    # kron(I_M, A_hat), bf16

        # data_bn (eval-mode affine), f32
        h = x_ref[...] * dbs_ref[...] + dbt_ref[...]

        def gcn(h, w_ref, b_ref):
            y = mm(h, w_ref[...])                            # per-frame channel mix h @ W
            y = mm(a_op, y)                                  # normalized adjacency over joints
            return jnp.maximum(y + b_ref[...], 0.0)

        def tcn(h, m_ref, s_ref):
            # pad + im2col + stride + conv + folded BN scale == one dense matmul
            return jnp.maximum(mm(h, m_ref[...]) + s_ref[...], 0.0)

        idx = 4
        for op in plan:
            if op[0] == "gcn":                               # gcn0
                h = gcn(h, refs[idx], refs[idx + 1]); idx += 2
            elif op[0] == "tcn":                             # tcn0 (no residual)
                h = tcn(h, refs[idx], refs[idx + 1]); idx += 2
            else:                                            # GTCN block
                h_in = h
                v = gcn(h_in, refs[idx], refs[idx + 1])
                v = tcn(v, refs[idx + 2], refs[idx + 3])
                idx += 4
                if op[1]:                                    # strided block: downsample-TCN residual
                    res = tcn(h_in, refs[idx], refs[idx + 1]); idx += 2
                else:                                        # identity residual
                    res = h_in
                h = v + res                                  # residual added AFTER relu (as in reference)
        assert idx == len(refs) - 4                          # trace-time sanity check

        # head: global mean over (m, v, t) + 1x1 conv classifier, as two matmuls
        pooled = mm(pool, h)                                 # (8, Tf*Cf); row 0 is the mean
        logits = mm(pooled, head_w) + head_b                 # (8, 128) lane-dense tile
        o_ref[0] = logits

    return kernel


# ----------------------------- forward wrapper --------------------------------
def stgcn_apply(x, operands, plan, N, M, T, V, C):
    """x: (N, M, T, V, C) -> logits (N, NUM_ACTION). Single fused pallas_call."""
    rows = M * V
    lanes0 = T * C
    # reformat once to the fixed (rows=(n,m,v), lanes=(t,c)) layout (tiny glue)
    x2 = jnp.transpose(x, (0, 1, 3, 2, 4)).reshape(N * rows, lanes0)

    in_specs = [pl.BlockSpec((rows, lanes0), lambda n: (n, 0))]
    for op in operands:                                      # weights/operators: full block, constant
        in_specs.append(pl.BlockSpec(op.shape, lambda n: (0, 0)))

    out = pl.pallas_call(
        make_kernel(plan),
        out_shape=jax.ShapeDtypeStruct((N, 8, 128), jnp.float32),
        grid=(N,),                                           # samples shard across TCs on v7x
        in_specs=in_specs,
        out_specs=pl.BlockSpec((1, 8, 128), lambda n: (n, 0, 0)),
        compiler_params=pltpu.CompilerParams(
            dimension_semantics=("parallel",),
            vmem_limit_bytes=32 * 1024 * 1024,               # ~2 MB actually used; documents headroom
        ),
    )(x2, *operands)
    return out[:, 0, :NUM_ACTION]                            # row 0 / first A lanes hold the logits


# ----------------------------- main -------------------------------------------
if __name__ == "__main__":
    # small shapes consistent with the module: (N, M, T, V, C)
    N, M, T, V, C = 2, 2, 8, 16, 3

    key = jax.random.PRNGKey(0)
    kx, kp = jax.random.split(key)
    x = jax.random.normal(kx, (N, M, T, V, C), jnp.float32)

    params = init_params(kp, C)
    operands, plan = build_operands(params, M, V, T, C)

    fwd = jax.jit(lambda xx, ops: stgcn_apply(xx, ops, plan, N, M, T, V, C))
    out = jax.block_until_ready(fwd(x, operands))

    assert out.shape == (N, NUM_ACTION), out.shape
    assert bool(jnp.all(jnp.isfinite(out)))
    print("KERNEL_OK")
</pallas_src>

<mosaic_0001>
module attributes {stable_mosaic.version = 11 : i64} {
  func.func @kernel(%arg0: i32, %arg1: memref<32x24xf32, #tpu.memory_space<vmem>>, %arg2: memref<32x24xf32, #tpu.memory_space<vmem>>, %arg3: memref<32x24xf32, #tpu.memory_space<vmem>>, %arg4: memref<32x32xbf16, #tpu.memory_space<vmem>>, %arg5: memref<24x128xbf16, #tpu.memory_space<vmem>>, %arg6: memref<1x128xf32, #tpu.memory_space<vmem>>, %arg7: memref<128x128xbf16, #tpu.memory_space<vmem>>, %arg8: memref<1x128xf32, #tpu.memory_space<vmem>>, %arg9: memref<128x128xbf16, #tpu.memory_space<vmem>>, %arg10: memref<1x128xf32, #tpu.memory_space<vmem>>, %arg11: memref<128x128xbf16, #tpu.memory_space<vmem>>, %arg12: memref<1x128xf32, #tpu.memory_space<vmem>>, %arg13: memref<128x128xbf16, #tpu.memory_space<vmem>>, %arg14: memref<1x128xf32, #tpu.memory_space<vmem>>, %arg15: memref<128x128xbf16, #tpu.memory_space<vmem>>, %arg16: memref<1x128xf32, #tpu.memory_space<vmem>>, %arg17: memref<128x128xbf16, #tpu.memory_space<vmem>>, %arg18: memref<1x128xf32, #tpu.memory_space<vmem>>, %arg19: memref<128x128xbf16, #tpu.memory_space<vmem>>, %arg20: memref<1x128xf32, #tpu.memory_space<vmem>>, %arg21: memref<128x256xbf16, #tpu.memory_space<vmem>>, %arg22: memref<1x256xf32, #tpu.memory_space<vmem>>, %arg23: memref<256x128xbf16, #tpu.memory_space<vmem>>, %arg24: memref<1x128xf32, #tpu.memory_space<vmem>>, %arg25: memref<128x128xbf16, #tpu.memory_space<vmem>>, %arg26: memref<1x128xf32, #tpu.memory_space<vmem>>, %arg27: memref<128x128xbf16, #tpu.memory_space<vmem>>, %arg28: memref<1x128xf32, #tpu.memory_space<vmem>>, %arg29: memref<128x128xbf16, #tpu.memory_space<vmem>>, %arg30: memref<1x128xf32, #tpu.memory_space<vmem>>, %arg31: memref<128x128xbf16, #tpu.memory_space<vmem>>, %arg32: memref<1x128xf32, #tpu.memory_space<vmem>>, %arg33: memref<128x128xbf16, #tpu.memory_space<vmem>>, %arg34: memref<1x128xf32, #tpu.memory_space<vmem>>, %arg35: memref<128x256xbf16, #tpu.memory_space<vmem>>, %arg36: memref<1x256xf32, #tpu.memory_space<vmem>>, %arg37: memref<256x128xbf16, #tpu.memory_space<vmem>>, %arg38: memref<1x128xf32, #tpu.memory_space<vmem>>, %arg39: memref<128x128xbf16, #tpu.memory_space<vmem>>, %arg40: memref<1x128xf32, #tpu.memory_space<vmem>>, %arg41: memref<128x128xbf16, #tpu.memory_space<vmem>>, %arg42: memref<1x128xf32, #tpu.memory_space<vmem>>, %arg43: memref<128x128xbf16, #tpu.memory_space<vmem>>, %arg44: memref<1x128xf32, #tpu.memory_space<vmem>>, %arg45: memref<128x128xbf16, #tpu.memory_space<vmem>>, %arg46: memref<1x128xf32, #tpu.memory_space<vmem>>, %arg47: memref<128x128xbf16, #tpu.memory_space<vmem>>, %arg48: memref<1x128xf32, #tpu.memory_space<vmem>>, %arg49: memref<8x32xbf16, #tpu.memory_space<vmem>>, %arg50: memref<128x128xbf16, #tpu.memory_space<vmem>>, %arg51: memref<1x128xf32, #tpu.memory_space<vmem>>, %arg52: memref<1x8x128xf32, #tpu.memory_space<vmem>>) attributes {dimension_semantics = [#tpu.dimension_semantics<parallel>], iteration_bounds = array<i64: 2>, scalar_prefetch = 0 : i64, scratch_operands = 0 : i64, tpu.core_type = #tpu.core_type<tc>, window_params = [{transform_indices = @transform_0, window_bounds = array<i64: 32, 24>}, {pipeline_mode = #tpu.pipeline_mode<synchronous>, transform_indices = @transform_1, window_bounds = array<i64: 32, 24>}, {pipeline_mode = #tpu.pipeline_mode<synchronous>, transform_indices = @transform_2, window_bounds = array<i64: 32, 24>}, {pipeline_mode = #tpu.pipeline_mode<synchronous>, transform_indices = @transform_3, window_bounds = array<i64: 32, 32>}, {pipeline_mode = #tpu.pipeline_mode<synchronous>, transform_indices = @transform_4, window_bounds = array<i64: 24, 128>}, {pipeline_mode = #tpu.pipeline_mode<synchronous>, transform_indices = @transform_5, window_bounds = array<i64: 1, 128>}, {pipeline_mode = #tpu.pipeline_mode<synchronous>, transform_indices = @transform_6, window_bounds = array<i64: 128, 128>}, {pipeline_mode = #tpu.pipeline_mode<synchronous>, transform_indices = @transform_7, window_bounds = array<i64: 1, 128>}, {pipeline_mode = #tpu.pipeline_mode<synchronous>, transform_indices = @transform_8, window_bounds = array<i64: 128, 128>}, {pipeline_mode = #tpu.pipeline_mode<synchronous>, transform_indices = @transform_9, window_bounds = array<i64: 1, 128>}, {pipeline_mode = #tpu.pipeline_mode<synchronous>, transform_indices = @transform_10, window_bounds = array<i64: 128, 128>}, {pipeline_mode = #tpu.pipeline_mode<synchronous>, transform_indices = @transform_11, window_bounds = array<i64: 1, 128>}, {pipeline_mode = #tpu.pipeline_mode<synchronous>, transform_indices = @transform_12, window_bounds = array<i64: 128, 128>}, {pipeline_mode = #tpu.pipeline_mode<synchronous>, transform_indices = @transform_13, window_bounds = array<i64: 1, 128>}, {pipeline_mode = #tpu.pipeline_mode<synchronous>, transform_indices = @transform_14, window_bounds = array<i64: 128, 128>}, {pipeline_mode = #tpu.pipeline_mode<synchronous>, transform_indices = @transform_15, window_bounds = array<i64: 1, 128>}, {pipeline_mode = #tpu.pipeline_mode<synchronous>, transform_indices = @transform_16, window_bounds = array<i64: 128, 128>}, {pipeline_mode = #tpu.pipeline_mode<synchronous>, transform_indices = @transform_17, window_bounds = array<i64: 1, 128>}, {pipeline_mode = #tpu.pipeline_mode<synchronous>, transform_indices = @transform_18, window_bounds = array<i64: 128, 128>}, {pipeline_mode = #tpu.pipeline_mode<synchronous>, transform_indices = @transform_19, window_bounds = array<i64: 1, 128>}, {pipeline_mode = #tpu.pipeline_mode<synchronous>, transform_indices = @transform_20, window_bounds = array<i64: 128, 256>}, {pipeline_mode = #tpu.pipeline_mode<synchronous>, transform_indices = @transform_21, window_bounds = array<i64: 1, 256>}, {pipeline_mode = #tpu.pipeline_mode<synchronous>, transform_indices = @transform_22, window_bounds = array<i64: 256, 128>}, {pipeline_mode = #tpu.pipeline_mode<synchronous>, transform_indices = @transform_23, window_bounds = array<i64: 1, 128>}, {pipeline_mode = #tpu.pipeline_mode<synchronous>, transform_indices = @transform_24, window_bounds = array<i64: 128, 128>}, {pipeline_mode = #tpu.pipeline_mode<synchronous>, transform_indices = @transform_25, window_bounds = array<i64: 1, 128>}, {pipeline_mode = #tpu.pipeline_mode<synchronous>, transform_indices = @transform_26, window_bounds = array<i64: 128, 128>}, {pipeline_mode = #tpu.pipeline_mode<synchronous>, transform_indices = @transform_27, window_bounds = array<i64: 1, 128>}, {pipeline_mode = #tpu.pipeline_mode<synchronous>, transform_indices = @transform_28, window_bounds = array<i64: 128, 128>}, {pipeline_mode = #tpu.pipeline_mode<synchronous>, transform_indices = @transform_29, window_bounds = array<i64: 1, 128>}, {pipeline_mode = #tpu.pipeline_mode<synchronous>, transform_indices = @transform_30, window_bounds = array<i64: 128, 128>}, {pipeline_mode = #tpu.pipeline_mode<synchronous>, transform_indices = @transform_31, window_bounds = array<i64: 1, 128>}, {pipeline_mode = #tpu.pipeline_mode<synchronous>, transform_indices = @transform_32, window_bounds = array<i64: 128, 128>}, {pipeline_mode = #tpu.pipeline_mode<synchronous>, transform_indices = @transform_33, window_bounds = array<i64: 1, 128>}, {pipeline_mode = #tpu.pipeline_mode<synchronous>, transform_indices = @transform_34, window_bounds = array<i64: 128, 256>}, {pipeline_mode = #tpu.pipeline_mode<synchronous>, transform_indices = @transform_35, window_bounds = array<i64: 1, 256>}, {pipeline_mode = #tpu.pipeline_mode<synchronous>, transform_indices = @transform_36, window_bounds = array<i64: 256, 128>}, {pipeline_mode = #tpu.pipeline_mode<synchronous>, transform_indices = @transform_37, window_bounds = array<i64: 1, 128>}, {pipeline_mode = #tpu.pipeline_mode<synchronous>, transform_indices = @transform_38, window_bounds = array<i64: 128, 128>}, {pipeline_mode = #tpu.pipeline_mode<synchronous>, transform_indices = @transform_39, window_bounds = array<i64: 1, 128>}, {pipeline_mode = #tpu.pipeline_mode<synchronous>, transform_indices = @transform_40, window_bounds = array<i64: 128, 128>}, {pipeline_mode = #tpu.pipeline_mode<synchronous>, transform_indices = @transform_41, window_bounds = array<i64: 1, 128>}, {pipeline_mode = #tpu.pipeline_mode<synchronous>, transform_indices = @transform_42, window_bounds = array<i64: 128, 128>}, {pipeline_mode = #tpu.pipeline_mode<synchronous>, transform_indices = @transform_43, window_bounds = array<i64: 1, 128>}, {pipeline_mode = #tpu.pipeline_mode<synchronous>, transform_indices = @transform_44, window_bounds = array<i64: 128, 128>}, {pipeline_mode = #tpu.pipeline_mode<synchronous>, transform_indices = @transform_45, window_bounds = array<i64: 1, 128>}, {pipeline_mode = #tpu.pipeline_mode<synchronous>, transform_indices = @transform_46, window_bounds = array<i64: 128, 128>}, {pipeline_mode = #tpu.pipeline_mode<synchronous>, transform_indices = @transform_47, window_bounds = array<i64: 1, 128>}, {pipeline_mode = #tpu.pipeline_mode<synchronous>, transform_indices = @transform_48, window_bounds = array<i64: 8, 32>}, {pipeline_mode = #tpu.pipeline_mode<synchronous>, transform_indices = @transform_49, window_bounds = array<i64: 128, 128>}, {pipeline_mode = #tpu.pipeline_mode<synchronous>, transform_indices = @transform_50, window_bounds = array<i64: 1, 128>}, {transform_indices = @transform_51, window_bounds = array<i64: 1, 8, 128>}]} {
    %c0 = arith.constant 0 : index
    %c0_0 = arith.constant 0 : index
    %0 = vector.load %arg49[%c0, %c0_0] : memref<8x32xbf16, #tpu.memory_space<vmem>>, vector<8x32xbf16>
    %c0_1 = arith.constant 0 : index
    %c0_2 = arith.constant 0 : index
    %1 = vector.load %arg50[%c0_1, %c0_2] : memref<128x128xbf16, #tpu.memory_space<vmem>>, vector<128x128xbf16>
    %c0_3 = arith.constant 0 : index
    %c0_4 = arith.constant 0 : index
    %2 = vector.load %arg51[%c0_3, %c0_4] : memref<1x128xf32, #tpu.memory_space<vmem>>, vector<1x128xf32>
    %c0_5 = arith.constant 0 : index
    %c0_6 = arith.constant 0 : index
    %3 = vector.load %arg4[%c0_5, %c0_6] : memref<32x32xbf16, #tpu.memory_space<vmem>>, vector<32x32xbf16>
    %c0_7 = arith.constant 0 : index
    %c0_8 = arith.constant 0 : index
    %4 = vector.load %arg1[%c0_7, %c0_8] : memref<32x24xf32, #tpu.memory_space<vmem>>, vector<32x24xf32>
    %c0_9 = arith.constant 0 : index
    %c0_10 = arith.constant 0 : index
    %5 = vector.load %arg2[%c0_9, %c0_10] : memref<32x24xf32, #tpu.memory_space<vmem>>, vector<32x24xf32>
    %6 = arith.mulf %4, %5 : vector<32x24xf32>
    %c0_11 = arith.constant 0 : index
    %c0_12 = arith.constant 0 : index
    %7 = vector.load %arg3[%c0_11, %c0_12] : memref<32x24xf32, #tpu.memory_space<vmem>>, vector<32x24xf32>
    %8 = arith.addf %6, %7 : vector<32x24xf32>
    %c0_13 = arith.constant 0 : index
    %c0_14 = arith.constant 0 : index
    %9 = vector.load %arg5[%c0_13, %c0_14] : memref<24x128xbf16, #tpu.memory_space<vmem>>, vector<24x128xbf16>
    %10 = arith.truncf %8 : vector<32x24xf32> to vector<32x24xbf16>
    %cst = arith.constant dense<0.000000e+00> : vector<32x128xf32>
    %11 = tpu.matmul %10, %9, %cst {dimension_numbers = #tpu.dot_dimension_numbers<[1], [0], [0], [1], [0, 0, 1, 1], [], []>} : vector<32x24xbf16>, vector<24x128xbf16>, vector<32x128xf32> -> vector<32x128xf32>
    %12 = arith.truncf %11 : vector<32x128xf32> to vector<32x128xbf16>
    %cst_15 = arith.constant dense<0.000000e+00> : vector<32x128xf32>
    %13 = tpu.matmul %3, %12, %cst_15 {dimension_numbers = #tpu.dot_dimension_numbers<[1], [0], [0], [1], [0, 0, 1, 1], [], []>} : vector<32x32xbf16>, vector<32x128xbf16>, vector<32x128xf32> -> vector<32x128xf32>
    %c0_16 = arith.constant 0 : index
    %c0_17 = arith.constant 0 : index
    %14 = vector.load %arg6[%c0_16, %c0_17] : memref<1x128xf32, #tpu.memory_space<vmem>>, vector<1x128xf32>
    %15 = vector.broadcast %14 : vector<1x128xf32> to vector<32x128xf32>
    %16 = arith.addf %13, %15 : vector<32x128xf32>
    %cst_18 = arith.constant 0.000000e+00 : f32
    %17 = vector.broadcast %cst_18 : f32 to vector<32x128xf32>
    %18 = arith.maximumf %16, %17 : vector<32x128xf32>
    %c0_19 = arith.constant 0 : index
    %c0_20 = arith.constant 0 : index
    %19 = vector.load %arg7[%c0_19, %c0_20] : memref<128x128xbf16, #tpu.memory_space<vmem>>, vector<128x128xbf16>
    %20 = arith.truncf %18 : vector<32x128xf32> to vector<32x128xbf16>
    %cst_21 = arith.constant dense<0.000000e+00> : vector<32x128xf32>
    %21 = tpu.matmul %20, %19, %cst_21 {dimension_numbers = #tpu.dot_dimension_numbers<[1], [0], [0], [1], [0, 0, 1, 1], [], []>} : vector<32x128xbf16>, vector<128x128xbf16>, vector<32x128xf32> -> vector<32x128xf32>
    %c0_22 = arith.constant 0 : index
    %c0_23 = arith.constant 0 : index
    %22 = vector.load %arg8[%c0_22, %c0_23] : memref<1x128xf32, #tpu.memory_space<vmem>>, vector<1x128xf32>
    %23 = vector.broadcast %22 : vector<1x128xf32> to vector<32x128xf32>
    %24 = arith.addf %21, %23 : vector<32x128xf32>
    %cst_24 = arith.constant 0.000000e+00 : f32
    %25 = vector.broadcast %cst_24 : f32 to vector<32x128xf32>
    %26 = arith.maximumf %24, %25 : vector<32x128xf32>
    %c0_25 = arith.constant 0 : index
    %c0_26 = arith.constant 0 : index
    %27 = vector.load %arg9[%c0_25, %c0_26] : memref<128x128xbf16, #tpu.memory_space<vmem>>, vector<128x128xbf16>
    %28 = arith.truncf %26 : vector<32x128xf32> to vector<32x128xbf16>
    %cst_27 = arith.constant dense<0.000000e+00> : vector<32x128xf32>
    %29 = tpu.matmul %28, %27, %cst_27 {dimension_numbers = #tpu.dot_dimension_numbers<[1], [0], [0], [1], [0, 0, 1, 1], [], []>} : vector<32x128xbf16>, vector<128x128xbf16>, vector<32x128xf32> -> vector<32x128xf32>
    %30 = arith.truncf %29 : vector<32x128xf32> to vector<32x128xbf16>
    %cst_28 = arith.constant dense<0.000000e+00> : vector<32x128xf32>
    %31 = tpu.matmul %3, %30, %cst_28 {dimension_numbers = #tpu.dot_dimension_numbers<[1], [0], [0], [1], [0, 0, 1, 1], [], []>} : vector<32x32xbf16>, vector<32x128xbf16>, vector<32x128xf32> -> vector<32x128xf32>
    %c0_29 = arith.constant 0 : index
    %c0_30 = arith.constant 0 : index
    %32 = vector.load %arg10[%c0_29, %c0_30] : memref<1x128xf32, #tpu.memory_space<vmem>>, vector<1x128xf32>
    %33 = vector.broadcast %32 : vector<1x128xf32> to vector<32x128xf32>
    %34 = arith.addf %31, %33 : vector<32x128xf32>
    %cst_31 = arith.constant 0.000000e+00 : f32
    %35 = vector.broadcast %cst_31 : f32 to vector<32x128xf32>
    %36 = arith.maximumf %34, %35 : vector<32x128xf32>
    %c0_32 = arith.constant 0 : index
    %c0_33 = arith.constant 0 : index
    %37 = vector.load %arg11[%c0_32, %c0_33] : memref<128x128xbf16, #tpu.memory_space<vmem>>, vector<128x128xbf16>
    %38 = arith.truncf %36 : vector<32x128xf32> to vector<32x128xbf16>
    %cst_34 = arith.constant dense<0.000000e+00> : vector<32x128xf32>
    %39 = tpu.matmul %38, %37, %cst_34 {dimension_numbers = #tpu.dot_dimension_numbers<[1], [0], [0], [1], [0, 0, 1, 1], [], []>} : vector<32x128xbf16>, vector<128x128xbf16>, vector<32x128xf32> -> vector<32x128xf32>
    %c0_35 = arith.constant 0 : index
    %c0_36 = arith.constant 0 : index
    %40 = vector.load %arg12[%c0_35, %c0_36] : memref<1x128xf32, #tpu.memory_space<vmem>>, vector<1x128xf32>
    %41 = vector.broadcast %40 : vector<1x128xf32> to vector<32x128xf32>
    %42 = arith.addf %39, %41 : vector<32x128xf32>
    %cst_37 = arith.constant 0.000000e+00 : f32
    %43 = vector.broadcast %cst_37 : f32 to vector<32x128xf32>
    %44 = arith.maximumf %42, %43 : vector<32x128xf32>
    %45 = arith.addf %44, %26 : vector<32x128xf32>
    %c0_38 = arith.constant 0 : index
    %c0_39 = arith.constant 0 : index
    %46 = vector.load %arg13[%c0_38, %c0_39] : memref<128x128xbf16, #tpu.memory_space<vmem>>, vector<128x128xbf16>
    %47 = arith.truncf %45 : vector<32x128xf32> to vector<32x128xbf16>
    %cst_40 = arith.constant dense<0.000000e+00> : vector<32x128xf32>
    %48 = tpu.matmul %47, %46, %cst_40 {dimension_numbers = #tpu.dot_dimension_numbers<[1], [0], [0], [1], [0, 0, 1, 1], [], []>} : vector<32x128xbf16>, vector<128x128xbf16>, vector<32x128xf32> -> vector<32x128xf32>
    %49 = arith.truncf %48 : vector<32x128xf32> to vector<32x128xbf16>
    %cst_41 = arith.constant dense<0.000000e+00> : vector<32x128xf32>
    %50 = tpu.matmul %3, %49, %cst_41 {dimension_numbers = #tpu.dot_dimension_numbers<[1], [0], [0], [1], [0, 0, 1, 1], [], []>} : vector<32x32xbf16>, vector<32x128xbf16>, vector<32x128xf32> -> vector<32x128xf32>
    %c0_42 = arith.constant 0 : index
    %c0_43 = arith.constant 0 : index
    %51 = vector.load %arg14[%c0_42, %c0_43] : memref<1x128xf32, #tpu.memory_space<vmem>>, vector<1x128xf32>
    %52 = vector.broadcast %51 : vector<1x128xf32> to vector<32x128xf32>
    %53 = arith.addf %50, %52 : vector<32x128xf32>
    %cst_44 = arith.constant 0.000000e+00 : f32
    %54 = vector.broadcast %cst_44 : f32 to vector<32x128xf32>
    %55 = arith.maximumf %53, %54 : vector<32x128xf32>
    %c0_45 = arith.constant 0 : index
    %c0_46 = arith.constant 0 : index
    %56 = vector.load %arg15[%c0_45, %c0_46] : memref<128x128xbf16, #tpu.memory_space<vmem>>, vector<128x128xbf16>
    %57 = arith.truncf %55 : vector<32x128xf32> to vector<32x128xbf16>
    %cst_47 = arith.constant dense<0.000000e+00> : vector<32x128xf32>
    %58 = tpu.matmul %57, %56, %cst_47 {dimension_numbers = #tpu.dot_dimension_numbers<[1], [0], [0], [1], [0, 0, 1, 1], [], []>} : vector<32x128xbf16>, vector<128x128xbf16>, vector<32x128xf32> -> vector<32x128xf32>
    %c0_48 = arith.constant 0 : index
    %c0_49 = arith.constant 0 : index
    %59 = vector.load %arg16[%c0_48, %c0_49] : memref<1x128xf32, #tpu.memory_space<vmem>>, vector<1x128xf32>
    %60 = vector.broadcast %59 : vector<1x128xf32> to vector<32x128xf32>
    %61 = arith.addf %58, %60 : vector<32x128xf32>
    %cst_50 = arith.constant 0.000000e+00 : f32
    %62 = vector.broadcast %cst_50 : f32 to vector<32x128xf32>
    %63 = arith.maximumf %61, %62 : vector<32x128xf32>
    %64 = arith.addf %63, %45 : vector<32x128xf32>
    %c0_51 = arith.constant 0 : index
    %c0_52 = arith.constant 0 : index
    %65 = vector.load %arg17[%c0_51, %c0_52] : memref<128x128xbf16, #tpu.memory_space<vmem>>, vector<128x128xbf16>
    %66 = arith.truncf %64 : vector<32x128xf32> to vector<32x128xbf16>
    %cst_53 = arith.constant dense<0.000000e+00> : vector<32x128xf32>
    %67 = tpu.matmul %66, %65, %cst_53 {dimension_numbers = #tpu.dot_dimension_numbers<[1], [0], [0], [1], [0, 0, 1, 1], [], []>} : vector<32x128xbf16>, vector<128x128xbf16>, vector<32x128xf32> -> vector<32x128xf32>
    %68 = arith.truncf %67 : vector<32x128xf32> to vector<32x128xbf16>
    %cst_54 = arith.constant dense<0.000000e+00> : vector<32x128xf32>
    %69 = tpu.matmul %3, %68, %cst_54 {dimension_numbers = #tpu.dot_dimension_numbers<[1], [0], [0], [1], [0, 0, 1, 1], [], []>} : vector<32x32xbf16>, vector<32x128xbf16>, vector<32x128xf32> -> vector<32x128xf32>
    %c0_55 = arith.constant 0 : index
    %c0_56 = arith.constant 0 : index
    %70 = vector.load %arg18[%c0_55, %c0_56] : memref<1x128xf32, #tpu.memory_space<vmem>>, vector<1x128xf32>
    %71 = vector.broadcast %70 : vector<1x128xf32> to vector<32x128xf32>
    %72 = arith.addf %69, %71 : vector<32x128xf32>
    %cst_57 = arith.constant 0.000000e+00 : f32
    %73 = vector.broadcast %cst_57 : f32 to vector<32x128xf32>
    %74 = arith.maximumf %72, %73 : vector<32x128xf32>
    %c0_58 = arith.constant 0 : index
    %c0_59 = arith.constant 0 : index
    %75 = vector.load %arg19[%c0_58, %c0_59] : memref<128x128xbf16, #tpu.memory_space<vmem>>, vector<128x128xbf16>
    %76 = arith.truncf %74 : vector<32x128xf32> to vector<32x128xbf16>
    %cst_60 = arith.constant dense<0.000000e+00> : vector<32x128xf32>
    %77 = tpu.matmul %76, %75, %cst_60 {dimension_numbers = #tpu.dot_dimension_numbers<[1], [0], [0], [1], [0, 0, 1, 1], [], []>} : vector<32x128xbf16>, vector<128x128xbf16>, vector<32x128xf32> -> vector<32x128xf32>
    %c0_61 = arith.constant 0 : index
    %c0_62 = arith.constant 0 : index
    %78 = vector.load %arg20[%c0_61, %c0_62] : memref<1x128xf32, #tpu.memory_space<vmem>>, vector<1x128xf32>
    %79 = vector.broadcast %78 : vector<1x128xf32> to vector<32x128xf32>
    %80 = arith.addf %77, %79 : vector<32x128xf32>
    %cst_63 = arith.constant 0.000000e+00 : f32
    %81 = vector.broadcast %cst_63 : f32 to vector<32x128xf32>
    %82 = arith.maximumf %80, %81 : vector<32x128xf32>
    %83 = arith.addf %82, %64 : vector<32x128xf32>
    %c0_64 = arith.constant 0 : index
    %c0_65 = arith.constant 0 : index
    %84 = vector.load %arg21[%c0_64, %c0_65] : memref<128x256xbf16, #tpu.memory_space<vmem>>, vector<128x256xbf16>
    %85 = arith.truncf %83 : vector<32x128xf32> to vector<32x128xbf16>
    %cst_66 = arith.constant dense<0.000000e+00> : vector<32x256xf32>
    %86 = tpu.matmul %85, %84, %cst_66 {dimension_numbers = #tpu.dot_dimension_numbers<[1], [0], [0], [1], [0, 0, 1, 1], [], []>} : vector<32x128xbf16>, vector<128x256xbf16>, vector<32x256xf32> -> vector<32x256xf32>
    %87 = arith.truncf %86 : vector<32x256xf32> to vector<32x256xbf16>
    %cst_67 = arith.constant dense<0.000000e+00> : vector<32x256xf32>
    %88 = tpu.matmul %3, %87, %cst_67 {dimension_numbers = #tpu.dot_dimension_numbers<[1], [0], [0], [1], [0, 0, 1, 1], [], []>} : vector<32x32xbf16>, vector<32x256xbf16>, vector<32x256xf32> -> vector<32x256xf32>
    %c0_68 = arith.constant 0 : index
    %c0_69 = arith.constant 0 : index
    %89 = vector.load %arg22[%c0_68, %c0_69] : memref<1x256xf32, #tpu.memory_space<vmem>>, vector<1x256xf32>
    %90 = vector.broadcast %89 : vector<1x256xf32> to vector<32x256xf32>
    %91 = arith.addf %88, %90 : vector<32x256xf32>
    %cst_70 = arith.constant 0.000000e+00 : f32
    %92 = vector.broadcast %cst_70 : f32 to vector<32x256xf32>
    %93 = arith.maximumf %91, %92 : vector<32x256xf32>
    %c0_71 = arith.constant 0 : index
    %c0_72 = arith.constant 0 : index
    %94 = vector.load %arg23[%c0_71, %c0_72] : memref<256x128xbf16, #tpu.memory_space<vmem>>, vector<256x128xbf16>
    %95 = arith.truncf %93 : vector<32x256xf32> to vector<32x256xbf16>
    %cst_73 = arith.constant dense<0.000000e+00> : vector<32x128xf32>
    %96 = tpu.matmul %95, %94, %cst_73 {dimension_numbers = #tpu.dot_dimension_numbers<[1], [0], [0], [1], [0, 0, 1, 1], [], []>} : vector<32x256xbf16>, vector<256x128xbf16>, vector<32x128xf32> -> vector<32x128xf32>
    %c0_74 = arith.constant 0 : index
    %c0_75 = arith.constant 0 : index
    %97 = vector.load %arg24[%c0_74, %c0_75] : memref<1x128xf32, #tpu.memory_space<vmem>>, vector<1x128xf32>
    %98 = vector.broadcast %97 : vector<1x128xf32> to vector<32x128xf32>
    %99 = arith.addf %96, %98 : vector<32x128xf32>
    %cst_76 = arith.constant 0.000000e+00 : f32
    %100 = vector.broadcast %cst_76 : f32 to vector<32x128xf32>
    %101 = arith.maximumf %99, %100 : vector<32x128xf32>
    %c0_77 = arith.constant 0 : index
    %c0_78 = arith.constant 0 : index
    %102 = vector.load %arg25[%c0_77, %c0_78] : memref<128x128xbf16, #tpu.memory_space<vmem>>, vector<128x128xbf16>
    %103 = arith.truncf %83 : vector<32x128xf32> to vector<32x128xbf16>
    %cst_79 = arith.constant dense<0.000000e+00> : vector<32x128xf32>
    %104 = tpu.matmul %103, %102, %cst_79 {dimension_numbers = #tpu.dot_dimension_numbers<[1], [0], [0], [1], [0, 0, 1, 1], [], []>} : vector<32x128xbf16>, vector<128x128xbf16>, vector<32x128xf32> -> vector<32x128xf32>
    %c0_80 = arith.constant 0 : index
    %c0_81 = arith.constant 0 : index
    %105 = vector.load %arg26[%c0_80, %c0_81] : memref<1x128xf32, #tpu.memory_space<vmem>>, vector<1x128xf32>
    %106 = vector.broadcast %105 : vector<1x128xf32> to vector<32x128xf32>
    %107 = arith.addf %104, %106 : vector<32x128xf32>
    %cst_82 = arith.constant 0.000000e+00 : f32
    %108 = vector.broadcast %cst_82 : f32 to vector<32x128xf32>
    %109 = arith.maximumf %107, %108 : vector<32x128xf32>
    %110 = arith.addf %101, %109 : vector<32x128xf32>
    %c0_83 = arith.constant 0 : index
    %c0_84 = arith.constant 0 : index
    %111 = vector.load %arg27[%c0_83, %c0_84] : memref<128x128xbf16, #tpu.memory_space<vmem>>, vector<128x128xbf16>
    %112 = arith.truncf %110 : vector<32x128xf32> to vector<32x128xbf16>
    %cst_85 = arith.constant dense<0.000000e+00> : vector<32x128xf32>
    %113 = tpu.matmul %112, %111, %cst_85 {dimension_numbers = #tpu.dot_dimension_numbers<[1], [0], [0], [1], [0, 0, 1, 1], [], []>} : vector<32x128xbf16>, vector<128x128xbf16>, vector<32x128xf32> -> vector<32x128xf32>
    %114 = arith.truncf %113 : vector<32x128xf32> to vector<32x128xbf16>
    %cst_86 = arith.constant dense<0.000000e+00> : vector<32x128xf32>
    %115 = tpu.matmul %3, %114, %cst_86 {dimension_numbers = #tpu.dot_dimension_numbers<[1], [0], [0], [1], [0, 0, 1, 1], [], []>} : vector<32x32xbf16>, vector<32x128xbf16>, vector<32x128xf32> -> vector<32x128xf32>
    %c0_87 = arith.constant 0 : index
    %c0_88 = arith.constant 0 : index
    %116 = vector.load %arg28[%c0_87, %c0_88] : memref<1x128xf32, #tpu.memory_space<vmem>>, vector<1x128xf32>
    %117 = vector.broadcast %116 : vector<1x128xf32> to vector<32x128xf32>
    %118 = arith.addf %115, %117 : vector<32x128xf32>
    %cst_89 = arith.constant 0.000000e+00 : f32
    %119 = vector.broadcast %cst_89 : f32 to vector<32x128xf32>
    %120 = arith.maximumf %118, %119 : vector<32x128xf32>
    %c0_90 = arith.constant 0 : index
    %c0_91 = arith.constant 0 : index
    %121 = vector.load %arg29[%c0_90, %c0_91] : memref<128x128xbf16, #tpu.memory_space<vmem>>, vector<128x128xbf16>
    %122 = arith.truncf %120 : vector<32x128xf32> to vector<32x128xbf16>
    %cst_92 = arith.constant dense<0.000000e+00> : vector<32x128xf32>
    %123 = tpu.matmul %122, %121, %cst_92 {dimension_numbers = #tpu.dot_dimension_numbers<[1], [0], [0], [1], [0, 0, 1, 1], [], []>} : vector<32x128xbf16>, vector<128x128xbf16>, vector<32x128xf32> -> vector<32x128xf32>
    %c0_93 = arith.constant 0 : index
    %c0_94 = arith.constant 0 : index
    %124 = vector.load %arg30[%c0_93, %c0_94] : memref<1x128xf32, #tpu.memory_space<vmem>>, vector<1x128xf32>
    %125 = vector.broadcast %124 : vector<1x128xf32> to vector<32x128xf32>
    %126 = arith.addf %123, %125 : vector<32x128xf32>
    %cst_95 = arith.constant 0.000000e+00 : f32
    %127 = vector.broadcast %cst_95 : f32 to vector<32x128xf32>
    %128 = arith.maximumf %126, %127 : vector<32x128xf32>
    %129 = arith.addf %128, %110 : vector<32x128xf32>
    %c0_96 = arith.constant 0 : index
    %c0_97 = arith.constant 0 : index
    %130 = vector.load %arg31[%c0_96, %c0_97] : memref<128x128xbf16, #tpu.memory_space<vmem>>, vector<128x128xbf16>
    %131 = arith.truncf %129 : vector<32x128xf32> to vector<32x128xbf16>
    %cst_98 = arith.constant dense<0.000000e+00> : vector<32x128xf32>
    %132 = tpu.matmul %131, %130, %cst_98 {dimension_numbers = #tpu.dot_dimension_numbers<[1], [0], [0], [1], [0, 0, 1, 1], [], []>} : vector<32x128xbf16>, vector<128x128xbf16>, vector<32x128xf32> -> vector<32x128xf32>
    %133 = arith.truncf %132 : vector<32x128xf32> to vector<32x128xbf16>
    %cst_99 = arith.constant dense<0.000000e+00> : vector<32x128xf32>
    %134 = tpu.matmul %3, %133, %cst_99 {dimension_numbers = #tpu.dot_dimension_numbers<[1], [0], [0], [1], [0, 0, 1, 1], [], []>} : vector<32x32xbf16>, vector<32x128xbf16>, vector<32x128xf32> -> vector<32x128xf32>
    %c0_100 = arith.constant 0 : index
    %c0_101 = arith.constant 0 : index
    %135 = vector.load %arg32[%c0_100, %c0_101] : memref<1x128xf32, #tpu.memory_space<vmem>>, vector<1x128xf32>
    %136 = vector.broadcast %135 : vector<1x128xf32> to vector<32x128xf32>
    %137 = arith.addf %134, %136 : vector<32x128xf32>
    %cst_102 = arith.constant 0.000000e+00 : f32
    %138 = vector.broadcast %cst_102 : f32 to vector<32x128xf32>
    %139 = arith.maximumf %137, %138 : vector<32x128xf32>
    %c0_103 = arith.constant 0 : index
    %c0_104 = arith.constant 0 : index
    %140 = vector.load %arg33[%c0_103, %c0_104] : memref<128x128xbf16, #tpu.memory_space<vmem>>, vector<128x128xbf16>
    %141 = arith.truncf %139 : vector<32x128xf32> to vector<32x128xbf16>
    %cst_105 = arith.constant dense<0.000000e+00> : vector<32x128xf32>
    %142 = tpu.matmul %141, %140, %cst_105 {dimension_numbers = #tpu.dot_dimension_numbers<[1], [0], [0], [1], [0, 0, 1, 1], [], []>} : vector<32x128xbf16>, vector<128x128xbf16>, vector<32x128xf32> -> vector<32x128xf32>
    %c0_106 = arith.constant 0 : index
    %c0_107 = arith.constant 0 : index
    %143 = vector.load %arg34[%c0_106, %c0_107] : memref<1x128xf32, #tpu.memory_space<vmem>>, vector<1x128xf32>
    %144 = vector.broadcast %143 : vector<1x128xf32> to vector<32x128xf32>
    %145 = arith.addf %142, %144 : vector<32x128xf32>
    %cst_108 = arith.constant 0.000000e+00 : f32
    %146 = vector.broadcast %cst_108 : f32 to vector<32x128xf32>
    %147 = arith.maximumf %145, %146 : vector<32x128xf32>
    %148 = arith.addf %147, %129 : vector<32x128xf32>
    %c0_109 = arith.constant 0 : index
    %c0_110 = arith.constant 0 : index
    %149 = vector.load %arg35[%c0_109, %c0_110] : memref<128x256xbf16, #tpu.memory_space<vmem>>, vector<128x256xbf16>
    %150 = arith.truncf %148 : vector<32x128xf32> to vector<32x128xbf16>
    %cst_111 = arith.constant dense<0.000000e+00> : vector<32x256xf32>
    %151 = tpu.matmul %150, %149, %cst_111 {dimension_numbers = #tpu.dot_dimension_numbers<[1], [0], [0], [1], [0, 0, 1, 1], [], []>} : vector<32x128xbf16>, vector<128x256xbf16>, vector<32x256xf32> -> vector<32x256xf32>
    %152 = arith.truncf %151 : vector<32x256xf32> to vector<32x256xbf16>
    %cst_112 = arith.constant dense<0.000000e+00> : vector<32x256xf32>
    %153 = tpu.matmul %3, %152, %cst_112 {dimension_numbers = #tpu.dot_dimension_numbers<[1], [0], [0], [1], [0, 0, 1, 1], [], []>} : vector<32x32xbf16>, vector<32x256xbf16>, vector<32x256xf32> -> vector<32x256xf32>
    %c0_113 = arith.constant 0 : index
    %c0_114 = arith.constant 0 : index
    %154 = vector.load %arg36[%c0_113, %c0_114] : memref<1x256xf32, #tpu.memory_space<vmem>>, vector<1x256xf32>
    %155 = vector.broadcast %154 : vector<1x256xf32> to vector<32x256xf32>
    %156 = arith.addf %153, %155 : vector<32x256xf32>
    %cst_115 = arith.constant 0.000000e+00 : f32
    %157 = vector.broadcast %cst_115 : f32 to vector<32x256xf32>
    %158 = arith.maximumf %156, %157 : vector<32x256xf32>
    %c0_116 = arith.constant 0 : index
    %c0_117 = arith.constant 0 : index
    %159 = vector.load %arg37[%c0_116, %c0_117] : memref<256x128xbf16, #tpu.memory_space<vmem>>, vector<256x128xbf16>
    %160 = arith.truncf %158 : vector<32x256xf32> to vector<32x256xbf16>
    %cst_118 = arith.constant dense<0.000000e+00> : vector<32x128xf32>
    %161 = tpu.matmul %160, %159, %cst_118 {dimension_numbers = #tpu.dot_dimension_numbers<[1], [0], [0], [1], [0, 0, 1, 1], [], []>} : vector<32x256xbf16>, vector<256x128xbf16>, vector<32x128xf32> -> vector<32x128xf32>
    %c0_119 = arith.constant 0 : index
    %c0_120 = arith.constant 0 : index
    %162 = vector.load %arg38[%c0_119, %c0_120] : memref<1x128xf32, #tpu.memory_space<vmem>>, vector<1x128xf32>
    %163 = vector.broadcast %162 : vector<1x128xf32> to vector<32x128xf32>
    %164 = arith.addf %161, %163 : vector<32x128xf32>
    %cst_121 = arith.constant 0.000000e+00 : f32
    %165 = vector.broadcast %cst_121 : f32 to vector<32x128xf32>
    %166 = arith.maximumf %164, %165 : vector<32x128xf32>
    %c0_122 = arith.constant 0 : index
    %c0_123 = arith.constant 0 : index
    %167 = vector.load %arg39[%c0_122, %c0_123] : memref<128x128xbf16, #tpu.memory_space<vmem>>, vector<128x128xbf16>
    %168 = arith.truncf %148 : vector<32x128xf32> to vector<32x128xbf16>
    %cst_124 = arith.constant dense<0.000000e+00> : vector<32x128xf32>
    %169 = tpu.matmul %168, %167, %cst_124 {dimension_numbers = #tpu.dot_dimension_numbers<[1], [0], [0], [1], [0, 0, 1, 1], [], []>} : vector<32x128xbf16>, vector<128x128xbf16>, vector<32x128xf32> -> vector<32x128xf32>
    %c0_125 = arith.constant 0 : index
    %c0_126 = arith.constant 0 : index
    %170 = vector.load %arg40[%c0_125, %c0_126] : memref<1x128xf32, #tpu.memory_space<vmem>>, vector<1x128xf32>
    %171 = vector.broadcast %170 : vector<1x128xf32> to vector<32x128xf32>
    %172 = arith.addf %169, %171 : vector<32x128xf32>
    %cst_127 = arith.constant 0.000000e+00 : f32
    %173 = vector.broadcast %cst_127 : f32 to vector<32x128xf32>
    %174 = arith.maximumf %172, %173 : vector<32x128xf32>
    %175 = arith.addf %166, %174 : vector<32x128xf32>
    %c0_128 = arith.constant 0 : index
    %c0_129 = arith.constant 0 : index
    %176 = vector.load %arg41[%c0_128, %c0_129] : memref<128x128xbf16, #tpu.memory_space<vmem>>, vector<128x128xbf16>
    %177 = arith.truncf %175 : vector<32x128xf32> to vector<32x128xbf16>
    %cst_130 = arith.constant dense<0.000000e+00> : vector<32x128xf32>
    %178 = tpu.matmul %177, %176, %cst_130 {dimension_numbers = #tpu.dot_dimension_numbers<[1], [0], [0], [1], [0, 0, 1, 1], [], []>} : vector<32x128xbf16>, vector<128x128xbf16>, vector<32x128xf32> -> vector<32x128xf32>
    %179 = arith.truncf %178 : vector<32x128xf32> to vector<32x128xbf16>
    %cst_131 = arith.constant dense<0.000000e+00> : vector<32x128xf32>
    %180 = tpu.matmul %3, %179, %cst_131 {dimension_numbers = #tpu.dot_dimension_numbers<[1], [0], [0], [1], [0, 0, 1, 1], [], []>} : vector<32x32xbf16>, vector<32x128xbf16>, vector<32x128xf32> -> vector<32x128xf32>
    %c0_132 = arith.constant 0 : index
    %c0_133 = arith.constant 0 : index
    %181 = vector.load %arg42[%c0_132, %c0_133] : memref<1x128xf32, #tpu.memory_space<vmem>>, vector<1x128xf32>
    %182 = vector.broadcast %181 : vector<1x128xf32> to vector<32x128xf32>
    %183 = arith.addf %180, %182 : vector<32x128xf32>
    %cst_134 = arith.constant 0.000000e+00 : f32
    %184 = vector.broadcast %cst_134 : f32 to vector<32x128xf32>
    %185 = arith.maximumf %183, %184 : vector<32x128xf32>
    %c0_135 = arith.constant 0 : index
    %c0_136 = arith.constant 0 : index
    %186 = vector.load %arg43[%c0_135, %c0_136] : memref<128x128xbf16, #tpu.memory_space<vmem>>, vector<128x128xbf16>
    %187 = arith.truncf %185 : vector<32x128xf32> to vector<32x128xbf16>
    %cst_137 = arith.constant dense<0.000000e+00> : vector<32x128xf32>
    %188 = tpu.matmul %187, %186, %cst_137 {dimension_numbers = #tpu.dot_dimension_numbers<[1], [0], [0], [1], [0, 0, 1, 1], [], []>} : vector<32x128xbf16>, vector<128x128xbf16>, vector<32x128xf32> -> vector<32x128xf32>
    %c0_138 = arith.constant 0 : index
    %c0_139 = arith.constant 0 : index
    %189 = vector.load %arg44[%c0_138, %c0_139] : memref<1x128xf32, #tpu.memory_space<vmem>>, vector<1x128xf32>
    %190 = vector.broadcast %189 : vector<1x128xf32> to vector<32x128xf32>
    %191 = arith.addf %188, %190 : vector<32x128xf32>
    %cst_140 = arith.constant 0.000000e+00 : f32
    %192 = vector.broadcast %cst_140 : f32 to vector<32x128xf32>
    %193 = arith.maximumf %191, %192 : vector<32x128xf32>
    %194 = arith.addf %193, %175 : vector<32x128xf32>
    %c0_141 = arith.constant 0 : index
    %c0_142 = arith.constant 0 : index
    %195 = vector.load %arg45[%c0_141, %c0_142] : memref<128x128xbf16, #tpu.memory_space<vmem>>, vector<128x128xbf16>
    %196 = arith.truncf %194 : vector<32x128xf32> to vector<32x128xbf16>
    %cst_143 = arith.constant dense<0.000000e+00> : vector<32x128xf32>
    %197 = tpu.matmul %196, %195, %cst_143 {dimension_numbers = #tpu.dot_dimension_numbers<[1], [0], [0], [1], [0, 0, 1, 1], [], []>} : vector<32x128xbf16>, vector<128x128xbf16>, vector<32x128xf32> -> vector<32x128xf32>
    %198 = arith.truncf %197 : vector<32x128xf32> to vector<32x128xbf16>
    %cst_144 = arith.constant dense<0.000000e+00> : vector<32x128xf32>
    %199 = tpu.matmul %3, %198, %cst_144 {dimension_numbers = #tpu.dot_dimension_numbers<[1], [0], [0], [1], [0, 0, 1, 1], [], []>} : vector<32x32xbf16>, vector<32x128xbf16>, vector<32x128xf32> -> vector<32x128xf32>
    %c0_145 = arith.constant 0 : index
    %c0_146 = arith.constant 0 : index
    %200 = vector.load %arg46[%c0_145, %c0_146] : memref<1x128xf32, #tpu.memory_space<vmem>>, vector<1x128xf32>
    %201 = vector.broadcast %200 : vector<1x128xf32> to vector<32x128xf32>
    %202 = arith.addf %199, %201 : vector<32x128xf32>
    %cst_147 = arith.constant 0.000000e+00 : f32
    %203 = vector.broadcast %cst_147 : f32 to vector<32x128xf32>
    %204 = arith.maximumf %202, %203 : vector<32x128xf32>
    %c0_148 = arith.constant 0 : index
    %c0_149 = arith.constant 0 : index
    %205 = vector.load %arg47[%c0_148, %c0_149] : memref<128x128xbf16, #tpu.memory_space<vmem>>, vector<128x128xbf16>
    %206 = arith.truncf %204 : vector<32x128xf32> to vector<32x128xbf16>
    %cst_150 = arith.constant dense<0.000000e+00> : vector<32x128xf32>
    %207 = tpu.matmul %206, %205, %cst_150 {dimension_numbers = #tpu.dot_dimension_numbers<[1], [0], [0], [1], [0, 0, 1, 1], [], []>} : vector<32x128xbf16>, vector<128x128xbf16>, vector<32x128xf32> -> vector<32x128xf32>
    %c0_151 = arith.constant 0 : index
    %c0_152 = arith.constant 0 : index
    %208 = vector.load %arg48[%c0_151, %c0_152] : memref<1x128xf32, #tpu.memory_space<vmem>>, vector<1x128xf32>
    %209 = vector.broadcast %208 : vector<1x128xf32> to vector<32x128xf32>
    %210 = arith.addf %207, %209 : vector<32x128xf32>
    %cst_153 = arith.constant 0.000000e+00 : f32
    %211 = vector.broadcast %cst_153 : f32 to vector<32x128xf32>
    %212 = arith.maximumf %210, %211 : vector<32x128xf32>
    %213 = arith.addf %212, %194 : vector<32x128xf32>
    %214 = arith.truncf %213 : vector<32x128xf32> to vector<32x128xbf16>
    %cst_154 = arith.constant dense<0.000000e+00> : vector<8x128xf32>
    %215 = tpu.matmul %0, %214, %cst_154 {dimension_numbers = #tpu.dot_dimension_numbers<[1], [0], [0], [1], [0, 0, 1, 1], [], []>} : vector<8x32xbf16>, vector<32x128xbf16>, vector<8x128xf32> -> vector<8x128xf32>
    %216 = arith.truncf %215 : vector<8x128xf32> to vector<8x128xbf16>
    %cst_155 = arith.constant dense<0.000000e+00> : vector<8x128xf32>
    %217 = tpu.matmul %216, %1, %cst_155 {dimension_numbers = #tpu.dot_dimension_numbers<[1], [0], [0], [1], [0, 0, 1, 1], [], []>} : vector<8x128xbf16>, vector<128x128xbf16>, vector<8x128xf32> -> vector<8x128xf32>
    %218 = vector.broadcast %2 : vector<1x128xf32> to vector<8x128xf32>
    %219 = arith.addf %217, %218 : vector<8x128xf32>
    %c0_156 = arith.constant 0 : index
    %c0_157 = arith.constant 0 : index
    %c0_158 = arith.constant 0 : index
    %220 = vector.load %arg52[%c0_156, %c0_157, %c0_158] : memref<1x8x128xf32, #tpu.memory_space<vmem>>, vector<1x8x128xf32>
    %221 = vector.shape_cast %220 : vector<1x8x128xf32> to vector<8x128xf32>
    %222 = vector.shape_cast %219 : vector<8x128xf32> to vector<1x8x128xf32>
    tpu.vector_store %arg52[%c0_156, %c0_157, %c0_158], %222 {strides = array<i32>} : memref<1x8x128xf32, #tpu.memory_space<vmem>>, vector<1x8x128xf32>,
    return
  }
  func.func @transform_0(%arg0: i32) -> (i32, i32) {
    %c0_i32 = arith.constant 0 : i32
    %c0_i32_0 = arith.constant 0 : i32
    return %arg0, %c0_i32 : i32, i32
  }
  func.func @transform_1(%arg0: i32) -> (i32, i32) {
    %c0_i32 = arith.constant 0 : i32
    %c0_i32_0 = arith.constant 0 : i32
    %c0_i32_1 = arith.constant 0 : i32
    return %c0_i32, %c0_i32_0 : i32, i32
  }
  func.func @transform_2(%arg0: i32) -> (i32, i32) {
    %c0_i32 = arith.constant 0 : i32
    %c0_i32_0 = arith.constant 0 : i32
    %c0_i32_1 = arith.constant 0 : i32
    return %c0_i32, %c0_i32_0 : i32, i32
  }
  func.func @transform_3(%arg0: i32) -> (i32, i32) {
    %c0_i32 = arith.constant 0 : i32
    %c0_i32_0 = arith.constant 0 : i32
    %c0_i32_1 = arith.constant 0 : i32
    return %c0_i32, %c0_i32_0 : i32, i32
  }
  func.func @transform_4(%arg0: i32) -> (i32, i32) {
    %c0_i32 = arith.constant 0 : i32
    %c0_i32_0 = arith.constant 0 : i32
    %c0_i32_1 = arith.constant 0 : i32
    return %c0_i32, %c0_i32_0 : i32, i32
  }
  func.func @transform_5(%arg0: i32) -> (i32, i32) {
    %c0_i32 = arith.constant 0 : i32
    %c0_i32_0 = arith.constant 0 : i32
    %c0_i32_1 = arith.constant 0 : i32
    return %c0_i32, %c0_i32_0 : i32, i32
  }
  func.func @transform_6(%arg0: i32) -> (i32, i32) {
    %c0_i32 = arith.constant 0 : i32
    %c0_i32_0 = arith.constant 0 : i32
    %c0_i32_1 = arith.constant 0 : i32
    return %c0_i32, %c0_i32_0 : i32, i32
  }
  func.func @transform_7(%arg0: i32) -> (i32, i32) {
    %c0_i32 = arith.constant 0 : i32
    %c0_i32_0 = arith.constant 0 : i32
    %c0_i32_1 = arith.constant 0 : i32
    return %c0_i32, %c0_i32_0 : i32, i32
  }
  func.func @transform_8(%arg0: i32) -> (i32, i32) {
    %c0_i32 = arith.constant 0 : i32
    %c0_i32_0 = arith.constant 0 : i32
    %c0_i32_1 = arith.constant 0 : i32
    return %c0_i32, %c0_i32_0 : i32, i32
  }
  func.func @transform_9(%arg0: i32) -> (i32, i32) {
    %c0_i32 = arith.constant 0 : i32
    %c0_i32_0 = arith.constant 0 : i32
    %c0_i32_1 = arith.constant 0 : i32
    return %c0_i32, %c0_i32_0 : i32, i32
  }
  func.func @transform_10(%arg0: i32) -> (i32, i32) {
    %c0_i32 = arith.constant 0 : i32
    %c0_i32_0 = arith.constant 0 : i32
    %c0_i32_1 = arith.constant 0 : i32
    return %c0_i32, %c0_i32_0 : i32, i32
  }
  func.func @transform_11(%arg0: i32) -> (i32, i32) {
    %c0_i32 = arith.constant 0 : i32
    %c0_i32_0 = arith.constant 0 : i32
    %c0_i32_1 = arith.constant 0 : i32
    return %c0_i32, %c0_i32_0 : i32, i32
  }
  func.func @transform_12(%arg0: i32) -> (i32, i32) {
    %c0_i32 = arith.constant 0 : i32
    %c0_i32_0 = arith.constant 0 : i32
    %c0_i32_1 = arith.constant 0 : i32
    return %c0_i32, %c0_i32_0 : i32, i32
  }
  func.func @transform_13(%arg0: i32) -> (i32, i32) {
    %c0_i32 = arith.constant 0 : i32
    %c0_i32_0 = arith.constant 0 : i32
    %c0_i32_1 = arith.constant 0 : i32
    return %c0_i32, %c0_i32_0 : i32, i32
  }
  func.func @transform_14(%arg0: i32) -> (i32, i32) {
    %c0_i32 = arith.constant 0 : i32
    %c0_i32_0 = arith.constant 0 : i32
    %c0_i32_1 = arith.constant 0 : i32
    return %c0_i32, %c0_i32_0 : i32, i32
  }
  func.func @transform_15(%arg0: i32) -> (i32, i32) {
    %c0_i32 = arith.constant 0 : i32
    %c0_i32_0 = arith.constant 0 : i32
    %c0_i32_1 = arith.constant 0 : i32
    return %c0_i32, %c0_i32_0 : i32, i32
  }
  func.func @transform_16(%arg0: i32) -> (i32, i32) {
    %c0_i32 = arith.constant 0 : i32
    %c0_i32_0 = arith.constant 0 : i32
    %c0_i32_1 = arith.constant 0 : i32
    return %c0_i32, %c0_i32_0 : i32, i32
  }
  func.func @transform_17(%arg0: i32) -> (i32, i32) {
    %c0_i32 = arith.constant 0 : i32
    %c0_i32_0 = arith.constant 0 : i32
    %c0_i32_1 = arith.constant 0 : i32
    return %c0_i32, %c0_i32_0 : i32, i32
  }
  func.func @transform_18(%arg0: i32) -> (i32, i32) {
    %c0_i32 = arith.constant 0 : i32
    %c0_i32_0 = arith.constant 0 : i32
    %c0_i32_1 = arith.constant 0 : i32
    return %c0_i32, %c0_i32_0 : i32, i32
  }
  func.func @transform_19(%arg0: i32) -> (i32, i32) {
    %c0_i32 = arith.constant 0 : i32
    %c0_i32_0 = arith.constant 0 : i32
    %c0_i32_1 = arith.constant 0 : i32
    return %c0_i32, %c0_i32_0 : i32, i32
  }
  func.func @transform_20(%arg0: i32) -> (i32, i32) {
    %c0_i32 = arith.constant 0 : i32
    %c0_i32_0 = arith.constant 0 : i32
    %c0_i32_1 = arith.constant 0 : i32
    return %c0_i32, %c0_i32_0 : i32, i32
  }
  func.func @transform_21(%arg0: i32) -> (i32, i32) {
    %c0_i32 = arith.constant 0 : i32
    %c0_i32_0 = arith.constant 0 : i32
    %c0_i32_1 = arith.constant 0 : i32
    return %c0_i32, %c0_i32_0 : i32, i32
  }
  func.func @transform_22(%arg0: i32) -> (i32, i32) {
    %c0_i32 = arith.constant 0 : i32
    %c0_i32_0 = arith.constant 0 : i32
    %c0_i32_1 = arith.constant 0 : i32
    return %c0_i32, %c0_i32_0 : i32, i32
  }
  func.func @transform_23(%arg0: i32) -> (i32, i32) {
    %c0_i32 = arith.constant 0 : i32
    %c0_i32_0 = arith.constant 0 : i32
    %c0_i32_1 = arith.constant 0 : i32
    return %c0_i32, %c0_i32_0 : i32, i32
  }
  func.func @transform_24(%arg0: i32) -> (i32, i32) {
    %c0_i32 = arith.constant 0 : i32
    %c0_i32_0 = arith.constant 0 : i32
    %c0_i32_1 = arith.constant 0 : i32
    return %c0_i32, %c0_i32_0 : i32, i32
  }
  func.func @transform_25(%arg0: i32) -> (i32, i32) {
    %c0_i32 = arith.constant 0 : i32
    %c0_i32_0 = arith.constant 0 : i32
    %c0_i32_1 = arith.constant 0 : i32
    return %c0_i32, %c0_i32_0 : i32, i32
  }
  func.func @transform_26(%arg0: i32) -> (i32, i32) {
    %c0_i32 = arith.constant 0 : i32
    %c0_i32_0 = arith.constant 0 : i32
    %c0_i32_1 = arith.constant 0 : i32
    return %c0_i32, %c0_i32_0 : i32, i32
  }
  func.func @transform_27(%arg0: i32) -> (i32, i32) {
    %c0_i32 = arith.constant 0 : i32
    %c0_i32_0 = arith.constant 0 : i32
    %c0_i32_1 = arith.constant 0 : i32
    return %c0_i32, %c0_i32_0 : i32, i32
  }
  func.func @transform_28(%arg0: i32) -> (i32, i32) {
    %c0_i32 = arith.constant 0 : i32
    %c0_i32_0 = arith.constant 0 : i32
    %c0_i32_1 = arith.constant 0 : i32
    return %c0_i32, %c0_i32_0 : i32, i32
  }
  func.func @transform_29(%arg0: i32) -> (i32, i32) {
    %c0_i32 = arith.constant 0 : i32
    %c0_i32_0 = arith.constant 0 : i32
    %c0_i32_1 = arith.constant 0 : i32
    return %c0_i32, %c0_i32_0 : i32, i32
  }
  func.func @transform_30(%arg0: i32) -> (i32, i32) {
    %c0_i32 = arith.constant 0 : i32
    %c0_i32_0 = arith.constant 0 : i32
    %c0_i32_1 = arith.constant 0 : i32
    return %c0_i32, %c0_i32_0 : i32, i32
  }
  func.func @transform_31(%arg0: i32) -> (i32, i32) {
    %c0_i32 = arith.constant 0 : i32
    %c0_i32_0 = arith.constant 0 : i32
    %c0_i32_1 = arith.constant 0 : i32
    return %c0_i32, %c0_i32_0 : i32, i32
  }
  func.func @transform_32(%arg0: i32) -> (i32, i32) {
    %c0_i32 = arith.constant 0 : i32
    %c0_i32_0 = arith.constant 0 : i32
    %c0_i32_1 = arith.constant 0 : i32
    return %c0_i32, %c0_i32_0 : i32, i32
  }
  func.func @transform_33(%arg0: i32) -> (i32, i32) {
    %c0_i32 = arith.constant 0 : i32
    %c0_i32_0 = arith.constant 0 : i32
    %c0_i32_1 = arith.constant 0 : i32
    return %c0_i32, %c0_i32_0 : i32, i32
  }
  func.func @transform_34(%arg0: i32) -> (i32, i32) {
    %c0_i32 = arith.constant 0 : i32
    %c0_i32_0 = arith.constant 0 : i32
    %c0_i32_1 = arith.constant 0 : i32
    return %c0_i32, %c0_i32_0 : i32, i32
  }
  func.func @transform_35(%arg0: i32) -> (i32, i32) {
    %c0_i32 = arith.constant 0 : i32
    %c0_i32_0 = arith.constant 0 : i32
    %c0_i32_1 = arith.constant 0 : i32
    return %c0_i32, %c0_i32_0 : i32, i32
  }
  func.func @transform_36(%arg0: i32) -> (i32, i32) {
    %c0_i32 = arith.constant 0 : i32
    %c0_i32_0 = arith.constant 0 : i32
    %c0_i32_1 = arith.constant 0 : i32
    return %c0_i32, %c0_i32_0 : i32, i32
  }
  func.func @transform_37(%arg0: i32) -> (i32, i32) {
    %c0_i32 = arith.constant 0 : i32
    %c0_i32_0 = arith.constant 0 : i32
    %c0_i32_1 = arith.constant 0 : i32
    return %c0_i32, %c0_i32_0 : i32, i32
  }
  func.func @transform_38(%arg0: i32) -> (i32, i32) {
    %c0_i32 = arith.constant 0 : i32
    %c0_i32_0 = arith.constant 0 : i32
    %c0_i32_1 = arith.constant 0 : i32
    return %c0_i32, %c0_i32_0 : i32, i32
  }
  func.func @transform_39(%arg0: i32) -> (i32, i32) {
    %c0_i32 = arith.constant 0 : i32
    %c0_i32_0 = arith.constant 0 : i32
    %c0_i32_1 = arith.constant 0 : i32
    return %c0_i32, %c0_i32_0 : i32, i32
  }
  func.func @transform_40(%arg0: i32) -> (i32, i32) {
    %c0_i32 = arith.constant 0 : i32
    %c0_i32_0 = arith.constant 0 : i32
    %c0_i32_1 = arith.constant 0 : i32
    return %c0_i32, %c0_i32_0 : i32, i32
  }
  func.func @transform_41(%arg0: i32) -> (i32, i32) {
    %c0_i32 = arith.constant 0 : i32
    %c0_i32_0 = arith.constant 0 : i32
    %c0_i32_1 = arith.constant 0 : i32
    return %c0_i32, %c0_i32_0 : i32, i32
  }
  func.func @transform_42(%arg0: i32) -> (i32, i32) {
    %c0_i32 = arith.constant 0 : i32
    %c0_i32_0 = arith.constant 0 : i32
    %c0_i32_1 = arith.constant 0 : i32
    return %c0_i32, %c0_i32_0 : i32, i32
  }
  func.func @transform_43(%arg0: i32) -> (i32, i32) {
    %c0_i32 = arith.constant 0 : i32
    %c0_i32_0 = arith.constant 0 : i32
    %c0_i32_1 = arith.constant 0 : i32
    return %c0_i32, %c0_i32_0 : i32, i32
  }
  func.func @transform_44(%arg0: i32) -> (i32, i32) {
    %c0_i32 = arith.constant 0 : i32
    %c0_i32_0 = arith.constant 0 : i32
    %c0_i32_1 = arith.constant 0 : i32
    return %c0_i32, %c0_i32_0 : i32, i32
  }
  func.func @transform_45(%arg0: i32) -> (i32, i32) {
    %c0_i32 = arith.constant 0 : i32
    %c0_i32_0 = arith.constant 0 : i32
    %c0_i32_1 = arith.constant 0 : i32
    return %c0_i32, %c0_i32_0 : i32, i32
  }
  func.func @transform_46(%arg0: i32) -> (i32, i32) {
    %c0_i32 = arith.constant 0 : i32
    %c0_i32_0 = arith.constant 0 : i32
    %c0_i32_1 = arith.constant 0 : i32
    return %c0_i32, %c0_i32_0 : i32, i32
  }
  func.func @transform_47(%arg0: i32) -> (i32, i32) {
    %c0_i32 = arith.constant 0 : i32
    %c0_i32_0 = arith.constant 0 : i32
    %c0_i32_1 = arith.constant 0 : i32
    return %c0_i32, %c0_i32_0 : i32, i32
  }
  func.func @transform_48(%arg0: i32) -> (i32, i32) {
    %c0_i32 = arith.constant 0 : i32
    %c0_i32_0 = arith.constant 0 : i32
    %c0_i32_1 = arith.constant 0 : i32
    return %c0_i32, %c0_i32_0 : i32, i32
  }
  func.func @transform_49(%arg0: i32) -> (i32, i32) {
    %c0_i32 = arith.constant 0 : i32
    %c0_i32_0 = arith.constant 0 : i32
    %c0_i32_1 = arith.constant 0 : i32
    return %c0_i32, %c0_i32_0 : i32, i32
  }
  func.func @transform_50(%arg0: i32) -> (i32, i32) {
    %c0_i32 = arith.constant 0 : i32
    %c0_i32_0 = arith.constant 0 : i32
    %c0_i32_1 = arith.constant 0 : i32
    return %c0_i32, %c0_i32_0 : i32, i32
  }
  func.func @transform_51(%arg0: i32) -> (i32, i32, i32) {
    %c0_i32 = arith.constant 0 : i32
    %c0_i32_0 = arith.constant 0 : i32
    %c0_i32_1 = arith.constant 0 : i32
    return %arg0, %c0_i32, %c0_i32_0 : i32, i32, i32
  }
}

</mosaic_0001>

<llo_original>
// kernel: _lambda_.1
$region0: #{_lambda_.1}
  #allocation0 [shape = 'u32[]', space=smem, size = 0x4, offset = 0x4, fixed_abs, tag = 'smem constant byte address 0x4 - core index']
  #allocation1 [shape = 'u32[144,128]{1,0:T(1,128)}', space=vmem, size = 0x12000, scoped, tag = 'internal scratch']
  %s0 = inlined_call_operand.smem [shape: u32[52], index: -1, kind: input, shape index: {}]
  %s1 = sld [smem:[%s0]]
  %s2 = scalar_lea.smem %s0, 1
  %s3 = sld [smem:[%s2]]
  %s4 = scalar_lea.smem %s0, 2
  %s5 = sld [smem:[%s4]]
  %s6 = scalar_lea.smem %s0, 3
  %s7 = sld [smem:[%s6]]
  %s8 = scalar_lea.smem %s0, 4
  %s9 = sld [smem:[%s8]]
  %s10 = scalar_lea.smem %s0, 5
  %s11 = sld [smem:[%s10]]
  %s12 = scalar_lea.smem %s0, 6
  %s13 = sld [smem:[%s12]]
  %s14 = scalar_lea.smem %s0, 7
  %s15 = sld [smem:[%s14]]
  %s16 = scalar_lea.smem %s0, 8
  %s17 = sld [smem:[%s16]]
  %s18 = scalar_lea.smem %s0, 9
  %s19 = sld [smem:[%s18]]
  %s20 = scalar_lea.smem %s0, 10
  %s21 = sld [smem:[%s20]]
  %s22 = scalar_lea.smem %s0, 11
  %s23 = sld [smem:[%s22]]
  %s24 = scalar_lea.smem %s0, 12
  %s25 = sld [smem:[%s24]]
  %s26 = scalar_lea.smem %s0, 13
  %s27 = sld [smem:[%s26]]
  %s28 = scalar_lea.smem %s0, 14
  %s29 = sld [smem:[%s28]]
  %s30 = scalar_lea.smem %s0, 15
  %s31 = sld [smem:[%s30]]
  %s32 = scalar_lea.smem %s0, 16
  %s33 = sld [smem:[%s32]]
  %s34 = scalar_lea.smem %s0, 17
  %s35 = sld [smem:[%s34]]
  %s36 = scalar_lea.smem %s0, 18
  %s37 = sld [smem:[%s36]]
  %s38 = scalar_lea.smem %s0, 19
  %s39 = sld [smem:[%s38]]
  %s40 = scalar_lea.smem %s0, 20
  %s41 = sld [smem:[%s40]]
  %s42 = scalar_lea.smem %s0, 21
  %s43 = sld [smem:[%s42]]
  %s44 = scalar_lea.smem %s0, 22
  %s45 = sld [smem:[%s44]]
  %s46 = scalar_lea.smem %s0, 23
  %s47 = sld [smem:[%s46]]
  %s48 = scalar_lea.smem %s0, 24
  %s49 = sld [smem:[%s48]]
  %s50 = scalar_lea.smem %s0, 25
  %s51 = sld [smem:[%s50]]
  %s52 = scalar_lea.smem %s0, 26
  %s53 = sld [smem:[%s52]]
  %s54 = scalar_lea.smem %s0, 27
  %s55 = sld [smem:[%s54]]
  %s56 = scalar_lea.smem %s0, 28
  %s57 = sld [smem:[%s56]]
  %s58 = scalar_lea.smem %s0, 29
  %s59 = sld [smem:[%s58]]
  %s60 = scalar_lea.smem %s0, 30
  %s61 = sld [smem:[%s60]]
  %s62 = scalar_lea.smem %s0, 31
  %s63 = sld [smem:[%s62]]
  %s64 = scalar_lea.smem %s0, 32
  %s65 = sld [smem:[%s64]]
  %s66 = scalar_lea.smem %s0, 33
  %s67 = sld [smem:[%s66]]
  %s68 = scalar_lea.smem %s0, 34
  %s69 = sld [smem:[%s68]]
  %s70 = scalar_lea.smem %s0, 35
  %s71 = sld [smem:[%s70]]
  %s72 = scalar_lea.smem %s0, 36
  %s73 = sld [smem:[%s72]]
  %s74 = scalar_lea.smem %s0, 37
  %s75 = sld [smem:[%s74]]
  %s76 = scalar_lea.smem %s0, 38
  %s77 = sld [smem:[%s76]]
  %s78 = scalar_lea.smem %s0, 39
  %s79 = sld [smem:[%s78]]
  %s80 = scalar_lea.smem %s0, 40
  %s81 = sld [smem:[%s80]]
  %s82 = scalar_lea.smem %s0, 41
  %s83 = sld [smem:[%s82]]
  %s84 = scalar_lea.smem %s0, 42
  %s85 = sld [smem:[%s84]]
  %s86 = scalar_lea.smem %s0, 43
  %s87 = sld [smem:[%s86]]
  %s88 = scalar_lea.smem %s0, 44
  %s89 = sld [smem:[%s88]]
  %s90 = scalar_lea.smem %s0, 45
  %s91 = sld [smem:[%s90]]
  %s92 = scalar_lea.smem %s0, 46
  %s93 = sld [smem:[%s92]]
  %s94 = scalar_lea.smem %s0, 47
  %s95 = sld [smem:[%s94]]
  %s96 = scalar_lea.smem %s0, 48
  %s97 = sld [smem:[%s96]]
  %s98 = scalar_lea.smem %s0, 49
  %s99 = sld [smem:[%s98]]
  %s100 = scalar_lea.smem %s0, 50
  %s101 = sld [smem:[%s100]]
  %s102 = scalar_lea.smem %s0, 51
  %s103 = sld [smem:[%s102]]
  %s104 = sld [smem:[#allocation0]]
  $region385: #{_lambda_.1} parent=0
    _
  %s106 = ssub.s32 1, %s104
  %s107 = scalar_select 0, %s106, %s104
  $region1: #{_lambda_.1} parent=0
    #allocation2 [shape = 'u8[8192]{0}', space=vmem, size = 0x2000, scoped, tag = 'input window, operand 3, single buffered']
    #allocation3 [shape = 's32[2]{0}', space=sflag, size = 0x8, scoped, tag = 'scoped memory for _lambda_.1']
    #allocation4 [shape = 'u8[6144]{0}', space=vmem, size = 0x1800, scoped, tag = 'input window, operand 4, single buffered']
    #allocation5 [shape = 's32[1]{0}', space=sflag, size = 0x4, scoped, tag = 'scoped memory for _lambda_.1']
    #allocation6 [shape = 'u8[32768]{0}', space=vmem, size = 0x8000, scoped, tag = 'input window, operand 6, single buffered']
    #allocation7 [shape = 'u8[512]{0}', space=vmem, size = 0x400, scoped, tag = 'input window, operand 7, single buffered']
    #allocation8 [shape = 's32[1]{0}', space=sflag, size = 0x4, scoped, tag = 'scoped memory for _lambda_.1']
    #allocation9 [shape = 'u8[32768]{0}', space=vmem, size = 0x8000, scoped, tag = 'input window, operand 8, single buffered']
    #allocation10 [shape = 'u8[512]{0}', space=vmem, size = 0x400, scoped, tag = 'input window, operand 9, single buffered']
    #allocation11 [shape = 's32[1]{0}', space=sflag, size = 0x4, scoped, tag = 'scoped memory for _lambda_.1']
    #allocation12 [shape = 'u8[32768]{0}', space=vmem, size = 0x8000, scoped, tag = 'input window, operand 10, single buffered']
    #allocation13 [shape = 'u8[32768]{0}', space=vmem, size = 0x8000, scoped, tag = 'input window, operand 14, single buffered']
    #allocation14 [shape = 's32[1]{0}', space=sflag, size = 0x4, scoped, tag = 'scoped memory for _lambda_.1']
    #allocation15 [shape = 'u8[32768]{0}', space=vmem, size = 0x8000, scoped, tag = 'input window, operand 16, single buffered']
    #allocation16 [shape = 'u8[32768]{0}', space=vmem, size = 0x8000, scoped, tag = 'input window, operand 18, single buffered']
    #allocation17 [shape = 's32[1]{0}', space=sflag, size = 0x4, scoped, tag = 'scoped memory for _lambda_.1']
    #allocation18 [shape = 'u8[1024]{0}', space=vmem, size = 0x400, scoped, tag = 'input window, operand 21, single buffered']
    #allocation19 [shape = 'u8[512]{0}', space=vmem, size = 0x400, scoped, tag = 'input window, operand 23, single buffered']
    #allocation20 [shape = 's32[1]{0}', space=sflag, size = 0x4, scoped, tag = 'scoped memory for _lambda_.1']
    #allocation21 [shape = 'u8[32768]{0}', space=vmem, size = 0x8000, scoped, tag = 'input window, operand 24, single buffered']
    #allocation22 [shape = 'u8[512]{0}', space=vmem, size = 0x400, scoped, tag = 'input window, operand 25, single buffered']
    #allocation23 [shape = 's32[1]{0}', space=sflag, size = 0x4, scoped, tag = 'scoped memory for _lambda_.1']
    #allocation24 [shape = 'u8[32768]{0}', space=vmem, size = 0x8000, scoped, tag = 'input window, operand 26, single buffered']
    #allocation25 [shape = 'u8[512]{0}', space=vmem, size = 0x400, scoped, tag = 'input window, operand 27, single buffered']
    #allocation26 [shape = 's32[1]{0}', space=sflag, size = 0x4, scoped, tag = 'scoped memory for _lambda_.1']
    #allocation27 [shape = 'u8[32768]{0}', space=vmem, size = 0x8000, scoped, tag = 'input window, operand 28, single buffered']
    #allocation28 [shape = 'u8[512]{0}', space=vmem, size = 0x400, scoped, tag = 'input window, operand 29, single buffered']
    #allocation29 [shape = 's32[1]{0}', space=sflag, size = 0x4, scoped, tag = 'scoped memory for _lambda_.1']
    #allocation30 [shape = 'u8[32768]{0}', space=vmem, size = 0x8000, scoped, tag = 'input window, operand 30, single buffered']
    #allocation31 [shape = 'u8[512]{0}', space=vmem, size = 0x400, scoped, tag = 'input window, operand 31, single buffered']
    #allocation32 [shape = 's32[1]{0}', space=sflag, size = 0x4, scoped, tag = 'scoped memory for _lambda_.1']
    #allocation33 [shape = 'u8[32768]{0}', space=vmem, size = 0x8000, scoped, tag = 'input window, operand 32, single buffered']
    #allocation34 [shape = 'u8[512]{0}', space=vmem, size = 0x400, scoped, tag = 'input window, operand 33, single buffered']
    #allocation35 [shape = 's32[1]{0}', space=sflag, size = 0x4, scoped, tag = 'scoped memory for _lambda_.1']
    #allocation36 [shape = 'u8[1024]{0}', space=vmem, size = 0x400, scoped, tag = 'input window, operand 35, single buffered']
    #allocation37 [shape = 'u8[512]{0}', space=vmem, size = 0x400, scoped, tag = 'input window, operand 37, single buffered']
    #allocation38 [shape = 's32[1]{0}', space=sflag, size = 0x4, scoped, tag = 'scoped memory for _lambda_.1']
    #allocation39 [shape = 'u8[32768]{0}', space=vmem, size = 0x8000, scoped, tag = 'input window, operand 38, single buffered']
    #allocation40 [shape = 'u8[512]{0}', space=vmem, size = 0x400, scoped, tag = 'input window, operand 39, single buffered']
    #allocation41 [shape = 's32[1]{0}', space=sflag, size = 0x4, scoped, tag = 'scoped memory for _lambda_.1']
    #allocation42 [shape = 'u8[32768]{0}', space=vmem, size = 0x8000, scoped, tag = 'input window, operand 40, single buffered']
    #allocation43 [shape = 'u8[512]{0}', space=vmem, size = 0x400, scoped, tag = 'input window, operand 41, single buffered']
    #allocation44 [shape = 's32[1]{0}', space=sflag, size = 0x4, scoped, tag = 'scoped memory for _lambda_.1']
    #allocation45 [shape = 'u8[32768]{0}', space=vmem, size = 0x8000, scoped, tag = 'input window, operand 42, single buffered']
    #allocation46 [shape = 'u8[512]{0}', space=vmem, size = 0x400, scoped, tag = 'input window, operand 43, single buffered']
    #allocation47 [shape = 's32[1]{0}', space=sflag, size = 0x4, scoped, tag = 'scoped memory for _lambda_.1']
    #allocation48 [shape = 'u8[32768]{0}', space=vmem, size = 0x8000, scoped, tag = 'input window, operand 44, single buffered']
    #allocation49 [shape = 'u8[512]{0}', space=vmem, size = 0x400, scoped, tag = 'input window, operand 45, single buffered']
    #allocation50 [shape = 's32[1]{0}', space=sflag, size = 0x4, scoped, tag = 'scoped memory for _lambda_.1']
    #allocation51 [shape = 'u8[32768]{0}', space=vmem, size = 0x8000, scoped, tag = 'input window, operand 46, single buffered']
    #allocation52 [shape = 'u8[512]{0}', space=vmem, size = 0x400, scoped, tag = 'input window, operand 47, single buffered']
    #allocation53 [shape = 's32[1]{0}', space=sflag, size = 0x4, scoped, tag = 'scoped memory for _lambda_.1']
    #allocation54 [shape = 'u8[2048]{0}', space=vmem, size = 0x800, scoped, tag = 'input window, operand 48, single buffered']
    #allocation55 [shape = 'u8[32768]{0}', space=vmem, size = 0x8000, scoped, tag = 'input window, operand 49, single buffered']
    #allocation56 [shape = 's32[1]{0}', space=sflag, size = 0x4, scoped, tag = 'scoped memory for _lambda_.1']
    #allocation57 [shape = 'u8[512]{0}', space=vmem, size = 0x400, scoped, tag = 'input window, operand 50, single buffered']
    %108 = vsyncpa [#allocation3], 0
    %109 = vsyncpa [#allocation5], 0
    %110 = vsyncpa [#allocation8], 0
    %111 = vsyncpa [#allocation11], 0
    %112 = vsyncpa [#allocation14], 0
    %113 = vsyncpa [#allocation17], 0
    %114 = vsyncpa [#allocation20], 0
    %115 = vsyncpa [#allocation23], 0
    %116 = vsyncpa [#allocation26], 0
    %117 = vsyncpa [#allocation29], 0
    %118 = vsyncpa [#allocation32], 0
    %119 = vsyncpa [#allocation35], 0
    %120 = vsyncpa [#allocation38], 0
    %121 = vsyncpa [#allocation41], 0
    %122 = vsyncpa [#allocation44], 0
    %123 = vsyncpa [#allocation47], 0
    %124 = vsyncpa [#allocation50], 0
    %125 = vsyncpa [#allocation53], 0
    %126 = vsyncpa [#allocation56], 0
    loop: start=0, step=1, limit=4
    $region2: #{_lambda_.1} parent=1 // loop_pre_header
      _
    $region3: #{_lambda_.1} parent=1 // loop_header
      %s128 = sphi 0, %s132
      %p129 = scmp.ge.s32.totalorder %s128, 4
      %s138 = sphi 0, %s140
      %s141 = sphi 0, %s138
      %s142 = sphi 0, %s141
      %s158 = sphi 0, %s142
      %s162 = sphi 0, %s162
      %s164 = sphi 0, %s162
      %s165 = sphi 0, %s164
      %s179 = sphi 0, %s165
      %s183 = sphi 0, %s183
      %s185 = sphi 0, %s183
      %s186 = sphi 0, %s185
      %s200 = sphi 0, %s186
      %s204 = sphi 0, %s204
      %s206 = sphi 0, %s204
      %s207 = sphi 0, %s206
      %s221 = sphi 0, %s207
      %s225 = sphi 0, %s225
      %s227 = sphi 0, %s225
      %s228 = sphi 0, %s227
      %s242 = sphi 0, %s228
      %s246 = sphi 0, %s246
      %s248 = sphi 0, %s246
      %s249 = sphi 0, %s248
      %s263 = sphi 0, %s249
      %s267 = sphi 0, %s267
      %s269 = sphi 0, %s267
      %s270 = sphi 0, %s269
      %s284 = sphi 0, %s270
      %s288 = sphi 0, %s288
      %s290 = sphi 0, %s288
      %s291 = sphi 0, %s290
      %s305 = sphi 0, %s291
      %s309 = sphi 0, %s309
      %s311 = sphi 0, %s309
      %s312 = sphi 0, %s311
      %s326 = sphi 0, %s312
      %s330 = sphi 0, %s330
      %s332 = sphi 0, %s330
      %s333 = sphi 0, %s332
      %s347 = sphi 0, %s333
      %s351 = sphi 0, %s351
      %s353 = sphi 0, %s351
      %s354 = sphi 0, %s353
      %s368 = sphi 0, %s354
      %s372 = sphi 0, %s372
      %s374 = sphi 0, %s372
      %s375 = sphi 0, %s374
      %s389 = sphi 0, %s375
      %s393 = sphi 0, %s393
      %s395 = sphi 0, %s393
      %s396 = sphi 0, %s395
      %s410 = sphi 0, %s396
      %s414 = sphi 0, %s414
      %s416 = sphi 0, %s414
      %s417 = sphi 0, %s416
      %s431 = sphi 0, %s417
      %s435 = sphi 0, %s435
      %s437 = sphi 0, %s435
      %s438 = sphi 0, %s437
      %s452 = sphi 0, %s438
      %s456 = sphi 0, %s456
      %s458 = sphi 0, %s456
      %s459 = sphi 0, %s458
      %s473 = sphi 0, %s459
      %s477 = sphi 0, %s477
      %s479 = sphi 0, %s477
      %s480 = sphi 0, %s479
      %s494 = sphi 0, %s480
      %s498 = sphi 0, %s498
      %s500 = sphi 0, %s498
      %s501 = sphi 0, %s500
      %s515 = sphi 0, %s501
      %s519 = sphi 0, %s519
      %s521 = sphi 0, %s519
      %s522 = sphi 0, %s521
      %s536 = sphi 0, %s522
      %s540 = sphi 0, %s540
      %s542 = sphi 0, %s540
      %s543 = sphi 0, %s542
      %s557 = sphi 0, %s543
      %s561 = sphi 0, %s561
      %s563 = sphi 0, %s561
      %s564 = sphi 0, %s563
      %s578 = sphi 0, %s564
      %s582 = sphi 0, %s582
      %s584 = sphi 0, %s582
      %s585 = sphi 0, %s584
      %s599 = sphi 0, %s585
      %s603 = sphi 0, %s603
      %s605 = sphi 0, %s603
      %s606 = sphi 0, %s605
      %s620 = sphi 0, %s606
      %s624 = sphi 0, %s624
      %s626 = sphi 0, %s624
      %s627 = sphi 0, %s626
      %s641 = sphi 0, %s627
      %s645 = sphi 0, %s645
      %s647 = sphi 0, %s645
      %s648 = sphi 0, %s647
      %s662 = sphi 0, %s648
      %s666 = sphi 0, %s666
      %s668 = sphi 0, %s666
      %s669 = sphi 0, %s668
      %s683 = sphi 0, %s669
      %s687 = sphi 0, %s687
      %s689 = sphi 0, %s687
      %s690 = sphi 0, %s689
      %s704 = sphi 0, %s690
      %s708 = sphi 0, %s708
      %s710 = sphi 0, %s708
      %s711 = sphi 0, %s710
      %s725 = sphi 0, %s711
      %s729 = sphi 0, %s729
      %s731 = sphi 0, %s729
      %s732 = sphi 0, %s731
      %s746 = sphi 0, %s732
      %s750 = sphi 0, %s750
      %s752 = sphi 0, %s750
      %s753 = sphi 0, %s752
      %s767 = sphi 0, %s753
      %s771 = sphi 0, %s771
      %s773 = sphi 0, %s771
      %s774 = sphi 0, %s773
      %s788 = sphi 0, %s774
      %s792 = sphi 0, %s792
      %s794 = sphi 0, %s792
      %s795 = sphi 0, %s794
      %s809 = sphi 0, %s795
      %s813 = sphi 0, %s813
      %s815 = sphi 0, %s813
      %s816 = sphi 0, %s815
      %s830 = sphi 0, %s816
      %s834 = sphi 0, %s834
      %s836 = sphi 0, %s834
      %s837 = sphi 0, %s836
      %s851 = sphi 0, %s837
      %s855 = sphi 0, %s855
      %s857 = sphi 0, %s855
      %s858 = sphi 0, %s857
      %s872 = sphi 0, %s858
      %s876 = sphi 0, %s876
      %s878 = sphi 0, %s876
      %s879 = sphi 0, %s878
      %s893 = sphi 0, %s879
      %s897 = sphi 0, %s897
      %s899 = sphi 0, %s897
      %s900 = sphi 0, %s899
      %s914 = sphi 0, %s900
      %s918 = sphi 0, %s918
      %s920 = sphi 0, %s918
      %s921 = sphi 0, %s920
      %s935 = sphi 0, %s921
      %s939 = sphi 0, %s939
      %s941 = sphi 0, %s939
      %s942 = sphi 0, %s941
      %s956 = sphi 0, %s942
      %s960 = sphi 0, %s960
      %s962 = sphi 0, %s960
      %s963 = sphi 0, %s962
      %s977 = sphi 0, %s963
      %s981 = sphi 0, %s981
      %s983 = sphi 0, %s981
      %s984 = sphi 0, %s983
      %s998 = sphi 0, %s984
      %s1002 = sphi 0, %s1002
      %s1004 = sphi 0, %s1002
      %s1005 = sphi 0, %s1004
      %s1019 = sphi 0, %s1005
      %s1023 = sphi 0, %s1023
      %s1025 = sphi 0, %s1023
      %s1026 = sphi 0, %s1025
      %s1040 = sphi 0, %s1026
      %s1044 = sphi 0, %s1044
      %s1046 = sphi 0, %s1044
      %s1047 = sphi 0, %s1046
      %s1061 = sphi 0, %s1047
      %s1065 = sphi 0, %s1065
      %s1067 = sphi 0, %s1065
      %s1068 = sphi 0, %s1067
      %s1082 = sphi 0, %s1068
      %s1086 = sphi 0, %s1086
      %s1088 = sphi 0, %s1086
      %s1089 = sphi 0, %s1088
      %s1103 = sphi 0, %s1089
      %s1107 = sphi 0, %s1107
      %s1109 = sphi 0, %s1107
      %s1110 = sphi 0, %s1109
      %s1124 = sphi 0, %s1110
      %s1128 = sphi 0, %s1128
      %s1130 = sphi 0, %s1128
      %s1131 = sphi 0, %s1130
      %s1145 = sphi 0, %s1131
      %s1149 = sphi 0, %s1149
      %s1151 = sphi 0, %s1149
      %s1152 = sphi 0, %s1151
      %s1166 = sphi 0, %s1152
      %s1170 = sphi 0, %s1170
      %s1172 = sphi 0, %s1170
      %s1173 = sphi 0, %s1172
      %s1187 = sphi 0, %s1173
      %s1191 = sphi 0, %s1191
      %s1193 = sphi 0, %s1191
      %s1194 = sphi 0, %s1193
      %s1208 = sphi 0, %s1194
      %s1214 = sphi 0, %s1216
      %s1217 = sphi 0, %s1214
      %s1218 = sphi 0, %s1217
      %s1234 = sphi 0, %s1218
    $region4: #{_lambda_.1} parent=1 // loop_header_branch
      %131 = sbr.rel (%p129) target = $region8
    $region5: #{_lambda_.1} parent=1 // loop_body
      %s133 = ssub.s32 %s128, 1
      %s134 = ssub.s32 %s128, 2
      %s135 = sadd.s32 %s128, 1
      %s136 = ssub.s32 %s128, %s135
      %p137 = scmp.eq.s32.totalorder %s136, 0
      %s139 = sadd.s32 %s138, 1
      %s140 = scalar_select %p137, %s138, %s139
      %p143 = pneg %p137
      %p144 = scmp.eq.s32.totalorder %s128, 1
      %p145 = por %p143, %p144
      %p146 = scmp.ne.s32.totalorder %s138, %s141
      %p147 = scmp.eq.s32.totalorder %s128, 0
      %p148 = por %p146, %p147
      %p149 = scmp.ne.s32.totalorder %s138, %s141
      %p150 = scmp.eq.s32.totalorder %s133, 1
      %p151 = por %p149, %p150
      %p152 = scmp.ne.s32.totalorder %s141, %s142
      %p153 = scmp.eq.s32.totalorder %s133, 0
      %p154 = por %p152, %p153
      %p155 = scmp.ne.s32.totalorder %s141, %s142
      %p156 = scmp.eq.s32.totalorder %s134, 1
      %p157 = por %p155, %p156
      %p159 = scmp.ne.s32.totalorder %s142, %s158
      %p160 = scmp.eq.s32.totalorder %s134, 0
      %p161 = por %p159, %p160
      %s163 = sadd.s32 %s162, 1
      %p166 = scmp.eq.s32.totalorder %s128, 1
      %p167 = scmp.ne.s32.totalorder %s162, %s164
      %p168 = scmp.eq.s32.totalorder %s128, 0
      %p169 = por %p167, %p168
      %p170 = scmp.ne.s32.totalorder %s162, %s164
      %p171 = scmp.eq.s32.totalorder %s133, 1
      %p172 = por %p170, %p171
      %p173 = scmp.ne.s32.totalorder %s164, %s165
      %p174 = scmp.eq.s32.totalorder %s133, 0
      %p175 = por %p173, %p174
      %p176 = scmp.ne.s32.totalorder %s164, %s165
      %p177 = scmp.eq.s32.totalorder %s134, 1
      %p178 = por %p176, %p177
      %p180 = scmp.ne.s32.totalorder %s165, %s179
      %p181 = scmp.eq.s32.totalorder %s134, 0
      %p182 = por %p180, %p181
      %s184 = sadd.s32 %s183, 1
      %p187 = scmp.eq.s32.totalorder %s128, 1
      %p188 = scmp.ne.s32.totalorder %s183, %s185
      %p189 = scmp.eq.s32.totalorder %s128, 0
      %p190 = por %p188, %p189
      %p191 = scmp.ne.s32.totalorder %s183, %s185
      %p192 = scmp.eq.s32.totalorder %s133, 1
      %p193 = por %p191, %p192
      %p194 = scmp.ne.s32.totalorder %s185, %s186
      %p195 = scmp.eq.s32.totalorder %s133, 0
      %p196 = por %p194, %p195
      %p197 = scmp.ne.s32.totalorder %s185, %s186
      %p198 = scmp.eq.s32.totalorder %s134, 1
      %p199 = por %p197, %p198
      %p201 = scmp.ne.s32.totalorder %s186, %s200
      %p202 = scmp.eq.s32.totalorder %s134, 0
      %p203 = por %p201, %p202
      %s205 = sadd.s32 %s204, 1
      %p208 = scmp.eq.s32.totalorder %s128, 1
      %p209 = scmp.ne.s32.totalorder %s204, %s206
      %p210 = scmp.eq.s32.totalorder %s128, 0
      %p211 = por %p209, %p210
      %p212 = scmp.ne.s32.totalorder %s204, %s206
      %p213 = scmp.eq.s32.totalorder %s133, 1
      %p214 = por %p212, %p213
      %p215 = scmp.ne.s32.totalorder %s206, %s207
      %p216 = scmp.eq.s32.totalorder %s133, 0
      %p217 = por %p215, %p216
      %p218 = scmp.ne.s32.totalorder %s206, %s207
      %p219 = scmp.eq.s32.totalorder %s134, 1
      %p220 = por %p218, %p219
      %p222 = scmp.ne.s32.totalorder %s207, %s221
      %p223 = scmp.eq.s32.totalorder %s134, 0
      %p224 = por %p222, %p223
      %s226 = sadd.s32 %s225, 1
      %p229 = scmp.eq.s32.totalorder %s128, 1
      %p230 = scmp.ne.s32.totalorder %s225, %s227
      %p231 = scmp.eq.s32.totalorder %s128, 0
      %p232 = por %p230, %p231
      %p233 = scmp.ne.s32.totalorder %s225, %s227
      %p234 = scmp.eq.s32.totalorder %s133, 1
      %p235 = por %p233, %p234
      %p236 = scmp.ne.s32.totalorder %s227, %s228
      %p237 = scmp.eq.s32.totalorder %s133, 0
      %p238 = por %p236, %p237
      %p239 = scmp.ne.s32.totalorder %s227, %s228
      %p240 = scmp.eq.s32.totalorder %s134, 1
      %p241 = por %p239, %p240
      %p243 = scmp.ne.s32.totalorder %s228, %s242
      %p244 = scmp.eq.s32.totalorder %s134, 0
      %p245 = por %p243, %p244
      %s247 = sadd.s32 %s246, 1
      %p250 = scmp.eq.s32.totalorder %s128, 1
      %p251 = scmp.ne.s32.totalorder %s246, %s248
      %p252 = scmp.eq.s32.totalorder %s128, 0
      %p253 = por %p251, %p252
      %p254 = scmp.ne.s32.totalorder %s246, %s248
      %p255 = scmp.eq.s32.totalorder %s133, 1
      %p256 = por %p254, %p255
      %p257 = scmp.ne.s32.totalorder %s248, %s249
      %p258 = scmp.eq.s32.totalorder %s133, 0
      %p259 = por %p257, %p258
      %p260 = scmp.ne.s32.totalorder %s248, %s249
      %p261 = scmp.eq.s32.totalorder %s134, 1
      %p262 = por %p260, %p261
      %p264 = scmp.ne.s32.totalorder %s249, %s263
      %p265 = scmp.eq.s32.totalorder %s134, 0
      %p266 = por %p264, %p265
      %s268 = sadd.s32 %s267, 1
      %p271 = scmp.eq.s32.totalorder %s128, 1
      %p272 = scmp.ne.s32.totalorder %s267, %s269
      %p273 = scmp.eq.s32.totalorder %s128, 0
      %p274 = por %p272, %p273
      %p275 = scmp.ne.s32.totalorder %s267, %s269
      %p276 = scmp.eq.s32.totalorder %s133, 1
      %p277 = por %p275, %p276
      %p278 = scmp.ne.s32.totalorder %s269, %s270
      %p279 = scmp.eq.s32.totalorder %s133, 0
      %p280 = por %p278, %p279
      %p281 = scmp.ne.s32.totalorder %s269, %s270
      %p282 = scmp.eq.s32.totalorder %s134, 1
      %p283 = por %p281, %p282
      %p285 = scmp.ne.s32.totalorder %s270, %s284
      %p286 = scmp.eq.s32.totalorder %s134, 0
      %p287 = por %p285, %p286
      %s289 = sadd.s32 %s288, 1
      %p292 = scmp.eq.s32.totalorder %s128, 1
      %p293 = scmp.ne.s32.totalorder %s288, %s290
      %p294 = scmp.eq.s32.totalorder %s128, 0
      %p295 = por %p293, %p294
      %p296 = scmp.ne.s32.totalorder %s288, %s290
      %p297 = scmp.eq.s32.totalorder %s133, 1
      %p298 = por %p296, %p297
      %p299 = scmp.ne.s32.totalorder %s290, %s291
      %p300 = scmp.eq.s32.totalorder %s133, 0
      %p301 = por %p299, %p300
      %p302 = scmp.ne.s32.totalorder %s290, %s291
      %p303 = scmp.eq.s32.totalorder %s134, 1
      %p304 = por %p302, %p303
      %p306 = scmp.ne.s32.totalorder %s291, %s305
      %p307 = scmp.eq.s32.totalorder %s134, 0
      %p308 = por %p306, %p307
      %s310 = sadd.s32 %s309, 1
      %p313 = scmp.eq.s32.totalorder %s128, 1
      %p314 = scmp.ne.s32.totalorder %s309, %s311
      %p315 = scmp.eq.s32.totalorder %s128, 0
      %p316 = por %p314, %p315
      %p317 = scmp.ne.s32.totalorder %s309, %s311
      %p318 = scmp.eq.s32.totalorder %s133, 1
      %p319 = por %p317, %p318
      %p320 = scmp.ne.s32.totalorder %s311, %s312
      %p321 = scmp.eq.s32.totalorder %s133, 0
      %p322 = por %p320, %p321
      %p323 = scmp.ne.s32.totalorder %s311, %s312
      %p324 = scmp.eq.s32.totalorder %s134, 1
      %p325 = por %p323, %p324
      %p327 = scmp.ne.s32.totalorder %s312, %s326
      %p328 = scmp.eq.s32.totalorder %s134, 0
      %p329 = por %p327, %p328
      %s331 = sadd.s32 %s330, 1
      %p334 = scmp.eq.s32.totalorder %s128, 1
      %p335 = scmp.ne.s32.totalorder %s330, %s332
      %p336 = scmp.eq.s32.totalorder %s128, 0
      %p337 = por %p335, %p336
      %p338 = scmp.ne.s32.totalorder %s330, %s332
      %p339 = scmp.eq.s32.totalorder %s133, 1
      %p340 = por %p338, %p339
      %p341 = scmp.ne.s32.totalorder %s332, %s333
      %p342 = scmp.eq.s32.totalorder %s133, 0
      %p343 = por %p341, %p342
      %p344 = scmp.ne.s32.totalorder %s332, %s333
      %p345 = scmp.eq.s32.totalorder %s134, 1
      %p346 = por %p344, %p345
      %p348 = scmp.ne.s32.totalorder %s333, %s347
      %p349 = scmp.eq.s32.totalorder %s134, 0
      %p350 = por %p348, %p349
      %s352 = sadd.s32 %s351, 1
      %p355 = scmp.eq.s32.totalorder %s128, 1
      %p356 = scmp.ne.s32.totalorder %s351, %s353
      %p357 = scmp.eq.s32.totalorder %s128, 0
      %p358 = por %p356, %p357
      %p359 = scmp.ne.s32.totalorder %s351, %s353
      %p360 = scmp.eq.s32.totalorder %s133, 1
      %p361 = por %p359, %p360
      %p362 = scmp.ne.s32.totalorder %s353, %s354
      %p363 = scmp.eq.s32.totalorder %s133, 0
      %p364 = por %p362, %p363
      %p365 = scmp.ne.s32.totalorder %s353, %s354
      %p366 = scmp.eq.s32.totalorder %s134, 1
      %p367 = por %p365, %p366
      %p369 = scmp.ne.s32.totalorder %s354, %s368
      %p370 = scmp.eq.s32.totalorder %s134, 0
      %p371 = por %p369, %p370
      %s373 = sadd.s32 %s372, 1
      %p376 = scmp.eq.s32.totalorder %s128, 1
      %p377 = scmp.ne.s32.totalorder %s372, %s374
      %p378 = scmp.eq.s32.totalorder %s128, 0
      %p379 = por %p377, %p378
      %p380 = scmp.ne.s32.totalorder %s372, %s374
      %p381 = scmp.eq.s32.totalorder %s133, 1
      %p382 = por %p380, %p381
      %p383 = scmp.ne.s32.totalorder %s374, %s375
      %p384 = scmp.eq.s32.totalorder %s133, 0
      %p385 = por %p383, %p384
      %p386 = scmp.ne.s32.totalorder %s374, %s375
      %p387 = scmp.eq.s32.totalorder %s134, 1
      %p388 = por %p386, %p387
      %p390 = scmp.ne.s32.totalorder %s375, %s389
      %p391 = scmp.eq.s32.totalorder %s134, 0
      %p392 = por %p390, %p391
      %s394 = sadd.s32 %s393, 1
      %p397 = scmp.eq.s32.totalorder %s128, 1
      %p398 = scmp.ne.s32.totalorder %s393, %s395
      %p399 = scmp.eq.s32.totalorder %s128, 0
      %p400 = por %p398, %p399
      %p401 = scmp.ne.s32.totalorder %s393, %s395
      %p402 = scmp.eq.s32.totalorder %s133, 1
      %p403 = por %p401, %p402
      %p404 = scmp.ne.s32.totalorder %s395, %s396
      %p405 = scmp.eq.s32.totalorder %s133, 0
      %p406 = por %p404, %p405
      %p407 = scmp.ne.s32.totalorder %s395, %s396
      %p408 = scmp.eq.s32.totalorder %s134, 1
      %p409 = por %p407, %p408
      %p411 = scmp.ne.s32.totalorder %s396, %s410
      %p412 = scmp.eq.s32.totalorder %s134, 0
      %p413 = por %p411, %p412
      %s415 = sadd.s32 %s414, 1
      %p418 = scmp.eq.s32.totalorder %s128, 1
      %p419 = scmp.ne.s32.totalorder %s414, %s416
      %p420 = scmp.eq.s32.totalorder %s128, 0
      %p421 = por %p419, %p420
      %p422 = scmp.ne.s32.totalorder %s414, %s416
      %p423 = scmp.eq.s32.totalorder %s133, 1
      %p424 = por %p422, %p423
      %p425 = scmp.ne.s32.totalorder %s416, %s417
      %p426 = scmp.eq.s32.totalorder %s133, 0
      %p427 = por %p425, %p426
      %p428 = scmp.ne.s32.totalorder %s416, %s417
      %p429 = scmp.eq.s32.totalorder %s134, 1
      %p430 = por %p428, %p429
      %p432 = scmp.ne.s32.totalorder %s417, %s431
      %p433 = scmp.eq.s32.totalorder %s134, 0
      %p434 = por %p432, %p433
      %s436 = sadd.s32 %s435, 1
      %p439 = scmp.eq.s32.totalorder %s128, 1
      %p440 = scmp.ne.s32.totalorder %s435, %s437
      %p441 = scmp.eq.s32.totalorder %s128, 0
      %p442 = por %p440, %p441
      %p443 = scmp.ne.s32.totalorder %s435, %s437
      %p444 = scmp.eq.s32.totalorder %s133, 1
      %p445 = por %p443, %p444
      %p446 = scmp.ne.s32.totalorder %s437, %s438
      %p447 = scmp.eq.s32.totalorder %s133, 0
      %p448 = por %p446, %p447
      %p449 = scmp.ne.s32.totalorder %s437, %s438
      %p450 = scmp.eq.s32.totalorder %s134, 1
      %p451 = por %p449, %p450
      %p453 = scmp.ne.s32.totalorder %s438, %s452
      %p454 = scmp.eq.s32.totalorder %s134, 0
      %p455 = por %p453, %p454
      %s457 = sadd.s32 %s456, 1
      %p460 = scmp.eq.s32.totalorder %s128, 1
      %p461 = scmp.ne.s32.totalorder %s456, %s458
      %p462 = scmp.eq.s32.totalorder %s128, 0
      %p463 = por %p461, %p462
      %p464 = scmp.ne.s32.totalorder %s456, %s458
      %p465 = scmp.eq.s32.totalorder %s133, 1
      %p466 = por %p464, %p465
      %p467 = scmp.ne.s32.totalorder %s458, %s459
      %p468 = scmp.eq.s32.totalorder %s133, 0
      %p469 = por %p467, %p468
      %p470 = scmp.ne.s32.totalorder %s458, %s459
      %p471 = scmp.eq.s32.totalorder %s134, 1
      %p472 = por %p470, %p471
      %p474 = scmp.ne.s32.totalorder %s459, %s473
      %p475 = scmp.eq.s32.totalorder %s134, 0
      %p476 = por %p474, %p475
      %s478 = sadd.s32 %s477, 1
      %p481 = scmp.eq.s32.totalorder %s128, 1
      %p482 = scmp.ne.s32.totalorder %s477, %s479
      %p483 = scmp.eq.s32.totalorder %s128, 0
      %p484 = por %p482, %p483
      %p485 = scmp.ne.s32.totalorder %s477, %s479
      %p486 = scmp.eq.s32.totalorder %s133, 1
      %p487 = por %p485, %p486
      %p488 = scmp.ne.s32.totalorder %s479, %s480
      %p489 = scmp.eq.s32.totalorder %s133, 0
      %p490 = por %p488, %p489
      %p491 = scmp.ne.s32.totalorder %s479, %s480
      %p492 = scmp.eq.s32.totalorder %s134, 1
      %p493 = por %p491, %p492
      %p495 = scmp.ne.s32.totalorder %s480, %s494
      %p496 = scmp.eq.s32.totalorder %s134, 0
      %p497 = por %p495, %p496
      %s499 = sadd.s32 %s498, 1
      %p502 = scmp.eq.s32.totalorder %s128, 1
      %p503 = scmp.ne.s32.totalorder %s498, %s500
      %p504 = scmp.eq.s32.totalorder %s128, 0
      %p505 = por %p503, %p504
      %p506 = scmp.ne.s32.totalorder %s498, %s500
      %p507 = scmp.eq.s32.totalorder %s133, 1
      %p508 = por %p506, %p507
      %p509 = scmp.ne.s32.totalorder %s500, %s501
      %p510 = scmp.eq.s32.totalorder %s133, 0
      %p511 = por %p509, %p510
      %p512 = scmp.ne.s32.totalorder %s500, %s501
      %p513 = scmp.eq.s32.totalorder %s134, 1
      %p514 = por %p512, %p513
      %p516 = scmp.ne.s32.totalorder %s501, %s515
      %p517 = scmp.eq.s32.totalorder %s134, 0
      %p518 = por %p516, %p517
      %s520 = sadd.s32 %s519, 1
      %p523 = scmp.eq.s32.totalorder %s128, 1
      %p524 = scmp.ne.s32.totalorder %s519, %s521
      %p525 = scmp.eq.s32.totalorder %s128, 0
      %p526 = por %p524, %p525
      %p527 = scmp.ne.s32.totalorder %s519, %s521
      %p528 = scmp.eq.s32.totalorder %s133, 1
      %p529 = por %p527, %p528
      %p530 = scmp.ne.s32.totalorder %s521, %s522
      %p531 = scmp.eq.s32.totalorder %s133, 0
      %p532 = por %p530, %p531
      %p533 = scmp.ne.s32.totalorder %s521, %s522
      %p534 = scmp.eq.s32.totalorder %s134, 1
      %p535 = por %p533, %p534
      %p537 = scmp.ne.s32.totalorder %s522, %s536
      %p538 = scmp.eq.s32.totalorder %s134, 0
      %p539 = por %p537, %p538
      %s541 = sadd.s32 %s540, 1
      %p544 = scmp.eq.s32.totalorder %s128, 1
      %p545 = scmp.ne.s32.totalorder %s540, %s542
      %p546 = scmp.eq.s32.totalorder %s128, 0
      %p547 = por %p545, %p546
      %p548 = scmp.ne.s32.totalorder %s540, %s542
      %p549 = scmp.eq.s32.totalorder %s133, 1
      %p550 = por %p548, %p549
      %p551 = scmp.ne.s32.totalorder %s542, %s543
      %p552 = scmp.eq.s32.totalorder %s133, 0
      %p553 = por %p551, %p552
      %p554 = scmp.ne.s32.totalorder %s542, %s543
      %p555 = scmp.eq.s32.totalorder %s134, 1
      %p556 = por %p554, %p555
      %p558 = scmp.ne.s32.totalorder %s543, %s557
      %p559 = scmp.eq.s32.totalorder %s134, 0
      %p560 = por %p558, %p559
      %s562 = sadd.s32 %s561, 1
      %p565 = scmp.eq.s32.totalorder %s128, 1
      %p566 = scmp.ne.s32.totalorder %s561, %s563
      %p567 = scmp.eq.s32.totalorder %s128, 0
      %p568 = por %p566, %p567
      %p569 = scmp.ne.s32.totalorder %s561, %s563
      %p570 = scmp.eq.s32.totalorder %s133, 1
      %p571 = por %p569, %p570
      %p572 = scmp.ne.s32.totalorder %s563, %s564
      %p573 = scmp.eq.s32.totalorder %s133, 0
      %p574 = por %p572, %p573
      %p575 = scmp.ne.s32.totalorder %s563, %s564
      %p576 = scmp.eq.s32.totalorder %s134, 1
      %p577 = por %p575, %p576
      %p579 = scmp.ne.s32.totalorder %s564, %s578
      %p580 = scmp.eq.s32.totalorder %s134, 0
      %p581 = por %p579, %p580
      %s583 = sadd.s32 %s582, 1
      %p586 = scmp.eq.s32.totalorder %s128, 1
      %p587 = scmp.ne.s32.totalorder %s582, %s584
      %p588 = scmp.eq.s32.totalorder %s128, 0
      %p589 = por %p587, %p588
      %p590 = scmp.ne.s32.totalorder %s582, %s584
      %p591 = scmp.eq.s32.totalorder %s133, 1
      %p592 = por %p590, %p591
      %p593 = scmp.ne.s32.totalorder %s584, %s585
      %p594 = scmp.eq.s32.totalorder %s133, 0
      %p595 = por %p593, %p594
      %p596 = scmp.ne.s32.totalorder %s584, %s585
      %p597 = scmp.eq.s32.totalorder %s134, 1
      %p598 = por %p596, %p597
      %p600 = scmp.ne.s32.totalorder %s585, %s599
      %p601 = scmp.eq.s32.totalorder %s134, 0
      %p602 = por %p600, %p601
      %s604 = sadd.s32 %s603, 1
      %p607 = scmp.eq.s32.totalorder %s128, 1
      %p608 = scmp.ne.s32.totalorder %s603, %s605
      %p609 = scmp.eq.s32.totalorder %s128, 0
      %p610 = por %p608, %p609
      %p611 = scmp.ne.s32.totalorder %s603, %s605
      %p612 = scmp.eq.s32.totalorder %s133, 1
      %p613 = por %p611, %p612
      %p614 = scmp.ne.s32.totalorder %s605, %s606
      %p615 = scmp.eq.s32.totalorder %s133, 0
      %p616 = por %p614, %p615
      %p617 = scmp.ne.s32.totalorder %s605, %s606
      %p618 = scmp.eq.s32.totalorder %s134, 1
      %p619 = por %p617, %p618
      %p621 = scmp.ne.s32.totalorder %s606, %s620
      %p622 = scmp.eq.s32.totalorder %s134, 0
      %p623 = por %p621, %p622
      %s625 = sadd.s32 %s624, 1
      %p628 = scmp.eq.s32.totalorder %s128, 1
      %p629 = scmp.ne.s32.totalorder %s624, %s626
      %p630 = scmp.eq.s32.totalorder %s128, 0
      %p631 = por %p629, %p630
      %p632 = scmp.ne.s32.totalorder %s624, %s626
      %p633 = scmp.eq.s32.totalorder %s133, 1
      %p634 = por %p632, %p633
      %p635 = scmp.ne.s32.totalorder %s626, %s627
      %p636 = scmp.eq.s32.totalorder %s133, 0
      %p637 = por %p635, %p636
      %p638 = scmp.ne.s32.totalorder %s626, %s627
      %p639 = scmp.eq.s32.totalorder %s134, 1
      %p640 = por %p638, %p639
      %p642 = scmp.ne.s32.totalorder %s627, %s641
      %p643 = scmp.eq.s32.totalorder %s134, 0
      %p644 = por %p642, %p643
      %s646 = sadd.s32 %s645, 1
      %p649 = scmp.eq.s32.totalorder %s128, 1
      %p650 = scmp.ne.s32.totalorder %s645, %s647
      %p651 = scmp.eq.s32.totalorder %s128, 0
      %p652 = por %p650, %p651
      %p653 = scmp.ne.s32.totalorder %s645, %s647
      %p654 = scmp.eq.s32.totalorder %s133, 1
      %p655 = por %p653, %p654
      %p656 = scmp.ne.s32.totalorder %s647, %s648
      %p657 = scmp.eq.s32.totalorder %s133, 0
      %p658 = por %p656, %p657
      %p659 = scmp.ne.s32.totalorder %s647, %s648
      %p660 = scmp.eq.s32.totalorder %s134, 1
      %p661 = por %p659, %p660
      %p663 = scmp.ne.s32.totalorder %s648, %s662
      %p664 = scmp.eq.s32.totalorder %s134, 0
      %p665 = por %p663, %p664
      %s667 = sadd.s32 %s666, 1
      %p670 = scmp.eq.s32.totalorder %s128, 1
      %p671 = scmp.ne.s32.totalorder %s666, %s668
      %p672 = scmp.eq.s32.totalorder %s128, 0
      %p673 = por %p671, %p672
      %p674 = scmp.ne.s32.totalorder %s666, %s668
      %p675 = scmp.eq.s32.totalorder %s133, 1
      %p676 = por %p674, %p675
      %p677 = scmp.ne.s32.totalorder %s668, %s669
      %p678 = scmp.eq.s32.totalorder %s133, 0
      %p679 = por %p677, %p678
      %p680 = scmp.ne.s32.totalorder %s668, %s669
      %p681 = scmp.eq.s32.totalorder %s134, 1
      %p682 = por %p680, %p681
      %p684 = scmp.ne.s32.totalorder %s669, %s683
      %p685 = scmp.eq.s32.totalorder %s134, 0
      %p686 = por %p684, %p685
      %s688 = sadd.s32 %s687, 1
      %p691 = scmp.eq.s32.totalorder %s128, 1
      %p692 = scmp.ne.s32.totalorder %s687, %s689
      %p693 = scmp.eq.s32.totalorder %s128, 0
      %p694 = por %p692, %p693
      %p695 = scmp.ne.s32.totalorder %s687, %s689
      %p696 = scmp.eq.s32.totalorder %s133, 1
      %p697 = por %p695, %p696
      %p698 = scmp.ne.s32.totalorder %s689, %s690
      %p699 = scmp.eq.s32.totalorder %s133, 0
      %p700 = por %p698, %p699
      %p701 = scmp.ne.s32.totalorder %s689, %s690
      %p702 = scmp.eq.s32.totalorder %s134, 1
      %p703 = por %p701, %p702
      %p705 = scmp.ne.s32.totalorder %s690, %s704
      %p706 = scmp.eq.s32.totalorder %s134, 0
      %p707 = por %p705, %p706
      %s709 = sadd.s32 %s708, 1
      %p712 = scmp.eq.s32.totalorder %s128, 1
      %p713 = scmp.ne.s32.totalorder %s708, %s710
      %p714 = scmp.eq.s32.totalorder %s128, 0
      %p715 = por %p713, %p714
      %p716 = scmp.ne.s32.totalorder %s708, %s710
      %p717 = scmp.eq.s32.totalorder %s133, 1
      %p718 = por %p716, %p717
      %p719 = scmp.ne.s32.totalorder %s710, %s711
      %p720 = scmp.eq.s32.totalorder %s133, 0
      %p721 = por %p719, %p720
      %p722 = scmp.ne.s32.totalorder %s710, %s711
      %p723 = scmp.eq.s32.totalorder %s134, 1
      %p724 = por %p722, %p723
      %p726 = scmp.ne.s32.totalorder %s711, %s725
      %p727 = scmp.eq.s32.totalorder %s134, 0
      %p728 = por %p726, %p727
      %s730 = sadd.s32 %s729, 1
      %p733 = scmp.eq.s32.totalorder %s128, 1
      %p734 = scmp.ne.s32.totalorder %s729, %s731
      %p735 = scmp.eq.s32.totalorder %s128, 0
      %p736 = por %p734, %p735
      %p737 = scmp.ne.s32.totalorder %s729, %s731
      %p738 = scmp.eq.s32.totalorder %s133, 1
      %p739 = por %p737, %p738
      %p740 = scmp.ne.s32.totalorder %s731, %s732
      %p741 = scmp.eq.s32.totalorder %s133, 0
      %p742 = por %p740, %p741
      %p743 = scmp.ne.s32.totalorder %s731, %s732
      %p744 = scmp.eq.s32.totalorder %s134, 1
      %p745 = por %p743, %p744
      %p747 = scmp.ne.s32.totalorder %s732, %s746
      %p748 = scmp.eq.s32.totalorder %s134, 0
      %p749 = por %p747, %p748
      %s751 = sadd.s32 %s750, 1
      %p754 = scmp.eq.s32.totalorder %s128, 1
      %p755 = scmp.ne.s32.totalorder %s750, %s752
      %p756 = scmp.eq.s32.totalorder %s128, 0
      %p757 = por %p755, %p756
      %p758 = scmp.ne.s32.totalorder %s750, %s752
      %p759 = scmp.eq.s32.totalorder %s133, 1
      %p760 = por %p758, %p759
      %p761 = scmp.ne.s32.totalorder %s752, %s753
      %p762 = scmp.eq.s32.totalorder %s133, 0
      %p763 = por %p761, %p762
      %p764 = scmp.ne.s32.totalorder %s752, %s753
      %p765 = scmp.eq.s32.totalorder %s134, 1
      %p766 = por %p764, %p765
      %p768 = scmp.ne.s32.totalorder %s753, %s767
      %p769 = scmp.eq.s32.totalorder %s134, 0
      %p770 = por %p768, %p769
      %s772 = sadd.s32 %s771, 1
      %p775 = scmp.eq.s32.totalorder %s128, 1
      %p776 = scmp.ne.s32.totalorder %s771, %s773
      %p777 = scmp.eq.s32.totalorder %s128, 0
      %p778 = por %p776, %p777
      %p779 = scmp.ne.s32.totalorder %s771, %s773
      %p780 = scmp.eq.s32.totalorder %s133, 1
      %p781 = por %p779, %p780
      %p782 = scmp.ne.s32.totalorder %s773, %s774
      %p783 = scmp.eq.s32.totalorder %s133, 0
      %p784 = por %p782, %p783
      %p785 = scmp.ne.s32.totalorder %s773, %s774
      %p786 = scmp.eq.s32.totalorder %s134, 1
      %p787 = por %p785, %p786
      %p789 = scmp.ne.s32.totalorder %s774, %s788
      %p790 = scmp.eq.s32.totalorder %s134, 0
      %p791 = por %p789, %p790
      %s793 = sadd.s32 %s792, 1
      %p796 = scmp.eq.s32.totalorder %s128, 1
      %p797 = scmp.ne.s32.totalorder %s792, %s794
      %p798 = scmp.eq.s32.totalorder %s128, 0
      %p799 = por %p797, %p798
      %p800 = scmp.ne.s32.totalorder %s792, %s794
      %p801 = scmp.eq.s32.totalorder %s133, 1
      %p802 = por %p800, %p801
      %p803 = scmp.ne.s32.totalorder %s794, %s795
      %p804 = scmp.eq.s32.totalorder %s133, 0
      %p805 = por %p803, %p804
      %p806 = scmp.ne.s32.totalorder %s794, %s795
      %p807 = scmp.eq.s32.totalorder %s134, 1
      %p808 = por %p806, %p807
      %p810 = scmp.ne.s32.totalorder %s795, %s809
      %p811 = scmp.eq.s32.totalorder %s134, 0
      %p812 = por %p810, %p811
      %s814 = sadd.s32 %s813, 1
      %p817 = scmp.eq.s32.totalorder %s128, 1
      %p818 = scmp.ne.s32.totalorder %s813, %s815
      %p819 = scmp.eq.s32.totalorder %s128, 0
      %p820 = por %p818, %p819
      %p821 = scmp.ne.s32.totalorder %s813, %s815
      %p822 = scmp.eq.s32.totalorder %s133, 1
      %p823 = por %p821, %p822
      %p824 = scmp.ne.s32.totalorder %s815, %s816
      %p825 = scmp.eq.s32.totalorder %s133, 0
      %p826 = por %p824, %p825
      %p827 = scmp.ne.s32.totalorder %s815, %s816
      %p828 = scmp.eq.s32.totalorder %s134, 1
      %p829 = por %p827, %p828
      %p831 = scmp.ne.s32.totalorder %s816, %s830
      %p832 = scmp.eq.s32.totalorder %s134, 0
      %p833 = por %p831, %p832
      %s835 = sadd.s32 %s834, 1
      %p838 = scmp.eq.s32.totalorder %s128, 1
      %p839 = scmp.ne.s32.totalorder %s834, %s836
      %p840 = scmp.eq.s32.totalorder %s128, 0
      %p841 = por %p839, %p840
      %p842 = scmp.ne.s32.totalorder %s834, %s836
      %p843 = scmp.eq.s32.totalorder %s133, 1
      %p844 = por %p842, %p843
      %p845 = scmp.ne.s32.totalorder %s836, %s837
      %p846 = scmp.eq.s32.totalorder %s133, 0
      %p847 = por %p845, %p846
      %p848 = scmp.ne.s32.totalorder %s836, %s837
      %p849 = scmp.eq.s32.totalorder %s134, 1
      %p850 = por %p848, %p849
      %p852 = scmp.ne.s32.totalorder %s837, %s851
      %p853 = scmp.eq.s32.totalorder %s134, 0
      %p854 = por %p852, %p853
      %s856 = sadd.s32 %s855, 1
      %p859 = scmp.eq.s32.totalorder %s128, 1
      %p860 = scmp.ne.s32.totalorder %s855, %s857
      %p861 = scmp.eq.s32.totalorder %s128, 0
      %p862 = por %p860, %p861
      %p863 = scmp.ne.s32.totalorder %s855, %s857
      %p864 = scmp.eq.s32.totalorder %s133, 1
      %p865 = por %p863, %p864
      %p866 = scmp.ne.s32.totalorder %s857, %s858
      %p867 = scmp.eq.s32.totalorder %s133, 0
      %p868 = por %p866, %p867
      %p869 = scmp.ne.s32.totalorder %s857, %s858
      %p870 = scmp.eq.s32.totalorder %s134, 1
      %p871 = por %p869, %p870
      %p873 = scmp.ne.s32.totalorder %s858, %s872
      %p874 = scmp.eq.s32.totalorder %s134, 0
      %p875 = por %p873, %p874
      %s877 = sadd.s32 %s876, 1
      %p880 = scmp.eq.s32.totalorder %s128, 1
      %p881 = scmp.ne.s32.totalorder %s876, %s878
      %p882 = scmp.eq.s32.totalorder %s128, 0
      %p883 = por %p881, %p882
      %p884 = scmp.ne.s32.totalorder %s876, %s878
      %p885 = scmp.eq.s32.totalorder %s133, 1
      %p886 = por %p884, %p885
      %p887 = scmp.ne.s32.totalorder %s878, %s879
      %p888 = scmp.eq.s32.totalorder %s133, 0
      %p889 = por %p887, %p888
      %p890 = scmp.ne.s32.totalorder %s878, %s879
      %p891 = scmp.eq.s32.totalorder %s134, 1
      %p892 = por %p890, %p891
      %p894 = scmp.ne.s32.totalorder %s879, %s893
      %p895 = scmp.eq.s32.totalorder %s134, 0
      %p896 = por %p894, %p895
      %s898 = sadd.s32 %s897, 1
      %p901 = scmp.eq.s32.totalorder %s128, 1
      %p902 = scmp.ne.s32.totalorder %s897, %s899
      %p903 = scmp.eq.s32.totalorder %s128, 0
      %p904 = por %p902, %p903
      %p905 = scmp.ne.s32.totalorder %s897, %s899
      %p906 = scmp.eq.s32.totalorder %s133, 1
      %p907 = por %p905, %p906
      %p908 = scmp.ne.s32.totalorder %s899, %s900
      %p909 = scmp.eq.s32.totalorder %s133, 0
      %p910 = por %p908, %p909
      %p911 = scmp.ne.s32.totalorder %s899, %s900
      %p912 = scmp.eq.s32.totalorder %s134, 1
      %p913 = por %p911, %p912
      %p915 = scmp.ne.s32.totalorder %s900, %s914
      %p916 = scmp.eq.s32.totalorder %s134, 0
      %p917 = por %p915, %p916
      %s919 = sadd.s32 %s918, 1
      %p922 = scmp.eq.s32.totalorder %s128, 1
      %p923 = scmp.ne.s32.totalorder %s918, %s920
      %p924 = scmp.eq.s32.totalorder %s128, 0
      %p925 = por %p923, %p924
      %p926 = scmp.ne.s32.totalorder %s918, %s920
      %p927 = scmp.eq.s32.totalorder %s133, 1
      %p928 = por %p926, %p927
      %p929 = scmp.ne.s32.totalorder %s920, %s921
      %p930 = scmp.eq.s32.totalorder %s133, 0
      %p931 = por %p929, %p930
      %p932 = scmp.ne.s32.totalorder %s920, %s921
      %p933 = scmp.eq.s32.totalorder %s134, 1
      %p934 = por %p932, %p933
      %p936 = scmp.ne.s32.totalorder %s921, %s935
      %p937 = scmp.eq.s32.totalorder %s134, 0
      %p938 = por %p936, %p937
      %s940 = sadd.s32 %s939, 1
      %p943 = scmp.eq.s32.totalorder %s128, 1
      %p944 = scmp.ne.s32.totalorder %s939, %s941
      %p945 = scmp.eq.s32.totalorder %s128, 0
      %p946 = por %p944, %p945
      %p947 = scmp.ne.s32.totalorder %s939, %s941
      %p948 = scmp.eq.s32.totalorder %s133, 1
      %p949 = por %p947, %p948
      %p950 = scmp.ne.s32.totalorder %s941, %s942
      %p951 = scmp.eq.s32.totalorder %s133, 0
      %p952 = por %p950, %p951
      %p953 = scmp.ne.s32.totalorder %s941, %s942
      %p954 = scmp.eq.s32.totalorder %s134, 1
      %p955 = por %p953, %p954
      %p957 = scmp.ne.s32.totalorder %s942, %s956
      %p958 = scmp.eq.s32.totalorder %s134, 0
      %p959 = por %p957, %p958
      %s961 = sadd.s32 %s960, 1
      %p964 = scmp.eq.s32.totalorder %s128, 1
      %p965 = scmp.ne.s32.totalorder %s960, %s962
      %p966 = scmp.eq.s32.totalorder %s128, 0
      %p967 = por %p965, %p966
      %p968 = scmp.ne.s32.totalorder %s960, %s962
      %p969 = scmp.eq.s32.totalorder %s133, 1
      %p970 = por %p968, %p969
      %p971 = scmp.ne.s32.totalorder %s962, %s963
      %p972 = scmp.eq.s32.totalorder %s133, 0
      %p973 = por %p971, %p972
      %p974 = scmp.ne.s32.totalorder %s962, %s963
      %p975 = scmp.eq.s32.totalorder %s134, 1
      %p976 = por %p974, %p975
      %p978 = scmp.ne.s32.totalorder %s963, %s977
      %p979 = scmp.eq.s32.totalorder %s134, 0
      %p980 = por %p978, %p979
      %s982 = sadd.s32 %s981, 1
      %p985 = scmp.eq.s32.totalorder %s128, 1
      %p986 = scmp.ne.s32.totalorder %s981, %s983
      %p987 = scmp.eq.s32.totalorder %s128, 0
      %p988 = por %p986, %p987
      %p989 = scmp.ne.s32.totalorder %s981, %s983
      %p990 = scmp.eq.s32.totalorder %s133, 1
      %p991 = por %p989, %p990
      %p992 = scmp.ne.s32.totalorder %s983, %s984
      %p993 = scmp.eq.s32.totalorder %s133, 0
      %p994 = por %p992, %p993
      %p995 = scmp.ne.s32.totalorder %s983, %s984
      %p996 = scmp.eq.s32.totalorder %s134, 1
      %p997 = por %p995, %p996
      %p999 = scmp.ne.s32.totalorder %s984, %s998
      %p1000 = scmp.eq.s32.totalorder %s134, 0
      %p1001 = por %p999, %p1000
      %s1003 = sadd.s32 %s1002, 1
      %p1006 = scmp.eq.s32.totalorder %s128, 1
      %p1007 = scmp.ne.s32.totalorder %s1002, %s1004
      %p1008 = scmp.eq.s32.totalorder %s128, 0
      %p1009 = por %p1007, %p1008
      %p1010 = scmp.ne.s32.totalorder %s1002, %s1004
      %p1011 = scmp.eq.s32.totalorder %s133, 1
      %p1012 = por %p1010, %p1011
      %p1013 = scmp.ne.s32.totalorder %s1004, %s1005
      %p1014 = scmp.eq.s32.totalorder %s133, 0
      %p1015 = por %p1013, %p1014
      %p1016 = scmp.ne.s32.totalorder %s1004, %s1005
      %p1017 = scmp.eq.s32.totalorder %s134, 1
      %p1018 = por %p1016, %p1017
      %p1020 = scmp.ne.s32.totalorder %s1005, %s1019
      %p1021 = scmp.eq.s32.totalorder %s134, 0
      %p1022 = por %p1020, %p1021
      %s1024 = sadd.s32 %s1023, 1
      %p1027 = scmp.eq.s32.totalorder %s128, 1
      %p1028 = scmp.ne.s32.totalorder %s1023, %s1025
      %p1029 = scmp.eq.s32.totalorder %s128, 0
      %p1030 = por %p1028, %p1029
      %p1031 = scmp.ne.s32.totalorder %s1023, %s1025
      %p1032 = scmp.eq.s32.totalorder %s133, 1
      %p1033 = por %p1031, %p1032
      %p1034 = scmp.ne.s32.totalorder %s1025, %s1026
      %p1035 = scmp.eq.s32.totalorder %s133, 0
      %p1036 = por %p1034, %p1035
      %p1037 = scmp.ne.s32.totalorder %s1025, %s1026
      %p1038 = scmp.eq.s32.totalorder %s134, 1
      %p1039 = por %p1037, %p1038
      %p1041 = scmp.ne.s32.totalorder %s1026, %s1040
      %p1042 = scmp.eq.s32.totalorder %s134, 0
      %p1043 = por %p1041, %p1042
      %s1045 = sadd.s32 %s1044, 1
      %p1048 = scmp.eq.s32.totalorder %s128, 1
      %p1049 = scmp.ne.s32.totalorder %s1044, %s1046
      %p1050 = scmp.eq.s32.totalorder %s128, 0
      %p1051 = por %p1049, %p1050
      %p1052 = scmp.ne.s32.totalorder %s1044, %s1046
      %p1053 = scmp.eq.s32.totalorder %s133, 1
      %p1054 = por %p1052, %p1053
      %p1055 = scmp.ne.s32.totalorder %s1046, %s1047
      %p1056 = scmp.eq.s32.totalorder %s133, 0
      %p1057 = por %p1055, %p1056
      %p1058 = scmp.ne.s32.totalorder %s1046, %s1047
      %p1059 = scmp.eq.s32.totalorder %s134, 1
      %p1060 = por %p1058, %p1059
      %p1062 = scmp.ne.s32.totalorder %s1047, %s1061
      %p1063 = scmp.eq.s32.totalorder %s134, 0
      %p1064 = por %p1062, %p1063
      %s1066 = sadd.s32 %s1065, 1
      %p1069 = scmp.eq.s32.totalorder %s128, 1
      %p1070 = scmp.ne.s32.totalorder %s1065, %s1067
      %p1071 = scmp.eq.s32.totalorder %s128, 0
      %p1072 = por %p1070, %p1071
      %p1073 = scmp.ne.s32.totalorder %s1065, %s1067
      %p1074 = scmp.eq.s32.totalorder %s133, 1
      %p1075 = por %p1073, %p1074
      %p1076 = scmp.ne.s32.totalorder %s1067, %s1068
      %p1077 = scmp.eq.s32.totalorder %s133, 0
      %p1078 = por %p1076, %p1077
      %p1079 = scmp.ne.s32.totalorder %s1067, %s1068
      %p1080 = scmp.eq.s32.totalorder %s134, 1
      %p1081 = por %p1079, %p1080
      %p1083 = scmp.ne.s32.totalorder %s1068, %s1082
      %p1084 = scmp.eq.s32.totalorder %s134, 0
      %p1085 = por %p1083, %p1084
      %s1087 = sadd.s32 %s1086, 1
      %p1090 = scmp.eq.s32.totalorder %s128, 1
      %p1091 = scmp.ne.s32.totalorder %s1086, %s1088
      %p1092 = scmp.eq.s32.totalorder %s128, 0
      %p1093 = por %p1091, %p1092
      %p1094 = scmp.ne.s32.totalorder %s1086, %s1088
      %p1095 = scmp.eq.s32.totalorder %s133, 1
      %p1096 = por %p1094, %p1095
      %p1097 = scmp.ne.s32.totalorder %s1088, %s1089
      %p1098 = scmp.eq.s32.totalorder %s133, 0
      %p1099 = por %p1097, %p1098
      %p1100 = scmp.ne.s32.totalorder %s1088, %s1089
      %p1101 = scmp.eq.s32.totalorder %s134, 1
      %p1102 = por %p1100, %p1101
      %p1104 = scmp.ne.s32.totalorder %s1089, %s1103
      %p1105 = scmp.eq.s32.totalorder %s134, 0
      %p1106 = por %p1104, %p1105
      %s1108 = sadd.s32 %s1107, 1
      %p1111 = scmp.eq.s32.totalorder %s128, 1
      %p1112 = scmp.ne.s32.totalorder %s1107, %s1109
      %p1113 = scmp.eq.s32.totalorder %s128, 0
      %p1114 = por %p1112, %p1113
      %p1115 = scmp.ne.s32.totalorder %s1107, %s1109
      %p1116 = scmp.eq.s32.totalorder %s133, 1
      %p1117 = por %p1115, %p1116
      %p1118 = scmp.ne.s32.totalorder %s1109, %s1110
      %p1119 = scmp.eq.s32.totalorder %s133, 0
      %p1120 = por %p1118, %p1119
      %p1121 = scmp.ne.s32.totalorder %s1109, %s1110
      %p1122 = scmp.eq.s32.totalorder %s134, 1
      %p1123 = por %p1121, %p1122
      %p1125 = scmp.ne.s32.totalorder %s1110, %s1124
      %p1126 = scmp.eq.s32.totalorder %s134, 0
      %p1127 = por %p1125, %p1126
      %s1129 = sadd.s32 %s1128, 1
      %p1132 = scmp.eq.s32.totalorder %s128, 1
      %p1133 = scmp.ne.s32.totalorder %s1128, %s1130
      %p1134 = scmp.eq.s32.totalorder %s128, 0
      %p1135 = por %p1133, %p1134
      %p1136 = scmp.ne.s32.totalorder %s1128, %s1130
      %p1137 = scmp.eq.s32.totalorder %s133, 1
      %p1138 = por %p1136, %p1137
      %p1139 = scmp.ne.s32.totalorder %s1130, %s1131
      %p1140 = scmp.eq.s32.totalorder %s133, 0
      %p1141 = por %p1139, %p1140
      %p1142 = scmp.ne.s32.totalorder %s1130, %s1131
      %p1143 = scmp.eq.s32.totalorder %s134, 1
      %p1144 = por %p1142, %p1143
      %p1146 = scmp.ne.s32.totalorder %s1131, %s1145
      %p1147 = scmp.eq.s32.totalorder %s134, 0
      %p1148 = por %p1146, %p1147
      %s1150 = sadd.s32 %s1149, 1
      %p1153 = scmp.eq.s32.totalorder %s128, 1
      %p1154 = scmp.ne.s32.totalorder %s1149, %s1151
      %p1155 = scmp.eq.s32.totalorder %s128, 0
      %p1156 = por %p1154, %p1155
      %p1157 = scmp.ne.s32.totalorder %s1149, %s1151
      %p1158 = scmp.eq.s32.totalorder %s133, 1
      %p1159 = por %p1157, %p1158
      %p1160 = scmp.ne.s32.totalorder %s1151, %s1152
      %p1161 = scmp.eq.s32.totalorder %s133, 0
      %p1162 = por %p1160, %p1161
      %p1163 = scmp.ne.s32.totalorder %s1151, %s1152
      %p1164 = scmp.eq.s32.totalorder %s134, 1
      %p1165 = por %p1163, %p1164
      %p1167 = scmp.ne.s32.totalorder %s1152, %s1166
      %p1168 = scmp.eq.s32.totalorder %s134, 0
      %p1169 = por %p1167, %p1168
      %s1171 = sadd.s32 %s1170, 1
      %p1174 = scmp.eq.s32.totalorder %s128, 1
      %p1175 = scmp.ne.s32.totalorder %s1170, %s1172
      %p1176 = scmp.eq.s32.totalorder %s128, 0
      %p1177 = por %p1175, %p1176
      %p1178 = scmp.ne.s32.totalorder %s1170, %s1172
      %p1179 = scmp.eq.s32.totalorder %s133, 1
      %p1180 = por %p1178, %p1179
      %p1181 = scmp.ne.s32.totalorder %s1172, %s1173
      %p1182 = scmp.eq.s32.totalorder %s133, 0
      %p1183 = por %p1181, %p1182
      %p1184 = scmp.ne.s32.totalorder %s1172, %s1173
      %p1185 = scmp.eq.s32.totalorder %s134, 1
      %p1186 = por %p1184, %p1185
      %p1188 = scmp.ne.s32.totalorder %s1173, %s1187
      %p1189 = scmp.eq.s32.totalorder %s134, 0
      %p1190 = por %p1188, %p1189
      %s1192 = sadd.s32 %s1191, 1
      %p1195 = scmp.eq.s32.totalorder %s128, 1
      %p1196 = scmp.ne.s32.totalorder %s1191, %s1193
      %p1197 = scmp.eq.s32.totalorder %s128, 0
      %p1198 = por %p1196, %p1197
      %p1199 = scmp.ne.s32.totalorder %s1191, %s1193
      %p1200 = scmp.eq.s32.totalorder %s133, 1
      %p1201 = por %p1199, %p1200
      %p1202 = scmp.ne.s32.totalorder %s1193, %s1194
      %p1203 = scmp.eq.s32.totalorder %s133, 0
      %p1204 = por %p1202, %p1203
      %p1205 = scmp.ne.s32.totalorder %s1193, %s1194
      %p1206 = scmp.eq.s32.totalorder %s134, 1
      %p1207 = por %p1205, %p1206
      %p1209 = scmp.ne.s32.totalorder %s1194, %s1208
      %p1210 = scmp.eq.s32.totalorder %s134, 0
      %p1211 = por %p1209, %p1210
      %s1212 = ssub.s32 %s128, %s135
      %p1213 = scmp.eq.s32.totalorder %s1212, 0
      %s1215 = sadd.s32 %s1214, 1
      %s1216 = scalar_select %p1213, %s1214, %s1215
      %p1219 = pneg %p1213
      %p1220 = scmp.eq.s32.totalorder %s128, 1
      %p1221 = por %p1219, %p1220
      %p1222 = scmp.ne.s32.totalorder %s1214, %s1217
      %p1223 = scmp.eq.s32.totalorder %s128, 0
      %p1224 = por %p1222, %p1223
      %p1225 = scmp.ne.s32.totalorder %s1214, %s1217
      %p1226 = scmp.eq.s32.totalorder %s133, 1
      %p1227 = por %p1225, %p1226
      %p1228 = scmp.ne.s32.totalorder %s1217, %s1218
      %p1229 = scmp.eq.s32.totalorder %s133, 0
      %p1230 = por %p1228, %p1229
      %p1231 = scmp.ne.s32.totalorder %s1217, %s1218
      %p1232 = scmp.eq.s32.totalorder %s134, 1
      %p1233 = por %p1231, %p1232
      %p1235 = scmp.ne.s32.totalorder %s1218, %s1234
      %p1236 = scmp.eq.s32.totalorder %s134, 0
      %p1237 = por %p1235, %p1236
      %p1238 = scmp.le.s32.totalorder 1, %s128
      %p1239 = scmp.lt.s32.totalorder %s128, 3
      %p1240 = pnand %p1238, %p1239
      %p1241 = pneg %p1240
      // Predicated region
      $region9: #{_lambda_.1} parent=5 // pred_check
        _
      $region10: #{_lambda_.1} parent=5 // pred_check_branch
        %1243 = sbr.rel (%p1240) target = $region12
      $region11: #{_lambda_.1} parent=5 // pred_region
        %s1244 = ssub.s32 %s128, 1
        // Predicated region
        $region13: #{_lambda_.1} parent=11 // pred_check
          %p1245 = pneg %p175
        $region14: #{_lambda_.1} parent=11 // pred_check_branch
          %1247 = sbr.rel (%p1245) target = $region16
        $region15: #{_lambda_.1} parent=11 // pred_region
          _
        $region16: #{_lambda_.1} parent=11 // pred_fallthru
          _
        // Predicated region
        $region17: #{_lambda_.1} parent=11 // pred_check
          %p1248 = pneg %p196
        $region18: #{_lambda_.1} parent=11 // pred_check_branch
          %1250 = sbr.rel (%p1248) target = $region20
        $region19: #{_lambda_.1} parent=11 // pred_region
          _
        $region20: #{_lambda_.1} parent=11 // pred_fallthru
          _
        // Predicated region
        $region21: #{_lambda_.1} parent=11 // pred_check
          %p1251 = pneg %p217
        $region22: #{_lambda_.1} parent=11 // pred_check_branch
          %1253 = sbr.rel (%p1251) target = $region24
        $region23: #{_lambda_.1} parent=11 // pred_region
          %s1255 = ssub.s32 256, 256
          %1256 = vsyncadd [#allocation3], %s1255
          %s1257 = sshll.u32 [#allocation2], 4
          %s1258 = int_to_ptr.vmem [resolvable:$true] %s1257
          %1263 = dma.hbm_to_vmem [thread:$0]  %s7, 256, %s1258, [#allocation3], 64, 64, 4
        $region24: #{_lambda_.1} parent=11 // pred_fallthru
          _
        // Predicated region
        $region25: #{_lambda_.1} parent=11 // pred_check
          %p1264 = pneg %p238
        $region26: #{_lambda_.1} parent=11 // pred_check_branch
          %1266 = sbr.rel (%p1264) target = $region28
        $region27: #{_lambda_.1} parent=11 // pred_region
          %s1268 = ssub.s32 192, 192
          %1269 = vsyncadd [#allocation5], %s1268
          %s1270 = sshll.u32 [#allocation4], 4
          %s1271 = int_to_ptr.vmem [resolvable:$true] %s1270
          %1276 = dma.hbm_to_vmem [thread:$0]  %s9, 192, %s1271, [#allocation5], 64, 64, 4
        $region28: #{_lambda_.1} parent=11 // pred_fallthru
          _
        // Predicated region
        $region29: #{_lambda_.1} parent=11 // pred_check
          %p1277 = pneg %p259
        $region30: #{_lambda_.1} parent=11 // pred_check_branch
          %1279 = sbr.rel (%p1277) target = $region32
        $region31: #{_lambda_.1} parent=11 // pred_region
          _
        $region32: #{_lambda_.1} parent=11 // pred_fallthru
          _
        // Predicated region
        $region33: #{_lambda_.1} parent=11 // pred_check
          %p1280 = pneg %p280
        $region34: #{_lambda_.1} parent=11 // pred_check_branch
          %1282 = sbr.rel (%p1280) target = $region36
        $region35: #{_lambda_.1} parent=11 // pred_region
          %s1284 = ssub.s32 1024, 1024
          %1285 = vsyncadd [#allocation5], %s1284
          %s1286 = sshll.u32 [#allocation6], 4
          %s1287 = int_to_ptr.vmem [resolvable:$true] %s1286
          %1292 = dma.hbm_to_vmem [thread:$0]  %s13, 1024, %s1287, [#allocation5], 64, 64, 4
        $region36: #{_lambda_.1} parent=11 // pred_fallthru
          _
        // Predicated region
        $region37: #{_lambda_.1} parent=11 // pred_check
          %p1293 = pneg %p301
        $region38: #{_lambda_.1} parent=11 // pred_check_branch
          %1295 = sbr.rel (%p1293) target = $region40
        $region39: #{_lambda_.1} parent=11 // pred_region
          %s1297 = ssub.s32 16, 16
          %1298 = vsyncadd [#allocation8], %s1297
          %s1300 = sshll.u32 [#allocation7], 4
          %s1301 = int_to_ptr.vmem [resolvable:$true] %s1300
          %1303 = dma.hbm_to_vmem [thread:$0]  %s15, 16, %s1301, [#allocation8]
        $region40: #{_lambda_.1} parent=11 // pred_fallthru
          _
        // Predicated region
        $region41: #{_lambda_.1} parent=11 // pred_check
          %p1304 = pneg %p322
        $region42: #{_lambda_.1} parent=11 // pred_check_branch
          %1306 = sbr.rel (%p1304) target = $region44
        $region43: #{_lambda_.1} parent=11 // pred_region
          %s1308 = ssub.s32 1024, 1024
          %1309 = vsyncadd [#allocation8], %s1308
          %s1310 = sshll.u32 [#allocation9], 4
          %s1311 = int_to_ptr.vmem [resolvable:$true] %s1310
          %1316 = dma.hbm_to_vmem [thread:$0]  %s17, 1024, %s1311, [#allocation8], 64, 64, 4
        $region44: #{_lambda_.1} parent=11 // pred_fallthru
          _
        // Predicated region
        $region45: #{_lambda_.1} parent=11 // pred_check
          %p1317 = pneg %p343
        $region46: #{_lambda_.1} parent=11 // pred_check_branch
          %1319 = sbr.rel (%p1317) target = $region48
        $region47: #{_lambda_.1} parent=11 // pred_region
          %s1321 = ssub.s32 16, 16
          %1322 = vsyncadd [#allocation11], %s1321
          %s1324 = sshll.u32 [#allocation10], 4
          %s1325 = int_to_ptr.vmem [resolvable:$true] %s1324
          %1327 = dma.hbm_to_vmem [thread:$0]  %s19, 16, %s1325, [#allocation11]
        $region48: #{_lambda_.1} parent=11 // pred_fallthru
          _
        // Predicated region
        $region49: #{_lambda_.1} parent=11 // pred_check
          %p1328 = pneg %p364
        $region50: #{_lambda_.1} parent=11 // pred_check_branch
          %1330 = sbr.rel (%p1328) target = $region52
        $region51: #{_lambda_.1} parent=11 // pred_region
          %s1332 = ssub.s32 1024, 1024
          %1333 = vsyncadd [#allocation11], %s1332
          %s1334 = sshll.u32 [#allocation12], 4
          %s1335 = int_to_ptr.vmem [resolvable:$true] %s1334
          %1340 = dma.hbm_to_vmem [thread:$0]  %s21, 1024, %s1335, [#allocation11], 64, 64, 4
        $region52: #{_lambda_.1} parent=11 // pred_fallthru
          _
        // Predicated region
        $region53: #{_lambda_.1} parent=11 // pred_check
          %p1341 = pneg %p385
        $region54: #{_lambda_.1} parent=11 // pred_check_branch
          %1343 = sbr.rel (%p1341) target = $region56
        $region55: #{_lambda_.1} parent=11 // pred_region
          _
        $region56: #{_lambda_.1} parent=11 // pred_fallthru
          _
        // Predicated region
        $region57: #{_lambda_.1} parent=11 // pred_check
          %p1344 = pneg %p406
        $region58: #{_lambda_.1} parent=11 // pred_check_branch
          %1346 = sbr.rel (%p1344) target = $region60
        $region59: #{_lambda_.1} parent=11 // pred_region
          _
        $region60: #{_lambda_.1} parent=11 // pred_fallthru
          _
        // Predicated region
        $region61: #{_lambda_.1} parent=11 // pred_check
          %p1347 = pneg %p427
        $region62: #{_lambda_.1} parent=11 // pred_check_branch
          %1349 = sbr.rel (%p1347) target = $region64
        $region63: #{_lambda_.1} parent=11 // pred_region
          _
        $region64: #{_lambda_.1} parent=11 // pred_fallthru
          _
        // Predicated region
        $region65: #{_lambda_.1} parent=11 // pred_check
          %p1350 = pneg %p448
        $region66: #{_lambda_.1} parent=11 // pred_check_branch
          %1352 = sbr.rel (%p1350) target = $region68
        $region67: #{_lambda_.1} parent=11 // pred_region
          %s1354 = ssub.s32 1024, 1024
          %1355 = vsyncadd [#allocation14], %s1354
          %s1356 = sshll.u32 [#allocation13], 4
          %s1357 = int_to_ptr.vmem [resolvable:$true] %s1356
          %1362 = dma.hbm_to_vmem [thread:$0]  %s29, 1024, %s1357, [#allocation14], 64, 64, 4
        $region68: #{_lambda_.1} parent=11 // pred_fallthru
          _
        // Predicated region
        $region69: #{_lambda_.1} parent=11 // pred_check
          %p1363 = pneg %p469
        $region70: #{_lambda_.1} parent=11 // pred_check_branch
          %1365 = sbr.rel (%p1363) target = $region72
        $region71: #{_lambda_.1} parent=11 // pred_region
          _
        $region72: #{_lambda_.1} parent=11 // pred_fallthru
          _
        // Predicated region
        $region73: #{_lambda_.1} parent=11 // pred_check
          %p1366 = pneg %p490
        $region74: #{_lambda_.1} parent=11 // pred_check_branch
          %1368 = sbr.rel (%p1366) target = $region76
        $region75: #{_lambda_.1} parent=11 // pred_region
          %s1370 = ssub.s32 1024, 1024
          %1371 = vsyncadd [#allocation14], %s1370
          %s1372 = sshll.u32 [#allocation15], 4
          %s1373 = int_to_ptr.vmem [resolvable:$true] %s1372
          %1378 = dma.hbm_to_vmem [thread:$0]  %s33, 1024, %s1373, [#allocation14], 64, 64, 4
        $region76: #{_lambda_.1} parent=11 // pred_fallthru
          _
        // Predicated region
        $region77: #{_lambda_.1} parent=11 // pred_check
          %p1379 = pneg %p511
        $region78: #{_lambda_.1} parent=11 // pred_check_branch
          %1381 = sbr.rel (%p1379) target = $region80
        $region79: #{_lambda_.1} parent=11 // pred_region
          _
        $region80: #{_lambda_.1} parent=11 // pred_fallthru
          _
        // Predicated region
        $region81: #{_lambda_.1} parent=11 // pred_check
          %p1382 = pneg %p532
        $region82: #{_lambda_.1} parent=11 // pred_check_branch
          %1384 = sbr.rel (%p1382) target = $region84
        $region83: #{_lambda_.1} parent=11 // pred_region
          %s1386 = ssub.s32 1024, 1024
          %1387 = vsyncadd [#allocation17], %s1386
          %s1388 = sshll.u32 [#allocation16], 4
          %s1389 = int_to_ptr.vmem [resolvable:$true] %s1388
          %1394 = dma.hbm_to_vmem [thread:$0]  %s37, 1024, %s1389, [#allocation17], 64, 64, 4
        $region84: #{_lambda_.1} parent=11 // pred_fallthru
          _
        // Predicated region
        $region85: #{_lambda_.1} parent=11 // pred_check
          %p1395 = pneg %p553
        $region86: #{_lambda_.1} parent=11 // pred_check_branch
          %1397 = sbr.rel (%p1395) target = $region88
        $region87: #{_lambda_.1} parent=11 // pred_region
          _
        $region88: #{_lambda_.1} parent=11 // pred_fallthru
          _
        // Predicated region
        $region89: #{_lambda_.1} parent=11 // pred_check
          %p1398 = pneg %p574
        $region90: #{_lambda_.1} parent=11 // pred_check_branch
          %1400 = sbr.rel (%p1398) target = $region92
        $region91: #{_lambda_.1} parent=11 // pred_region
          _
        $region92: #{_lambda_.1} parent=11 // pred_fallthru
          _
        // Predicated region
        $region93: #{_lambda_.1} parent=11 // pred_check
          %p1401 = pneg %p595
        $region94: #{_lambda_.1} parent=11 // pred_check_branch
          %1403 = sbr.rel (%p1401) target = $region96
        $region95: #{_lambda_.1} parent=11 // pred_region
          %s1405 = ssub.s32 32, 32
          %1406 = vsyncadd [#allocation17], %s1405
          %s1408 = sshll.u32 [#allocation18], 4
          %s1409 = int_to_ptr.vmem [resolvable:$true] %s1408
          %1411 = dma.hbm_to_vmem [thread:$0]  %s43, 32, %s1409, [#allocation17]
        $region96: #{_lambda_.1} parent=11 // pred_fallthru
          _
        // Predicated region
        $region97: #{_lambda_.1} parent=11 // pred_check
          %p1412 = pneg %p616
        $region98: #{_lambda_.1} parent=11 // pred_check_branch
          %1414 = sbr.rel (%p1412) target = $region100
        $region99: #{_lambda_.1} parent=11 // pred_region
          _
        $region100: #{_lambda_.1} parent=11 // pred_fallthru
          _
        // Predicated region
        $region101: #{_lambda_.1} parent=11 // pred_check
          %p1415 = pneg %p637
        $region102: #{_lambda_.1} parent=11 // pred_check_branch
          %1417 = sbr.rel (%p1415) target = $region104
        $region103: #{_lambda_.1} parent=11 // pred_region
          %s1419 = ssub.s32 16, 16
          %1420 = vsyncadd [#allocation20], %s1419
          %s1422 = sshll.u32 [#allocation19], 4
          %s1423 = int_to_ptr.vmem [resolvable:$true] %s1422
          %1425 = dma.hbm_to_vmem [thread:$0]  %s47, 16, %s1423, [#allocation20]
        $region104: #{_lambda_.1} parent=11 // pred_fallthru
          _
        // Predicated region
        $region105: #{_lambda_.1} parent=11 // pred_check
          %p1426 = pneg %p658
        $region106: #{_lambda_.1} parent=11 // pred_check_branch
          %1428 = sbr.rel (%p1426) target = $region108
        $region107: #{_lambda_.1} parent=11 // pred_region
          %s1430 = ssub.s32 1024, 1024
          %1431 = vsyncadd [#allocation20], %s1430
          %s1432 = sshll.u32 [#allocation21], 4
          %s1433 = int_to_ptr.vmem [resolvable:$true] %s1432
          %1438 = dma.hbm_to_vmem [thread:$0]  %s49, 1024, %s1433, [#allocation20], 64, 64, 4
        $region108: #{_lambda_.1} parent=11 // pred_fallthru
          _
        // Predicated region
        $region109: #{_lambda_.1} parent=11 // pred_check
          %p1439 = pneg %p679
        $region110: #{_lambda_.1} parent=11 // pred_check_branch
          %1441 = sbr.rel (%p1439) target = $region112
        $region111: #{_lambda_.1} parent=11 // pred_region
          %s1443 = ssub.s32 16, 16
          %1444 = vsyncadd [#allocation23], %s1443
          %s1446 = sshll.u32 [#allocation22], 4
          %s1447 = int_to_ptr.vmem [resolvable:$true] %s1446
          %1449 = dma.hbm_to_vmem [thread:$0]  %s51, 16, %s1447, [#allocation23]
        $region112: #{_lambda_.1} parent=11 // pred_fallthru
          _
        // Predicated region
        $region113: #{_lambda_.1} parent=11 // pred_check
          %p1450 = pneg %p700
        $region114: #{_lambda_.1} parent=11 // pred_check_branch
          %1452 = sbr.rel (%p1450) target = $region116
        $region115: #{_lambda_.1} parent=11 // pred_region
          %s1454 = ssub.s32 1024, 1024
          %1455 = vsyncadd [#allocation23], %s1454
          %s1456 = sshll.u32 [#allocation24], 4
          %s1457 = int_to_ptr.vmem [resolvable:$true] %s1456
          %1462 = dma.hbm_to_vmem [thread:$0]  %s53, 1024, %s1457, [#allocation23], 64, 64, 4
        $region116: #{_lambda_.1} parent=11 // pred_fallthru
          _
        // Predicated region
        $region117: #{_lambda_.1} parent=11 // pred_check
          %p1463 = pneg %p721
        $region118: #{_lambda_.1} parent=11 // pred_check_branch
          %1465 = sbr.rel (%p1463) target = $region120
        $region119: #{_lambda_.1} parent=11 // pred_region
          %s1467 = ssub.s32 16, 16
          %1468 = vsyncadd [#allocation26], %s1467
          %s1470 = sshll.u32 [#allocation25], 4
          %s1471 = int_to_ptr.vmem [resolvable:$true] %s1470
          %1473 = dma.hbm_to_vmem [thread:$0]  %s55, 16, %s1471, [#allocation26]
        $region120: #{_lambda_.1} parent=11 // pred_fallthru
          _
        // Predicated region
        $region121: #{_lambda_.1} parent=11 // pred_check
          %p1474 = pneg %p742
        $region122: #{_lambda_.1} parent=11 // pred_check_branch
          %1476 = sbr.rel (%p1474) target = $region124
        $region123: #{_lambda_.1} parent=11 // pred_region
          %s1478 = ssub.s32 1024, 1024
          %1479 = vsyncadd [#allocation26], %s1478
          %s1480 = sshll.u32 [#allocation27], 4
          %s1481 = int_to_ptr.vmem [resolvable:$true] %s1480
          %1486 = dma.hbm_to_vmem [thread:$0]  %s57, 1024, %s1481, [#allocation26], 64, 64, 4
        $region124: #{_lambda_.1} parent=11 // pred_fallthru
          _
        // Predicated region
        $region125: #{_lambda_.1} parent=11 // pred_check
          %p1487 = pneg %p763
        $region126: #{_lambda_.1} parent=11 // pred_check_branch
          %1489 = sbr.rel (%p1487) target = $region128
        $region127: #{_lambda_.1} parent=11 // pred_region
          %s1491 = ssub.s32 16, 16
          %1492 = vsyncadd [#allocation29], %s1491
          %s1494 = sshll.u32 [#allocation28], 4
          %s1495 = int_to_ptr.vmem [resolvable:$true] %s1494
          %1497 = dma.hbm_to_vmem [thread:$0]  %s59, 16, %s1495, [#allocation29]
        $region128: #{_lambda_.1} parent=11 // pred_fallthru
          _
        // Predicated region
        $region129: #{_lambda_.1} parent=11 // pred_check
          %p1498 = pneg %p784
        $region130: #{_lambda_.1} parent=11 // pred_check_branch
          %1500 = sbr.rel (%p1498) target = $region132
        $region131: #{_lambda_.1} parent=11 // pred_region
          %s1502 = ssub.s32 1024, 1024
          %1503 = vsyncadd [#allocation29], %s1502
          %s1504 = sshll.u32 [#allocation30], 4
          %s1505 = int_to_ptr.vmem [resolvable:$true] %s1504
          %1510 = dma.hbm_to_vmem [thread:$0]  %s61, 1024, %s1505, [#allocation29], 64, 64, 4
        $region132: #{_lambda_.1} parent=11 // pred_fallthru
          _
        // Predicated region
        $region133: #{_lambda_.1} parent=11 // pred_check
          %p1511 = pneg %p805
        $region134: #{_lambda_.1} parent=11 // pred_check_branch
          %1513 = sbr.rel (%p1511) target = $region136
        $region135: #{_lambda_.1} parent=11 // pred_region
          %s1515 = ssub.s32 16, 16
          %1516 = vsyncadd [#allocation32], %s1515
          %s1518 = sshll.u32 [#allocation31], 4
          %s1519 = int_to_ptr.vmem [resolvable:$true] %s1518
          %1521 = dma.hbm_to_vmem [thread:$0]  %s63, 16, %s1519, [#allocation32]
        $region136: #{_lambda_.1} parent=11 // pred_fallthru
          _
        // Predicated region
        $region137: #{_lambda_.1} parent=11 // pred_check
          %p1522 = pneg %p826
        $region138: #{_lambda_.1} parent=11 // pred_check_branch
          %1524 = sbr.rel (%p1522) target = $region140
        $region139: #{_lambda_.1} parent=11 // pred_region
          %s1526 = ssub.s32 1024, 1024
          %1527 = vsyncadd [#allocation32], %s1526
          %s1528 = sshll.u32 [#allocation33], 4
          %s1529 = int_to_ptr.vmem [resolvable:$true] %s1528
          %1534 = dma.hbm_to_vmem [thread:$0]  %s65, 1024, %s1529, [#allocation32], 64, 64, 4
        $region140: #{_lambda_.1} parent=11 // pred_fallthru
          _
        // Predicated region
        $region141: #{_lambda_.1} parent=11 // pred_check
          %p1535 = pneg %p847
        $region142: #{_lambda_.1} parent=11 // pred_check_branch
          %1537 = sbr.rel (%p1535) target = $region144
        $region143: #{_lambda_.1} parent=11 // pred_region
          %s1539 = ssub.s32 16, 16
          %1540 = vsyncadd [#allocation35], %s1539
          %s1542 = sshll.u32 [#allocation34], 4
          %s1543 = int_to_ptr.vmem [resolvable:$true] %s1542
          %1545 = dma.hbm_to_vmem [thread:$0]  %s67, 16, %s1543, [#allocation35]
        $region144: #{_lambda_.1} parent=11 // pred_fallthru
          _
        // Predicated region
        $region145: #{_lambda_.1} parent=11 // pred_check
          %p1546 = pneg %p868
        $region146: #{_lambda_.1} parent=11 // pred_check_branch
          %1548 = sbr.rel (%p1546) target = $region148
        $region147: #{_lambda_.1} parent=11 // pred_region
          _
        $region148: #{_lambda_.1} parent=11 // pred_fallthru
          _
        // Predicated region
        $region149: #{_lambda_.1} parent=11 // pred_check
          %p1549 = pneg %p889
        $region150: #{_lambda_.1} parent=11 // pred_check_branch
          %1551 = sbr.rel (%p1549) target = $region152
        $region151: #{_lambda_.1} parent=11 // pred_region
          %s1553 = ssub.s32 32, 32
          %1554 = vsyncadd [#allocation35], %s1553
          %s1556 = sshll.u32 [#allocation36], 4
          %s1557 = int_to_ptr.vmem [resolvable:$true] %s1556
          %1559 = dma.hbm_to_vmem [thread:$0]  %s71, 32, %s1557, [#allocation35]
        $region152: #{_lambda_.1} parent=11 // pred_fallthru
          _
        // Predicated region
        $region153: #{_lambda_.1} parent=11 // pred_check
          %p1560 = pneg %p910
        $region154: #{_lambda_.1} parent=11 // pred_check_branch
          %1562 = sbr.rel (%p1560) target = $region156
        $region155: #{_lambda_.1} parent=11 // pred_region
          _
        $region156: #{_lambda_.1} parent=11 // pred_fallthru
          _
        // Predicated region
        $region157: #{_lambda_.1} parent=11 // pred_check
          %p1563 = pneg %p931
        $region158: #{_lambda_.1} parent=11 // pred_check_branch
          %1565 = sbr.rel (%p1563) target = $region160
        $region159: #{_lambda_.1} parent=11 // pred_region
          %s1567 = ssub.s32 16, 16
          %1568 = vsyncadd [#allocation38], %s1567
          %s1570 = sshll.u32 [#allocation37], 4
          %s1571 = int_to_ptr.vmem [resolvable:$true] %s1570
          %1573 = dma.hbm_to_vmem [thread:$0]  %s75, 16, %s1571, [#allocation38]
        $region160: #{_lambda_.1} parent=11 // pred_fallthru
          _
        // Predicated region
        $region161: #{_lambda_.1} parent=11 // pred_check
          %p1574 = pneg %p952
        $region162: #{_lambda_.1} parent=11 // pred_check_branch
          %1576 = sbr.rel (%p1574) target = $region164
        $region163: #{_lambda_.1} parent=11 // pred_region
          %s1578 = ssub.s32 1024, 1024
          %1579 = vsyncadd [#allocation38], %s1578
          %s1580 = sshll.u32 [#allocation39], 4
          %s1581 = int_to_ptr.vmem [resolvable:$true] %s1580
          %1586 = dma.hbm_to_vmem [thread:$0]  %s77, 1024, %s1581, [#allocation38], 64, 64, 4
        $region164: #{_lambda_.1} parent=11 // pred_fallthru
          _
        // Predicated region
        $region165: #{_lambda_.1} parent=11 // pred_check
          %p1587 = pneg %p973
        $region166: #{_lambda_.1} parent=11 // pred_check_branch
          %1589 = sbr.rel (%p1587) target = $region168
        $region167: #{_lambda_.1} parent=11 // pred_region
          %s1591 = ssub.s32 16, 16
          %1592 = vsyncadd [#allocation41], %s1591
          %s1594 = sshll.u32 [#allocation40], 4
          %s1595 = int_to_ptr.vmem [resolvable:$true] %s1594
          %1597 = dma.hbm_to_vmem [thread:$0]  %s79, 16, %s1595, [#allocation41]
        $region168: #{_lambda_.1} parent=11 // pred_fallthru
          _
        // Predicated region
        $region169: #{_lambda_.1} parent=11 // pred_check
          %p1598 = pneg %p994
        $region170: #{_lambda_.1} parent=11 // pred_check_branch
          %1600 = sbr.rel (%p1598) target = $region172
        $region171: #{_lambda_.1} parent=11 // pred_region
          %s1602 = ssub.s32 1024, 1024
          %1603 = vsyncadd [#allocation41], %s1602
          %s1604 = sshll.u32 [#allocation42], 4
          %s1605 = int_to_ptr.vmem [resolvable:$true] %s1604
          %1610 = dma.hbm_to_vmem [thread:$0]  %s81, 1024, %s1605, [#allocation41], 64, 64, 4
        $region172: #{_lambda_.1} parent=11 // pred_fallthru
          _
        // Predicated region
        $region173: #{_lambda_.1} parent=11 // pred_check
          %p1611 = pneg %p1015
        $region174: #{_lambda_.1} parent=11 // pred_check_branch
          %1613 = sbr.rel (%p1611) target = $region176
        $region175: #{_lambda_.1} parent=11 // pred_region
          %s1615 = ssub.s32 16, 16
          %1616 = vsyncadd [#allocation44], %s1615
          %s1618 = sshll.u32 [#allocation43], 4
          %s1619 = int_to_ptr.vmem [resolvable:$true] %s1618
          %1621 = dma.hbm_to_vmem [thread:$0]  %s83, 16, %s1619, [#allocation44]
        $region176: #{_lambda_.1} parent=11 // pred_fallthru
          _
        // Predicated region
        $region177: #{_lambda_.1} parent=11 // pred_check
          %p1622 = pneg %p1036
        $region178: #{_lambda_.1} parent=11 // pred_check_branch
          %1624 = sbr.rel (%p1622) target = $region180
        $region179: #{_lambda_.1} parent=11 // pred_region
          %s1626 = ssub.s32 1024, 1024
          %1627 = vsyncadd [#allocation44], %s1626
          %s1628 = sshll.u32 [#allocation45], 4
          %s1629 = int_to_ptr.vmem [resolvable:$true] %s1628
          %1634 = dma.hbm_to_vmem [thread:$0]  %s85, 1024, %s1629, [#allocation44], 64, 64, 4
        $region180: #{_lambda_.1} parent=11 // pred_fallthru
          _
        // Predicated region
        $region181: #{_lambda_.1} parent=11 // pred_check
          %p1635 = pneg %p1057
        $region182: #{_lambda_.1} parent=11 // pred_check_branch
          %1637 = sbr.rel (%p1635) target = $region184
        $region183: #{_lambda_.1} parent=11 // pred_region
          %s1639 = ssub.s32 16, 16
          %1640 = vsyncadd [#allocation47], %s1639
          %s1642 = sshll.u32 [#allocation46], 4
          %s1643 = int_to_ptr.vmem [resolvable:$true] %s1642
          %1645 = dma.hbm_to_vmem [thread:$0]  %s87, 16, %s1643, [#allocation47]
        $region184: #{_lambda_.1} parent=11 // pred_fallthru
          _
        // Predicated region
        $region185: #{_lambda_.1} parent=11 // pred_check
          %p1646 = pneg %p1078
        $region186: #{_lambda_.1} parent=11 // pred_check_branch
          %1648 = sbr.rel (%p1646) target = $region188
        $region187: #{_lambda_.1} parent=11 // pred_region
          %s1650 = ssub.s32 1024, 1024
          %1651 = vsyncadd [#allocation47], %s1650
          %s1652 = sshll.u32 [#allocation48], 4
          %s1653 = int_to_ptr.vmem [resolvable:$true] %s1652
          %1658 = dma.hbm_to_vmem [thread:$0]  %s89, 1024, %s1653, [#allocation47], 64, 64, 4
        $region188: #{_lambda_.1} parent=11 // pred_fallthru
          _
        // Predicated region
        $region189: #{_lambda_.1} parent=11 // pred_check
          %p1659 = pneg %p1099
        $region190: #{_lambda_.1} parent=11 // pred_check_branch
          %1661 = sbr.rel (%p1659) target = $region192
        $region191: #{_lambda_.1} parent=11 // pred_region
          %s1663 = ssub.s32 16, 16
          %1664 = vsyncadd [#allocation50], %s1663
          %s1666 = sshll.u32 [#allocation49], 4
          %s1667 = int_to_ptr.vmem [resolvable:$true] %s1666
          %1669 = dma.hbm_to_vmem [thread:$0]  %s91, 16, %s1667, [#allocation50]
        $region192: #{_lambda_.1} parent=11 // pred_fallthru
          _
        // Predicated region
        $region193: #{_lambda_.1} parent=11 // pred_check
          %p1670 = pneg %p1120
        $region194: #{_lambda_.1} parent=11 // pred_check_branch
          %1672 = sbr.rel (%p1670) target = $region196
        $region195: #{_lambda_.1} parent=11 // pred_region
          %s1674 = ssub.s32 1024, 1024
          %1675 = vsyncadd [#allocation50], %s1674
          %s1676 = sshll.u32 [#allocation51], 4
          %s1677 = int_to_ptr.vmem [resolvable:$true] %s1676
          %1682 = dma.hbm_to_vmem [thread:$0]  %s93, 1024, %s1677, [#allocation50], 64, 64, 4
        $region196: #{_lambda_.1} parent=11 // pred_fallthru
          _
        // Predicated region
        $region197: #{_lambda_.1} parent=11 // pred_check
          %p1683 = pneg %p1141
        $region198: #{_lambda_.1} parent=11 // pred_check_branch
          %1685 = sbr.rel (%p1683) target = $region200
        $region199: #{_lambda_.1} parent=11 // pred_region
          %s1687 = ssub.s32 16, 16
          %1688 = vsyncadd [#allocation53], %s1687
          %s1690 = sshll.u32 [#allocation52], 4
          %s1691 = int_to_ptr.vmem [resolvable:$true] %s1690
          %1693 = dma.hbm_to_vmem [thread:$0]  %s95, 16, %s1691, [#allocation53]
        $region200: #{_lambda_.1} parent=11 // pred_fallthru
          _
        // Predicated region
        $region201: #{_lambda_.1} parent=11 // pred_check
          %p1694 = pneg %p1162
        $region202: #{_lambda_.1} parent=11 // pred_check_branch
          %1696 = sbr.rel (%p1694) target = $region204
        $region203: #{_lambda_.1} parent=11 // pred_region
          %s1698 = ssub.s32 64, 64
          %1699 = vsyncadd [#allocation53], %s1698
          %s1701 = sshll.u32 [#allocation54], 4
          %s1702 = int_to_ptr.vmem [resolvable:$true] %s1701
          %1704 = dma.hbm_to_vmem [thread:$0]  %s97, 64, %s1702, [#allocation53]
        $region204: #{_lambda_.1} parent=11 // pred_fallthru
          _
        // Predicated region
        $region205: #{_lambda_.1} parent=11 // pred_check
          %p1705 = pneg %p1183
        $region206: #{_lambda_.1} parent=11 // pred_check_branch
          %1707 = sbr.rel (%p1705) target = $region208
        $region207: #{_lambda_.1} parent=11 // pred_region
          %s1709 = ssub.s32 1024, 1024
          %1710 = vsyncadd [#allocation56], %s1709
          %s1711 = sshll.u32 [#allocation55], 4
          %s1712 = int_to_ptr.vmem [resolvable:$true] %s1711
          %1717 = dma.hbm_to_vmem [thread:$0]  %s99, 1024, %s1712, [#allocation56], 64, 64, 4
        $region208: #{_lambda_.1} parent=11 // pred_fallthru
          _
        // Predicated region
        $region209: #{_lambda_.1} parent=11 // pred_check
          %p1718 = pneg %p1204
        $region210: #{_lambda_.1} parent=11 // pred_check_branch
          %1720 = sbr.rel (%p1718) target = $region212
        $region211: #{_lambda_.1} parent=11 // pred_region
          %s1722 = ssub.s32 16, 16
          %1723 = vsyncadd [#allocation56], %s1722
          %s1725 = sshll.u32 [#allocation57], 4
          %s1726 = int_to_ptr.vmem [resolvable:$true] %s1725
          %1728 = dma.hbm_to_vmem [thread:$0]  %s101, 16, %s1726, [#allocation56]
        $region212: #{_lambda_.1} parent=11 // pred_fallthru
          _
      $region12: #{_lambda_.1} parent=5 // pred_fallthru
        _
      %p1729 = scmp.lt.s32.totalorder %s128, 2
      // Predicated region
      $region213: #{_lambda_.1} parent=5 // pred_check
        %p1730 = pneg %p1729
      $region214: #{_lambda_.1} parent=5 // pred_check_branch
        %1732 = sbr.rel (%p1730) target = $region216
      $region215: #{_lambda_.1} parent=5 // pred_region
        // Predicated region
        $region217: #{_lambda_.1} parent=215 // pred_check
          %p1733 = pneg %p148
        $region218: #{_lambda_.1} parent=215 // pred_check_branch
          %1735 = sbr.rel (%p1733) target = $region220
        $region219: #{_lambda_.1} parent=215 // pred_region
          %s1736 = smul.u32 4, %s128
          %p1737 = scmp.lt.s32.totalorder %s1736, 7
          %s1738 = scalar_select %p1737, %s1736, 7
          %s1739 = smul.addr %s1738, 8
          %s1740 = scalar_lea.vmem %s1, %s1739
          %s1741 = smul.u32 4, %s128
        $region220: #{_lambda_.1} parent=215 // pred_fallthru
          _
      $region216: #{_lambda_.1} parent=5 // pred_fallthru
        _
      %p1742 = scmp.le.s32.totalorder 1, %s128
      %p1743 = scmp.lt.s32.totalorder %s128, 3
      %p1744 = pnand %p1742, %p1743
      %p1745 = pneg %p1744
      // Predicated region
      $region221: #{_lambda_.1} parent=5 // pred_check
        _
      $region222: #{_lambda_.1} parent=5 // pred_check_branch
        %1747 = sbr.rel (%p1744) target = $region224
      $region223: #{_lambda_.1} parent=5 // pred_region
        %s1748 = ssub.s32 %s128, 1
        // Predicated region
        $region225: #{_lambda_.1} parent=223 // pred_check
          %p1749 = pneg %p217
        $region226: #{_lambda_.1} parent=223 // pred_check_branch
          %1751 = sbr.rel (%p1749) target = $region228
        $region227: #{_lambda_.1} parent=223 // pred_region
          %1752 = dma.done [#allocation3], 256
        $region228: #{_lambda_.1} parent=223 // pred_fallthru
          _
        // Predicated region
        $region229: #{_lambda_.1} parent=223 // pred_check
          %p1753 = pneg %p238
        $region230: #{_lambda_.1} parent=223 // pred_check_branch
          %1755 = sbr.rel (%p1753) target = $region232
        $region231: #{_lambda_.1} parent=223 // pred_region
          %1756 = dma.done [#allocation5], 192
        $region232: #{_lambda_.1} parent=223 // pred_fallthru
          _
        // Predicated region
        $region233: #{_lambda_.1} parent=223 // pred_check
          %p1757 = pneg %p280
        $region234: #{_lambda_.1} parent=223 // pred_check_branch
          %1759 = sbr.rel (%p1757) target = $region236
        $region235: #{_lambda_.1} parent=223 // pred_region
          %1760 = dma.done [#allocation5], 1024
        $region236: #{_lambda_.1} parent=223 // pred_fallthru
          _
        // Predicated region
        $region237: #{_lambda_.1} parent=223 // pred_check
          %p1761 = pneg %p301
        $region238: #{_lambda_.1} parent=223 // pred_check_branch
          %1763 = sbr.rel (%p1761) target = $region240
        $region239: #{_lambda_.1} parent=223 // pred_region
          %1764 = dma.done [#allocation8], 16
        $region240: #{_lambda_.1} parent=223 // pred_fallthru
          _
        // Predicated region
        $region241: #{_lambda_.1} parent=223 // pred_check
          %p1765 = pneg %p322
        $region242: #{_lambda_.1} parent=223 // pred_check_branch
          %1767 = sbr.rel (%p1765) target = $region244
        $region243: #{_lambda_.1} parent=223 // pred_region
          %1768 = dma.done [#allocation8], 1024
        $region244: #{_lambda_.1} parent=223 // pred_fallthru
          _
        // Predicated region
        $region245: #{_lambda_.1} parent=223 // pred_check
          %p1769 = pneg %p343
        $region246: #{_lambda_.1} parent=223 // pred_check_branch
          %1771 = sbr.rel (%p1769) target = $region248
        $region247: #{_lambda_.1} parent=223 // pred_region
          %1772 = dma.done [#allocation11], 16
        $region248: #{_lambda_.1} parent=223 // pred_fallthru
          _
        // Predicated region
        $region249: #{_lambda_.1} parent=223 // pred_check
          %p1773 = pneg %p364
        $region250: #{_lambda_.1} parent=223 // pred_check_branch
          %1775 = sbr.rel (%p1773) target = $region252
        $region251: #{_lambda_.1} parent=223 // pred_region
          %1776 = dma.done [#allocation11], 1024
        $region252: #{_lambda_.1} parent=223 // pred_fallthru
          _
        // Predicated region
        $region253: #{_lambda_.1} parent=223 // pred_check
          %p1777 = pneg %p448
        $region254: #{_lambda_.1} parent=223 // pred_check_branch
          %1779 = sbr.rel (%p1777) target = $region256
        $region255: #{_lambda_.1} parent=223 // pred_region
          %1780 = dma.done [#allocation14], 1024
        $region256: #{_lambda_.1} parent=223 // pred_fallthru
          _
        // Predicated region
        $region257: #{_lambda_.1} parent=223 // pred_check
          %p1781 = pneg %p490
        $region258: #{_lambda_.1} parent=223 // pred_check_branch
          %1783 = sbr.rel (%p1781) target = $region260
        $region259: #{_lambda_.1} parent=223 // pred_region
          %1784 = dma.done [#allocation14], 1024
        $region260: #{_lambda_.1} parent=223 // pred_fallthru
          _
        // Predicated region
        $region261: #{_lambda_.1} parent=223 // pred_check
          %p1785 = pneg %p532
        $region262: #{_lambda_.1} parent=223 // pred_check_branch
          %1787 = sbr.rel (%p1785) target = $region264
        $region263: #{_lambda_.1} parent=223 // pred_region
          %1788 = dma.done [#allocation17], 1024
        $region264: #{_lambda_.1} parent=223 // pred_fallthru
          _
        // Predicated region
        $region265: #{_lambda_.1} parent=223 // pred_check
          %p1789 = pneg %p595
        $region266: #{_lambda_.1} parent=223 // pred_check_branch
          %1791 = sbr.rel (%p1789) target = $region268
        $region267: #{_lambda_.1} parent=223 // pred_region
          %1792 = dma.done [#allocation17], 32
        $region268: #{_lambda_.1} parent=223 // pred_fallthru
          _
        // Predicated region
        $region269: #{_lambda_.1} parent=223 // pred_check
          %p1793 = pneg %p637
        $region270: #{_lambda_.1} parent=223 // pred_check_branch
          %1795 = sbr.rel (%p1793) target = $region272
        $region271: #{_lambda_.1} parent=223 // pred_region
          %1796 = dma.done [#allocation20], 16
        $region272: #{_lambda_.1} parent=223 // pred_fallthru
          _
        // Predicated region
        $region273: #{_lambda_.1} parent=223 // pred_check
          %p1797 = pneg %p658
        $region274: #{_lambda_.1} parent=223 // pred_check_branch
          %1799 = sbr.rel (%p1797) target = $region276
        $region275: #{_lambda_.1} parent=223 // pred_region
          %1800 = dma.done [#allocation20], 1024
        $region276: #{_lambda_.1} parent=223 // pred_fallthru
          _
        // Predicated region
        $region277: #{_lambda_.1} parent=223 // pred_check
          %p1801 = pneg %p679
        $region278: #{_lambda_.1} parent=223 // pred_check_branch
          %1803 = sbr.rel (%p1801) target = $region280
        $region279: #{_lambda_.1} parent=223 // pred_region
          %1804 = dma.done [#allocation23], 16
        $region280: #{_lambda_.1} parent=223 // pred_fallthru
          _
        // Predicated region
        $region281: #{_lambda_.1} parent=223 // pred_check
          %p1805 = pneg %p700
        $region282: #{_lambda_.1} parent=223 // pred_check_branch
          %1807 = sbr.rel (%p1805) target = $region284
        $region283: #{_lambda_.1} parent=223 // pred_region
          %1808 = dma.done [#allocation23], 1024
        $region284: #{_lambda_.1} parent=223 // pred_fallthru
          _
        // Predicated region
        $region285: #{_lambda_.1} parent=223 // pred_check
          %p1809 = pneg %p721
        $region286: #{_lambda_.1} parent=223 // pred_check_branch
          %1811 = sbr.rel (%p1809) target = $region288
        $region287: #{_lambda_.1} parent=223 // pred_region
          %1812 = dma.done [#allocation26], 16
        $region288: #{_lambda_.1} parent=223 // pred_fallthru
          _
        // Predicated region
        $region289: #{_lambda_.1} parent=223 // pred_check
          %p1813 = pneg %p742
        $region290: #{_lambda_.1} parent=223 // pred_check_branch
          %1815 = sbr.rel (%p1813) target = $region292
        $region291: #{_lambda_.1} parent=223 // pred_region
          %1816 = dma.done [#allocation26], 1024
        $region292: #{_lambda_.1} parent=223 // pred_fallthru
          _
        // Predicated region
        $region293: #{_lambda_.1} parent=223 // pred_check
          %p1817 = pneg %p763
        $region294: #{_lambda_.1} parent=223 // pred_check_branch
          %1819 = sbr.rel (%p1817) target = $region296
        $region295: #{_lambda_.1} parent=223 // pred_region
          %1820 = dma.done [#allocation29], 16
        $region296: #{_lambda_.1} parent=223 // pred_fallthru
          _
        // Predicated region
        $region297: #{_lambda_.1} parent=223 // pred_check
          %p1821 = pneg %p784
        $region298: #{_lambda_.1} parent=223 // pred_check_branch
          %1823 = sbr.rel (%p1821) target = $region300
        $region299: #{_lambda_.1} parent=223 // pred_region
          %1824 = dma.done [#allocation29], 1024
        $region300: #{_lambda_.1} parent=223 // pred_fallthru
          _
        // Predicated region
        $region301: #{_lambda_.1} parent=223 // pred_check
          %p1825 = pneg %p805
        $region302: #{_lambda_.1} parent=223 // pred_check_branch
          %1827 = sbr.rel (%p1825) target = $region304
        $region303: #{_lambda_.1} parent=223 // pred_region
          %1828 = dma.done [#allocation32], 16
        $region304: #{_lambda_.1} parent=223 // pred_fallthru
          _
        // Predicated region
        $region305: #{_lambda_.1} parent=223 // pred_check
          %p1829 = pneg %p826
        $region306: #{_lambda_.1} parent=223 // pred_check_branch
          %1831 = sbr.rel (%p1829) target = $region308
        $region307: #{_lambda_.1} parent=223 // pred_region
          %1832 = dma.done [#allocation32], 1024
        $region308: #{_lambda_.1} parent=223 // pred_fallthru
          _
        // Predicated region
        $region309: #{_lambda_.1} parent=223 // pred_check
          %p1833 = pneg %p847
        $region310: #{_lambda_.1} parent=223 // pred_check_branch
          %1835 = sbr.rel (%p1833) target = $region312
        $region311: #{_lambda_.1} parent=223 // pred_region
          %1836 = dma.done [#allocation35], 16
        $region312: #{_lambda_.1} parent=223 // pred_fallthru
          _
        // Predicated region
        $region313: #{_lambda_.1} parent=223 // pred_check
          %p1837 = pneg %p889
        $region314: #{_lambda_.1} parent=223 // pred_check_branch
          %1839 = sbr.rel (%p1837) target = $region316
        $region315: #{_lambda_.1} parent=223 // pred_region
          %1840 = dma.done [#allocation35], 32
        $region316: #{_lambda_.1} parent=223 // pred_fallthru
          _
        // Predicated region
        $region317: #{_lambda_.1} parent=223 // pred_check
          %p1841 = pneg %p931
        $region318: #{_lambda_.1} parent=223 // pred_check_branch
          %1843 = sbr.rel (%p1841) target = $region320
        $region319: #{_lambda_.1} parent=223 // pred_region
          %1844 = dma.done [#allocation38], 16
        $region320: #{_lambda_.1} parent=223 // pred_fallthru
          _
        // Predicated region
        $region321: #{_lambda_.1} parent=223 // pred_check
          %p1845 = pneg %p952
        $region322: #{_lambda_.1} parent=223 // pred_check_branch
          %1847 = sbr.rel (%p1845) target = $region324
        $region323: #{_lambda_.1} parent=223 // pred_region
          %1848 = dma.done [#allocation38], 1024
        $region324: #{_lambda_.1} parent=223 // pred_fallthru
          _
        // Predicated region
        $region325: #{_lambda_.1} parent=223 // pred_check
          %p1849 = pneg %p973
        $region326: #{_lambda_.1} parent=223 // pred_check_branch
          %1851 = sbr.rel (%p1849) target = $region328
        $region327: #{_lambda_.1} parent=223 // pred_region
          %1852 = dma.done [#allocation41], 16
        $region328: #{_lambda_.1} parent=223 // pred_fallthru
          _
        // Predicated region
        $region329: #{_lambda_.1} parent=223 // pred_check
          %p1853 = pneg %p994
        $region330: #{_lambda_.1} parent=223 // pred_check_branch
          %1855 = sbr.rel (%p1853) target = $region332
        $region331: #{_lambda_.1} parent=223 // pred_region
          %1856 = dma.done [#allocation41], 1024
        $region332: #{_lambda_.1} parent=223 // pred_fallthru
          _
        // Predicated region
        $region333: #{_lambda_.1} parent=223 // pred_check
          %p1857 = pneg %p1015
        $region334: #{_lambda_.1} parent=223 // pred_check_branch
          %1859 = sbr.rel (%p1857) target = $region336
        $region335: #{_lambda_.1} parent=223 // pred_region
          %1860 = dma.done [#allocation44], 16
        $region336: #{_lambda_.1} parent=223 // pred_fallthru
          _
        // Predicated region
        $region337: #{_lambda_.1} parent=223 // pred_check
          %p1861 = pneg %p1036
        $region338: #{_lambda_.1} parent=223 // pred_check_branch
          %1863 = sbr.rel (%p1861) target = $region340
        $region339: #{_lambda_.1} parent=223 // pred_region
          %1864 = dma.done [#allocation44], 1024
        $region340: #{_lambda_.1} parent=223 // pred_fallthru
          _
        // Predicated region
        $region341: #{_lambda_.1} parent=223 // pred_check
          %p1865 = pneg %p1057
        $region342: #{_lambda_.1} parent=223 // pred_check_branch
          %1867 = sbr.rel (%p1865) target = $region344
        $region343: #{_lambda_.1} parent=223 // pred_region
          %1868 = dma.done [#allocation47], 16
        $region344: #{_lambda_.1} parent=223 // pred_fallthru
          _
        // Predicated region
        $region345: #{_lambda_.1} parent=223 // pred_check
          %p1869 = pneg %p1078
        $region346: #{_lambda_.1} parent=223 // pred_check_branch
          %1871 = sbr.rel (%p1869) target = $region348
        $region347: #{_lambda_.1} parent=223 // pred_region
          %1872 = dma.done [#allocation47], 1024
        $region348: #{_lambda_.1} parent=223 // pred_fallthru
          _
        // Predicated region
        $region349: #{_lambda_.1} parent=223 // pred_check
          %p1873 = pneg %p1099
        $region350: #{_lambda_.1} parent=223 // pred_check_branch
          %1875 = sbr.rel (%p1873) target = $region352
        $region351: #{_lambda_.1} parent=223 // pred_region
          %1876 = dma.done [#allocation50], 16
        $region352: #{_lambda_.1} parent=223 // pred_fallthru
          _
        // Predicated region
        $region353: #{_lambda_.1} parent=223 // pred_check
          %p1877 = pneg %p1120
        $region354: #{_lambda_.1} parent=223 // pred_check_branch
          %1879 = sbr.rel (%p1877) target = $region356
        $region355: #{_lambda_.1} parent=223 // pred_region
          %1880 = dma.done [#allocation50], 1024
        $region356: #{_lambda_.1} parent=223 // pred_fallthru
          _
        // Predicated region
        $region357: #{_lambda_.1} parent=223 // pred_check
          %p1881 = pneg %p1141
        $region358: #{_lambda_.1} parent=223 // pred_check_branch
          %1883 = sbr.rel (%p1881) target = $region360
        $region359: #{_lambda_.1} parent=223 // pred_region
          %1884 = dma.done [#allocation53], 16
        $region360: #{_lambda_.1} parent=223 // pred_fallthru
          _
        // Predicated region
        $region361: #{_lambda_.1} parent=223 // pred_check
          %p1885 = pneg %p1162
        $region362: #{_lambda_.1} parent=223 // pred_check_branch
          %1887 = sbr.rel (%p1885) target = $region364
        $region363: #{_lambda_.1} parent=223 // pred_region
          %1888 = dma.done [#allocation53], 64
        $region364: #{_lambda_.1} parent=223 // pred_fallthru
          _
        // Predicated region
        $region365: #{_lambda_.1} parent=223 // pred_check
          %p1889 = pneg %p1183
        $region366: #{_lambda_.1} parent=223 // pred_check_branch
          %1891 = sbr.rel (%p1889) target = $region368
        $region367: #{_lambda_.1} parent=223 // pred_region
          %1892 = dma.done [#allocation56], 1024
        $region368: #{_lambda_.1} parent=223 // pred_fallthru
          _
        // Predicated region
        $region369: #{_lambda_.1} parent=223 // pred_check
          %p1893 = pneg %p1204
        $region370: #{_lambda_.1} parent=223 // pred_check_branch
          %1895 = sbr.rel (%p1893) target = $region372
        $region371: #{_lambda_.1} parent=223 // pred_region
          %1896 = dma.done [#allocation56], 16
        $region372: #{_lambda_.1} parent=223 // pred_fallthru
          _
        %s1897 = smul.u32 4, %s133
        %p1898 = scmp.lt.s32.totalorder %s1897, 7
        %s1899 = scalar_select %p1898, %s1897, 7
        %s1900 = smul.addr %s1899, 8
        %s1901 = scalar_lea.vmem %s1, %s1900
        %p1902 = pneg %p154
        %p1903 = pneg %p151
        %p1904 = pneg %p175
        %p1905 = pneg %p172
        %p1906 = pneg %p196
        %p1907 = pneg %p193
        %p1908 = pneg %p217
        %p1909 = pneg %p214
        %p1910 = pneg %p238
        %p1911 = pneg %p235
        %p1912 = pneg %p259
        %p1913 = pneg %p256
        %p1914 = pneg %p280
        %p1915 = pneg %p277
        %p1916 = pneg %p301
        %p1917 = pneg %p298
        %p1918 = pneg %p322
        %p1919 = pneg %p319
        %p1920 = pneg %p343
        %p1921 = pneg %p340
        %p1922 = pneg %p364
        %p1923 = pneg %p361
        %p1924 = pneg %p385
        %p1925 = pneg %p382
        %p1926 = pneg %p406
        %p1927 = pneg %p403
        %p1928 = pneg %p427
        %p1929 = pneg %p424
        %p1930 = pneg %p448
        %p1931 = pneg %p445
        %p1932 = pneg %p469
        %p1933 = pneg %p466
        %p1934 = pneg %p490
        %p1935 = pneg %p487
        %p1936 = pneg %p511
        %p1937 = pneg %p508
        %p1938 = pneg %p532
        %p1939 = pneg %p529
        %p1940 = pneg %p553
        %p1941 = pneg %p550
        %p1942 = pneg %p574
        %p1943 = pneg %p571
        %p1944 = pneg %p595
        %p1945 = pneg %p592
        %p1946 = pneg %p616
        %p1947 = pneg %p613
        %p1948 = pneg %p637
        %p1949 = pneg %p634
        %p1950 = pneg %p658
        %p1951 = pneg %p655
        %p1952 = pneg %p679
        %p1953 = pneg %p676
        %p1954 = pneg %p700
        %p1955 = pneg %p697
        %p1956 = pneg %p721
        %p1957 = pneg %p718
        %p1958 = pneg %p742
        %p1959 = pneg %p739
        %p1960 = pneg %p763
        %p1961 = pneg %p760
        %p1962 = pneg %p784
        %p1963 = pneg %p781
        %p1964 = pneg %p805
        %p1965 = pneg %p802
        %p1966 = pneg %p826
        %p1967 = pneg %p823
        %p1968 = pneg %p847
        %p1969 = pneg %p844
        %p1970 = pneg %p868
        %p1971 = pneg %p865
        %p1972 = pneg %p889
        %p1973 = pneg %p886
        %p1974 = pneg %p910
        %p1975 = pneg %p907
        %p1976 = pneg %p931
        %p1977 = pneg %p928
        %p1978 = pneg %p952
        %p1979 = pneg %p949
        %p1980 = pneg %p973
        %p1981 = pneg %p970
        %p1982 = pneg %p994
        %p1983 = pneg %p991
        %p1984 = pneg %p1015
        %p1985 = pneg %p1012
        %p1986 = pneg %p1036
        %p1987 = pneg %p1033
        %p1988 = pneg %p1057
        %p1989 = pneg %p1054
        %p1990 = pneg %p1078
        %p1991 = pneg %p1075
        %p1992 = pneg %p1099
        %p1993 = pneg %p1096
        %p1994 = pneg %p1120
        %p1995 = pneg %p1117
        %p1996 = pneg %p1141
        %p1997 = pneg %p1138
        %p1998 = pneg %p1162
        %p1999 = pneg %p1159
        %p2000 = pneg %p1183
        %p2001 = pneg %p1180
        %p2002 = pneg %p1204
        %p2003 = pneg %p1201
        %p2004 = pneg %p1230
        %p2005 = pneg %p1227
        %p2006 = scmp.lt.s32.totalorder %s133, 1
        %s2007 = scalar_select %p2006, %s133, 1
        %s2008 = smul.addr %s2007, 8
        %s2009 = scalar_lea.vmem %s103, %s2008
        %s2010 = smul.u32 4, %s133
        %p2011 = scmp.lt.s32.totalorder %s2010, 7
        %s2012 = scalar_select %p2011, %s2010, 7
        %s2013 = smul.addr %s2012, 8
        %s2014 = scalar_lea.vmem %s1, %s2013
        %s2015 = smul.u32 4, %s133
        %p2016 = scmp.lt.s32.totalorder %s133, 1
        %s2017 = scalar_select %p2016, %s133, 1
        %s2018 = smul.addr %s2017, 8
        %s2019 = scalar_lea.vmem %s103, %s2018
        %v2021 = vld [vmem:[#allocation54] sm:$0xf]
        %v2022 = vld [vmem:[#allocation55] sm:$0xf]
        %v2023 = vld [vmem:[#allocation55 + $0x4] sm:$0xf]
        %v2024 = vld [vmem:[#allocation55 + $0x8] sm:$0xf]
        %v2025 = vld [vmem:[#allocation55 + $0xc] sm:$0xf]
        %v2026 = vld [vmem:[#allocation55 + $0x10] sm:$0xf]
        %v2027 = vld [vmem:[#allocation55 + $0x14] sm:$0xf]
        %v2028 = vld [vmem:[#allocation55 + $0x18] sm:$0xf]
        %v2029 = vld [vmem:[#allocation55 + $0x1c] sm:$0xf]
        %v2030 = vld [vmem:[#allocation55 + $0x20] sm:$0xf]
        %v2031 = vld [vmem:[#allocation55 + $0x24] sm:$0xf]
        %v2032 = vld [vmem:[#allocation55 + $0x28] sm:$0xf]
        %v2033 = vld [vmem:[#allocation55 + $0x2c] sm:$0xf]
        %v2034 = vld [vmem:[#allocation55 + $0x30] sm:$0xf]
        %v2035 = vld [vmem:[#allocation55 + $0x34] sm:$0xf]
        %v2036 = vld [vmem:[#allocation55 + $0x38] sm:$0xf]
        %v2037 = vld [vmem:[#allocation55 + $0x3c] sm:$0xf]
        %v2038 = vld [vmem:[#allocation57] sm:$0x1]
        %v2039 = vld [vmem:[#allocation2] sm:$0xf]
        %v2040 = vld [vmem:[#allocation2 + $0x4] sm:$0xf]
        %v2041 = vld [vmem:[#allocation2 + $0x8] sm:$0xf]
        %v2042 = vld [vmem:[#allocation2 + $0xc] sm:$0xf]
        %v2043 = vld [vmem:[%s2014] sm:$0xff]
        %v2044 = vld [vmem:[%s2014 + $0x8] sm:$0xff]
        %v2045 = vld [vmem:[%s2014 + $0x10] sm:$0xff]
        %v2046 = vld [vmem:[%s2014 + $0x18] sm:$0xff]
        %v2047 = vld [vmem:[%s3] sm:$0xff]
        %v2048 = vld [vmem:[%s3 + $0x8] sm:$0xff]
        %v2049 = vld [vmem:[%s3 + $0x10] sm:$0xff]
        %v2050 = vld [vmem:[%s3 + $0x18] sm:$0xff]
        %v2051 = vmul.f32 %v2043, %v2047
        %v2052 = vmul.f32 %v2044, %v2048
        %v2053 = vmul.f32 %v2045, %v2049
        %v2054 = vmul.f32 %v2046, %v2050
        %v2055 = vld [vmem:[%s5] sm:$0xff]
        %v2056 = vld [vmem:[%s5 + $0x8] sm:$0xff]
        %v2057 = vld [vmem:[%s5 + $0x10] sm:$0xff]
        %v2058 = vld [vmem:[%s5 + $0x18] sm:$0xff]
        %v2059 = vadd.f32 %v2051, %v2055
        %v2060 = vadd.f32 %v2052, %v2056
        %v2061 = vadd.f32 %v2053, %v2057
        %v2062 = vadd.f32 %v2054, %v2058
        %v2063 = vld [vmem:[#allocation4] sm:$0xf]
        %v2064 = vld [vmem:[#allocation4 + $0x4] sm:$0xf]
        %v2065 = vld [vmem:[#allocation4 + $0x8] sm:$0xf]
        %v2066 = vpack.c.bf16 %v2060, %v2059
        %v2067 = vpack.c.bf16 %v2062, %v2061
        %v2071 = vunpack.c.l.b16 %v2063
        %v2072 = vunpack.c.l.b16 %v2064
        %v2073 = vunpack.c.l.b16 %v2065
        %v2074 = vpack.c.b16 %v2072, %v2071
        %v2075 = vpack.c.b16 %v2073, %v2073
        %vm2077 = vcmask 195584
        %v2079 = vsel %vm2077, %v2066, 0
        %v2082 = vsel %vm2077, %v2067, 0
        %vm2084 = vcmask 1043456
        %v2086 = vsel %vm2084, %v2075, 0
        %2088 = vmatprep.subr.bf16.mxu0 0
        %2089 = vmatpush1.bf16.msra.mxu0 0
        %2090 = vmatprep.subr.bf16.mxu0 0
        %2091 = vmatpush1.bf16.msra.mxu0 0
        %2092 = vmatprep.subr.bf16.mxu0 0
        %2093 = vmatpush1.bf16.msra.mxu0 0
        %2094 = vmatprep.subr.bf16.mxu0 0
        %2095 = vmatpush1.bf16.msra.mxu0 0
        %2096 = vmatprep.subr.bf16.mxu0 0
        %2097 = vmatpush1.bf16.msra.mxu0 0
        %2098 = vmatprep.subr.bf16.mxu0 0
        %2099 = vmatpush1.bf16.msra.mxu0 0
        %2100 = vmatprep.subr.bf16.mxu0 0
        %2101 = vmatpush1.bf16.msra.mxu0 %v2086
        %2102 = vmatprep.subr.bf16.mxu0 0
        %2103 = vmatpush1.bf16.msra.mxu0 %v2074
        %2104 = vmatprep.subr.bf16.mxu0 0
        %2105 = vmatpush2.bf16.msra.mxu0 0
        %2106 = vmatprep.subr.bf16.mxu0 0
        %2107 = vmatpush2.bf16.msra.mxu0 0
        %2108 = vmatprep.subr.bf16.mxu0 0
        %2109 = vmatpush2.bf16.msra.mxu0 0
        %2110 = vmatprep.subr.bf16.mxu0 0
        %2111 = vmatpush2.bf16.msra.mxu0 0
        %2112 = vmatprep.subr.bf16.mxu0 0
        %2113 = vmatpush2.bf16.msra.mxu0 0
        %2114 = vmatprep.subr.bf16.mxu0 0
        %2115 = vmatpush2.bf16.msra.mxu0 0
        %2116 = vmatprep.subr.bf16.mxu0 0
        %2117 = vmatpush2.bf16.msra.mxu0 0
        %2118 = vmatprep.subr.bf16.mxu0 0
        %2119 = vmatpush2.bf16.msra.mxu0 0
        %2120 = vmatprep.mubr.bf16.mxu0 0
        %2121 = vmatmul.mubr.bf16.gmra.mxu0 %v2079
        %v2122 = vpop.f32.mrf.mxu0
        %v2123 = vadd.f32 0.0, %v2122
        %v2124 = vpop.f32.mrf.mxu0
        %v2125 = vpop.f32.mrf.mxu0
        %v2126 = vadd.f32 0.0, %v2125
        %v2127 = vpop.f32.mrf.mxu0
        %2128 = vmatprep.mubr.bf16.mxu0 0
        %2129 = vmatmul.mubr.bf16.gmra.mxu0 %v2082
        %v2130 = vpop.f32.mrf.mxu0
        %v2131 = vadd.f32 0.0, %v2130
        %v2132 = vpop.f32.mrf.mxu0
        %v2133 = vpop.f32.mrf.mxu0
        %v2134 = vadd.f32 0.0, %v2133
        %v2135 = vpop.f32.mrf.mxu0
        %2136 = vdwg.mxu0
        %v2137 = vpack.c.bf16 %v2126, %v2123
        %v2138 = vpack.c.bf16 %v2134, %v2131
        %v2139 = vld [vmem:[%s11] sm:$0x1]
        %v2141 = vlaneseq
        %v2142 = vshrl.u32 %v2141, 7
        %v2143 = vsub.s32 0, %v2142
        %v2144 = vrot.slane %v2139, %v2143
        %v2150 = vunpack.c.l.b16 %v2039
        %v2151 = vunpack.c.l.b16 %v2040
        %v2152 = vunpack.c.l.b16 %v2041
        %v2153 = vunpack.c.l.b16 %v2042
        %v2154 = vpack.c.b16 %v2151, %v2150
        %v2155 = vpack.c.b16 %v2153, %v2152
        %vm2156 = vcmask 261120
        %v2158 = vsel %vm2156, %v2154, 0
        %v2161 = vsel %vm2156, %v2155, 0
        %2163 = vmatprep.subr.bf16.mxu0 0
        %2164 = vmatpush1.bf16.msra.mxu0 0
        %2165 = vmatprep.subr.bf16.mxu0 0
        %2166 = vmatpush1.bf16.msra.mxu0 0
        %2167 = vmatprep.subr.bf16.mxu0 0
        %2168 = vmatpush1.bf16.msra.mxu0 0
        %2169 = vmatprep.subr.bf16.mxu0 0
        %2170 = vmatpush1.bf16.msra.mxu0 0
        %2171 = vmatprep.subr.bf16.mxu0 0
        %2172 = vmatpush1.bf16.msra.mxu0 0
        %2173 = vmatprep.subr.bf16.mxu0 0
        %2174 = vmatpush1.bf16.msra.mxu0 0
        %2175 = vmatprep.subr.bf16.mxu0 0
        %2176 = vmatpush1.bf16.msra.mxu0 %v2138
        %2177 = vmatprep.subr.bf16.mxu0 0
        %2178 = vmatpush1.bf16.msra.mxu0 %v2137
        %2179 = vmatprep.subr.bf16.mxu0 0
        %2180 = vmatpush2.bf16.msra.mxu0 0
        %2181 = vmatprep.subr.bf16.mxu0 0
        %2182 = vmatpush2.bf16.msra.mxu0 0
        %2183 = vmatprep.subr.bf16.mxu0 0
        %2184 = vmatpush2.bf16.msra.mxu0 0
        %2185 = vmatprep.subr.bf16.mxu0 0
        %2186 = vmatpush2.bf16.msra.mxu0 0
        %2187 = vmatprep.subr.bf16.mxu0 0
        %2188 = vmatpush2.bf16.msra.mxu0 0
        %2189 = vmatprep.subr.bf16.mxu0 0
        %2190 = vmatpush2.bf16.msra.mxu0 0
        %2191 = vmatprep.subr.bf16.mxu0 0
        %2192 = vmatpush2.bf16.msra.mxu0 0
        %2193 = vmatprep.subr.bf16.mxu0 0
        %2194 = vmatpush2.bf16.msra.mxu0 0
        %2195 = vmatprep.mubr.bf16.mxu0 0
        %2196 = vmatmul.mubr.bf16.gmra.mxu0 %v2158
        %v2197 = vpop.f32.mrf.mxu0
        %v2198 = vadd.f32 %v2144, %v2197
        %v2199 = vpop.f32.mrf.mxu0
        %v2200 = vpop.f32.mrf.mxu0
        %v2201 = vadd.f32 %v2144, %v2200
        %v2202 = vpop.f32.mrf.mxu0
        %2203 = vmatprep.mubr.bf16.mxu0 0
        %2204 = vmatmul.mubr.bf16.gmra.mxu0 %v2161
        %v2205 = vpop.f32.mrf.mxu0
        %v2206 = vadd.f32 %v2144, %v2205
        %v2207 = vpop.f32.mrf.mxu0
        %v2208 = vpop.f32.mrf.mxu0
        %v2209 = vadd.f32 %v2144, %v2208
        %v2210 = vpop.f32.mrf.mxu0
        %2211 = vdwg.mxu0
        %v2212 = vmax.f32 %v2198, 0.0
        %v2213 = vmax.f32 %v2201, 0.0
        %v2214 = vmax.f32 %v2206, 0.0
        %v2215 = vmax.f32 %v2209, 0.0
        %v2216 = vld [vmem:[#allocation6] sm:$0xf]
        %v2217 = vld [vmem:[#allocation6 + $0x4] sm:$0xf]
        %v2218 = vld [vmem:[#allocation6 + $0x8] sm:$0xf]
        %v2219 = vld [vmem:[#allocation6 + $0xc] sm:$0xf]
        %v2220 = vld [vmem:[#allocation6 + $0x10] sm:$0xf]
        %v2221 = vld [vmem:[#allocation6 + $0x14] sm:$0xf]
        %v2222 = vld [vmem:[#allocation6 + $0x18] sm:$0xf]
        %v2223 = vld [vmem:[#allocation6 + $0x1c] sm:$0xf]
        %v2224 = vld [vmem:[#allocation6 + $0x20] sm:$0xf]
        %v2225 = vld [vmem:[#allocation6 + $0x24] sm:$0xf]
        %v2226 = vld [vmem:[#allocation6 + $0x28] sm:$0xf]
        %v2227 = vld [vmem:[#allocation6 + $0x2c] sm:$0xf]
        %v2228 = vld [vmem:[#allocation6 + $0x30] sm:$0xf]
        %v2229 = vld [vmem:[#allocation6 + $0x34] sm:$0xf]
        %v2230 = vld [vmem:[#allocation6 + $0x38] sm:$0xf]
        %v2231 = vld [vmem:[#allocation6 + $0x3c] sm:$0xf]
        %v2232 = vpack.c.bf16 %v2213, %v2212
        %v2233 = vpack.c.bf16 %v2215, %v2214
        %v2234 = vld [vmem:[#allocation7] sm:$0x1]
        %v2236 = vlaneseq
        %v2237 = vshrl.u32 %v2236, 7
        %v2238 = vsub.s32 0, %v2237
        %v2239 = vrot.slane %v2234, %v2238
        %v2257 = vunpack.c.l.b16 %v2216
        %v2258 = vunpack.c.l.b16 %v2217
        %v2259 = vunpack.c.l.b16 %v2218
        %v2260 = vunpack.c.l.b16 %v2219
        %v2261 = vunpack.c.l.b16 %v2220
        %v2262 = vunpack.c.l.b16 %v2221
        %v2263 = vunpack.c.l.b16 %v2222
        %v2264 = vunpack.c.l.b16 %v2223
        %v2265 = vunpack.c.l.b16 %v2224
        %v2266 = vunpack.c.l.b16 %v2225
        %v2267 = vunpack.c.l.b16 %v2226
        %v2268 = vunpack.c.l.b16 %v2227
        %v2269 = vunpack.c.l.b16 %v2228
        %v2270 = vunpack.c.l.b16 %v2229
        %v2271 = vunpack.c.l.b16 %v2230
        %v2272 = vunpack.c.l.b16 %v2231
        %v2273 = vpack.c.b16 %v2258, %v2257
        %v2274 = vpack.c.b16 %v2260, %v2259
        %v2275 = vpack.c.b16 %v2262, %v2261
        %v2276 = vpack.c.b16 %v2264, %v2263
        %v2277 = vpack.c.b16 %v2266, %v2265
        %v2278 = vpack.c.b16 %v2268, %v2267
        %v2279 = vpack.c.b16 %v2270, %v2269
        %v2280 = vpack.c.b16 %v2272, %v2271
        %2289 = vmatprep.subr.bf16.mxu0 0
        %2290 = vmatpush1.bf16.msra.mxu0 %v2280
        %2291 = vmatprep.subr.bf16.mxu0 0
        %2292 = vmatpush1.bf16.msra.mxu0 %v2279
        %2293 = vmatprep.subr.bf16.mxu0 0
        %2294 = vmatpush1.bf16.msra.mxu0 %v2278
        %2295 = vmatprep.subr.bf16.mxu0 0
        %2296 = vmatpush1.bf16.msra.mxu0 %v2277
        %2297 = vmatprep.subr.bf16.mxu0 0
        %2298 = vmatpush1.bf16.msra.mxu0 %v2276
        %2299 = vmatprep.subr.bf16.mxu0 0
        %2300 = vmatpush1.bf16.msra.mxu0 %v2275
        %2301 = vmatprep.subr.bf16.mxu0 0
        %2302 = vmatpush1.bf16.msra.mxu0 %v2274
        %2303 = vmatprep.subr.bf16.mxu0 0
        %2304 = vmatpush1.bf16.msra.mxu0 %v2273
        %2305 = vmatprep.subr.bf16.mxu0 0
        %2306 = vmatpush2.bf16.msra.mxu0 0
        %2307 = vmatprep.subr.bf16.mxu0 0
        %2308 = vmatpush2.bf16.msra.mxu0 0
        %2309 = vmatprep.subr.bf16.mxu0 0
        %2310 = vmatpush2.bf16.msra.mxu0 0
        %2311 = vmatprep.subr.bf16.mxu0 0
        %2312 = vmatpush2.bf16.msra.mxu0 0
        %2313 = vmatprep.subr.bf16.mxu0 0
        %2314 = vmatpush2.bf16.msra.mxu0 0
        %2315 = vmatprep.subr.bf16.mxu0 0
        %2316 = vmatpush2.bf16.msra.mxu0 0
        %2317 = vmatprep.subr.bf16.mxu0 0
        %2318 = vmatpush2.bf16.msra.mxu0 0
        %2319 = vmatprep.subr.bf16.mxu0 0
        %2320 = vmatpush2.bf16.msra.mxu0 0
        %2321 = vmatprep.mubr.bf16.mxu0 0
        %2322 = vmatmul.mubr.bf16.gmra.mxu0 %v2232
        %v2323 = vpop.f32.mrf.mxu0
        %v2324 = vadd.f32 %v2239, %v2323
        %v2325 = vpop.f32.mrf.mxu0
        %v2326 = vpop.f32.mrf.mxu0
        %v2327 = vadd.f32 %v2239, %v2326
        %v2328 = vpop.f32.mrf.mxu0
        %2329 = vmatprep.mubr.bf16.mxu0 0
        %2330 = vmatmul.mubr.bf16.gmra.mxu0 %v2233
        %v2331 = vpop.f32.mrf.mxu0
        %v2332 = vadd.f32 %v2239, %v2331
        %v2333 = vpop.f32.mrf.mxu0
        %v2334 = vpop.f32.mrf.mxu0
        %v2335 = vadd.f32 %v2239, %v2334
        %v2336 = vpop.f32.mrf.mxu0
        %2337 = vdwg.mxu0
        %v2338 = vmax.f32 %v2324, 0.0
        %v2339 = vmax.f32 %v2327, 0.0
        %v2340 = vmax.f32 %v2332, 0.0
        %v2341 = vmax.f32 %v2335, 0.0
        %v2342 = vld [vmem:[#allocation9] sm:$0xf]
        %v2343 = vld [vmem:[#allocation9 + $0x4] sm:$0xf]
        %v2344 = vld [vmem:[#allocation9 + $0x8] sm:$0xf]
        %v2345 = vld [vmem:[#allocation9 + $0xc] sm:$0xf]
        %v2346 = vld [vmem:[#allocation9 + $0x10] sm:$0xf]
        %v2347 = vld [vmem:[#allocation9 + $0x14] sm:$0xf]
        %v2348 = vld [vmem:[#allocation9 + $0x18] sm:$0xf]
        %v2349 = vld [vmem:[#allocation9 + $0x1c] sm:$0xf]
        %v2350 = vld [vmem:[#allocation9 + $0x20] sm:$0xf]
        %v2351 = vld [vmem:[#allocation9 + $0x24] sm:$0xf]
        %v2352 = vld [vmem:[#allocation9 + $0x28] sm:$0xf]
        %v2353 = vld [vmem:[#allocation9 + $0x2c] sm:$0xf]
        %v2354 = vld [vmem:[#allocation9 + $0x30] sm:$0xf]
        %v2355 = vld [vmem:[#allocation9 + $0x34] sm:$0xf]
        %v2356 = vld [vmem:[#allocation9 + $0x38] sm:$0xf]
        %v2357 = vld [vmem:[#allocation9 + $0x3c] sm:$0xf]
        %v2358 = vpack.c.bf16 %v2339, %v2338
        %v2359 = vpack.c.bf16 %v2341, %v2340
        %v2376 = vunpack.c.l.b16 %v2342
        %v2377 = vunpack.c.l.b16 %v2343
        %v2378 = vunpack.c.l.b16 %v2344
        %v2379 = vunpack.c.l.b16 %v2345
        %v2380 = vunpack.c.l.b16 %v2346
        %v2381 = vunpack.c.l.b16 %v2347
        %v2382 = vunpack.c.l.b16 %v2348
        %v2383 = vunpack.c.l.b16 %v2349
        %v2384 = vunpack.c.l.b16 %v2350
        %v2385 = vunpack.c.l.b16 %v2351
        %v2386 = vunpack.c.l.b16 %v2352
        %v2387 = vunpack.c.l.b16 %v2353
        %v2388 = vunpack.c.l.b16 %v2354
        %v2389 = vunpack.c.l.b16 %v2355
        %v2390 = vunpack.c.l.b16 %v2356
        %v2391 = vunpack.c.l.b16 %v2357
        %v2392 = vpack.c.b16 %v2377, %v2376
        %v2393 = vpack.c.b16 %v2379, %v2378
        %v2394 = vpack.c.b16 %v2381, %v2380
        %v2395 = vpack.c.b16 %v2383, %v2382
        %v2396 = vpack.c.b16 %v2385, %v2384
        %v2397 = vpack.c.b16 %v2387, %v2386
        %v2398 = vpack.c.b16 %v2389, %v2388
        %v2399 = vpack.c.b16 %v2391, %v2390
        %2408 = vmatprep.subr.bf16.mxu0 0
        %2409 = vmatpush1.bf16.msra.mxu0 %v2399
        %2410 = vmatprep.subr.bf16.mxu0 0
        %2411 = vmatpush1.bf16.msra.mxu0 %v2398
        %2412 = vmatprep.subr.bf16.mxu0 0
        %2413 = vmatpush1.bf16.msra.mxu0 %v2397
        %2414 = vmatprep.subr.bf16.mxu0 0
        %2415 = vmatpush1.bf16.msra.mxu0 %v2396
        %2416 = vmatprep.subr.bf16.mxu0 0
        %2417 = vmatpush1.bf16.msra.mxu0 %v2395
        %2418 = vmatprep.subr.bf16.mxu0 0
        %2419 = vmatpush1.bf16.msra.mxu0 %v2394
        %2420 = vmatprep.subr.bf16.mxu0 0
        %2421 = vmatpush1.bf16.msra.mxu0 %v2393
        %2422 = vmatprep.subr.bf16.mxu0 0
        %2423 = vmatpush1.bf16.msra.mxu0 %v2392
        %2424 = vmatprep.subr.bf16.mxu0 0
        %2425 = vmatpush2.bf16.msra.mxu0 0
        %2426 = vmatprep.subr.bf16.mxu0 0
        %2427 = vmatpush2.bf16.msra.mxu0 0
        %2428 = vmatprep.subr.bf16.mxu0 0
        %2429 = vmatpush2.bf16.msra.mxu0 0
        %2430 = vmatprep.subr.bf16.mxu0 0
        %2431 = vmatpush2.bf16.msra.mxu0 0
        %2432 = vmatprep.subr.bf16.mxu0 0
        %2433 = vmatpush2.bf16.msra.mxu0 0
        %2434 = vmatprep.subr.bf16.mxu0 0
        %2435 = vmatpush2.bf16.msra.mxu0 0
        %2436 = vmatprep.subr.bf16.mxu0 0
        %2437 = vmatpush2.bf16.msra.mxu0 0
        %2438 = vmatprep.subr.bf16.mxu0 0
        %2439 = vmatpush2.bf16.msra.mxu0 0
        %2440 = vmatprep.mubr.bf16.mxu0 0
        %2441 = vmatmul.mubr.bf16.gmra.mxu0 %v2358
        %v2442 = vpop.f32.mrf.mxu0
        %v2443 = vadd.f32 0.0, %v2442
        %v2444 = vpop.f32.mrf.mxu0
        %v2445 = vpop.f32.mrf.mxu0
        %v2446 = vadd.f32 0.0, %v2445
        %v2447 = vpop.f32.mrf.mxu0
        %2448 = vmatprep.mubr.bf16.mxu0 0
        %2449 = vmatmul.mubr.bf16.gmra.mxu0 %v2359
        %v2450 = vpop.f32.mrf.mxu0
        %v2451 = vadd.f32 0.0, %v2450
        %v2452 = vpop.f32.mrf.mxu0
        %v2453 = vpop.f32.mrf.mxu0
        %v2454 = vadd.f32 0.0, %v2453
        %v2455 = vpop.f32.mrf.mxu0
        %2456 = vdwg.mxu0
        %v2457 = vpack.c.bf16 %v2446, %v2443
        %v2458 = vpack.c.bf16 %v2454, %v2451
        %v2459 = vld [vmem:[#allocation10] sm:$0x1]
        %v2461 = vlaneseq
        %v2462 = vshrl.u32 %v2461, 7
        %v2463 = vsub.s32 0, %v2462
        %v2464 = vrot.slane %v2459, %v2463
        %2466 = vmatprep.subr.bf16.mxu0 0
        %2467 = vmatpush1.bf16.msra.mxu0 0
        %2468 = vmatprep.subr.bf16.mxu0 0
        %2469 = vmatpush1.bf16.msra.mxu0 0
        %2470 = vmatprep.subr.bf16.mxu0 0
        %2471 = vmatpush1.bf16.msra.mxu0 0
        %2472 = vmatprep.subr.bf16.mxu0 0
        %2473 = vmatpush1.bf16.msra.mxu0 0
        %2474 = vmatprep.subr.bf16.mxu0 0
        %2475 = vmatpush1.bf16.msra.mxu0 0
        %2476 = vmatprep.subr.bf16.mxu0 0
        %2477 = vmatpush1.bf16.msra.mxu0 0
        %2478 = vmatprep.subr.bf16.mxu0 0
        %2479 = vmatpush1.bf16.msra.mxu0 %v2458
        %2480 = vmatprep.subr.bf16.mxu0 0
        %2481 = vmatpush1.bf16.msra.mxu0 %v2457
        %2482 = vmatprep.subr.bf16.mxu0 0
        %2483 = vmatpush2.bf16.msra.mxu0 0
        %2484 = vmatprep.subr.bf16.mxu0 0
        %2485 = vmatpush2.bf16.msra.mxu0 0
        %2486 = vmatprep.subr.bf16.mxu0 0
        %2487 = vmatpush2.bf16.msra.mxu0 0
        %2488 = vmatprep.subr.bf16.mxu0 0
        %2489 = vmatpush2.bf16.msra.mxu0 0
        %2490 = vmatprep.subr.bf16.mxu0 0
        %2491 = vmatpush2.bf16.msra.mxu0 0
        %2492 = vmatprep.subr.bf16.mxu0 0
        %2493 = vmatpush2.bf16.msra.mxu0 0
        %2494 = vmatprep.subr.bf16.mxu0 0
        %2495 = vmatpush2.bf16.msra.mxu0 0
        %2496 = vmatprep.subr.bf16.mxu0 0
        %2497 = vmatpush2.bf16.msra.mxu0 0
        %2498 = vmatprep.mubr.bf16.mxu0 0
        %2499 = vmatmul.mubr.bf16.gmra.mxu0 %v2158
        %v2500 = vpop.f32.mrf.mxu0
        %v2501 = vadd.f32 %v2464, %v2500
        %v2502 = vpop.f32.mrf.mxu0
        %v2503 = vpop.f32.mrf.mxu0
        %v2504 = vadd.f32 %v2464, %v2503
        %v2505 = vpop.f32.mrf.mxu0
        %2506 = vmatprep.mubr.bf16.mxu0 0
        %2507 = vmatmul.mubr.bf16.gmra.mxu0 %v2161
        %v2508 = vpop.f32.mrf.mxu0
        %v2509 = vadd.f32 %v2464, %v2508
        %v2510 = vpop.f32.mrf.mxu0
        %v2511 = vpop.f32.mrf.mxu0
        %v2512 = vadd.f32 %v2464, %v2511
        %v2513 = vpop.f32.mrf.mxu0
        %2514 = vdwg.mxu0
        %v2515 = vmax.f32 %v2501, 0.0
        %v2516 = vmax.f32 %v2504, 0.0
        %v2517 = vmax.f32 %v2509, 0.0
        %v2518 = vmax.f32 %v2512, 0.0
        %v2519 = vld [vmem:[#allocation12] sm:$0xf]
        %v2520 = vld [vmem:[#allocation12 + $0x4] sm:$0xf]
        %v2521 = vld [vmem:[#allocation12 + $0x8] sm:$0xf]
        %v2522 = vld [vmem:[#allocation12 + $0xc] sm:$0xf]
        %v2523 = vld [vmem:[#allocation12 + $0x10] sm:$0xf]
        %v2524 = vld [vmem:[#allocation12 + $0x14] sm:$0xf]
        %v2525 = vld [vmem:[#allocation12 + $0x18] sm:$0xf]
        %v2526 = vld [vmem:[#allocation12 + $0x1c] sm:$0xf]
        %v2527 = vld [vmem:[#allocation12 + $0x20] sm:$0xf]
        %v2528 = vld [vmem:[#allocation12 + $0x24] sm:$0xf]
        %v2529 = vld [vmem:[#allocation12 + $0x28] sm:$0xf]
        %v2530 = vld [vmem:[#allocation12 + $0x2c] sm:$0xf]
        %v2531 = vld [vmem:[#allocation12 + $0x30] sm:$0xf]
        %v2532 = vld [vmem:[#allocation12 + $0x34] sm:$0xf]
        %v2533 = vld [vmem:[#allocation12 + $0x38] sm:$0xf]
        %v2534 = vld [vmem:[#allocation12 + $0x3c] sm:$0xf]
        %v2535 = vpack.c.bf16 %v2516, %v2515
        %v2536 = vpack.c.bf16 %v2518, %v2517
        %v2537 = vld [vmem:[%s23] sm:$0x1]
        %v2539 = vlaneseq
        %v2540 = vshrl.u32 %v2539, 7
        %v2541 = vsub.s32 0, %v2540
        %v2542 = vrot.slane %v2537, %v2541
        %v2560 = vunpack.c.l.b16 %v2519
        %v2561 = vunpack.c.l.b16 %v2520
        %v2562 = vunpack.c.l.b16 %v2521
        %v2563 = vunpack.c.l.b16 %v2522
        %v2564 = vunpack.c.l.b16 %v2523
        %v2565 = vunpack.c.l.b16 %v2524
        %v2566 = vunpack.c.l.b16 %v2525
        %v2567 = vunpack.c.l.b16 %v2526
        %v2568 = vunpack.c.l.b16 %v2527
        %v2569 = vunpack.c.l.b16 %v2528
        %v2570 = vunpack.c.l.b16 %v2529
        %v2571 = vunpack.c.l.b16 %v2530
        %v2572 = vunpack.c.l.b16 %v2531
        %v2573 = vunpack.c.l.b16 %v2532
        %v2574 = vunpack.c.l.b16 %v2533
        %v2575 = vunpack.c.l.b16 %v2534
        %v2576 = vpack.c.b16 %v2561, %v2560
        %v2577 = vpack.c.b16 %v2563, %v2562
        %v2578 = vpack.c.b16 %v2565, %v2564
        %v2579 = vpack.c.b16 %v2567, %v2566
        %v2580 = vpack.c.b16 %v2569, %v2568
        %v2581 = vpack.c.b16 %v2571, %v2570
        %v2582 = vpack.c.b16 %v2573, %v2572
        %v2583 = vpack.c.b16 %v2575, %v2574
        %2592 = vmatprep.subr.bf16.mxu0 0
        %2593 = vmatpush1.bf16.msra.mxu0 %v2583
        %2594 = vmatprep.subr.bf16.mxu0 0
        %2595 = vmatpush1.bf16.msra.mxu0 %v2582
        %2596 = vmatprep.subr.bf16.mxu0 0
        %2597 = vmatpush1.bf16.msra.mxu0 %v2581
        %2598 = vmatprep.subr.bf16.mxu0 0
        %2599 = vmatpush1.bf16.msra.mxu0 %v2580
        %2600 = vmatprep.subr.bf16.mxu0 0
        %2601 = vmatpush1.bf16.msra.mxu0 %v2579
        %2602 = vmatprep.subr.bf16.mxu0 0
        %2603 = vmatpush1.bf16.msra.mxu0 %v2578
        %2604 = vmatprep.subr.bf16.mxu0 0
        %2605 = vmatpush1.bf16.msra.mxu0 %v2577
        %2606 = vmatprep.subr.bf16.mxu0 0
        %2607 = vmatpush1.bf16.msra.mxu0 %v2576
        %2608 = vmatprep.subr.bf16.mxu0 0
        %2609 = vmatpush2.bf16.msra.mxu0 0
        %2610 = vmatprep.subr.bf16.mxu0 0
        %2611 = vmatpush2.bf16.msra.mxu0 0
        %2612 = vmatprep.subr.bf16.mxu0 0
        %2613 = vmatpush2.bf16.msra.mxu0 0
        %2614 = vmatprep.subr.bf16.mxu0 0
        %2615 = vmatpush2.bf16.msra.mxu0 0
        %2616 = vmatprep.subr.bf16.mxu0 0
        %2617 = vmatpush2.bf16.msra.mxu0 0
        %2618 = vmatprep.subr.bf16.mxu0 0
        %2619 = vmatpush2.bf16.msra.mxu0 0
        %2620 = vmatprep.subr.bf16.mxu0 0
        %2621 = vmatpush2.bf16.msra.mxu0 0
        %2622 = vmatprep.subr.bf16.mxu0 0
        %2623 = vmatpush2.bf16.msra.mxu0 0
        %2624 = vmatprep.mubr.bf16.mxu0 0
        %2625 = vmatmul.mubr.bf16.gmra.mxu0 %v2535
        %v2626 = vpop.f32.mrf.mxu0
        %v2627 = vadd.f32 %v2542, %v2626
        %v2628 = vpop.f32.mrf.mxu0
        %v2629 = vpop.f32.mrf.mxu0
        %v2630 = vadd.f32 %v2542, %v2629
        %v2631 = vpop.f32.mrf.mxu0
        %2632 = vmatprep.mubr.bf16.mxu0 0
        %2633 = vmatmul.mubr.bf16.gmra.mxu0 %v2536
        %v2634 = vpop.f32.mrf.mxu0
        %v2635 = vadd.f32 %v2542, %v2634
        %v2636 = vpop.f32.mrf.mxu0
        %v2637 = vpop.f32.mrf.mxu0
        %v2638 = vadd.f32 %v2542, %v2637
        %v2639 = vpop.f32.mrf.mxu0
        %2640 = vdwg.mxu0
        %v2641 = vmax.f32 %v2627, 0.0
        %v2642 = vmax.f32 %v2630, 0.0
        %v2643 = vmax.f32 %v2635, 0.0
        %v2644 = vmax.f32 %v2638, 0.0
        %v2645 = vadd.f32 %v2641, %v2338
        %v2646 = vadd.f32 %v2642, %v2339
        %v2647 = vadd.f32 %v2643, %v2340
        %v2648 = vadd.f32 %v2644, %v2341
        %v2649 = vld [vmem:[%s25] sm:$0xf]
        %v2650 = vld [vmem:[%s25 + $0x4] sm:$0xf]
        %v2651 = vld [vmem:[%s25 + $0x8] sm:$0xf]
        %v2652 = vld [vmem:[%s25 + $0xc] sm:$0xf]
        %v2653 = vld [vmem:[%s25 + $0x10] sm:$0xf]
        %v2654 = vld [vmem:[%s25 + $0x14] sm:$0xf]
        %v2655 = vld [vmem:[%s25 + $0x18] sm:$0xf]
        %v2656 = vld [vmem:[%s25 + $0x1c] sm:$0xf]
        %v2657 = vld [vmem:[%s25 + $0x20] sm:$0xf]
        %v2658 = vld [vmem:[%s25 + $0x24] sm:$0xf]
        %v2659 = vld [vmem:[%s25 + $0x28] sm:$0xf]
        %v2660 = vld [vmem:[%s25 + $0x2c] sm:$0xf]
        %v2661 = vld [vmem:[%s25 + $0x30] sm:$0xf]
        %v2662 = vld [vmem:[%s25 + $0x34] sm:$0xf]
        %v2663 = vld [vmem:[%s25 + $0x38] sm:$0xf]
        %v2664 = vld [vmem:[%s25 + $0x3c] sm:$0xf]
        %v2665 = vpack.c.bf16 %v2646, %v2645
        %v2666 = vpack.c.bf16 %v2648, %v2647
        %v2683 = vunpack.c.l.b16 %v2649
        %v2684 = vunpack.c.l.b16 %v2650
        %v2685 = vunpack.c.l.b16 %v2651
        %v2686 = vunpack.c.l.b16 %v2652
        %v2687 = vunpack.c.l.b16 %v2653
        %v2688 = vunpack.c.l.b16 %v2654
        %v2689 = vunpack.c.l.b16 %v2655
        %v2690 = vunpack.c.l.b16 %v2656
        %v2691 = vunpack.c.l.b16 %v2657
        %v2692 = vunpack.c.l.b16 %v2658
        %v2693 = vunpack.c.l.b16 %v2659
        %v2694 = vunpack.c.l.b16 %v2660
        %v2695 = vunpack.c.l.b16 %v2661
        %v2696 = vunpack.c.l.b16 %v2662
        %v2697 = vunpack.c.l.b16 %v2663
        %v2698 = vunpack.c.l.b16 %v2664
        %v2699 = vpack.c.b16 %v2684, %v2683
        %v2700 = vpack.c.b16 %v2686, %v2685
        %v2701 = vpack.c.b16 %v2688, %v2687
        %v2702 = vpack.c.b16 %v2690, %v2689
        %v2703 = vpack.c.b16 %v2692, %v2691
        %v2704 = vpack.c.b16 %v2694, %v2693
        %v2705 = vpack.c.b16 %v2696, %v2695
        %v2706 = vpack.c.b16 %v2698, %v2697
        %2715 = vmatprep.subr.bf16.mxu0 0
        %2716 = vmatpush1.bf16.msra.mxu0 %v2706
        %2717 = vmatprep.subr.bf16.mxu0 0
        %2718 = vmatpush1.bf16.msra.mxu0 %v2705
        %2719 = vmatprep.subr.bf16.mxu0 0
        %2720 = vmatpush1.bf16.msra.mxu0 %v2704
        %2721 = vmatprep.subr.bf16.mxu0 0
        %2722 = vmatpush1.bf16.msra.mxu0 %v2703
        %2723 = vmatprep.subr.bf16.mxu0 0
        %2724 = vmatpush1.bf16.msra.mxu0 %v2702
        %2725 = vmatprep.subr.bf16.mxu0 0
        %2726 = vmatpush1.bf16.msra.mxu0 %v2701
        %2727 = vmatprep.subr.bf16.mxu0 0
        %2728 = vmatpush1.bf16.msra.mxu0 %v2700
        %2729 = vmatprep.subr.bf16.mxu0 0
        %2730 = vmatpush1.bf16.msra.mxu0 %v2699
        %2731 = vmatprep.subr.bf16.mxu0 0
        %2732 = vmatpush2.bf16.msra.mxu0 0
        %2733 = vmatprep.subr.bf16.mxu0 0
        %2734 = vmatpush2.bf16.msra.mxu0 0
        %2735 = vmatprep.subr.bf16.mxu0 0
        %2736 = vmatpush2.bf16.msra.mxu0 0
        %2737 = vmatprep.subr.bf16.mxu0 0
        %2738 = vmatpush2.bf16.msra.mxu0 0
        %2739 = vmatprep.subr.bf16.mxu0 0
        %2740 = vmatpush2.bf16.msra.mxu0 0
        %2741 = vmatprep.subr.bf16.mxu0 0
        %2742 = vmatpush2.bf16.msra.mxu0 0
        %2743 = vmatprep.subr.bf16.mxu0 0
        %2744 = vmatpush2.bf16.msra.mxu0 0
        %2745 = vmatprep.subr.bf16.mxu0 0
        %2746 = vmatpush2.bf16.msra.mxu0 0
        %2747 = vmatprep.mubr.bf16.mxu0 0
        %2748 = vmatmul.mubr.bf16.gmra.mxu0 %v2665
        %v2749 = vpop.f32.mrf.mxu0
        %v2750 = vadd.f32 0.0, %v2749
        %v2751 = vpop.f32.mrf.mxu0
        %v2752 = vpop.f32.mrf.mxu0
        %v2753 = vadd.f32 0.0, %v2752
        %v2754 = vpop.f32.mrf.mxu0
        %2755 = vmatprep.mubr.bf16.mxu0 0
        %2756 = vmatmul.mubr.bf16.gmra.mxu0 %v2666
        %v2757 = vpop.f32.mrf.mxu0
        %v2758 = vadd.f32 0.0, %v2757
        %v2759 = vpop.f32.mrf.mxu0
        %v2760 = vpop.f32.mrf.mxu0
        %v2761 = vadd.f32 0.0, %v2760
        %v2762 = vpop.f32.mrf.mxu0
        %2763 = vdwg.mxu0
        %v2764 = vpack.c.bf16 %v2753, %v2750
        %v2765 = vpack.c.bf16 %v2761, %v2758
        %v2766 = vld [vmem:[%s27] sm:$0x1]
        %v2768 = vlaneseq
        %v2769 = vshrl.u32 %v2768, 7
        %v2770 = vsub.s32 0, %v2769
        %v2771 = vrot.slane %v2766, %v2770
        %2773 = vmatprep.subr.bf16.mxu0 0
        %2774 = vmatpush1.bf16.msra.mxu0 0
        %2775 = vmatprep.subr.bf16.mxu0 0
        %2776 = vmatpush1.bf16.msra.mxu0 0
        %2777 = vmatprep.subr.bf16.mxu0 0
        %2778 = vmatpush1.bf16.msra.mxu0 0
        %2779 = vmatprep.subr.bf16.mxu0 0
        %2780 = vmatpush1.bf16.msra.mxu0 0
        %2781 = vmatprep.subr.bf16.mxu0 0
        %2782 = vmatpush1.bf16.msra.mxu0 0
        %2783 = vmatprep.subr.bf16.mxu0 0
        %2784 = vmatpush1.bf16.msra.mxu0 0
        %2785 = vmatprep.subr.bf16.mxu0 0
        %2786 = vmatpush1.bf16.msra.mxu0 %v2765
        %2787 = vmatprep.subr.bf16.mxu0 0
        %2788 = vmatpush1.bf16.msra.mxu0 %v2764
        %2789 = vmatprep.subr.bf16.mxu0 0
        %2790 = vmatpush2.bf16.msra.mxu0 0
        %2791 = vmatprep.subr.bf16.mxu0 0
        %2792 = vmatpush2.bf16.msra.mxu0 0
        %2793 = vmatprep.subr.bf16.mxu0 0
        %2794 = vmatpush2.bf16.msra.mxu0 0
        %2795 = vmatprep.subr.bf16.mxu0 0
        %2796 = vmatpush2.bf16.msra.mxu0 0
        %2797 = vmatprep.subr.bf16.mxu0 0
        %2798 = vmatpush2.bf16.msra.mxu0 0
        %2799 = vmatprep.subr.bf16.mxu0 0
        %2800 = vmatpush2.bf16.msra.mxu0 0
        %2801 = vmatprep.subr.bf16.mxu0 0
        %2802 = vmatpush2.bf16.msra.mxu0 0
        %2803 = vmatprep.subr.bf16.mxu0 0
        %2804 = vmatpush2.bf16.msra.mxu0 0
        %2805 = vmatprep.mubr.bf16.mxu0 0
        %2806 = vmatmul.mubr.bf16.gmra.mxu0 %v2158
        %v2807 = vpop.f32.mrf.mxu0
        %v2808 = vadd.f32 %v2771, %v2807
        %v2809 = vpop.f32.mrf.mxu0
        %v2810 = vpop.f32.mrf.mxu0
        %v2811 = vadd.f32 %v2771, %v2810
        %v2812 = vpop.f32.mrf.mxu0
        %2813 = vmatprep.mubr.bf16.mxu0 0
        %2814 = vmatmul.mubr.bf16.gmra.mxu0 %v2161
        %v2815 = vpop.f32.mrf.mxu0
        %v2816 = vadd.f32 %v2771, %v2815
        %v2817 = vpop.f32.mrf.mxu0
        %v2818 = vpop.f32.mrf.mxu0
        %v2819 = vadd.f32 %v2771, %v2818
        %v2820 = vpop.f32.mrf.mxu0
        %2821 = vdwg.mxu0
        %v2822 = vmax.f32 %v2808, 0.0
        %v2823 = vmax.f32 %v2811, 0.0
        %v2824 = vmax.f32 %v2816, 0.0
        %v2825 = vmax.f32 %v2819, 0.0
        %v2826 = vld [vmem:[#allocation13] sm:$0xf]
        %v2827 = vld [vmem:[#allocation13 + $0x4] sm:$0xf]
        %v2828 = vld [vmem:[#allocation13 + $0x8] sm:$0xf]
        %v2829 = vld [vmem:[#allocation13 + $0xc] sm:$0xf]
        %v2830 = vld [vmem:[#allocation13 + $0x10] sm:$0xf]
        %v2831 = vld [vmem:[#allocation13 + $0x14] sm:$0xf]
        %v2832 = vld [vmem:[#allocation13 + $0x18] sm:$0xf]
        %v2833 = vld [vmem:[#allocation13 + $0x1c] sm:$0xf]
        %v2834 = vld [vmem:[#allocation13 + $0x20] sm:$0xf]
        %v2835 = vld [vmem:[#allocation13 + $0x24] sm:$0xf]
        %v2836 = vld [vmem:[#allocation13 + $0x28] sm:$0xf]
        %v2837 = vld [vmem:[#allocation13 + $0x2c] sm:$0xf]
        %v2838 = vld [vmem:[#allocation13 + $0x30] sm:$0xf]
        %v2839 = vld [vmem:[#allocation13 + $0x34] sm:$0xf]
        %v2840 = vld [vmem:[#allocation13 + $0x38] sm:$0xf]
        %v2841 = vld [vmem:[#allocation13 + $0x3c] sm:$0xf]
        %v2842 = vpack.c.bf16 %v2823, %v2822
        %v2843 = vpack.c.bf16 %v2825, %v2824
        %v2844 = vld [vmem:[%s31] sm:$0x1]
        %v2846 = vlaneseq
        %v2847 = vshrl.u32 %v2846, 7
        %v2848 = vsub.s32 0, %v2847
        %v2849 = vrot.slane %v2844, %v2848
        %v2867 = vunpack.c.l.b16 %v2826
        %v2868 = vunpack.c.l.b16 %v2827
        %v2869 = vunpack.c.l.b16 %v2828
        %v2870 = vunpack.c.l.b16 %v2829
        %v2871 = vunpack.c.l.b16 %v2830
        %v2872 = vunpack.c.l.b16 %v2831
        %v2873 = vunpack.c.l.b16 %v2832
        %v2874 = vunpack.c.l.b16 %v2833
        %v2875 = vunpack.c.l.b16 %v2834
        %v2876 = vunpack.c.l.b16 %v2835
        %v2877 = vunpack.c.l.b16 %v2836
        %v2878 = vunpack.c.l.b16 %v2837
        %v2879 = vunpack.c.l.b16 %v2838
        %v2880 = vunpack.c.l.b16 %v2839
        %v2881 = vunpack.c.l.b16 %v2840
        %v2882 = vunpack.c.l.b16 %v2841
        %v2883 = vpack.c.b16 %v2868, %v2867
        %v2884 = vpack.c.b16 %v2870, %v2869
        %v2885 = vpack.c.b16 %v2872, %v2871
        %v2886 = vpack.c.b16 %v2874, %v2873
        %v2887 = vpack.c.b16 %v2876, %v2875
        %v2888 = vpack.c.b16 %v2878, %v2877
        %v2889 = vpack.c.b16 %v2880, %v2879
        %v2890 = vpack.c.b16 %v2882, %v2881
        %2899 = vmatprep.subr.bf16.mxu0 0
        %2900 = vmatpush1.bf16.msra.mxu0 %v2890
        %2901 = vmatprep.subr.bf16.mxu0 0
        %2902 = vmatpush1.bf16.msra.mxu0 %v2889
        %2903 = vmatprep.subr.bf16.mxu0 0
        %2904 = vmatpush1.bf16.msra.mxu0 %v2888
        %2905 = vmatprep.subr.bf16.mxu0 0
        %2906 = vmatpush1.bf16.msra.mxu0 %v2887
        %2907 = vmatprep.subr.bf16.mxu0 0
        %2908 = vmatpush1.bf16.msra.mxu0 %v2886
        %2909 = vmatprep.subr.bf16.mxu0 0
        %2910 = vmatpush1.bf16.msra.mxu0 %v2885
        %2911 = vmatprep.subr.bf16.mxu0 0
        %2912 = vmatpush1.bf16.msra.mxu0 %v2884
        %2913 = vmatprep.subr.bf16.mxu0 0
        %2914 = vmatpush1.bf16.msra.mxu0 %v2883
        %2915 = vmatprep.subr.bf16.mxu0 0
        %2916 = vmatpush2.bf16.msra.mxu0 0
        %2917 = vmatprep.subr.bf16.mxu0 0
        %2918 = vmatpush2.bf16.msra.mxu0 0
        %2919 = vmatprep.subr.bf16.mxu0 0
        %2920 = vmatpush2.bf16.msra.mxu0 0
        %2921 = vmatprep.subr.bf16.mxu0 0
        %2922 = vmatpush2.bf16.msra.mxu0 0
        %2923 = vmatprep.subr.bf16.mxu0 0
        %2924 = vmatpush2.bf16.msra.mxu0 0
        %2925 = vmatprep.subr.bf16.mxu0 0
        %2926 = vmatpush2.bf16.msra.mxu0 0
        %2927 = vmatprep.subr.bf16.mxu0 0
        %2928 = vmatpush2.bf16.msra.mxu0 0
        %2929 = vmatprep.subr.bf16.mxu0 0
        %2930 = vmatpush2.bf16.msra.mxu0 0
        %2931 = vmatprep.mubr.bf16.mxu0 0
        %2932 = vmatmul.mubr.bf16.gmra.mxu0 %v2842
        %v2933 = vpop.f32.mrf.mxu0
        %v2934 = vadd.f32 %v2849, %v2933
        %v2935 = vpop.f32.mrf.mxu0
        %v2936 = vpop.f32.mrf.mxu0
        %v2937 = vadd.f32 %v2849, %v2936
        %v2938 = vpop.f32.mrf.mxu0
        %2939 = vmatprep.mubr.bf16.mxu0 0
        %2940 = vmatmul.mubr.bf16.gmra.mxu0 %v2843
        %v2941 = vpop.f32.mrf.mxu0
        %v2942 = vadd.f32 %v2849, %v2941
        %v2943 = vpop.f32.mrf.mxu0
        %v2944 = vpop.f32.mrf.mxu0
        %v2945 = vadd.f32 %v2849, %v2944
        %v2946 = vpop.f32.mrf.mxu0
        %2947 = vdwg.mxu0
        %v2948 = vmax.f32 %v2934, 0.0
        %v2949 = vmax.f32 %v2937, 0.0
        %v2950 = vmax.f32 %v2942, 0.0
        %v2951 = vmax.f32 %v2945, 0.0
        %v2952 = vadd.f32 %v2948, %v2645
        %v2953 = vadd.f32 %v2949, %v2646
        %v2954 = vadd.f32 %v2950, %v2647
        %v2955 = vadd.f32 %v2951, %v2648
        %v2956 = vld [vmem:[#allocation15] sm:$0xf]
        %v2957 = vld [vmem:[#allocation15 + $0x4] sm:$0xf]
        %v2958 = vld [vmem:[#allocation15 + $0x8] sm:$0xf]
        %v2959 = vld [vmem:[#allocation15 + $0xc] sm:$0xf]
        %v2960 = vld [vmem:[#allocation15 + $0x10] sm:$0xf]
        %v2961 = vld [vmem:[#allocation15 + $0x14] sm:$0xf]
        %v2962 = vld [vmem:[#allocation15 + $0x18] sm:$0xf]
        %v2963 = vld [vmem:[#allocation15 + $0x1c] sm:$0xf]
        %v2964 = vld [vmem:[#allocation15 + $0x20] sm:$0xf]
        %v2965 = vld [vmem:[#allocation15 + $0x24] sm:$0xf]
        %v2966 = vld [vmem:[#allocation15 + $0x28] sm:$0xf]
        %v2967 = vld [vmem:[#allocation15 + $0x2c] sm:$0xf]
        %v2968 = vld [vmem:[#allocation15 + $0x30] sm:$0xf]
        %v2969 = vld [vmem:[#allocation15 + $0x34] sm:$0xf]
        %v2970 = vld [vmem:[#allocation15 + $0x38] sm:$0xf]
        %v2971 = vld [vmem:[#allocation15 + $0x3c] sm:$0xf]
        %v2972 = vpack.c.bf16 %v2953, %v2952
        %v2973 = vpack.c.bf16 %v2955, %v2954
        %v2990 = vunpack.c.l.b16 %v2956
        %v2991 = vunpack.c.l.b16 %v2957
        %v2992 = vunpack.c.l.b16 %v2958
        %v2993 = vunpack.c.l.b16 %v2959
        %v2994 = vunpack.c.l.b16 %v2960
        %v2995 = vunpack.c.l.b16 %v2961
        %v2996 = vunpack.c.l.b16 %v2962
        %v2997 = vunpack.c.l.b16 %v2963
        %v2998 = vunpack.c.l.b16 %v2964
        %v2999 = vunpack.c.l.b16 %v2965
        %v3000 = vunpack.c.l.b16 %v2966
        %v3001 = vunpack.c.l.b16 %v2967
        %v3002 = vunpack.c.l.b16 %v2968
        %v3003 = vunpack.c.l.b16 %v2969
        %v3004 = vunpack.c.l.b16 %v2970
        %v3005 = vunpack.c.l.b16 %v2971
        %v3006 = vpack.c.b16 %v2991, %v2990
        %v3007 = vpack.c.b16 %v2993, %v2992
        %v3008 = vpack.c.b16 %v2995, %v2994
        %v3009 = vpack.c.b16 %v2997, %v2996
        %v3010 = vpack.c.b16 %v2999, %v2998
        %v3011 = vpack.c.b16 %v3001, %v3000
        %v3012 = vpack.c.b16 %v3003, %v3002
        %v3013 = vpack.c.b16 %v3005, %v3004
        %3022 = vmatprep.subr.bf16.mxu0 0
        %3023 = vmatpush1.bf16.msra.mxu0 %v3013
        %3024 = vmatprep.subr.bf16.mxu0 0
        %3025 = vmatpush1.bf16.msra.mxu0 %v3012
        %3026 = vmatprep.subr.bf16.mxu0 0
        %3027 = vmatpush1.bf16.msra.mxu0 %v3011
        %3028 = vmatprep.subr.bf16.mxu0 0
        %3029 = vmatpush1.bf16.msra.mxu0 %v3010
        %3030 = vmatprep.subr.bf16.mxu0 0
        %3031 = vmatpush1.bf16.msra.mxu0 %v3009
        %3032 = vmatprep.subr.bf16.mxu0 0
        %3033 = vmatpush1.bf16.msra.mxu0 %v3008
        %3034 = vmatprep.subr.bf16.mxu0 0
        %3035 = vmatpush1.bf16.msra.mxu0 %v3007
        %3036 = vmatprep.subr.bf16.mxu0 0
        %3037 = vmatpush1.bf16.msra.mxu0 %v3006
        %3038 = vmatprep.subr.bf16.mxu0 0
        %3039 = vmatpush2.bf16.msra.mxu0 0
        %3040 = vmatprep.subr.bf16.mxu0 0
        %3041 = vmatpush2.bf16.msra.mxu0 0
        %3042 = vmatprep.subr.bf16.mxu0 0
        %3043 = vmatpush2.bf16.msra.mxu0 0
        %3044 = vmatprep.subr.bf16.mxu0 0
        %3045 = vmatpush2.bf16.msra.mxu0 0
        %3046 = vmatprep.subr.bf16.mxu0 0
        %3047 = vmatpush2.bf16.msra.mxu0 0
        %3048 = vmatprep.subr.bf16.mxu0 0
        %3049 = vmatpush2.bf16.msra.mxu0 0
        %3050 = vmatprep.subr.bf16.mxu0 0
        %3051 = vmatpush2.bf16.msra.mxu0 0
        %3052 = vmatprep.subr.bf16.mxu0 0
        %3053 = vmatpush2.bf16.msra.mxu0 0
        %3054 = vmatprep.mubr.bf16.mxu0 0
        %3055 = vmatmul.mubr.bf16.gmra.mxu0 %v2972
        %v3056 = vpop.f32.mrf.mxu0
        %v3057 = vadd.f32 0.0, %v3056
        %v3058 = vpop.f32.mrf.mxu0
        %v3059 = vpop.f32.mrf.mxu0
        %v3060 = vadd.f32 0.0, %v3059
        %v3061 = vpop.f32.mrf.mxu0
        %3062 = vmatprep.mubr.bf16.mxu0 0
        %3063 = vmatmul.mubr.bf16.gmra.mxu0 %v2973
        %v3064 = vpop.f32.mrf.mxu0
        %v3065 = vadd.f32 0.0, %v3064
        %v3066 = vpop.f32.mrf.mxu0
        %v3067 = vpop.f32.mrf.mxu0
        %v3068 = vadd.f32 0.0, %v3067
        %v3069 = vpop.f32.mrf.mxu0
        %3070 = vdwg.mxu0
        %v3071 = vpack.c.bf16 %v3060, %v3057
        %v3072 = vpack.c.bf16 %v3068, %v3065
        %v3073 = vld [vmem:[%s35] sm:$0x1]
        %v3075 = vlaneseq
        %v3076 = vshrl.u32 %v3075, 7
        %v3077 = vsub.s32 0, %v3076
        %v3078 = vrot.slane %v3073, %v3077
        %3080 = vmatprep.subr.bf16.mxu0 0
        %3081 = vmatpush1.bf16.msra.mxu0 0
        %3082 = vmatprep.subr.bf16.mxu0 0
        %3083 = vmatpush1.bf16.msra.mxu0 0
        %3084 = vmatprep.subr.bf16.mxu0 0
        %3085 = vmatpush1.bf16.msra.mxu0 0
        %3086 = vmatprep.subr.bf16.mxu0 0
        %3087 = vmatpush1.bf16.msra.mxu0 0
        %3088 = vmatprep.subr.bf16.mxu0 0
        %3089 = vmatpush1.bf16.msra.mxu0 0
        %3090 = vmatprep.subr.bf16.mxu0 0
        %3091 = vmatpush1.bf16.msra.mxu0 0
        %3092 = vmatprep.subr.bf16.mxu0 0
        %3093 = vmatpush1.bf16.msra.mxu0 %v3072
        %3094 = vmatprep.subr.bf16.mxu0 0
        %3095 = vmatpush1.bf16.msra.mxu0 %v3071
        %3096 = vmatprep.subr.bf16.mxu0 0
        %3097 = vmatpush2.bf16.msra.mxu0 0
        %3098 = vmatprep.subr.bf16.mxu0 0
        %3099 = vmatpush2.bf16.msra.mxu0 0
        %3100 = vmatprep.subr.bf16.mxu0 0
        %3101 = vmatpush2.bf16.msra.mxu0 0
        %3102 = vmatprep.subr.bf16.mxu0 0
        %3103 = vmatpush2.bf16.msra.mxu0 0
        %3104 = vmatprep.subr.bf16.mxu0 0
        %3105 = vmatpush2.bf16.msra.mxu0 0
        %3106 = vmatprep.subr.bf16.mxu0 0
        %3107 = vmatpush2.bf16.msra.mxu0 0
        %3108 = vmatprep.subr.bf16.mxu0 0
        %3109 = vmatpush2.bf16.msra.mxu0 0
        %3110 = vmatprep.subr.bf16.mxu0 0
        %3111 = vmatpush2.bf16.msra.mxu0 0
        %3112 = vmatprep.mubr.bf16.mxu0 0
        %3113 = vmatmul.mubr.bf16.gmra.mxu0 %v2158
        %v3114 = vpop.f32.mrf.mxu0
        %v3115 = vadd.f32 %v3078, %v3114
        %v3116 = vpop.f32.mrf.mxu0
        %v3117 = vpop.f32.mrf.mxu0
        %v3118 = vadd.f32 %v3078, %v3117
        %v3119 = vpop.f32.mrf.mxu0
        %3120 = vmatprep.mubr.bf16.mxu0 0
        %3121 = vmatmul.mubr.bf16.gmra.mxu0 %v2161
        %v3122 = vpop.f32.mrf.mxu0
        %v3123 = vadd.f32 %v3078, %v3122
        %v3124 = vpop.f32.mrf.mxu0
        %v3125 = vpop.f32.mrf.mxu0
        %v3126 = vadd.f32 %v3078, %v3125
        %v3127 = vpop.f32.mrf.mxu0
        %3128 = vdwg.mxu0
        %v3129 = vmax.f32 %v3115, 0.0
        %v3130 = vmax.f32 %v3118, 0.0
        %v3131 = vmax.f32 %v3123, 0.0
        %v3132 = vmax.f32 %v3126, 0.0
        %v3133 = vld [vmem:[#allocation16] sm:$0xf]
        %v3134 = vld [vmem:[#allocation16 + $0x4] sm:$0xf]
        %v3135 = vld [vmem:[#allocation16 + $0x8] sm:$0xf]
        %v3136 = vld [vmem:[#allocation16 + $0xc] sm:$0xf]
        %v3137 = vld [vmem:[#allocation16 + $0x10] sm:$0xf]
        %v3138 = vld [vmem:[#allocation16 + $0x14] sm:$0xf]
        %v3139 = vld [vmem:[#allocation16 + $0x18] sm:$0xf]
        %v3140 = vld [vmem:[#allocation16 + $0x1c] sm:$0xf]
        %v3141 = vld [vmem:[#allocation16 + $0x20] sm:$0xf]
        %v3142 = vld [vmem:[#allocation16 + $0x24] sm:$0xf]
        %v3143 = vld [vmem:[#allocation16 + $0x28] sm:$0xf]
        %v3144 = vld [vmem:[#allocation16 + $0x2c] sm:$0xf]
        %v3145 = vld [vmem:[#allocation16 + $0x30] sm:$0xf]
        %v3146 = vld [vmem:[#allocation16 + $0x34] sm:$0xf]
        %v3147 = vld [vmem:[#allocation16 + $0x38] sm:$0xf]
        %v3148 = vld [vmem:[#allocation16 + $0x3c] sm:$0xf]
        %v3149 = vpack.c.bf16 %v3130, %v3129
        %v3150 = vpack.c.bf16 %v3132, %v3131
        %v3151 = vld [vmem:[%s39] sm:$0x1]
        %v3153 = vlaneseq
        %v3154 = vshrl.u32 %v3153, 7
        %v3155 = vsub.s32 0, %v3154
        %v3156 = vrot.slane %v3151, %v3155
        %v3174 = vunpack.c.l.b16 %v3133
        %v3175 = vunpack.c.l.b16 %v3134
        %v3176 = vunpack.c.l.b16 %v3135
        %v3177 = vunpack.c.l.b16 %v3136
        %v3178 = vunpack.c.l.b16 %v3137
        %v3179 = vunpack.c.l.b16 %v3138
        %v3180 = vunpack.c.l.b16 %v3139
        %v3181 = vunpack.c.l.b16 %v3140
        %v3182 = vunpack.c.l.b16 %v3141
        %v3183 = vunpack.c.l.b16 %v3142
        %v3184 = vunpack.c.l.b16 %v3143
        %v3185 = vunpack.c.l.b16 %v3144
        %v3186 = vunpack.c.l.b16 %v3145
        %v3187 = vunpack.c.l.b16 %v3146
        %v3188 = vunpack.c.l.b16 %v3147
        %v3189 = vunpack.c.l.b16 %v3148
        %v3190 = vpack.c.b16 %v3175, %v3174
        %v3191 = vpack.c.b16 %v3177, %v3176
        %v3192 = vpack.c.b16 %v3179, %v3178
        %v3193 = vpack.c.b16 %v3181, %v3180
        %v3194 = vpack.c.b16 %v3183, %v3182
        %v3195 = vpack.c.b16 %v3185, %v3184
        %v3196 = vpack.c.b16 %v3187, %v3186
        %v3197 = vpack.c.b16 %v3189, %v3188
        %3206 = vmatprep.subr.bf16.mxu0 0
        %3207 = vmatpush1.bf16.msra.mxu0 %v3197
        %3208 = vmatprep.subr.bf16.mxu0 0
        %3209 = vmatpush1.bf16.msra.mxu0 %v3196
        %3210 = vmatprep.subr.bf16.mxu0 0
        %3211 = vmatpush1.bf16.msra.mxu0 %v3195
        %3212 = vmatprep.subr.bf16.mxu0 0
        %3213 = vmatpush1.bf16.msra.mxu0 %v3194
        %3214 = vmatprep.subr.bf16.mxu0 0
        %3215 = vmatpush1.bf16.msra.mxu0 %v3193
        %3216 = vmatprep.subr.bf16.mxu0 0
        %3217 = vmatpush1.bf16.msra.mxu0 %v3192
        %3218 = vmatprep.subr.bf16.mxu0 0
        %3219 = vmatpush1.bf16.msra.mxu0 %v3191
        %3220 = vmatprep.subr.bf16.mxu0 0
        %3221 = vmatpush1.bf16.msra.mxu0 %v3190
        %3222 = vmatprep.subr.bf16.mxu0 0
        %3223 = vmatpush2.bf16.msra.mxu0 0
        %3224 = vmatprep.subr.bf16.mxu0 0
        %3225 = vmatpush2.bf16.msra.mxu0 0
        %3226 = vmatprep.subr.bf16.mxu0 0
        %3227 = vmatpush2.bf16.msra.mxu0 0
        %3228 = vmatprep.subr.bf16.mxu0 0
        %3229 = vmatpush2.bf16.msra.mxu0 0
        %3230 = vmatprep.subr.bf16.mxu0 0
        %3231 = vmatpush2.bf16.msra.mxu0 0
        %3232 = vmatprep.subr.bf16.mxu0 0
        %3233 = vmatpush2.bf16.msra.mxu0 0
        %3234 = vmatprep.subr.bf16.mxu0 0
        %3235 = vmatpush2.bf16.msra.mxu0 0
        %3236 = vmatprep.subr.bf16.mxu0 0
        %3237 = vmatpush2.bf16.msra.mxu0 0
        %3238 = vmatprep.mubr.bf16.mxu0 0
        %3239 = vmatmul.mubr.bf16.gmra.mxu0 %v3149
        %v3240 = vpop.f32.mrf.mxu0
        %v3241 = vadd.f32 %v3156, %v3240
        %v3242 = vpop.f32.mrf.mxu0
        %v3243 = vpop.f32.mrf.mxu0
        %v3244 = vadd.f32 %v3156, %v3243
        %v3245 = vpop.f32.mrf.mxu0
        %3246 = vmatprep.mubr.bf16.mxu0 0
        %3247 = vmatmul.mubr.bf16.gmra.mxu0 %v3150
        %v3248 = vpop.f32.mrf.mxu0
        %v3249 = vadd.f32 %v3156, %v3248
        %v3250 = vpop.f32.mrf.mxu0
        %v3251 = vpop.f32.mrf.mxu0
        %v3252 = vadd.f32 %v3156, %v3251
        %v3253 = vpop.f32.mrf.mxu0
        %3254 = vdwg.mxu0
        %v3255 = vmax.f32 %v3241, 0.0
        %v3256 = vmax.f32 %v3244, 0.0
        %v3257 = vmax.f32 %v3249, 0.0
        %v3258 = vmax.f32 %v3252, 0.0
        %v3259 = vadd.f32 %v3255, %v2952
        %v3260 = vadd.f32 %v3256, %v2953
        %v3261 = vadd.f32 %v3257, %v2954
        %v3262 = vadd.f32 %v3258, %v2955
        %v3263 = vld [vmem:[%s41] sm:$0xff]
        %v3264 = vld [vmem:[%s41 + $0x8] sm:$0xff]
        %v3265 = vld [vmem:[%s41 + $0x10] sm:$0xff]
        %v3266 = vld [vmem:[%s41 + $0x18] sm:$0xff]
        %v3267 = vld [vmem:[%s41 + $0x20] sm:$0xff]
        %v3268 = vld [vmem:[%s41 + $0x28] sm:$0xff]
        %v3269 = vld [vmem:[%s41 + $0x30] sm:$0xff]
        %v3270 = vld [vmem:[%s41 + $0x38] sm:$0xff]
        %v3271 = vld [vmem:[%s41 + $0x40] sm:$0xff]
        %v3272 = vld [vmem:[%s41 + $0x48] sm:$0xff]
        %v3273 = vld [vmem:[%s41 + $0x50] sm:$0xff]
        %v3274 = vld [vmem:[%s41 + $0x58] sm:$0xff]
        %v3275 = vld [vmem:[%s41 + $0x60] sm:$0xff]
        %v3276 = vld [vmem:[%s41 + $0x68] sm:$0xff]
        %v3277 = vld [vmem:[%s41 + $0x70] sm:$0xff]
        %v3278 = vld [vmem:[%s41 + $0x78] sm:$0xff]
        %v3279 = vpack.c.bf16 %v3260, %v3259
        %v3280 = vpack.c.bf16 %v3262, %v3261
        %v3297 = vunpack.c.l.b16 %v3263
        %v3298 = vunpack.c.h.b16 %v3263
        %v3299 = vunpack.c.l.b16 %v3264
        %v3300 = vunpack.c.h.b16 %v3264
        %v3301 = vunpack.c.l.b16 %v3265
        %v3302 = vunpack.c.h.b16 %v3265
        %v3303 = vunpack.c.l.b16 %v3266
        %v3304 = vunpack.c.h.b16 %v3266
        %v3305 = vunpack.c.l.b16 %v3267
        %v3306 = vunpack.c.h.b16 %v3267
        %v3307 = vunpack.c.l.b16 %v3268
        %v3308 = vunpack.c.h.b16 %v3268
        %v3309 = vunpack.c.l.b16 %v3269
        %v3310 = vunpack.c.h.b16 %v3269
        %v3311 = vunpack.c.l.b16 %v3270
        %v3312 = vunpack.c.h.b16 %v3270
        %v3313 = vunpack.c.l.b16 %v3271
        %v3314 = vunpack.c.h.b16 %v3271
        %v3315 = vunpack.c.l.b16 %v3272
        %v3316 = vunpack.c.h.b16 %v3272
        %v3317 = vunpack.c.l.b16 %v3273
        %v3318 = vunpack.c.h.b16 %v3273
        %v3319 = vunpack.c.l.b16 %v3274
        %v3320 = vunpack.c.h.b16 %v3274
        %v3321 = vunpack.c.l.b16 %v3275
        %v3322 = vunpack.c.h.b16 %v3275
        %v3323 = vunpack.c.l.b16 %v3276
        %v3324 = vunpack.c.h.b16 %v3276
        %v3325 = vunpack.c.l.b16 %v3277
        %v3326 = vunpack.c.h.b16 %v3277
        %v3327 = vunpack.c.l.b16 %v3278
        %v3328 = vunpack.c.h.b16 %v3278
        %v3329 = vpack.c.b16 %v3299, %v3297
        %v3330 = vpack.c.b16 %v3300, %v3298
        %v3331 = vpack.c.b16 %v3303, %v3301
        %v3332 = vpack.c.b16 %v3304, %v3302
        %v3333 = vpack.c.b16 %v3307, %v3305
        %v3334 = vpack.c.b16 %v3308, %v3306
        %v3335 = vpack.c.b16 %v3311, %v3309
        %v3336 = vpack.c.b16 %v3312, %v3310
        %v3337 = vpack.c.b16 %v3315, %v3313
        %v3338 = vpack.c.b16 %v3316, %v3314
        %v3339 = vpack.c.b16 %v3319, %v3317
        %v3340 = vpack.c.b16 %v3320, %v3318
        %v3341 = vpack.c.b16 %v3323, %v3321
        %v3342 = vpack.c.b16 %v3324, %v3322
        %v3343 = vpack.c.b16 %v3327, %v3325
        %v3344 = vpack.c.b16 %v3328, %v3326
        %3361 = vmatprep.subr.bf16.mxu0 %v3344
        %3362 = vmatpush1.bf16.msra.mxu0 %v3343
        %3363 = vmatprep.subr.bf16.mxu0 %v3342
        %3364 = vmatpush1.bf16.msra.mxu0 %v3341
        %3365 = vmatprep.subr.bf16.mxu0 %v3340
        %3366 = vmatpush1.bf16.msra.mxu0 %v3339
        %3367 = vmatprep.subr.bf16.mxu0 %v3338
        %3368 = vmatpush1.bf16.msra.mxu0 %v3337
        %3369 = vmatprep.subr.bf16.mxu0 %v3336
        %3370 = vmatpush1.bf16.msra.mxu0 %v3335
        %3371 = vmatprep.subr.bf16.mxu0 %v3334
        %3372 = vmatpush1.bf16.msra.mxu0 %v3333
        %3373 = vmatprep.subr.bf16.mxu0 %v3332
        %3374 = vmatpush1.bf16.msra.mxu0 %v3331
        %3375 = vmatprep.subr.bf16.mxu0 %v3330
        %3376 = vmatpush1.bf16.msra.mxu0 %v3329
        %3377 = vmatprep.subr.bf16.mxu0 0
        %3378 = vmatpush2.bf16.msra.mxu0 0
        %3379 = vmatprep.subr.bf16.mxu0 0
        %3380 = vmatpush2.bf16.msra.mxu0 0
        %3381 = vmatprep.subr.bf16.mxu0 0
        %3382 = vmatpush2.bf16.msra.mxu0 0
        %3383 = vmatprep.subr.bf16.mxu0 0
        %3384 = vmatpush2.bf16.msra.mxu0 0
        %3385 = vmatprep.subr.bf16.mxu0 0
        %3386 = vmatpush2.bf16.msra.mxu0 0
        %3387 = vmatprep.subr.bf16.mxu0 0
        %3388 = vmatpush2.bf16.msra.mxu0 0
        %3389 = vmatprep.subr.bf16.mxu0 0
        %3390 = vmatpush2.bf16.msra.mxu0 0
        %3391 = vmatprep.subr.bf16.mxu0 0
        %3392 = vmatpush2.bf16.msra.mxu0 0
        %3393 = vmatprep.mubr.bf16.mxu0 0
        %3394 = vmatmul.mubr.bf16.gmra.mxu0 %v3279
        %v3395 = vpop.f32.mrf.mxu0
        %v3396 = vadd.f32 0.0, %v3395
        %v3397 = vpop.f32.mrf.mxu0
        %v3398 = vadd.f32 0.0, %v3397
        %v3399 = vpop.f32.mrf.mxu0
        %v3400 = vadd.f32 0.0, %v3399
        %v3401 = vpop.f32.mrf.mxu0
        %v3402 = vadd.f32 0.0, %v3401
        %3403 = vmatprep.mubr.bf16.mxu0 0
        %3404 = vmatmul.mubr.bf16.gmra.mxu0 %v3280
        %v3405 = vpop.f32.mrf.mxu0
        %v3406 = vadd.f32 0.0, %v3405
        %v3407 = vpop.f32.mrf.mxu0
        %v3408 = vadd.f32 0.0, %v3407
        %v3409 = vpop.f32.mrf.mxu0
        %v3410 = vadd.f32 0.0, %v3409
        %v3411 = vpop.f32.mrf.mxu0
        %v3412 = vadd.f32 0.0, %v3411
        %3413 = vdwg.mxu0
        %v3414 = vpack.c.bf16 %v3400, %v3396
        %v3415 = vpack.c.bf16 %v3402, %v3398
        %v3416 = vpack.c.bf16 %v3410, %v3406
        %v3417 = vpack.c.bf16 %v3412, %v3408
        %v3418 = vld [vmem:[#allocation18] sm:$0x3]
        %v3420 = vlaneseq
        %v3421 = vshrl.u32 %v3420, 7
        %v3422 = vsub.s32 0, %v3421
        %v3423 = vrot.slane %v3418, %v3422
        %v3424 = vlaneseq
        %v3425 = vshrl.u32 %v3424, 7
        %v3426 = vsub.s32 1, %v3425
        %v3427 = vrot.slane %v3418, %v3426
        %3430 = vmatprep.subr.bf16.mxu0 0
        %3431 = vmatpush1.bf16.msra.mxu0 0
        %3432 = vmatprep.subr.bf16.mxu0 0
        %3433 = vmatpush1.bf16.msra.mxu0 0
        %3434 = vmatprep.subr.bf16.mxu0 0
        %3435 = vmatpush1.bf16.msra.mxu0 0
        %3436 = vmatprep.subr.bf16.mxu0 0
        %3437 = vmatpush1.bf16.msra.mxu0 0
        %3438 = vmatprep.subr.bf16.mxu0 0
        %3439 = vmatpush1.bf16.msra.mxu0 0
        %3440 = vmatprep.subr.bf16.mxu0 0
        %3441 = vmatpush1.bf16.msra.mxu0 0
        %3442 = vmatprep.subr.bf16.mxu0 %v3417
        %3443 = vmatpush1.bf16.msra.mxu0 %v3416
        %3444 = vmatprep.subr.bf16.mxu0 %v3415
        %3445 = vmatpush1.bf16.msra.mxu0 %v3414
        %3446 = vmatprep.subr.bf16.mxu0 0
        %3447 = vmatpush2.bf16.msra.mxu0 0
        %3448 = vmatprep.subr.bf16.mxu0 0
        %3449 = vmatpush2.bf16.msra.mxu0 0
        %3450 = vmatprep.subr.bf16.mxu0 0
        %3451 = vmatpush2.bf16.msra.mxu0 0
        %3452 = vmatprep.subr.bf16.mxu0 0
        %3453 = vmatpush2.bf16.msra.mxu0 0
        %3454 = vmatprep.subr.bf16.mxu0 0
        %3455 = vmatpush2.bf16.msra.mxu0 0
        %3456 = vmatprep.subr.bf16.mxu0 0
        %3457 = vmatpush2.bf16.msra.mxu0 0
        %3458 = vmatprep.subr.bf16.mxu0 0
        %3459 = vmatpush2.bf16.msra.mxu0 0
        %3460 = vmatprep.subr.bf16.mxu0 0
        %3461 = vmatpush2.bf16.msra.mxu0 0
        %3462 = vmatprep.mubr.bf16.mxu0 0
        %3463 = vmatmul.mubr.bf16.gmra.mxu0 %v2158
        %v3464 = vpop.f32.mrf.mxu0
        %v3465 = vadd.f32 %v3423, %v3464
        %v3466 = vpop.f32.mrf.mxu0
        %v3467 = vadd.f32 %v3427, %v3466
        %v3468 = vpop.f32.mrf.mxu0
        %v3469 = vadd.f32 %v3423, %v3468
        %v3470 = vpop.f32.mrf.mxu0
        %v3471 = vadd.f32 %v3427, %v3470
        %3472 = vmatprep.mubr.bf16.mxu0 0
        %3473 = vmatmul.mubr.bf16.gmra.mxu0 %v2161
        %v3474 = vpop.f32.mrf.mxu0
        %v3475 = vadd.f32 %v3423, %v3474
        %v3476 = vpop.f32.mrf.mxu0
        %v3477 = vadd.f32 %v3427, %v3476
        %v3478 = vpop.f32.mrf.mxu0
        %v3479 = vadd.f32 %v3423, %v3478
        %v3480 = vpop.f32.mrf.mxu0
        %v3481 = vadd.f32 %v3427, %v3480
        %3482 = vdwg.mxu0
        %v3483 = vmax.f32 %v3465, 0.0
        %v3484 = vmax.f32 %v3467, 0.0
        %v3485 = vmax.f32 %v3469, 0.0
        %v3486 = vmax.f32 %v3471, 0.0
        %v3487 = vmax.f32 %v3475, 0.0
        %v3488 = vmax.f32 %v3477, 0.0
        %v3489 = vmax.f32 %v3479, 0.0
        %v3490 = vmax.f32 %v3481, 0.0
        %v3491 = vld [vmem:[%s45] sm:$0xf]
        %v3492 = vld [vmem:[%s45 + $0x4] sm:$0xf]
        %v3493 = vld [vmem:[%s45 + $0x8] sm:$0xf]
        %v3494 = vld [vmem:[%s45 + $0xc] sm:$0xf]
        %v3495 = vld [vmem:[%s45 + $0x10] sm:$0xf]
        %v3496 = vld [vmem:[%s45 + $0x14] sm:$0xf]
        %v3497 = vld [vmem:[%s45 + $0x18] sm:$0xf]
        %v3498 = vld [vmem:[%s45 + $0x1c] sm:$0xf]
        %v3499 = vld [vmem:[%s45 + $0x20] sm:$0xf]
        %v3500 = vld [vmem:[%s45 + $0x24] sm:$0xf]
        %v3501 = vld [vmem:[%s45 + $0x28] sm:$0xf]
        %v3502 = vld [vmem:[%s45 + $0x2c] sm:$0xf]
        %v3503 = vld [vmem:[%s45 + $0x30] sm:$0xf]
        %v3504 = vld [vmem:[%s45 + $0x34] sm:$0xf]
        %v3505 = vld [vmem:[%s45 + $0x38] sm:$0xf]
        %v3506 = vld [vmem:[%s45 + $0x3c] sm:$0xf]
        %v3507 = vld [vmem:[%s45 + $0x40] sm:$0xf]
        %v3508 = vld [vmem:[%s45 + $0x44] sm:$0xf]
        %v3509 = vld [vmem:[%s45 + $0x48] sm:$0xf]
        %v3510 = vld [vmem:[%s45 + $0x4c] sm:$0xf]
        %v3511 = vld [vmem:[%s45 + $0x50] sm:$0xf]
        %v3512 = vld [vmem:[%s45 + $0x54] sm:$0xf]
        %v3513 = vld [vmem:[%s45 + $0x58] sm:$0xf]
        %v3514 = vld [vmem:[%s45 + $0x5c] sm:$0xf]
        %v3515 = vld [vmem:[%s45 + $0x60] sm:$0xf]
        %v3516 = vld [vmem:[%s45 + $0x64] sm:$0xf]
        %v3517 = vld [vmem:[%s45 + $0x68] sm:$0xf]
        %v3518 = vld [vmem:[%s45 + $0x6c] sm:$0xf]
        %v3519 = vld [vmem:[%s45 + $0x70] sm:$0xf]
        %v3520 = vld [vmem:[%s45 + $0x74] sm:$0xf]
        %v3521 = vld [vmem:[%s45 + $0x78] sm:$0xf]
        %v3522 = vld [vmem:[%s45 + $0x7c] sm:$0xf]
        %v3523 = vpack.c.bf16 %v3485, %v3483
        %v3524 = vpack.c.bf16 %v3486, %v3484
        %v3525 = vpack.c.bf16 %v3489, %v3487
        %v3526 = vpack.c.bf16 %v3490, %v3488
        %v3527 = vld [vmem:[#allocation19] sm:$0x1]
        %v3529 = vlaneseq
        %v3530 = vshrl.u32 %v3529, 7
        %v3531 = vsub.s32 0, %v3530
        %v3532 = vrot.slane %v3527, %v3531
        %v3566 = vunpack.c.l.b16 %v3491
        %v3567 = vunpack.c.l.b16 %v3492
        %v3568 = vunpack.c.l.b16 %v3493
        %v3569 = vunpack.c.l.b16 %v3494
        %v3570 = vunpack.c.l.b16 %v3495
        %v3571 = vunpack.c.l.b16 %v3496
        %v3572 = vunpack.c.l.b16 %v3497
        %v3573 = vunpack.c.l.b16 %v3498
        %v3574 = vunpack.c.l.b16 %v3499
        %v3575 = vunpack.c.l.b16 %v3500
        %v3576 = vunpack.c.l.b16 %v3501
        %v3577 = vunpack.c.l.b16 %v3502
        %v3578 = vunpack.c.l.b16 %v3503
        %v3579 = vunpack.c.l.b16 %v3504
        %v3580 = vunpack.c.l.b16 %v3505
        %v3581 = vunpack.c.l.b16 %v3506
        %v3582 = vunpack.c.l.b16 %v3507
        %v3583 = vunpack.c.l.b16 %v3508
        %v3584 = vunpack.c.l.b16 %v3509
        %v3585 = vunpack.c.l.b16 %v3510
        %v3586 = vunpack.c.l.b16 %v3511
        %v3587 = vunpack.c.l.b16 %v3512
        %v3588 = vunpack.c.l.b16 %v3513
        %v3589 = vunpack.c.l.b16 %v3514
        %v3590 = vunpack.c.l.b16 %v3515
        %v3591 = vunpack.c.l.b16 %v3516
        %v3592 = vunpack.c.l.b16 %v3517
        %v3593 = vunpack.c.l.b16 %v3518
        %v3594 = vunpack.c.l.b16 %v3519
        %v3595 = vunpack.c.l.b16 %v3520
        %v3596 = vunpack.c.l.b16 %v3521
        %v3597 = vunpack.c.l.b16 %v3522
        %v3598 = vpack.c.b16 %v3567, %v3566
        %v3599 = vpack.c.b16 %v3569, %v3568
        %v3600 = vpack.c.b16 %v3571, %v3570
        %v3601 = vpack.c.b16 %v3573, %v3572
        %v3602 = vpack.c.b16 %v3575, %v3574
        %v3603 = vpack.c.b16 %v3577, %v3576
        %v3604 = vpack.c.b16 %v3579, %v3578
        %v3605 = vpack.c.b16 %v3581, %v3580
        %v3606 = vpack.c.b16 %v3583, %v3582
        %v3607 = vpack.c.b16 %v3585, %v3584
        %v3608 = vpack.c.b16 %v3587, %v3586
        %v3609 = vpack.c.b16 %v3589, %v3588
        %v3610 = vpack.c.b16 %v3591, %v3590
        %v3611 = vpack.c.b16 %v3593, %v3592
        %v3612 = vpack.c.b16 %v3595, %v3594
        %v3613 = vpack.c.b16 %v3597, %v3596
        %3630 = vmatprep.subr.bf16.mxu0 0
        %3631 = vmatpush1.bf16.msra.mxu0 %v3605
        %3632 = vmatprep.subr.bf16.mxu0 0
        %3633 = vmatpush1.bf16.msra.mxu0 %v3604
        %3634 = vmatprep.subr.bf16.mxu0 0
        %3635 = vmatpush1.bf16.msra.mxu0 %v3603
        %3636 = vmatprep.subr.bf16.mxu0 0
        %3637 = vmatpush1.bf16.msra.mxu0 %v3602
        %3638 = vmatprep.subr.bf16.mxu0 0
        %3639 = vmatpush1.bf16.msra.mxu0 %v3601
        %3640 = vmatprep.subr.bf16.mxu0 0
        %3641 = vmatpush1.bf16.msra.mxu0 %v3600
        %3642 = vmatprep.subr.bf16.mxu0 0
        %3643 = vmatpush1.bf16.msra.mxu0 %v3599
        %3644 = vmatprep.subr.bf16.mxu0 0
        %3645 = vmatpush1.bf16.msra.mxu0 %v3598
        %3646 = vmatprep.subr.bf16.mxu0 0
        %3647 = vmatpush2.bf16.msra.mxu0 %v3613
        %3648 = vmatprep.subr.bf16.mxu0 0
        %3649 = vmatpush2.bf16.msra.mxu0 %v3612
        %3650 = vmatprep.subr.bf16.mxu0 0
        %3651 = vmatpush2.bf16.msra.mxu0 %v3611
        %3652 = vmatprep.subr.bf16.mxu0 0
        %3653 = vmatpush2.bf16.msra.mxu0 %v3610
        %3654 = vmatprep.subr.bf16.mxu0 0
        %3655 = vmatpush2.bf16.msra.mxu0 %v3609
        %3656 = vmatprep.subr.bf16.mxu0 0
        %3657 = vmatpush2.bf16.msra.mxu0 %v3608
        %3658 = vmatprep.subr.bf16.mxu0 0
        %3659 = vmatpush2.bf16.msra.mxu0 %v3607
        %3660 = vmatprep.subr.bf16.mxu0 0
        %3661 = vmatpush2.bf16.msra.mxu0 %v3606
        %3662 = vmatprep.mubr.bf16.mxu0 %v3524
        %3663 = vmatmul.mubr.bf16.gmra.mxu0 %v3523
        %v3664 = vpop.f32.mrf.mxu0
        %v3665 = vadd.f32 %v3532, %v3664
        %v3666 = vpop.f32.mrf.mxu0
        %v3667 = vpop.f32.mrf.mxu0
        %v3668 = vadd.f32 %v3532, %v3667
        %v3669 = vpop.f32.mrf.mxu0
        %3670 = vmatprep.mubr.bf16.mxu0 %v3526
        %3671 = vmatmul.mubr.bf16.gmra.mxu0 %v3525
        %v3672 = vpop.f32.mrf.mxu0
        %v3673 = vadd.f32 %v3532, %v3672
        %v3674 = vpop.f32.mrf.mxu0
        %v3675 = vpop.f32.mrf.mxu0
        %v3676 = vadd.f32 %v3532, %v3675
        %v3677 = vpop.f32.mrf.mxu0
        %3678 = vdwg.mxu0
        %v3679 = vmax.f32 %v3665, 0.0
        %v3680 = vmax.f32 %v3668, 0.0
        %v3681 = vmax.f32 %v3673, 0.0
        %v3682 = vmax.f32 %v3676, 0.0
        %v3683 = vld [vmem:[#allocation21] sm:$0xf]
        %v3684 = vld [vmem:[#allocation21 + $0x4] sm:$0xf]
        %v3685 = vld [vmem:[#allocation21 + $0x8] sm:$0xf]
        %v3686 = vld [vmem:[#allocation21 + $0xc] sm:$0xf]
        %v3687 = vld [vmem:[#allocation21 + $0x10] sm:$0xf]
        %v3688 = vld [vmem:[#allocation21 + $0x14] sm:$0xf]
        %v3689 = vld [vmem:[#allocation21 + $0x18] sm:$0xf]
        %v3690 = vld [vmem:[#allocation21 + $0x1c] sm:$0xf]
        %v3691 = vld [vmem:[#allocation21 + $0x20] sm:$0xf]
        %v3692 = vld [vmem:[#allocation21 + $0x24] sm:$0xf]
        %v3693 = vld [vmem:[#allocation21 + $0x28] sm:$0xf]
        %v3694 = vld [vmem:[#allocation21 + $0x2c] sm:$0xf]
        %v3695 = vld [vmem:[#allocation21 + $0x30] sm:$0xf]
        %v3696 = vld [vmem:[#allocation21 + $0x34] sm:$0xf]
        %v3697 = vld [vmem:[#allocation21 + $0x38] sm:$0xf]
        %v3698 = vld [vmem:[#allocation21 + $0x3c] sm:$0xf]
        %v3699 = vld [vmem:[#allocation22] sm:$0x1]
        %v3701 = vlaneseq
        %v3702 = vshrl.u32 %v3701, 7
        %v3703 = vsub.s32 0, %v3702
        %v3704 = vrot.slane %v3699, %v3703
        %v3722 = vunpack.c.l.b16 %v3683
        %v3723 = vunpack.c.l.b16 %v3684
        %v3724 = vunpack.c.l.b16 %v3685
        %v3725 = vunpack.c.l.b16 %v3686
        %v3726 = vunpack.c.l.b16 %v3687
        %v3727 = vunpack.c.l.b16 %v3688
        %v3728 = vunpack.c.l.b16 %v3689
        %v3729 = vunpack.c.l.b16 %v3690
        %v3730 = vunpack.c.l.b16 %v3691
        %v3731 = vunpack.c.l.b16 %v3692
        %v3732 = vunpack.c.l.b16 %v3693
        %v3733 = vunpack.c.l.b16 %v3694
        %v3734 = vunpack.c.l.b16 %v3695
        %v3735 = vunpack.c.l.b16 %v3696
        %v3736 = vunpack.c.l.b16 %v3697
        %v3737 = vunpack.c.l.b16 %v3698
        %v3738 = vpack.c.b16 %v3723, %v3722
        %v3739 = vpack.c.b16 %v3725, %v3724
        %v3740 = vpack.c.b16 %v3727, %v3726
        %v3741 = vpack.c.b16 %v3729, %v3728
        %v3742 = vpack.c.b16 %v3731, %v3730
        %v3743 = vpack.c.b16 %v3733, %v3732
        %v3744 = vpack.c.b16 %v3735, %v3734
        %v3745 = vpack.c.b16 %v3737, %v3736
        %3754 = vmatprep.subr.bf16.mxu0 0
        %3755 = vmatpush1.bf16.msra.mxu0 %v3745
        %3756 = vmatprep.subr.bf16.mxu0 0
        %3757 = vmatpush1.bf16.msra.mxu0 %v3744
        %3758 = vmatprep.subr.bf16.mxu0 0
        %3759 = vmatpush1.bf16.msra.mxu0 %v3743
        %3760 = vmatprep.subr.bf16.mxu0 0
        %3761 = vmatpush1.bf16.msra.mxu0 %v3742
        %3762 = vmatprep.subr.bf16.mxu0 0
        %3763 = vmatpush1.bf16.msra.mxu0 %v3741
        %3764 = vmatprep.subr.bf16.mxu0 0
        %3765 = vmatpush1.bf16.msra.mxu0 %v3740
        %3766 = vmatprep.subr.bf16.mxu0 0
        %3767 = vmatpush1.bf16.msra.mxu0 %v3739
        %3768 = vmatprep.subr.bf16.mxu0 0
        %3769 = vmatpush1.bf16.msra.mxu0 %v3738
        %3770 = vmatprep.subr.bf16.mxu0 0
        %3771 = vmatpush2.bf16.msra.mxu0 0
        %3772 = vmatprep.subr.bf16.mxu0 0
        %3773 = vmatpush2.bf16.msra.mxu0 0
        %3774 = vmatprep.subr.bf16.mxu0 0
        %3775 = vmatpush2.bf16.msra.mxu0 0
        %3776 = vmatprep.subr.bf16.mxu0 0
        %3777 = vmatpush2.bf16.msra.mxu0 0
        %3778 = vmatprep.subr.bf16.mxu0 0
        %3779 = vmatpush2.bf16.msra.mxu0 0
        %3780 = vmatprep.subr.bf16.mxu0 0
        %3781 = vmatpush2.bf16.msra.mxu0 0
        %3782 = vmatprep.subr.bf16.mxu0 0
        %3783 = vmatpush2.bf16.msra.mxu0 0
        %3784 = vmatprep.subr.bf16.mxu0 0
        %3785 = vmatpush2.bf16.msra.mxu0 0
        %3786 = vmatprep.mubr.bf16.mxu0 0
        %3787 = vmatmul.mubr.bf16.gmra.mxu0 %v3279
        %v3788 = vpop.f32.mrf.mxu0
        %v3789 = vadd.f32 %v3704, %v3788
        %v3790 = vpop.f32.mrf.mxu0
        %v3791 = vpop.f32.mrf.mxu0
        %v3792 = vadd.f32 %v3704, %v3791
        %v3793 = vpop.f32.mrf.mxu0
        %3794 = vmatprep.mubr.bf16.mxu0 0
        %3795 = vmatmul.mubr.bf16.gmra.mxu0 %v3280
        %v3796 = vpop.f32.mrf.mxu0
        %v3797 = vadd.f32 %v3704, %v3796
        %v3798 = vpop.f32.mrf.mxu0
        %v3799 = vpop.f32.mrf.mxu0
        %v3800 = vadd.f32 %v3704, %v3799
        %v3801 = vpop.f32.mrf.mxu0
        %3802 = vdwg.mxu0
        %v3803 = vmax.f32 %v3789, 0.0
        %v3804 = vmax.f32 %v3792, 0.0
        %v3805 = vmax.f32 %v3797, 0.0
        %v3806 = vmax.f32 %v3800, 0.0
        %v3807 = vadd.f32 %v3679, %v3803
        %v3808 = vadd.f32 %v3680, %v3804
        %v3809 = vadd.f32 %v3681, %v3805
        %v3810 = vadd.f32 %v3682, %v3806
        %v3811 = vld [vmem:[#allocation24] sm:$0xf]
        %v3812 = vld [vmem:[#allocation24 + $0x4] sm:$0xf]
        %v3813 = vld [vmem:[#allocation24 + $0x8] sm:$0xf]
        %v3814 = vld [vmem:[#allocation24 + $0xc] sm:$0xf]
        %v3815 = vld [vmem:[#allocation24 + $0x10] sm:$0xf]
        %v3816 = vld [vmem:[#allocation24 + $0x14] sm:$0xf]
        %v3817 = vld [vmem:[#allocation24 + $0x18] sm:$0xf]
        %v3818 = vld [vmem:[#allocation24 + $0x1c] sm:$0xf]
        %v3819 = vld [vmem:[#allocation24 + $0x20] sm:$0xf]
        %v3820 = vld [vmem:[#allocation24 + $0x24] sm:$0xf]
        %v3821 = vld [vmem:[#allocation24 + $0x28] sm:$0xf]
        %v3822 = vld [vmem:[#allocation24 + $0x2c] sm:$0xf]
        %v3823 = vld [vmem:[#allocation24 + $0x30] sm:$0xf]
        %v3824 = vld [vmem:[#allocation24 + $0x34] sm:$0xf]
        %v3825 = vld [vmem:[#allocation24 + $0x38] sm:$0xf]
        %v3826 = vld [vmem:[#allocation24 + $0x3c] sm:$0xf]
        %v3827 = vpack.c.bf16 %v3808, %v3807
        %v3828 = vpack.c.bf16 %v3810, %v3809
        %v3845 = vunpack.c.l.b16 %v3811
        %v3846 = vunpack.c.l.b16 %v3812
        %v3847 = vunpack.c.l.b16 %v3813
        %v3848 = vunpack.c.l.b16 %v3814
        %v3849 = vunpack.c.l.b16 %v3815
        %v3850 = vunpack.c.l.b16 %v3816
        %v3851 = vunpack.c.l.b16 %v3817
        %v3852 = vunpack.c.l.b16 %v3818
        %v3853 = vunpack.c.l.b16 %v3819
        %v3854 = vunpack.c.l.b16 %v3820
        %v3855 = vunpack.c.l.b16 %v3821
        %v3856 = vunpack.c.l.b16 %v3822
        %v3857 = vunpack.c.l.b16 %v3823
        %v3858 = vunpack.c.l.b16 %v3824
        %v3859 = vunpack.c.l.b16 %v3825
        %v3860 = vunpack.c.l.b16 %v3826
        %v3861 = vpack.c.b16 %v3846, %v3845
        %v3862 = vpack.c.b16 %v3848, %v3847
        %v3863 = vpack.c.b16 %v3850, %v3849
        %v3864 = vpack.c.b16 %v3852, %v3851
        %v3865 = vpack.c.b16 %v3854, %v3853
        %v3866 = vpack.c.b16 %v3856, %v3855
        %v3867 = vpack.c.b16 %v3858, %v3857
        %v3868 = vpack.c.b16 %v3860, %v3859
        %3877 = vmatprep.subr.bf16.mxu0 0
        %3878 = vmatpush1.bf16.msra.mxu0 %v3868
        %3879 = vmatprep.subr.bf16.mxu0 0
        %3880 = vmatpush1.bf16.msra.mxu0 %v3867
        %3881 = vmatprep.subr.bf16.mxu0 0
        %3882 = vmatpush1.bf16.msra.mxu0 %v3866
        %3883 = vmatprep.subr.bf16.mxu0 0
        %3884 = vmatpush1.bf16.msra.mxu0 %v3865
        %3885 = vmatprep.subr.bf16.mxu0 0
        %3886 = vmatpush1.bf16.msra.mxu0 %v3864
        %3887 = vmatprep.subr.bf16.mxu0 0
        %3888 = vmatpush1.bf16.msra.mxu0 %v3863
        %3889 = vmatprep.subr.bf16.mxu0 0
        %3890 = vmatpush1.bf16.msra.mxu0 %v3862
        %3891 = vmatprep.subr.bf16.mxu0 0
        %3892 = vmatpush1.bf16.msra.mxu0 %v3861
        %3893 = vmatprep.subr.bf16.mxu0 0
        %3894 = vmatpush2.bf16.msra.mxu0 0
        %3895 = vmatprep.subr.bf16.mxu0 0
        %3896 = vmatpush2.bf16.msra.mxu0 0
        %3897 = vmatprep.subr.bf16.mxu0 0
        %3898 = vmatpush2.bf16.msra.mxu0 0
        %3899 = vmatprep.subr.bf16.mxu0 0
        %3900 = vmatpush2.bf16.msra.mxu0 0
        %3901 = vmatprep.subr.bf16.mxu0 0
        %3902 = vmatpush2.bf16.msra.mxu0 0
        %3903 = vmatprep.subr.bf16.mxu0 0
        %3904 = vmatpush2.bf16.msra.mxu0 0
        %3905 = vmatprep.subr.bf16.mxu0 0
        %3906 = vmatpush2.bf16.msra.mxu0 0
        %3907 = vmatprep.subr.bf16.mxu0 0
        %3908 = vmatpush2.bf16.msra.mxu0 0
        %3909 = vmatprep.mubr.bf16.mxu0 0
        %3910 = vmatmul.mubr.bf16.gmra.mxu0 %v3827
        %v3911 = vpop.f32.mrf.mxu0
        %v3912 = vadd.f32 0.0, %v3911
        %v3913 = vpop.f32.mrf.mxu0
        %v3914 = vpop.f32.mrf.mxu0
        %v3915 = vadd.f32 0.0, %v3914
        %v3916 = vpop.f32.mrf.mxu0
        %3917 = vmatprep.mubr.bf16.mxu0 0
        %3918 = vmatmul.mubr.bf16.gmra.mxu0 %v3828
        %v3919 = vpop.f32.mrf.mxu0
        %v3920 = vadd.f32 0.0, %v3919
        %v3921 = vpop.f32.mrf.mxu0
        %v3922 = vpop.f32.mrf.mxu0
        %v3923 = vadd.f32 0.0, %v3922
        %v3924 = vpop.f32.mrf.mxu0
        %3925 = vdwg.mxu0
        %v3926 = vpack.c.bf16 %v3915, %v3912
        %v3927 = vpack.c.bf16 %v3923, %v3920
        %v3928 = vld [vmem:[#allocation25] sm:$0x1]
        %v3930 = vlaneseq
        %v3931 = vshrl.u32 %v3930, 7
        %v3932 = vsub.s32 0, %v3931
        %v3933 = vrot.slane %v3928, %v3932
        %3935 = vmatprep.subr.bf16.mxu0 0
        %3936 = vmatpush1.bf16.msra.mxu0 0
        %3937 = vmatprep.subr.bf16.mxu0 0
        %3938 = vmatpush1.bf16.msra.mxu0 0
        %3939 = vmatprep.subr.bf16.mxu0 0
        %3940 = vmatpush1.bf16.msra.mxu0 0
        %3941 = vmatprep.subr.bf16.mxu0 0
        %3942 = vmatpush1.bf16.msra.mxu0 0
        %3943 = vmatprep.subr.bf16.mxu0 0
        %3944 = vmatpush1.bf16.msra.mxu0 0
        %3945 = vmatprep.subr.bf16.mxu0 0
        %3946 = vmatpush1.bf16.msra.mxu0 0
        %3947 = vmatprep.subr.bf16.mxu0 0
        %3948 = vmatpush1.bf16.msra.mxu0 %v3927
        %3949 = vmatprep.subr.bf16.mxu0 0
        %3950 = vmatpush1.bf16.msra.mxu0 %v3926
        %3951 = vmatprep.subr.bf16.mxu0 0
        %3952 = vmatpush2.bf16.msra.mxu0 0
        %3953 = vmatprep.subr.bf16.mxu0 0
        %3954 = vmatpush2.bf16.msra.mxu0 0
        %3955 = vmatprep.subr.bf16.mxu0 0
        %3956 = vmatpush2.bf16.msra.mxu0 0
        %3957 = vmatprep.subr.bf16.mxu0 0
        %3958 = vmatpush2.bf16.msra.mxu0 0
        %3959 = vmatprep.subr.bf16.mxu0 0
        %3960 = vmatpush2.bf16.msra.mxu0 0
        %3961 = vmatprep.subr.bf16.mxu0 0
        %3962 = vmatpush2.bf16.msra.mxu0 0
        %3963 = vmatprep.subr.bf16.mxu0 0
        %3964 = vmatpush2.bf16.msra.mxu0 0
        %3965 = vmatprep.subr.bf16.mxu0 0
        %3966 = vmatpush2.bf16.msra.mxu0 0
        %3967 = vmatprep.mubr.bf16.mxu0 0
        %3968 = vmatmul.mubr.bf16.gmra.mxu0 %v2158
        %v3969 = vpop.f32.mrf.mxu0
        %v3970 = vadd.f32 %v3933, %v3969
        %v3971 = vpop.f32.mrf.mxu0
        %v3972 = vpop.f32.mrf.mxu0
        %v3973 = vadd.f32 %v3933, %v3972
        %v3974 = vpop.f32.mrf.mxu0
        %3975 = vmatprep.mubr.bf16.mxu0 0
        %3976 = vmatmul.mubr.bf16.gmra.mxu0 %v2161
        %v3977 = vpop.f32.mrf.mxu0
        %v3978 = vadd.f32 %v3933, %v3977
        %v3979 = vpop.f32.mrf.mxu0
        %v3980 = vpop.f32.mrf.mxu0
        %v3981 = vadd.f32 %v3933, %v3980
        %v3982 = vpop.f32.mrf.mxu0
        %3983 = vdwg.mxu0
        %v3984 = vmax.f32 %v3970, 0.0
        %v3985 = vmax.f32 %v3973, 0.0
        %v3986 = vmax.f32 %v3978, 0.0
        %v3987 = vmax.f32 %v3981, 0.0
        %v3988 = vld [vmem:[#allocation27] sm:$0xf]
        %v3989 = vld [vmem:[#allocation27 + $0x4] sm:$0xf]
        %v3990 = vld [vmem:[#allocation27 + $0x8] sm:$0xf]
        %v3991 = vld [vmem:[#allocation27 + $0xc] sm:$0xf]
        %v3992 = vld [vmem:[#allocation27 + $0x10] sm:$0xf]
        %v3993 = vld [vmem:[#allocation27 + $0x14] sm:$0xf]
        %v3994 = vld [vmem:[#allocation27 + $0x18] sm:$0xf]
        %v3995 = vld [vmem:[#allocation27 + $0x1c] sm:$0xf]
        %v3996 = vld [vmem:[#allocation27 + $0x20] sm:$0xf]
        %v3997 = vld [vmem:[#allocation27 + $0x24] sm:$0xf]
        %v3998 = vld [vmem:[#allocation27 + $0x28] sm:$0xf]
        %v3999 = vld [vmem:[#allocation27 + $0x2c] sm:$0xf]
        %v4000 = vld [vmem:[#allocation27 + $0x30] sm:$0xf]
        %v4001 = vld [vmem:[#allocation27 + $0x34] sm:$0xf]
        %v4002 = vld [vmem:[#allocation27 + $0x38] sm:$0xf]
        %v4003 = vld [vmem:[#allocation27 + $0x3c] sm:$0xf]
        %v4004 = vpack.c.bf16 %v3985, %v3984
        %v4005 = vpack.c.bf16 %v3987, %v3986
        %v4006 = vld [vmem:[#allocation28] sm:$0x1]
        %v4008 = vlaneseq
        %v4009 = vshrl.u32 %v4008, 7
        %v4010 = vsub.s32 0, %v4009
        %v4011 = vrot.slane %v4006, %v4010
        %v4029 = vunpack.c.l.b16 %v3988
        %v4030 = vunpack.c.l.b16 %v3989
        %v4031 = vunpack.c.l.b16 %v3990
        %v4032 = vunpack.c.l.b16 %v3991
        %v4033 = vunpack.c.l.b16 %v3992
        %v4034 = vunpack.c.l.b16 %v3993
        %v4035 = vunpack.c.l.b16 %v3994
        %v4036 = vunpack.c.l.b16 %v3995
        %v4037 = vunpack.c.l.b16 %v3996
        %v4038 = vunpack.c.l.b16 %v3997
        %v4039 = vunpack.c.l.b16 %v3998
        %v4040 = vunpack.c.l.b16 %v3999
        %v4041 = vunpack.c.l.b16 %v4000
        %v4042 = vunpack.c.l.b16 %v4001
        %v4043 = vunpack.c.l.b16 %v4002
        %v4044 = vunpack.c.l.b16 %v4003
        %v4045 = vpack.c.b16 %v4030, %v4029
        %v4046 = vpack.c.b16 %v4032, %v4031
        %v4047 = vpack.c.b16 %v4034, %v4033
        %v4048 = vpack.c.b16 %v4036, %v4035
        %v4049 = vpack.c.b16 %v4038, %v4037
        %v4050 = vpack.c.b16 %v4040, %v4039
        %v4051 = vpack.c.b16 %v4042, %v4041
        %v4052 = vpack.c.b16 %v4044, %v4043
        %4061 = vmatprep.subr.bf16.mxu0 0
        %4062 = vmatpush1.bf16.msra.mxu0 %v4052
        %4063 = vmatprep.subr.bf16.mxu0 0
        %4064 = vmatpush1.bf16.msra.mxu0 %v4051
        %4065 = vmatprep.subr.bf16.mxu0 0
        %4066 = vmatpush1.bf16.msra.mxu0 %v4050
        %4067 = vmatprep.subr.bf16.mxu0 0
        %4068 = vmatpush1.bf16.msra.mxu0 %v4049
        %4069 = vmatprep.subr.bf16.mxu0 0
        %4070 = vmatpush1.bf16.msra.mxu0 %v4048
        %4071 = vmatprep.subr.bf16.mxu0 0
        %4072 = vmatpush1.bf16.msra.mxu0 %v4047
        %4073 = vmatprep.subr.bf16.mxu0 0
        %4074 = vmatpush1.bf16.msra.mxu0 %v4046
        %4075 = vmatprep.subr.bf16.mxu0 0
        %4076 = vmatpush1.bf16.msra.mxu0 %v4045
        %4077 = vmatprep.subr.bf16.mxu0 0
        %4078 = vmatpush2.bf16.msra.mxu0 0
        %4079 = vmatprep.subr.bf16.mxu0 0
        %4080 = vmatpush2.bf16.msra.mxu0 0
        %4081 = vmatprep.subr.bf16.mxu0 0
        %4082 = vmatpush2.bf16.msra.mxu0 0
        %4083 = vmatprep.subr.bf16.mxu0 0
        %4084 = vmatpush2.bf16.msra.mxu0 0
        %4085 = vmatprep.subr.bf16.mxu0 0
        %4086 = vmatpush2.bf16.msra.mxu0 0
        %4087 = vmatprep.subr.bf16.mxu0 0
        %4088 = vmatpush2.bf16.msra.mxu0 0
        %4089 = vmatprep.subr.bf16.mxu0 0
        %4090 = vmatpush2.bf16.msra.mxu0 0
        %4091 = vmatprep.subr.bf16.mxu0 0
        %4092 = vmatpush2.bf16.msra.mxu0 0
        %4093 = vmatprep.mubr.bf16.mxu0 0
        %4094 = vmatmul.mubr.bf16.gmra.mxu0 %v4004
        %v4095 = vpop.f32.mrf.mxu0
        %v4096 = vadd.f32 %v4011, %v4095
        %v4097 = vpop.f32.mrf.mxu0
        %v4098 = vpop.f32.mrf.mxu0
        %v4099 = vadd.f32 %v4011, %v4098
        %v4100 = vpop.f32.mrf.mxu0
        %4101 = vmatprep.mubr.bf16.mxu0 0
        %4102 = vmatmul.mubr.bf16.gmra.mxu0 %v4005
        %v4103 = vpop.f32.mrf.mxu0
        %v4104 = vadd.f32 %v4011, %v4103
        %v4105 = vpop.f32.mrf.mxu0
        %v4106 = vpop.f32.mrf.mxu0
        %v4107 = vadd.f32 %v4011, %v4106
        %v4108 = vpop.f32.mrf.mxu0
        %4109 = vdwg.mxu0
        %v4110 = vmax.f32 %v4096, 0.0
        %v4111 = vmax.f32 %v4099, 0.0
        %v4112 = vmax.f32 %v4104, 0.0
        %v4113 = vmax.f32 %v4107, 0.0
        %v4114 = vadd.f32 %v4110, %v3807
        %v4115 = vadd.f32 %v4111, %v3808
        %v4116 = vadd.f32 %v4112, %v3809
        %v4117 = vadd.f32 %v4113, %v3810
        %v4118 = vld [vmem:[#allocation30] sm:$0xf]
        %v4119 = vld [vmem:[#allocation30 + $0x4] sm:$0xf]
        %v4120 = vld [vmem:[#allocation30 + $0x8] sm:$0xf]
        %v4121 = vld [vmem:[#allocation30 + $0xc] sm:$0xf]
        %v4122 = vld [vmem:[#allocation30 + $0x10] sm:$0xf]
        %v4123 = vld [vmem:[#allocation30 + $0x14] sm:$0xf]
        %v4124 = vld [vmem:[#allocation30 + $0x18] sm:$0xf]
        %v4125 = vld [vmem:[#allocation30 + $0x1c] sm:$0xf]
        %v4126 = vld [vmem:[#allocation30 + $0x20] sm:$0xf]
        %v4127 = vld [vmem:[#allocation30 + $0x24] sm:$0xf]
        %v4128 = vld [vmem:[#allocation30 + $0x28] sm:$0xf]
        %v4129 = vld [vmem:[#allocation30 + $0x2c] sm:$0xf]
        %v4130 = vld [vmem:[#allocation30 + $0x30] sm:$0xf]
        %v4131 = vld [vmem:[#allocation30 + $0x34] sm:$0xf]
        %v4132 = vld [vmem:[#allocation30 + $0x38] sm:$0xf]
        %v4133 = vld [vmem:[#allocation30 + $0x3c] sm:$0xf]
        %v4134 = vpack.c.bf16 %v4115, %v4114
        %v4135 = vpack.c.bf16 %v4117, %v4116
        %v4152 = vunpack.c.l.b16 %v4118
        %v4153 = vunpack.c.l.b16 %v4119
        %v4154 = vunpack.c.l.b16 %v4120
        %v4155 = vunpack.c.l.b16 %v4121
        %v4156 = vunpack.c.l.b16 %v4122
        %v4157 = vunpack.c.l.b16 %v4123
        %v4158 = vunpack.c.l.b16 %v4124
        %v4159 = vunpack.c.l.b16 %v4125
        %v4160 = vunpack.c.l.b16 %v4126
        %v4161 = vunpack.c.l.b16 %v4127
        %v4162 = vunpack.c.l.b16 %v4128
        %v4163 = vunpack.c.l.b16 %v4129
        %v4164 = vunpack.c.l.b16 %v4130
        %v4165 = vunpack.c.l.b16 %v4131
        %v4166 = vunpack.c.l.b16 %v4132
        %v4167 = vunpack.c.l.b16 %v4133
        %v4168 = vpack.c.b16 %v4153, %v4152
        %v4169 = vpack.c.b16 %v4155, %v4154
        %v4170 = vpack.c.b16 %v4157, %v4156
        %v4171 = vpack.c.b16 %v4159, %v4158
        %v4172 = vpack.c.b16 %v4161, %v4160
        %v4173 = vpack.c.b16 %v4163, %v4162
        %v4174 = vpack.c.b16 %v4165, %v4164
        %v4175 = vpack.c.b16 %v4167, %v4166
        %4184 = vmatprep.subr.bf16.mxu0 0
        %4185 = vmatpush1.bf16.msra.mxu0 %v4175
        %4186 = vmatprep.subr.bf16.mxu0 0
        %4187 = vmatpush1.bf16.msra.mxu0 %v4174
        %4188 = vmatprep.subr.bf16.mxu0 0
        %4189 = vmatpush1.bf16.msra.mxu0 %v4173
        %4190 = vmatprep.subr.bf16.mxu0 0
        %4191 = vmatpush1.bf16.msra.mxu0 %v4172
        %4192 = vmatprep.subr.bf16.mxu0 0
        %4193 = vmatpush1.bf16.msra.mxu0 %v4171
        %4194 = vmatprep.subr.bf16.mxu0 0
        %4195 = vmatpush1.bf16.msra.mxu0 %v4170
        %4196 = vmatprep.subr.bf16.mxu0 0
        %4197 = vmatpush1.bf16.msra.mxu0 %v4169
        %4198 = vmatprep.subr.bf16.mxu0 0
        %4199 = vmatpush1.bf16.msra.mxu0 %v4168
        %4200 = vmatprep.subr.bf16.mxu0 0
        %4201 = vmatpush2.bf16.msra.mxu0 0
        %4202 = vmatprep.subr.bf16.mxu0 0
        %4203 = vmatpush2.bf16.msra.mxu0 0
        %4204 = vmatprep.subr.bf16.mxu0 0
        %4205 = vmatpush2.bf16.msra.mxu0 0
        %4206 = vmatprep.subr.bf16.mxu0 0
        %4207 = vmatpush2.bf16.msra.mxu0 0
        %4208 = vmatprep.subr.bf16.mxu0 0
        %4209 = vmatpush2.bf16.msra.mxu0 0
        %4210 = vmatprep.subr.bf16.mxu0 0
        %4211 = vmatpush2.bf16.msra.mxu0 0
        %4212 = vmatprep.subr.bf16.mxu0 0
        %4213 = vmatpush2.bf16.msra.mxu0 0
        %4214 = vmatprep.subr.bf16.mxu0 0
        %4215 = vmatpush2.bf16.msra.mxu0 0
        %4216 = vmatprep.mubr.bf16.mxu0 0
        %4217 = vmatmul.mubr.bf16.gmra.mxu0 %v4134
        %v4218 = vpop.f32.mrf.mxu0
        %v4219 = vadd.f32 0.0, %v4218
        %v4220 = vpop.f32.mrf.mxu0
        %v4221 = vpop.f32.mrf.mxu0
        %v4222 = vadd.f32 0.0, %v4221
        %v4223 = vpop.f32.mrf.mxu0
        %4224 = vmatprep.mubr.bf16.mxu0 0
        %4225 = vmatmul.mubr.bf16.gmra.mxu0 %v4135
        %v4226 = vpop.f32.mrf.mxu0
        %v4227 = vadd.f32 0.0, %v4226
        %v4228 = vpop.f32.mrf.mxu0
        %v4229 = vpop.f32.mrf.mxu0
        %v4230 = vadd.f32 0.0, %v4229
        %v4231 = vpop.f32.mrf.mxu0
        %4232 = vdwg.mxu0
        %v4233 = vpack.c.bf16 %v4222, %v4219
        %v4234 = vpack.c.bf16 %v4230, %v4227
        %v4235 = vld [vmem:[#allocation31] sm:$0x1]
        %v4237 = vlaneseq
        %v4238 = vshrl.u32 %v4237, 7
        %v4239 = vsub.s32 0, %v4238
        %v4240 = vrot.slane %v4235, %v4239
        %4242 = vmatprep.subr.bf16.mxu0 0
        %4243 = vmatpush1.bf16.msra.mxu0 0
        %4244 = vmatprep.subr.bf16.mxu0 0
        %4245 = vmatpush1.bf16.msra.mxu0 0
        %4246 = vmatprep.subr.bf16.mxu0 0
        %4247 = vmatpush1.bf16.msra.mxu0 0
        %4248 = vmatprep.subr.bf16.mxu0 0
        %4249 = vmatpush1.bf16.msra.mxu0 0
        %4250 = vmatprep.subr.bf16.mxu0 0
        %4251 = vmatpush1.bf16.msra.mxu0 0
        %4252 = vmatprep.subr.bf16.mxu0 0
        %4253 = vmatpush1.bf16.msra.mxu0 0
        %4254 = vmatprep.subr.bf16.mxu0 0
        %4255 = vmatpush1.bf16.msra.mxu0 %v4234
        %4256 = vmatprep.subr.bf16.mxu0 0
        %4257 = vmatpush1.bf16.msra.mxu0 %v4233
        %4258 = vmatprep.subr.bf16.mxu0 0
        %4259 = vmatpush2.bf16.msra.mxu0 0
        %4260 = vmatprep.subr.bf16.mxu0 0
        %4261 = vmatpush2.bf16.msra.mxu0 0
        %4262 = vmatprep.subr.bf16.mxu0 0
        %4263 = vmatpush2.bf16.msra.mxu0 0
        %4264 = vmatprep.subr.bf16.mxu0 0
        %4265 = vmatpush2.bf16.msra.mxu0 0
        %4266 = vmatprep.subr.bf16.mxu0 0
        %4267 = vmatpush2.bf16.msra.mxu0 0
        %4268 = vmatprep.subr.bf16.mxu0 0
        %4269 = vmatpush2.bf16.msra.mxu0 0
        %4270 = vmatprep.subr.bf16.mxu0 0
        %4271 = vmatpush2.bf16.msra.mxu0 0
        %4272 = vmatprep.subr.bf16.mxu0 0
        %4273 = vmatpush2.bf16.msra.mxu0 0
        %4274 = vmatprep.mubr.bf16.mxu0 0
        %4275 = vmatmul.mubr.bf16.gmra.mxu0 %v2158
        %v4276 = vpop.f32.mrf.mxu0
        %v4277 = vadd.f32 %v4240, %v4276
        %v4278 = vpop.f32.mrf.mxu0
        %v4279 = vpop.f32.mrf.mxu0
        %v4280 = vadd.f32 %v4240, %v4279
        %v4281 = vpop.f32.mrf.mxu0
        %4282 = vmatprep.mubr.bf16.mxu0 0
        %4283 = vmatmul.mubr.bf16.gmra.mxu0 %v2161
        %v4284 = vpop.f32.mrf.mxu0
        %v4285 = vadd.f32 %v4240, %v4284
        %v4286 = vpop.f32.mrf.mxu0
        %v4287 = vpop.f32.mrf.mxu0
        %v4288 = vadd.f32 %v4240, %v4287
        %v4289 = vpop.f32.mrf.mxu0
        %4290 = vdwg.mxu0
        %v4291 = vmax.f32 %v4277, 0.0
        %v4292 = vmax.f32 %v4280, 0.0
        %v4293 = vmax.f32 %v4285, 0.0
        %v4294 = vmax.f32 %v4288, 0.0
        %v4295 = vld [vmem:[#allocation33] sm:$0xf]
        %v4296 = vld [vmem:[#allocation33 + $0x4] sm:$0xf]
        %v4297 = vld [vmem:[#allocation33 + $0x8] sm:$0xf]
        %v4298 = vld [vmem:[#allocation33 + $0xc] sm:$0xf]
        %v4299 = vld [vmem:[#allocation33 + $0x10] sm:$0xf]
        %v4300 = vld [vmem:[#allocation33 + $0x14] sm:$0xf]
        %v4301 = vld [vmem:[#allocation33 + $0x18] sm:$0xf]
        %v4302 = vld [vmem:[#allocation33 + $0x1c] sm:$0xf]
        %v4303 = vld [vmem:[#allocation33 + $0x20] sm:$0xf]
        %v4304 = vld [vmem:[#allocation33 + $0x24] sm:$0xf]
        %v4305 = vld [vmem:[#allocation33 + $0x28] sm:$0xf]
        %v4306 = vld [vmem:[#allocation33 + $0x2c] sm:$0xf]
        %v4307 = vld [vmem:[#allocation33 + $0x30] sm:$0xf]
        %v4308 = vld [vmem:[#allocation33 + $0x34] sm:$0xf]
        %v4309 = vld [vmem:[#allocation33 + $0x38] sm:$0xf]
        %v4310 = vld [vmem:[#allocation33 + $0x3c] sm:$0xf]
        %v4311 = vpack.c.bf16 %v4292, %v4291
        %v4312 = vpack.c.bf16 %v4294, %v4293
        %v4313 = vld [vmem:[#allocation34] sm:$0x1]
        %v4315 = vlaneseq
        %v4316 = vshrl.u32 %v4315, 7
        %v4317 = vsub.s32 0, %v4316
        %v4318 = vrot.slane %v4313, %v4317
        %v4336 = vunpack.c.l.b16 %v4295
        %v4337 = vunpack.c.l.b16 %v4296
        %v4338 = vunpack.c.l.b16 %v4297
        %v4339 = vunpack.c.l.b16 %v4298
        %v4340 = vunpack.c.l.b16 %v4299
        %v4341 = vunpack.c.l.b16 %v4300
        %v4342 = vunpack.c.l.b16 %v4301
        %v4343 = vunpack.c.l.b16 %v4302
        %v4344 = vunpack.c.l.b16 %v4303
        %v4345 = vunpack.c.l.b16 %v4304
        %v4346 = vunpack.c.l.b16 %v4305
        %v4347 = vunpack.c.l.b16 %v4306
        %v4348 = vunpack.c.l.b16 %v4307
        %v4349 = vunpack.c.l.b16 %v4308
        %v4350 = vunpack.c.l.b16 %v4309
        %v4351 = vunpack.c.l.b16 %v4310
        %v4352 = vpack.c.b16 %v4337, %v4336
        %v4353 = vpack.c.b16 %v4339, %v4338
        %v4354 = vpack.c.b16 %v4341, %v4340
        %v4355 = vpack.c.b16 %v4343, %v4342
        %v4356 = vpack.c.b16 %v4345, %v4344
        %v4357 = vpack.c.b16 %v4347, %v4346
        %v4358 = vpack.c.b16 %v4349, %v4348
        %v4359 = vpack.c.b16 %v4351, %v4350
        %4368 = vmatprep.subr.bf16.mxu0 0
        %4369 = vmatpush1.bf16.msra.mxu0 %v4359
        %4370 = vmatprep.subr.bf16.mxu0 0
        %4371 = vmatpush1.bf16.msra.mxu0 %v4358
        %4372 = vmatprep.subr.bf16.mxu0 0
        %4373 = vmatpush1.bf16.msra.mxu0 %v4357
        %4374 = vmatprep.subr.bf16.mxu0 0
        %4375 = vmatpush1.bf16.msra.mxu0 %v4356
        %4376 = vmatprep.subr.bf16.mxu0 0
        %4377 = vmatpush1.bf16.msra.mxu0 %v4355
        %4378 = vmatprep.subr.bf16.mxu0 0
        %4379 = vmatpush1.bf16.msra.mxu0 %v4354
        %4380 = vmatprep.subr.bf16.mxu0 0
        %4381 = vmatpush1.bf16.msra.mxu0 %v4353
        %4382 = vmatprep.subr.bf16.mxu0 0
        %4383 = vmatpush1.bf16.msra.mxu0 %v4352
        %4384 = vmatprep.subr.bf16.mxu0 0
        %4385 = vmatpush2.bf16.msra.mxu0 0
        %4386 = vmatprep.subr.bf16.mxu0 0
        %4387 = vmatpush2.bf16.msra.mxu0 0
        %4388 = vmatprep.subr.bf16.mxu0 0
        %4389 = vmatpush2.bf16.msra.mxu0 0
        %4390 = vmatprep.subr.bf16.mxu0 0
        %4391 = vmatpush2.bf16.msra.mxu0 0
        %4392 = vmatprep.subr.bf16.mxu0 0
        %4393 = vmatpush2.bf16.msra.mxu0 0
        %4394 = vmatprep.subr.bf16.mxu0 0
        %4395 = vmatpush2.bf16.msra.mxu0 0
        %4396 = vmatprep.subr.bf16.mxu0 0
        %4397 = vmatpush2.bf16.msra.mxu0 0
        %4398 = vmatprep.subr.bf16.mxu0 0
        %4399 = vmatpush2.bf16.msra.mxu0 0
        %4400 = vmatprep.mubr.bf16.mxu0 0
        %4401 = vmatmul.mubr.bf16.gmra.mxu0 %v4311
        %v4402 = vpop.f32.mrf.mxu0
        %v4403 = vadd.f32 %v4318, %v4402
        %v4404 = vpop.f32.mrf.mxu0
        %v4405 = vpop.f32.mrf.mxu0
        %v4406 = vadd.f32 %v4318, %v4405
        %v4407 = vpop.f32.mrf.mxu0
        %4408 = vmatprep.mubr.bf16.mxu0 0
        %4409 = vmatmul.mubr.bf16.gmra.mxu0 %v4312
        %v4410 = vpop.f32.mrf.mxu0
        %v4411 = vadd.f32 %v4318, %v4410
        %v4412 = vpop.f32.mrf.mxu0
        %v4413 = vpop.f32.mrf.mxu0
        %v4414 = vadd.f32 %v4318, %v4413
        %v4415 = vpop.f32.mrf.mxu0
        %4416 = vdwg.mxu0
        %v4417 = vmax.f32 %v4403, 0.0
        %v4418 = vmax.f32 %v4406, 0.0
        %v4419 = vmax.f32 %v4411, 0.0
        %v4420 = vmax.f32 %v4414, 0.0
        %v4421 = vadd.f32 %v4417, %v4114
        %v4422 = vadd.f32 %v4418, %v4115
        %v4423 = vadd.f32 %v4419, %v4116
        %v4424 = vadd.f32 %v4420, %v4117
        %v4425 = vld [vmem:[%s69] sm:$0xff]
        %v4426 = vld [vmem:[%s69 + $0x8] sm:$0xff]
        %v4427 = vld [vmem:[%s69 + $0x10] sm:$0xff]
        %v4428 = vld [vmem:[%s69 + $0x18] sm:$0xff]
        %v4429 = vld [vmem:[%s69 + $0x20] sm:$0xff]
        %v4430 = vld [vmem:[%s69 + $0x28] sm:$0xff]
        %v4431 = vld [vmem:[%s69 + $0x30] sm:$0xff]
        %v4432 = vld [vmem:[%s69 + $0x38] sm:$0xff]
        %v4433 = vld [vmem:[%s69 + $0x40] sm:$0xff]
        %v4434 = vld [vmem:[%s69 + $0x48] sm:$0xff]
        %v4435 = vld [vmem:[%s69 + $0x50] sm:$0xff]
        %v4436 = vld [vmem:[%s69 + $0x58] sm:$0xff]
        %v4437 = vld [vmem:[%s69 + $0x60] sm:$0xff]
        %v4438 = vld [vmem:[%s69 + $0x68] sm:$0xff]
        %v4439 = vld [vmem:[%s69 + $0x70] sm:$0xff]
        %v4440 = vld [vmem:[%s69 + $0x78] sm:$0xff]
        %v4441 = vpack.c.bf16 %v4422, %v4421
        %v4442 = vpack.c.bf16 %v4424, %v4423
        %v4459 = vunpack.c.l.b16 %v4425
        %v4460 = vunpack.c.h.b16 %v4425
        %v4461 = vunpack.c.l.b16 %v4426
        %v4462 = vunpack.c.h.b16 %v4426
        %v4463 = vunpack.c.l.b16 %v4427
        %v4464 = vunpack.c.h.b16 %v4427
        %v4465 = vunpack.c.l.b16 %v4428
        %v4466 = vunpack.c.h.b16 %v4428
        %v4467 = vunpack.c.l.b16 %v4429
        %v4468 = vunpack.c.h.b16 %v4429
        %v4469 = vunpack.c.l.b16 %v4430
        %v4470 = vunpack.c.h.b16 %v4430
        %v4471 = vunpack.c.l.b16 %v4431
        %v4472 = vunpack.c.h.b16 %v4431
        %v4473 = vunpack.c.l.b16 %v4432
        %v4474 = vunpack.c.h.b16 %v4432
        %v4475 = vunpack.c.l.b16 %v4433
        %v4476 = vunpack.c.h.b16 %v4433
        %v4477 = vunpack.c.l.b16 %v4434
        %v4478 = vunpack.c.h.b16 %v4434
        %v4479 = vunpack.c.l.b16 %v4435
        %v4480 = vunpack.c.h.b16 %v4435
        %v4481 = vunpack.c.l.b16 %v4436
        %v4482 = vunpack.c.h.b16 %v4436
        %v4483 = vunpack.c.l.b16 %v4437
        %v4484 = vunpack.c.h.b16 %v4437
        %v4485 = vunpack.c.l.b16 %v4438
        %v4486 = vunpack.c.h.b16 %v4438
        %v4487 = vunpack.c.l.b16 %v4439
        %v4488 = vunpack.c.h.b16 %v4439
        %v4489 = vunpack.c.l.b16 %v4440
        %v4490 = vunpack.c.h.b16 %v4440
        %v4491 = vpack.c.b16 %v4461, %v4459
        %v4492 = vpack.c.b16 %v4462, %v4460
        %v4493 = vpack.c.b16 %v4465, %v4463
        %v4494 = vpack.c.b16 %v4466, %v4464
        %v4495 = vpack.c.b16 %v4469, %v4467
        %v4496 = vpack.c.b16 %v4470, %v4468
        %v4497 = vpack.c.b16 %v4473, %v4471
        %v4498 = vpack.c.b16 %v4474, %v4472
        %v4499 = vpack.c.b16 %v4477, %v4475
        %v4500 = vpack.c.b16 %v4478, %v4476
        %v4501 = vpack.c.b16 %v4481, %v4479
        %v4502 = vpack.c.b16 %v4482, %v4480
        %v4503 = vpack.c.b16 %v4485, %v4483
        %v4504 = vpack.c.b16 %v4486, %v4484
        %v4505 = vpack.c.b16 %v4489, %v4487
        %v4506 = vpack.c.b16 %v4490, %v4488
        %4523 = vmatprep.subr.bf16.mxu0 %v4506
        %4524 = vmatpush1.bf16.msra.mxu0 %v4505
        %4525 = vmatprep.subr.bf16.mxu0 %v4504
        %4526 = vmatpush1.bf16.msra.mxu0 %v4503
        %4527 = vmatprep.subr.bf16.mxu0 %v4502
        %4528 = vmatpush1.bf16.msra.mxu0 %v4501
        %4529 = vmatprep.subr.bf16.mxu0 %v4500
        %4530 = vmatpush1.bf16.msra.mxu0 %v4499
        %4531 = vmatprep.subr.bf16.mxu0 %v4498
        %4532 = vmatpush1.bf16.msra.mxu0 %v4497
        %4533 = vmatprep.subr.bf16.mxu0 %v4496
        %4534 = vmatpush1.bf16.msra.mxu0 %v4495
        %4535 = vmatprep.subr.bf16.mxu0 %v4494
        %4536 = vmatpush1.bf16.msra.mxu0 %v4493
        %4537 = vmatprep.subr.bf16.mxu0 %v4492
        %4538 = vmatpush1.bf16.msra.mxu0 %v4491
        %4539 = vmatprep.subr.bf16.mxu0 0
        %4540 = vmatpush2.bf16.msra.mxu0 0
        %4541 = vmatprep.subr.bf16.mxu0 0
        %4542 = vmatpush2.bf16.msra.mxu0 0
        %4543 = vmatprep.subr.bf16.mxu0 0
        %4544 = vmatpush2.bf16.msra.mxu0 0
        %4545 = vmatprep.subr.bf16.mxu0 0
        %4546 = vmatpush2.bf16.msra.mxu0 0
        %4547 = vmatprep.subr.bf16.mxu0 0
        %4548 = vmatpush2.bf16.msra.mxu0 0
        %4549 = vmatprep.subr.bf16.mxu0 0
        %4550 = vmatpush2.bf16.msra.mxu0 0
        %4551 = vmatprep.subr.bf16.mxu0 0
        %4552 = vmatpush2.bf16.msra.mxu0 0
        %4553 = vmatprep.subr.bf16.mxu0 0
        %4554 = vmatpush2.bf16.msra.mxu0 0
        %4555 = vmatprep.mubr.bf16.mxu0 0
        %4556 = vmatmul.mubr.bf16.gmra.mxu0 %v4441
        %v4557 = vpop.f32.mrf.mxu0
        %v4558 = vadd.f32 0.0, %v4557
        %v4559 = vpop.f32.mrf.mxu0
        %v4560 = vadd.f32 0.0, %v4559
        %v4561 = vpop.f32.mrf.mxu0
        %v4562 = vadd.f32 0.0, %v4561
        %v4563 = vpop.f32.mrf.mxu0
        %v4564 = vadd.f32 0.0, %v4563
        %4565 = vmatprep.mubr.bf16.mxu0 0
        %4566 = vmatmul.mubr.bf16.gmra.mxu0 %v4442
        %v4567 = vpop.f32.mrf.mxu0
        %v4568 = vadd.f32 0.0, %v4567
        %v4569 = vpop.f32.mrf.mxu0
        %v4570 = vadd.f32 0.0, %v4569
        %v4571 = vpop.f32.mrf.mxu0
        %v4572 = vadd.f32 0.0, %v4571
        %v4573 = vpop.f32.mrf.mxu0
        %v4574 = vadd.f32 0.0, %v4573
        %4575 = vdwg.mxu0
        %v4576 = vpack.c.bf16 %v4562, %v4558
        %v4577 = vpack.c.bf16 %v4564, %v4560
        %v4578 = vpack.c.bf16 %v4572, %v4568
        %v4579 = vpack.c.bf16 %v4574, %v4570
        %v4580 = vld [vmem:[#allocation36] sm:$0x3]
        %v4582 = vlaneseq
        %v4583 = vshrl.u32 %v4582, 7
        %v4584 = vsub.s32 0, %v4583
        %v4585 = vrot.slane %v4580, %v4584
        %v4586 = vlaneseq
        %v4587 = vshrl.u32 %v4586, 7
        %v4588 = vsub.s32 1, %v4587
        %v4589 = vrot.slane %v4580, %v4588
        %4592 = vmatprep.subr.bf16.mxu0 0
        %4593 = vmatpush1.bf16.msra.mxu0 0
        %4594 = vmatprep.subr.bf16.mxu0 0
        %4595 = vmatpush1.bf16.msra.mxu0 0
        %4596 = vmatprep.subr.bf16.mxu0 0
        %4597 = vmatpush1.bf16.msra.mxu0 0
        %4598 = vmatprep.subr.bf16.mxu0 0
        %4599 = vmatpush1.bf16.msra.mxu0 0
        %4600 = vmatprep.subr.bf16.mxu0 0
        %4601 = vmatpush1.bf16.msra.mxu0 0
        %4602 = vmatprep.subr.bf16.mxu0 0
        %4603 = vmatpush1.bf16.msra.mxu0 0
        %4604 = vmatprep.subr.bf16.mxu0 %v4579
        %4605 = vmatpush1.bf16.msra.mxu0 %v4578
        %4606 = vmatprep.subr.bf16.mxu0 %v4577
        %4607 = vmatpush1.bf16.msra.mxu0 %v4576
        %4608 = vmatprep.subr.bf16.mxu0 0
        %4609 = vmatpush2.bf16.msra.mxu0 0
        %4610 = vmatprep.subr.bf16.mxu0 0
        %4611 = vmatpush2.bf16.msra.mxu0 0
        %4612 = vmatprep.subr.bf16.mxu0 0
        %4613 = vmatpush2.bf16.msra.mxu0 0
        %4614 = vmatprep.subr.bf16.mxu0 0
        %4615 = vmatpush2.bf16.msra.mxu0 0
        %4616 = vmatprep.subr.bf16.mxu0 0
        %4617 = vmatpush2.bf16.msra.mxu0 0
        %4618 = vmatprep.subr.bf16.mxu0 0
        %4619 = vmatpush2.bf16.msra.mxu0 0
        %4620 = vmatprep.subr.bf16.mxu0 0
        %4621 = vmatpush2.bf16.msra.mxu0 0
        %4622 = vmatprep.subr.bf16.mxu0 0
        %4623 = vmatpush2.bf16.msra.mxu0 0
        %4624 = vmatprep.mubr.bf16.mxu0 0
        %4625 = vmatmul.mubr.bf16.gmra.mxu0 %v2158
        %v4626 = vpop.f32.mrf.mxu0
        %v4627 = vadd.f32 %v4585, %v4626
        %v4628 = vpop.f32.mrf.mxu0
        %v4629 = vadd.f32 %v4589, %v4628
        %v4630 = vpop.f32.mrf.mxu0
        %v4631 = vadd.f32 %v4585, %v4630
        %v4632 = vpop.f32.mrf.mxu0
        %v4633 = vadd.f32 %v4589, %v4632
        %4634 = vmatprep.mubr.bf16.mxu0 0
        %4635 = vmatmul.mubr.bf16.gmra.mxu0 %v2161
        %v4636 = vpop.f32.mrf.mxu0
        %v4637 = vadd.f32 %v4585, %v4636
        %v4638 = vpop.f32.mrf.mxu0
        %v4639 = vadd.f32 %v4589, %v4638
        %v4640 = vpop.f32.mrf.mxu0
        %v4641 = vadd.f32 %v4585, %v4640
        %v4642 = vpop.f32.mrf.mxu0
        %v4643 = vadd.f32 %v4589, %v4642
        %4644 = vdwg.mxu0
        %v4645 = vmax.f32 %v4627, 0.0
        %v4646 = vmax.f32 %v4629, 0.0
        %v4647 = vmax.f32 %v4631, 0.0
        %v4648 = vmax.f32 %v4633, 0.0
        %v4649 = vmax.f32 %v4637, 0.0
        %v4650 = vmax.f32 %v4639, 0.0
        %v4651 = vmax.f32 %v4641, 0.0
        %v4652 = vmax.f32 %v4643, 0.0
        %v4653 = vld [vmem:[%s73] sm:$0xf]
        %v4654 = vld [vmem:[%s73 + $0x4] sm:$0xf]
        %v4655 = vld [vmem:[%s73 + $0x8] sm:$0xf]
        %v4656 = vld [vmem:[%s73 + $0xc] sm:$0xf]
        %v4657 = vld [vmem:[%s73 + $0x10] sm:$0xf]
        %v4658 = vld [vmem:[%s73 + $0x14] sm:$0xf]
        %v4659 = vld [vmem:[%s73 + $0x18] sm:$0xf]
        %v4660 = vld [vmem:[%s73 + $0x1c] sm:$0xf]
        %v4661 = vld [vmem:[%s73 + $0x20] sm:$0xf]
        %v4662 = vld [vmem:[%s73 + $0x24] sm:$0xf]
        %v4663 = vld [vmem:[%s73 + $0x28] sm:$0xf]
        %v4664 = vld [vmem:[%s73 + $0x2c] sm:$0xf]
        %v4665 = vld [vmem:[%s73 + $0x30] sm:$0xf]
        %v4666 = vld [vmem:[%s73 + $0x34] sm:$0xf]
        %v4667 = vld [vmem:[%s73 + $0x38] sm:$0xf]
        %v4668 = vld [vmem:[%s73 + $0x3c] sm:$0xf]
        %v4669 = vld [vmem:[%s73 + $0x40] sm:$0xf]
        %v4670 = vld [vmem:[%s73 + $0x44] sm:$0xf]
        %v4671 = vld [vmem:[%s73 + $0x48] sm:$0xf]
        %v4672 = vld [vmem:[%s73 + $0x4c] sm:$0xf]
        %v4673 = vld [vmem:[%s73 + $0x50] sm:$0xf]
        %v4674 = vld [vmem:[%s73 + $0x54] sm:$0xf]
        %v4675 = vld [vmem:[%s73 + $0x58] sm:$0xf]
        %v4676 = vld [vmem:[%s73 + $0x5c] sm:$0xf]
        %v4677 = vld [vmem:[%s73 + $0x60] sm:$0xf]
        %v4678 = vld [vmem:[%s73 + $0x64] sm:$0xf]
        %v4679 = vld [vmem:[%s73 + $0x68] sm:$0xf]
        %v4680 = vld [vmem:[%s73 + $0x6c] sm:$0xf]
        %v4681 = vld [vmem:[%s73 + $0x70] sm:$0xf]
        %v4682 = vld [vmem:[%s73 + $0x74] sm:$0xf]
        %v4683 = vld [vmem:[%s73 + $0x78] sm:$0xf]
        %v4684 = vld [vmem:[%s73 + $0x7c] sm:$0xf]
        %v4685 = vpack.c.bf16 %v4647, %v4645
        %v4686 = vpack.c.bf16 %v4648, %v4646
        %v4687 = vpack.c.bf16 %v4651, %v4649
        %v4688 = vpack.c.bf16 %v4652, %v4650
        %v4689 = vld [vmem:[#allocation37] sm:$0x1]
        %v4691 = vlaneseq
        %v4692 = vshrl.u32 %v4691, 7
        %v4693 = vsub.s32 0, %v4692
        %v4694 = vrot.slane %v4689, %v4693
        %v4728 = vunpack.c.l.b16 %v4653
        %v4729 = vunpack.c.l.b16 %v4654
        %v4730 = vunpack.c.l.b16 %v4655
        %v4731 = vunpack.c.l.b16 %v4656
        %v4732 = vunpack.c.l.b16 %v4657
        %v4733 = vunpack.c.l.b16 %v4658
        %v4734 = vunpack.c.l.b16 %v4659
        %v4735 = vunpack.c.l.b16 %v4660
        %v4736 = vunpack.c.l.b16 %v4661
        %v4737 = vunpack.c.l.b16 %v4662
        %v4738 = vunpack.c.l.b16 %v4663
        %v4739 = vunpack.c.l.b16 %v4664
        %v4740 = vunpack.c.l.b16 %v4665
        %v4741 = vunpack.c.l.b16 %v4666
        %v4742 = vunpack.c.l.b16 %v4667
        %v4743 = vunpack.c.l.b16 %v4668
        %v4744 = vunpack.c.l.b16 %v4669
        %v4745 = vunpack.c.l.b16 %v4670
        %v4746 = vunpack.c.l.b16 %v4671
        %v4747 = vunpack.c.l.b16 %v4672
        %v4748 = vunpack.c.l.b16 %v4673
        %v4749 = vunpack.c.l.b16 %v4674
        %v4750 = vunpack.c.l.b16 %v4675
        %v4751 = vunpack.c.l.b16 %v4676
        %v4752 = vunpack.c.l.b16 %v4677
        %v4753 = vunpack.c.l.b16 %v4678
        %v4754 = vunpack.c.l.b16 %v4679
        %v4755 = vunpack.c.l.b16 %v4680
        %v4756 = vunpack.c.l.b16 %v4681
        %v4757 = vunpack.c.l.b16 %v4682
        %v4758 = vunpack.c.l.b16 %v4683
        %v4759 = vunpack.c.l.b16 %v4684
        %v4760 = vpack.c.b16 %v4729, %v4728
        %v4761 = vpack.c.b16 %v4731, %v4730
        %v4762 = vpack.c.b16 %v4733, %v4732
        %v4763 = vpack.c.b16 %v4735, %v4734
        %v4764 = vpack.c.b16 %v4737, %v4736
        %v4765 = vpack.c.b16 %v4739, %v4738
        %v4766 = vpack.c.b16 %v4741, %v4740
        %v4767 = vpack.c.b16 %v4743, %v4742
        %v4768 = vpack.c.b16 %v4745, %v4744
        %v4769 = vpack.c.b16 %v4747, %v4746
        %v4770 = vpack.c.b16 %v4749, %v4748
        %v4771 = vpack.c.b16 %v4751, %v4750
        %v4772 = vpack.c.b16 %v4753, %v4752
        %v4773 = vpack.c.b16 %v4755, %v4754
        %v4774 = vpack.c.b16 %v4757, %v4756
        %v4775 = vpack.c.b16 %v4759, %v4758
        %4792 = vmatprep.subr.bf16.mxu0 0
        %4793 = vmatpush1.bf16.msra.mxu0 %v4767
        %4794 = vmatprep.subr.bf16.mxu0 0
        %4795 = vmatpush1.bf16.msra.mxu0 %v4766
        %4796 = vmatprep.subr.bf16.mxu0 0
        %4797 = vmatpush1.bf16.msra.mxu0 %v4765
        %4798 = vmatprep.subr.bf16.mxu0 0
        %4799 = vmatpush1.bf16.msra.mxu0 %v4764
        %4800 = vmatprep.subr.bf16.mxu0 0
        %4801 = vmatpush1.bf16.msra.mxu0 %v4763
        %4802 = vmatprep.subr.bf16.mxu0 0
        %4803 = vmatpush1.bf16.msra.mxu0 %v4762
        %4804 = vmatprep.subr.bf16.mxu0 0
        %4805 = vmatpush1.bf16.msra.mxu0 %v4761
        %4806 = vmatprep.subr.bf16.mxu0 0
        %4807 = vmatpush1.bf16.msra.mxu0 %v4760
        %4808 = vmatprep.subr.bf16.mxu0 0
        %4809 = vmatpush2.bf16.msra.mxu0 %v4775
        %4810 = vmatprep.subr.bf16.mxu0 0
        %4811 = vmatpush2.bf16.msra.mxu0 %v4774
        %4812 = vmatprep.subr.bf16.mxu0 0
        %4813 = vmatpush2.bf16.msra.mxu0 %v4773
        %4814 = vmatprep.subr.bf16.mxu0 0
        %4815 = vmatpush2.bf16.msra.mxu0 %v4772
        %4816 = vmatprep.subr.bf16.mxu0 0
        %4817 = vmatpush2.bf16.msra.mxu0 %v4771
        %4818 = vmatprep.subr.bf16.mxu0 0
        %4819 = vmatpush2.bf16.msra.mxu0 %v4770
        %4820 = vmatprep.subr.bf16.mxu0 0
        %4821 = vmatpush2.bf16.msra.mxu0 %v4769
        %4822 = vmatprep.subr.bf16.mxu0 0
        %4823 = vmatpush2.bf16.msra.mxu0 %v4768
        %4824 = vmatprep.mubr.bf16.mxu0 %v4686
        %4825 = vmatmul.mubr.bf16.gmra.mxu0 %v4685
        %v4826 = vpop.f32.mrf.mxu0
        %v4827 = vadd.f32 %v4694, %v4826
        %v4828 = vpop.f32.mrf.mxu0
        %v4829 = vpop.f32.mrf.mxu0
        %v4830 = vadd.f32 %v4694, %v4829
        %v4831 = vpop.f32.mrf.mxu0
        %4832 = vmatprep.mubr.bf16.mxu0 %v4688
        %4833 = vmatmul.mubr.bf16.gmra.mxu0 %v4687
        %v4834 = vpop.f32.mrf.mxu0
        %v4835 = vadd.f32 %v4694, %v4834
        %v4836 = vpop.f32.mrf.mxu0
        %v4837 = vpop.f32.mrf.mxu0
        %v4838 = vadd.f32 %v4694, %v4837
        %v4839 = vpop.f32.mrf.mxu0
        %4840 = vdwg.mxu0
        %v4841 = vmax.f32 %v4827, 0.0
        %v4842 = vmax.f32 %v4830, 0.0
        %v4843 = vmax.f32 %v4835, 0.0
        %v4844 = vmax.f32 %v4838, 0.0
        %v4845 = vld [vmem:[#allocation39] sm:$0xf]
        %v4846 = vld [vmem:[#allocation39 + $0x4] sm:$0xf]
        %v4847 = vld [vmem:[#allocation39 + $0x8] sm:$0xf]
        %v4848 = vld [vmem:[#allocation39 + $0xc] sm:$0xf]
        %v4849 = vld [vmem:[#allocation39 + $0x10] sm:$0xf]
        %v4850 = vld [vmem:[#allocation39 + $0x14] sm:$0xf]
        %v4851 = vld [vmem:[#allocation39 + $0x18] sm:$0xf]
        %v4852 = vld [vmem:[#allocation39 + $0x1c] sm:$0xf]
        %v4853 = vld [vmem:[#allocation39 + $0x20] sm:$0xf]
        %v4854 = vld [vmem:[#allocation39 + $0x24] sm:$0xf]
        %v4855 = vld [vmem:[#allocation39 + $0x28] sm:$0xf]
        %v4856 = vld [vmem:[#allocation39 + $0x2c] sm:$0xf]
        %v4857 = vld [vmem:[#allocation39 + $0x30] sm:$0xf]
        %v4858 = vld [vmem:[#allocation39 + $0x34] sm:$0xf]
        %v4859 = vld [vmem:[#allocation39 + $0x38] sm:$0xf]
        %v4860 = vld [vmem:[#allocation39 + $0x3c] sm:$0xf]
        %v4861 = vld [vmem:[#allocation40] sm:$0x1]
        %v4863 = vlaneseq
        %v4864 = vshrl.u32 %v4863, 7
        %v4865 = vsub.s32 0, %v4864
        %v4866 = vrot.slane %v4861, %v4865
        %v4884 = vunpack.c.l.b16 %v4845
        %v4885 = vunpack.c.l.b16 %v4846
        %v4886 = vunpack.c.l.b16 %v4847
        %v4887 = vunpack.c.l.b16 %v4848
        %v4888 = vunpack.c.l.b16 %v4849
        %v4889 = vunpack.c.l.b16 %v4850
        %v4890 = vunpack.c.l.b16 %v4851
        %v4891 = vunpack.c.l.b16 %v4852
        %v4892 = vunpack.c.l.b16 %v4853
        %v4893 = vunpack.c.l.b16 %v4854
        %v4894 = vunpack.c.l.b16 %v4855
        %v4895 = vunpack.c.l.b16 %v4856
        %v4896 = vunpack.c.l.b16 %v4857
        %v4897 = vunpack.c.l.b16 %v4858
        %v4898 = vunpack.c.l.b16 %v4859
        %v4899 = vunpack.c.l.b16 %v4860
        %v4900 = vpack.c.b16 %v4885, %v4884
        %v4901 = vpack.c.b16 %v4887, %v4886
        %v4902 = vpack.c.b16 %v4889, %v4888
        %v4903 = vpack.c.b16 %v4891, %v4890
        %v4904 = vpack.c.b16 %v4893, %v4892
        %v4905 = vpack.c.b16 %v4895, %v4894
        %v4906 = vpack.c.b16 %v4897, %v4896
        %v4907 = vpack.c.b16 %v4899, %v4898
        %4916 = vmatprep.subr.bf16.mxu0 0
        %4917 = vmatpush1.bf16.msra.mxu0 %v4907
        %4918 = vmatprep.subr.bf16.mxu0 0
        %4919 = vmatpush1.bf16.msra.mxu0 %v4906
        %4920 = vmatprep.subr.bf16.mxu0 0
        %4921 = vmatpush1.bf16.msra.mxu0 %v4905
        %4922 = vmatprep.subr.bf16.mxu0 0
        %4923 = vmatpush1.bf16.msra.mxu0 %v4904
        %4924 = vmatprep.subr.bf16.mxu0 0
        %4925 = vmatpush1.bf16.msra.mxu0 %v4903
        %4926 = vmatprep.subr.bf16.mxu0 0
        %4927 = vmatpush1.bf16.msra.mxu0 %v4902
        %4928 = vmatprep.subr.bf16.mxu0 0
        %4929 = vmatpush1.bf16.msra.mxu0 %v4901
        %4930 = vmatprep.subr.bf16.mxu0 0
        %4931 = vmatpush1.bf16.msra.mxu0 %v4900
        %4932 = vmatprep.subr.bf16.mxu0 0
        %4933 = vmatpush2.bf16.msra.mxu0 0
        %4934 = vmatprep.subr.bf16.mxu0 0
        %4935 = vmatpush2.bf16.msra.mxu0 0
        %4936 = vmatprep.subr.bf16.mxu0 0
        %4937 = vmatpush2.bf16.msra.mxu0 0
        %4938 = vmatprep.subr.bf16.mxu0 0
        %4939 = vmatpush2.bf16.msra.mxu0 0
        %4940 = vmatprep.subr.bf16.mxu0 0
        %4941 = vmatpush2.bf16.msra.mxu0 0
        %4942 = vmatprep.subr.bf16.mxu0 0
        %4943 = vmatpush2.bf16.msra.mxu0 0
        %4944 = vmatprep.subr.bf16.mxu0 0
        %4945 = vmatpush2.bf16.msra.mxu0 0
        %4946 = vmatprep.subr.bf16.mxu0 0
        %4947 = vmatpush2.bf16.msra.mxu0 0
        %4948 = vmatprep.mubr.bf16.mxu0 0
        %4949 = vmatmul.mubr.bf16.gmra.mxu0 %v4441
        %v4950 = vpop.f32.mrf.mxu0
        %v4951 = vadd.f32 %v4866, %v4950
        %v4952 = vpop.f32.mrf.mxu0
        %v4953 = vpop.f32.mrf.mxu0
        %v4954 = vadd.f32 %v4866, %v4953
        %v4955 = vpop.f32.mrf.mxu0
        %4956 = vmatprep.mubr.bf16.mxu0 0
        %4957 = vmatmul.mubr.bf16.gmra.mxu0 %v4442
        %v4958 = vpop.f32.mrf.mxu0
        %v4959 = vadd.f32 %v4866, %v4958
        %v4960 = vpop.f32.mrf.mxu0
        %v4961 = vpop.f32.mrf.mxu0
        %v4962 = vadd.f32 %v4866, %v4961
        %v4963 = vpop.f32.mrf.mxu0
        %4964 = vdwg.mxu0
        %v4965 = vmax.f32 %v4951, 0.0
        %v4966 = vmax.f32 %v4954, 0.0
        %v4967 = vmax.f32 %v4959, 0.0
        %v4968 = vmax.f32 %v4962, 0.0
        %v4969 = vadd.f32 %v4841, %v4965
        %v4970 = vadd.f32 %v4842, %v4966
        %v4971 = vadd.f32 %v4843, %v4967
        %v4972 = vadd.f32 %v4844, %v4968
        %v4973 = vld [vmem:[#allocation42] sm:$0xf]
        %v4974 = vld [vmem:[#allocation42 + $0x4] sm:$0xf]
        %v4975 = vld [vmem:[#allocation42 + $0x8] sm:$0xf]
        %v4976 = vld [vmem:[#allocation42 + $0xc] sm:$0xf]
        %v4977 = vld [vmem:[#allocation42 + $0x10] sm:$0xf]
        %v4978 = vld [vmem:[#allocation42 + $0x14] sm:$0xf]
        %v4979 = vld [vmem:[#allocation42 + $0x18] sm:$0xf]
        %v4980 = vld [vmem:[#allocation42 + $0x1c] sm:$0xf]
        %v4981 = vld [vmem:[#allocation42 + $0x20] sm:$0xf]
        %v4982 = vld [vmem:[#allocation42 + $0x24] sm:$0xf]
        %v4983 = vld [vmem:[#allocation42 + $0x28] sm:$0xf]
        %v4984 = vld [vmem:[#allocation42 + $0x2c] sm:$0xf]
        %v4985 = vld [vmem:[#allocation42 + $0x30] sm:$0xf]
        %v4986 = vld [vmem:[#allocation42 + $0x34] sm:$0xf]
        %v4987 = vld [vmem:[#allocation42 + $0x38] sm:$0xf]
        %v4988 = vld [vmem:[#allocation42 + $0x3c] sm:$0xf]
        %v4989 = vpack.c.bf16 %v4970, %v4969
        %v4990 = vpack.c.bf16 %v4972, %v4971
        %v5007 = vunpack.c.l.b16 %v4973
        %v5008 = vunpack.c.l.b16 %v4974
        %v5009 = vunpack.c.l.b16 %v4975
        %v5010 = vunpack.c.l.b16 %v4976
        %v5011 = vunpack.c.l.b16 %v4977
        %v5012 = vunpack.c.l.b16 %v4978
        %v5013 = vunpack.c.l.b16 %v4979
        %v5014 = vunpack.c.l.b16 %v4980
        %v5015 = vunpack.c.l.b16 %v4981
        %v5016 = vunpack.c.l.b16 %v4982
        %v5017 = vunpack.c.l.b16 %v4983
        %v5018 = vunpack.c.l.b16 %v4984
        %v5019 = vunpack.c.l.b16 %v4985
        %v5020 = vunpack.c.l.b16 %v4986
        %v5021 = vunpack.c.l.b16 %v4987
        %v5022 = vunpack.c.l.b16 %v4988
        %v5023 = vpack.c.b16 %v5008, %v5007
        %v5024 = vpack.c.b16 %v5010, %v5009
        %v5025 = vpack.c.b16 %v5012, %v5011
        %v5026 = vpack.c.b16 %v5014, %v5013
        %v5027 = vpack.c.b16 %v5016, %v5015
        %v5028 = vpack.c.b16 %v5018, %v5017
        %v5029 = vpack.c.b16 %v5020, %v5019
        %v5030 = vpack.c.b16 %v5022, %v5021
        %5039 = vmatprep.subr.bf16.mxu0 0
        %5040 = vmatpush1.bf16.msra.mxu0 %v5030
        %5041 = vmatprep.subr.bf16.mxu0 0
        %5042 = vmatpush1.bf16.msra.mxu0 %v5029
        %5043 = vmatprep.subr.bf16.mxu0 0
        %5044 = vmatpush1.bf16.msra.mxu0 %v5028
        %5045 = vmatprep.subr.bf16.mxu0 0
        %5046 = vmatpush1.bf16.msra.mxu0 %v5027
        %5047 = vmatprep.subr.bf16.mxu0 0
        %5048 = vmatpush1.bf16.msra.mxu0 %v5026
        %5049 = vmatprep.subr.bf16.mxu0 0
        %5050 = vmatpush1.bf16.msra.mxu0 %v5025
        %5051 = vmatprep.subr.bf16.mxu0 0
        %5052 = vmatpush1.bf16.msra.mxu0 %v5024
        %5053 = vmatprep.subr.bf16.mxu0 0
        %5054 = vmatpush1.bf16.msra.mxu0 %v5023
        %5055 = vmatprep.subr.bf16.mxu0 0
        %5056 = vmatpush2.bf16.msra.mxu0 0
        %5057 = vmatprep.subr.bf16.mxu0 0
        %5058 = vmatpush2.bf16.msra.mxu0 0
        %5059 = vmatprep.subr.bf16.mxu0 0
        %5060 = vmatpush2.bf16.msra.mxu0 0
        %5061 = vmatprep.subr.bf16.mxu0 0
        %5062 = vmatpush2.bf16.msra.mxu0 0
        %5063 = vmatprep.subr.bf16.mxu0 0
        %5064 = vmatpush2.bf16.msra.mxu0 0
        %5065 = vmatprep.subr.bf16.mxu0 0
        %5066 = vmatpush2.bf16.msra.mxu0 0
        %5067 = vmatprep.subr.bf16.mxu0 0
        %5068 = vmatpush2.bf16.msra.mxu0 0
        %5069 = vmatprep.subr.bf16.mxu0 0
        %5070 = vmatpush2.bf16.msra.mxu0 0
        %5071 = vmatprep.mubr.bf16.mxu0 0
        %5072 = vmatmul.mubr.bf16.gmra.mxu0 %v4989
        %v5073 = vpop.f32.mrf.mxu0
        %v5074 = vadd.f32 0.0, %v5073
        %v5075 = vpop.f32.mrf.mxu0
        %v5076 = vpop.f32.mrf.mxu0
        %v5077 = vadd.f32 0.0, %v5076
        %v5078 = vpop.f32.mrf.mxu0
        %5079 = vmatprep.mubr.bf16.mxu0 0
        %5080 = vmatmul.mubr.bf16.gmra.mxu0 %v4990
        %v5081 = vpop.f32.mrf.mxu0
        %v5082 = vadd.f32 0.0, %v5081
        %v5083 = vpop.f32.mrf.mxu0
        %v5084 = vpop.f32.mrf.mxu0
        %v5085 = vadd.f32 0.0, %v5084
        %v5086 = vpop.f32.mrf.mxu0
        %5087 = vdwg.mxu0
        %v5088 = vpack.c.bf16 %v5077, %v5074
        %v5089 = vpack.c.bf16 %v5085, %v5082
        %v5090 = vld [vmem:[#allocation43] sm:$0x1]
        %v5092 = vlaneseq
        %v5093 = vshrl.u32 %v5092, 7
        %v5094 = vsub.s32 0, %v5093
        %v5095 = vrot.slane %v5090, %v5094
        %5097 = vmatprep.subr.bf16.mxu0 0
        %5098 = vmatpush1.bf16.msra.mxu0 0
        %5099 = vmatprep.subr.bf16.mxu0 0
        %5100 = vmatpush1.bf16.msra.mxu0 0
        %5101 = vmatprep.subr.bf16.mxu0 0
        %5102 = vmatpush1.bf16.msra.mxu0 0
        %5103 = vmatprep.subr.bf16.mxu0 0
        %5104 = vmatpush1.bf16.msra.mxu0 0
        %5105 = vmatprep.subr.bf16.mxu0 0
        %5106 = vmatpush1.bf16.msra.mxu0 0
        %5107 = vmatprep.subr.bf16.mxu0 0
        %5108 = vmatpush1.bf16.msra.mxu0 0
        %5109 = vmatprep.subr.bf16.mxu0 0
        %5110 = vmatpush1.bf16.msra.mxu0 %v5089
        %5111 = vmatprep.subr.bf16.mxu0 0
        %5112 = vmatpush1.bf16.msra.mxu0 %v5088
        %5113 = vmatprep.subr.bf16.mxu0 0
        %5114 = vmatpush2.bf16.msra.mxu0 0
        %5115 = vmatprep.subr.bf16.mxu0 0
        %5116 = vmatpush2.bf16.msra.mxu0 0
        %5117 = vmatprep.subr.bf16.mxu0 0
        %5118 = vmatpush2.bf16.msra.mxu0 0
        %5119 = vmatprep.subr.bf16.mxu0 0
        %5120 = vmatpush2.bf16.msra.mxu0 0
        %5121 = vmatprep.subr.bf16.mxu0 0
        %5122 = vmatpush2.bf16.msra.mxu0 0
        %5123 = vmatprep.subr.bf16.mxu0 0
        %5124 = vmatpush2.bf16.msra.mxu0 0
        %5125 = vmatprep.subr.bf16.mxu0 0
        %5126 = vmatpush2.bf16.msra.mxu0 0
        %5127 = vmatprep.subr.bf16.mxu0 0
        %5128 = vmatpush2.bf16.msra.mxu0 0
        %5129 = vmatprep.mubr.bf16.mxu0 0
        %5130 = vmatmul.mubr.bf16.gmra.mxu0 %v2158
        %v5131 = vpop.f32.mrf.mxu0
        %v5132 = vadd.f32 %v5095, %v5131
        %v5133 = vpop.f32.mrf.mxu0
        %v5134 = vpop.f32.mrf.mxu0
        %v5135 = vadd.f32 %v5095, %v5134
        %v5136 = vpop.f32.mrf.mxu0
        %5137 = vmatprep.mubr.bf16.mxu0 0
        %5138 = vmatmul.mubr.bf16.gmra.mxu0 %v2161
        %v5139 = vpop.f32.mrf.mxu0
        %v5140 = vadd.f32 %v5095, %v5139
        %v5141 = vpop.f32.mrf.mxu0
        %v5142 = vpop.f32.mrf.mxu0
        %v5143 = vadd.f32 %v5095, %v5142
        %v5144 = vpop.f32.mrf.mxu0
        %5145 = vdwg.mxu0
        %v5146 = vmax.f32 %v5132, 0.0
        %v5147 = vmax.f32 %v5135, 0.0
        %v5148 = vmax.f32 %v5140, 0.0
        %v5149 = vmax.f32 %v5143, 0.0
        %v5150 = vld [vmem:[#allocation45] sm:$0xf]
        %v5151 = vld [vmem:[#allocation45 + $0x4] sm:$0xf]
        %v5152 = vld [vmem:[#allocation45 + $0x8] sm:$0xf]
        %v5153 = vld [vmem:[#allocation45 + $0xc] sm:$0xf]
        %v5154 = vld [vmem:[#allocation45 + $0x10] sm:$0xf]
        %v5155 = vld [vmem:[#allocation45 + $0x14] sm:$0xf]
        %v5156 = vld [vmem:[#allocation45 + $0x18] sm:$0xf]
        %v5157 = vld [vmem:[#allocation45 + $0x1c] sm:$0xf]
        %v5158 = vld [vmem:[#allocation45 + $0x20] sm:$0xf]
        %v5159 = vld [vmem:[#allocation45 + $0x24] sm:$0xf]
        %v5160 = vld [vmem:[#allocation45 + $0x28] sm:$0xf]
        %v5161 = vld [vmem:[#allocation45 + $0x2c] sm:$0xf]
        %v5162 = vld [vmem:[#allocation45 + $0x30] sm:$0xf]
        %v5163 = vld [vmem:[#allocation45 + $0x34] sm:$0xf]
        %v5164 = vld [vmem:[#allocation45 + $0x38] sm:$0xf]
        %v5165 = vld [vmem:[#allocation45 + $0x3c] sm:$0xf]
        %v5166 = vpack.c.bf16 %v5147, %v5146
        %v5167 = vpack.c.bf16 %v5149, %v5148
        %v5168 = vld [vmem:[#allocation46] sm:$0x1]
        %v5170 = vlaneseq
        %v5171 = vshrl.u32 %v5170, 7
        %v5172 = vsub.s32 0, %v5171
        %v5173 = vrot.slane %v5168, %v5172
        %v5191 = vunpack.c.l.b16 %v5150
        %v5192 = vunpack.c.l.b16 %v5151
        %v5193 = vunpack.c.l.b16 %v5152
        %v5194 = vunpack.c.l.b16 %v5153
        %v5195 = vunpack.c.l.b16 %v5154
        %v5196 = vunpack.c.l.b16 %v5155
        %v5197 = vunpack.c.l.b16 %v5156
        %v5198 = vunpack.c.l.b16 %v5157
        %v5199 = vunpack.c.l.b16 %v5158
        %v5200 = vunpack.c.l.b16 %v5159
        %v5201 = vunpack.c.l.b16 %v5160
        %v5202 = vunpack.c.l.b16 %v5161
        %v5203 = vunpack.c.l.b16 %v5162
        %v5204 = vunpack.c.l.b16 %v5163
        %v5205 = vunpack.c.l.b16 %v5164
        %v5206 = vunpack.c.l.b16 %v5165
        %v5207 = vpack.c.b16 %v5192, %v5191
        %v5208 = vpack.c.b16 %v5194, %v5193
        %v5209 = vpack.c.b16 %v5196, %v5195
        %v5210 = vpack.c.b16 %v5198, %v5197
        %v5211 = vpack.c.b16 %v5200, %v5199
        %v5212 = vpack.c.b16 %v5202, %v5201
        %v5213 = vpack.c.b16 %v5204, %v5203
        %v5214 = vpack.c.b16 %v5206, %v5205
        %5223 = vmatprep.subr.bf16.mxu0 0
        %5224 = vmatpush1.bf16.msra.mxu0 %v5214
        %5225 = vmatprep.subr.bf16.mxu0 0
        %5226 = vmatpush1.bf16.msra.mxu0 %v5213
        %5227 = vmatprep.subr.bf16.mxu0 0
        %5228 = vmatpush1.bf16.msra.mxu0 %v5212
        %5229 = vmatprep.subr.bf16.mxu0 0
        %5230 = vmatpush1.bf16.msra.mxu0 %v5211
        %5231 = vmatprep.subr.bf16.mxu0 0
        %5232 = vmatpush1.bf16.msra.mxu0 %v5210
        %5233 = vmatprep.subr.bf16.mxu0 0
        %5234 = vmatpush1.bf16.msra.mxu0 %v5209
        %5235 = vmatprep.subr.bf16.mxu0 0
        %5236 = vmatpush1.bf16.msra.mxu0 %v5208
        %5237 = vmatprep.subr.bf16.mxu0 0
        %5238 = vmatpush1.bf16.msra.mxu0 %v5207
        %5239 = vmatprep.subr.bf16.mxu0 0
        %5240 = vmatpush2.bf16.msra.mxu0 0
        %5241 = vmatprep.subr.bf16.mxu0 0
        %5242 = vmatpush2.bf16.msra.mxu0 0
        %5243 = vmatprep.subr.bf16.mxu0 0
        %5244 = vmatpush2.bf16.msra.mxu0 0
        %5245 = vmatprep.subr.bf16.mxu0 0
        %5246 = vmatpush2.bf16.msra.mxu0 0
        %5247 = vmatprep.subr.bf16.mxu0 0
        %5248 = vmatpush2.bf16.msra.mxu0 0
        %5249 = vmatprep.subr.bf16.mxu0 0
        %5250 = vmatpush2.bf16.msra.mxu0 0
        %5251 = vmatprep.subr.bf16.mxu0 0
        %5252 = vmatpush2.bf16.msra.mxu0 0
        %5253 = vmatprep.subr.bf16.mxu0 0
        %5254 = vmatpush2.bf16.msra.mxu0 0
        %5255 = vmatprep.mubr.bf16.mxu0 0
        %5256 = vmatmul.mubr.bf16.gmra.mxu0 %v5166
        %v5257 = vpop.f32.mrf.mxu0
        %v5258 = vadd.f32 %v5173, %v5257
        %v5259 = vpop.f32.mrf.mxu0
        %v5260 = vpop.f32.mrf.mxu0
        %v5261 = vadd.f32 %v5173, %v5260
        %v5262 = vpop.f32.mrf.mxu0
        %5263 = vmatprep.mubr.bf16.mxu0 0
        %5264 = vmatmul.mubr.bf16.gmra.mxu0 %v5167
        %v5265 = vpop.f32.mrf.mxu0
        %v5266 = vadd.f32 %v5173, %v5265
        %v5267 = vpop.f32.mrf.mxu0
        %v5268 = vpop.f32.mrf.mxu0
        %v5269 = vadd.f32 %v5173, %v5268
        %v5270 = vpop.f32.mrf.mxu0
        %5271 = vdwg.mxu0
        %v5272 = vmax.f32 %v5258, 0.0
        %v5273 = vmax.f32 %v5261, 0.0
        %v5274 = vmax.f32 %v5266, 0.0
        %v5275 = vmax.f32 %v5269, 0.0
        %v5276 = vadd.f32 %v5272, %v4969
        %v5277 = vadd.f32 %v5273, %v4970
        %v5278 = vadd.f32 %v5274, %v4971
        %v5279 = vadd.f32 %v5275, %v4972
        %v5280 = vld [vmem:[#allocation48] sm:$0xf]
        %v5281 = vld [vmem:[#allocation48 + $0x4] sm:$0xf]
        %v5282 = vld [vmem:[#allocation48 + $0x8] sm:$0xf]
        %v5283 = vld [vmem:[#allocation48 + $0xc] sm:$0xf]
        %v5284 = vld [vmem:[#allocation48 + $0x10] sm:$0xf]
        %v5285 = vld [vmem:[#allocation48 + $0x14] sm:$0xf]
        %v5286 = vld [vmem:[#allocation48 + $0x18] sm:$0xf]
        %v5287 = vld [vmem:[#allocation48 + $0x1c] sm:$0xf]
        %v5288 = vld [vmem:[#allocation48 + $0x20] sm:$0xf]
        %v5289 = vld [vmem:[#allocation48 + $0x24] sm:$0xf]
        %v5290 = vld [vmem:[#allocation48 + $0x28] sm:$0xf]
        %v5291 = vld [vmem:[#allocation48 + $0x2c] sm:$0xf]
        %v5292 = vld [vmem:[#allocation48 + $0x30] sm:$0xf]
        %v5293 = vld [vmem:[#allocation48 + $0x34] sm:$0xf]
        %v5294 = vld [vmem:[#allocation48 + $0x38] sm:$0xf]
        %v5295 = vld [vmem:[#allocation48 + $0x3c] sm:$0xf]
        %v5296 = vpack.c.bf16 %v5277, %v5276
        %v5297 = vpack.c.bf16 %v5279, %v5278
        %v5314 = vunpack.c.l.b16 %v5280
        %v5315 = vunpack.c.l.b16 %v5281
        %v5316 = vunpack.c.l.b16 %v5282
        %v5317 = vunpack.c.l.b16 %v5283
        %v5318 = vunpack.c.l.b16 %v5284
        %v5319 = vunpack.c.l.b16 %v5285
        %v5320 = vunpack.c.l.b16 %v5286
        %v5321 = vunpack.c.l.b16 %v5287
        %v5322 = vunpack.c.l.b16 %v5288
        %v5323 = vunpack.c.l.b16 %v5289
        %v5324 = vunpack.c.l.b16 %v5290
        %v5325 = vunpack.c.l.b16 %v5291
        %v5326 = vunpack.c.l.b16 %v5292
        %v5327 = vunpack.c.l.b16 %v5293
        %v5328 = vunpack.c.l.b16 %v5294
        %v5329 = vunpack.c.l.b16 %v5295
        %v5330 = vpack.c.b16 %v5315, %v5314
        %v5331 = vpack.c.b16 %v5317, %v5316
        %v5332 = vpack.c.b16 %v5319, %v5318
        %v5333 = vpack.c.b16 %v5321, %v5320
        %v5334 = vpack.c.b16 %v5323, %v5322
        %v5335 = vpack.c.b16 %v5325, %v5324
        %v5336 = vpack.c.b16 %v5327, %v5326
        %v5337 = vpack.c.b16 %v5329, %v5328
        %5346 = vmatprep.subr.bf16.mxu0 0
        %5347 = vmatpush1.bf16.msra.mxu0 %v5337
        %5348 = vmatprep.subr.bf16.mxu0 0
        %5349 = vmatpush1.bf16.msra.mxu0 %v5336
        %5350 = vmatprep.subr.bf16.mxu0 0
        %5351 = vmatpush1.bf16.msra.mxu0 %v5335
        %5352 = vmatprep.subr.bf16.mxu0 0
        %5353 = vmatpush1.bf16.msra.mxu0 %v5334
        %5354 = vmatprep.subr.bf16.mxu0 0
        %5355 = vmatpush1.bf16.msra.mxu0 %v5333
        %5356 = vmatprep.subr.bf16.mxu0 0
        %5357 = vmatpush1.bf16.msra.mxu0 %v5332
        %5358 = vmatprep.subr.bf16.mxu0 0
        %5359 = vmatpush1.bf16.msra.mxu0 %v5331
        %5360 = vmatprep.subr.bf16.mxu0 0
        %5361 = vmatpush1.bf16.msra.mxu0 %v5330
        %5362 = vmatprep.subr.bf16.mxu0 0
        %5363 = vmatpush2.bf16.msra.mxu0 0
        %5364 = vmatprep.subr.bf16.mxu0 0
        %5365 = vmatpush2.bf16.msra.mxu0 0
        %5366 = vmatprep.subr.bf16.mxu0 0
        %5367 = vmatpush2.bf16.msra.mxu0 0
        %5368 = vmatprep.subr.bf16.mxu0 0
        %5369 = vmatpush2.bf16.msra.mxu0 0
        %5370 = vmatprep.subr.bf16.mxu0 0
        %5371 = vmatpush2.bf16.msra.mxu0 0
        %5372 = vmatprep.subr.bf16.mxu0 0
        %5373 = vmatpush2.bf16.msra.mxu0 0
        %5374 = vmatprep.subr.bf16.mxu0 0
        %5375 = vmatpush2.bf16.msra.mxu0 0
        %5376 = vmatprep.subr.bf16.mxu0 0
        %5377 = vmatpush2.bf16.msra.mxu0 0
        %5378 = vmatprep.mubr.bf16.mxu0 0
        %5379 = vmatmul.mubr.bf16.gmra.mxu0 %v5296
        %v5380 = vpop.f32.mrf.mxu0
        %v5381 = vadd.f32 0.0, %v5380
        %v5382 = vpop.f32.mrf.mxu0
        %v5383 = vpop.f32.mrf.mxu0
        %v5384 = vadd.f32 0.0, %v5383
        %v5385 = vpop.f32.mrf.mxu0
        %5386 = vmatprep.mubr.bf16.mxu0 0
        %5387 = vmatmul.mubr.bf16.gmra.mxu0 %v5297
        %v5388 = vpop.f32.mrf.mxu0
        %v5389 = vadd.f32 0.0, %v5388
        %v5390 = vpop.f32.mrf.mxu0
        %v5391 = vpop.f32.mrf.mxu0
        %v5392 = vadd.f32 0.0, %v5391
        %v5393 = vpop.f32.mrf.mxu0
        %5394 = vdwg.mxu0
        %v5395 = vpack.c.bf16 %v5384, %v5381
        %v5396 = vpack.c.bf16 %v5392, %v5389
        %v5397 = vld [vmem:[#allocation49] sm:$0x1]
        %v5399 = vlaneseq
        %v5400 = vshrl.u32 %v5399, 7
        %v5401 = vsub.s32 0, %v5400
        %v5402 = vrot.slane %v5397, %v5401
        %5404 = vmatprep.subr.bf16.mxu0 0
        %5405 = vmatpush1.bf16.msra.mxu0 0
        %5406 = vmatprep.subr.bf16.mxu0 0
        %5407 = vmatpush1.bf16.msra.mxu0 0
        %5408 = vmatprep.subr.bf16.mxu0 0
        %5409 = vmatpush1.bf16.msra.mxu0 0
        %5410 = vmatprep.subr.bf16.mxu0 0
        %5411 = vmatpush1.bf16.msra.mxu0 0
        %5412 = vmatprep.subr.bf16.mxu0 0
        %5413 = vmatpush1.bf16.msra.mxu0 0
        %5414 = vmatprep.subr.bf16.mxu0 0
        %5415 = vmatpush1.bf16.msra.mxu0 0
        %5416 = vmatprep.subr.bf16.mxu0 0
        %5417 = vmatpush1.bf16.msra.mxu0 %v5396
        %5418 = vmatprep.subr.bf16.mxu0 0
        %5419 = vmatpush1.bf16.msra.mxu0 %v5395
        %5420 = vmatprep.subr.bf16.mxu0 0
        %5421 = vmatpush2.bf16.msra.mxu0 0
        %5422 = vmatprep.subr.bf16.mxu0 0
        %5423 = vmatpush2.bf16.msra.mxu0 0
        %5424 = vmatprep.subr.bf16.mxu0 0
        %5425 = vmatpush2.bf16.msra.mxu0 0
        %5426 = vmatprep.subr.bf16.mxu0 0
        %5427 = vmatpush2.bf16.msra.mxu0 0
        %5428 = vmatprep.subr.bf16.mxu0 0
        %5429 = vmatpush2.bf16.msra.mxu0 0
        %5430 = vmatprep.subr.bf16.mxu0 0
        %5431 = vmatpush2.bf16.msra.mxu0 0
        %5432 = vmatprep.subr.bf16.mxu0 0
        %5433 = vmatpush2.bf16.msra.mxu0 0
        %5434 = vmatprep.subr.bf16.mxu0 0
        %5435 = vmatpush2.bf16.msra.mxu0 0
        %5436 = vmatprep.mubr.bf16.mxu0 0
        %5437 = vmatmul.mubr.bf16.gmra.mxu0 %v2158
        %v5438 = vpop.f32.mrf.mxu0
        %v5439 = vadd.f32 %v5402, %v5438
        %v5440 = vpop.f32.mrf.mxu0
        %v5441 = vpop.f32.mrf.mxu0
        %v5442 = vadd.f32 %v5402, %v5441
        %v5443 = vpop.f32.mrf.mxu0
        %5444 = vmatprep.mubr.bf16.mxu0 0
        %5445 = vmatmul.mubr.bf16.gmra.mxu0 %v2161
        %v5446 = vpop.f32.mrf.mxu0
        %v5447 = vadd.f32 %v5402, %v5446
        %v5448 = vpop.f32.mrf.mxu0
        %v5449 = vpop.f32.mrf.mxu0
        %v5450 = vadd.f32 %v5402, %v5449
        %v5451 = vpop.f32.mrf.mxu0
        %5452 = vdwg.mxu0
        %v5453 = vmax.f32 %v5439, 0.0
        %v5454 = vmax.f32 %v5442, 0.0
        %v5455 = vmax.f32 %v5447, 0.0
        %v5456 = vmax.f32 %v5450, 0.0
        %v5457 = vld [vmem:[#allocation51] sm:$0xf]
        %v5458 = vld [vmem:[#allocation51 + $0x4] sm:$0xf]
        %v5459 = vld [vmem:[#allocation51 + $0x8] sm:$0xf]
        %v5460 = vld [vmem:[#allocation51 + $0xc] sm:$0xf]
        %v5461 = vld [vmem:[#allocation51 + $0x10] sm:$0xf]
        %v5462 = vld [vmem:[#allocation51 + $0x14] sm:$0xf]
        %v5463 = vld [vmem:[#allocation51 + $0x18] sm:$0xf]
        %v5464 = vld [vmem:[#allocation51 + $0x1c] sm:$0xf]
        %v5465 = vld [vmem:[#allocation51 + $0x20] sm:$0xf]
        %v5466 = vld [vmem:[#allocation51 + $0x24] sm:$0xf]
        %v5467 = vld [vmem:[#allocation51 + $0x28] sm:$0xf]
        %v5468 = vld [vmem:[#allocation51 + $0x2c] sm:$0xf]
        %v5469 = vld [vmem:[#allocation51 + $0x30] sm:$0xf]
        %v5470 = vld [vmem:[#allocation51 + $0x34] sm:$0xf]
        %v5471 = vld [vmem:[#allocation51 + $0x38] sm:$0xf]
        %v5472 = vld [vmem:[#allocation51 + $0x3c] sm:$0xf]
        %v5473 = vpack.c.bf16 %v5454, %v5453
        %v5474 = vpack.c.bf16 %v5456, %v5455
        %v5475 = vld [vmem:[#allocation52] sm:$0x1]
        %v5477 = vlaneseq
        %v5478 = vshrl.u32 %v5477, 7
        %v5479 = vsub.s32 0, %v5478
        %v5480 = vrot.slane %v5475, %v5479
        %v5498 = vunpack.c.l.b16 %v5457
        %v5499 = vunpack.c.l.b16 %v5458
        %v5500 = vunpack.c.l.b16 %v5459
        %v5501 = vunpack.c.l.b16 %v5460
        %v5502 = vunpack.c.l.b16 %v5461
        %v5503 = vunpack.c.l.b16 %v5462
        %v5504 = vunpack.c.l.b16 %v5463
        %v5505 = vunpack.c.l.b16 %v5464
        %v5506 = vunpack.c.l.b16 %v5465
        %v5507 = vunpack.c.l.b16 %v5466
        %v5508 = vunpack.c.l.b16 %v5467
        %v5509 = vunpack.c.l.b16 %v5468
        %v5510 = vunpack.c.l.b16 %v5469
        %v5511 = vunpack.c.l.b16 %v5470
        %v5512 = vunpack.c.l.b16 %v5471
        %v5513 = vunpack.c.l.b16 %v5472
        %v5514 = vpack.c.b16 %v5499, %v5498
        %v5515 = vpack.c.b16 %v5501, %v5500
        %v5516 = vpack.c.b16 %v5503, %v5502
        %v5517 = vpack.c.b16 %v5505, %v5504
        %v5518 = vpack.c.b16 %v5507, %v5506
        %v5519 = vpack.c.b16 %v5509, %v5508
        %v5520 = vpack.c.b16 %v5511, %v5510
        %v5521 = vpack.c.b16 %v5513, %v5512
        %5530 = vmatprep.subr.bf16.mxu0 0
        %5531 = vmatpush1.bf16.msra.mxu0 %v5521
        %5532 = vmatprep.subr.bf16.mxu0 0
        %5533 = vmatpush1.bf16.msra.mxu0 %v5520
        %5534 = vmatprep.subr.bf16.mxu0 0
        %5535 = vmatpush1.bf16.msra.mxu0 %v5519
        %5536 = vmatprep.subr.bf16.mxu0 0
        %5537 = vmatpush1.bf16.msra.mxu0 %v5518
        %5538 = vmatprep.subr.bf16.mxu0 0
        %5539 = vmatpush1.bf16.msra.mxu0 %v5517
        %5540 = vmatprep.subr.bf16.mxu0 0
        %5541 = vmatpush1.bf16.msra.mxu0 %v5516
        %5542 = vmatprep.subr.bf16.mxu0 0
        %5543 = vmatpush1.bf16.msra.mxu0 %v5515
        %5544 = vmatprep.subr.bf16.mxu0 0
        %5545 = vmatpush1.bf16.msra.mxu0 %v5514
        %5546 = vmatprep.subr.bf16.mxu0 0
        %5547 = vmatpush2.bf16.msra.mxu0 0
        %5548 = vmatprep.subr.bf16.mxu0 0
        %5549 = vmatpush2.bf16.msra.mxu0 0
        %5550 = vmatprep.subr.bf16.mxu0 0
        %5551 = vmatpush2.bf16.msra.mxu0 0
        %5552 = vmatprep.subr.bf16.mxu0 0
        %5553 = vmatpush2.bf16.msra.mxu0 0
        %5554 = vmatprep.subr.bf16.mxu0 0
        %5555 = vmatpush2.bf16.msra.mxu0 0
        %5556 = vmatprep.subr.bf16.mxu0 0
        %5557 = vmatpush2.bf16.msra.mxu0 0
        %5558 = vmatprep.subr.bf16.mxu0 0
        %5559 = vmatpush2.bf16.msra.mxu0 0
        %5560 = vmatprep.subr.bf16.mxu0 0
        %5561 = vmatpush2.bf16.msra.mxu0 0
        %5562 = vmatprep.mubr.bf16.mxu0 0
        %5563 = vmatmul.mubr.bf16.gmra.mxu0 %v5473
        %v5564 = vpop.f32.mrf.mxu0
        %v5565 = vadd.f32 %v5480, %v5564
        %v5566 = vpop.f32.mrf.mxu0
        %v5567 = vpop.f32.mrf.mxu0
        %v5568 = vadd.f32 %v5480, %v5567
        %v5569 = vpop.f32.mrf.mxu0
        %5570 = vmatprep.mubr.bf16.mxu0 0
        %5571 = vmatmul.mubr.bf16.gmra.mxu0 %v5474
        %v5572 = vpop.f32.mrf.mxu0
        %v5573 = vadd.f32 %v5480, %v5572
        %v5574 = vpop.f32.mrf.mxu0
        %v5575 = vpop.f32.mrf.mxu0
        %v5576 = vadd.f32 %v5480, %v5575
        %v5577 = vpop.f32.mrf.mxu0
        %5578 = vdwg.mxu0
        %v5579 = vmax.f32 %v5565, 0.0
        %v5580 = vmax.f32 %v5568, 0.0
        %v5581 = vmax.f32 %v5573, 0.0
        %v5582 = vmax.f32 %v5576, 0.0
        %v5583 = vadd.f32 %v5579, %v5276
        %v5584 = vadd.f32 %v5580, %v5277
        %v5585 = vadd.f32 %v5581, %v5278
        %v5586 = vadd.f32 %v5582, %v5279
        %v5587 = vpack.c.bf16 %v5584, %v5583
        %v5588 = vpack.c.bf16 %v5586, %v5585
        %v5590 = vsel %vm2156, %v2021, 0
        %5592 = vmatprep.subr.bf16.mxu0 0
        %5593 = vmatpush1.bf16.msra.mxu0 0
        %5594 = vmatprep.subr.bf16.mxu0 0
        %5595 = vmatpush1.bf16.msra.mxu0 0
        %5596 = vmatprep.subr.bf16.mxu0 0
        %5597 = vmatpush1.bf16.msra.mxu0 0
        %5598 = vmatprep.subr.bf16.mxu0 0
        %5599 = vmatpush1.bf16.msra.mxu0 0
        %5600 = vmatprep.subr.bf16.mxu0 0
        %5601 = vmatpush1.bf16.msra.mxu0 0
        %5602 = vmatprep.subr.bf16.mxu0 0
        %5603 = vmatpush1.bf16.msra.mxu0 0
        %5604 = vmatprep.subr.bf16.mxu0 0
        %5605 = vmatpush1.bf16.msra.mxu0 %v5588
        %5606 = vmatprep.subr.bf16.mxu0 0
        %5607 = vmatpush1.bf16.msra.mxu0 %v5587
        %5608 = vmatprep.subr.bf16.mxu0 0
        %5609 = vmatpush2.bf16.msra.mxu0 0
        %5610 = vmatprep.subr.bf16.mxu0 0
        %5611 = vmatpush2.bf16.msra.mxu0 0
        %5612 = vmatprep.subr.bf16.mxu0 0
        %5613 = vmatpush2.bf16.msra.mxu0 0
        %5614 = vmatprep.subr.bf16.mxu0 0
        %5615 = vmatpush2.bf16.msra.mxu0 0
        %5616 = vmatprep.subr.bf16.mxu0 0
        %5617 = vmatpush2.bf16.msra.mxu0 0
        %5618 = vmatprep.subr.bf16.mxu0 0
        %5619 = vmatpush2.bf16.msra.mxu0 0
        %5620 = vmatprep.subr.bf16.mxu0 0
        %5621 = vmatpush2.bf16.msra.mxu0 0
        %5622 = vmatprep.subr.bf16.mxu0 0
        %5623 = vmatpush2.bf16.msra.mxu0 0
        %5624 = vmatprep.mubr.bf16.mxu0 0
        %5625 = vmatmul.mubr.bf16.gmra.mxu0 %v5590
        %v5626 = vpop.f32.mrf.mxu0
        %v5627 = vadd.f32 0.0, %v5626
        %v5628 = vpop.f32.mrf.mxu0
        %v5629 = vpop.f32.mrf.mxu0
        %v5630 = vpop.f32.mrf.mxu0
        %5631 = vdwg.mxu0
        %v5632 = vpack.c.bf16 %v5627, %v5627
        %v5634 = vlaneseq
        %v5635 = vshrl.u32 %v5634, 7
        %v5636 = vsub.s32 0, %v5635
        %v5637 = vrot.slane %v2038, %v5636
        %v5655 = vunpack.c.l.b16 %v2022
        %v5656 = vunpack.c.l.b16 %v2023
        %v5657 = vunpack.c.l.b16 %v2024
        %v5658 = vunpack.c.l.b16 %v2025
        %v5659 = vunpack.c.l.b16 %v2026
        %v5660 = vunpack.c.l.b16 %v2027
        %v5661 = vunpack.c.l.b16 %v2028
        %v5662 = vunpack.c.l.b16 %v2029
        %v5663 = vunpack.c.l.b16 %v2030
        %v5664 = vunpack.c.l.b16 %v2031
        %v5665 = vunpack.c.l.b16 %v2032
        %v5666 = vunpack.c.l.b16 %v2033
        %v5667 = vunpack.c.l.b16 %v2034
        %v5668 = vunpack.c.l.b16 %v2035
        %v5669 = vunpack.c.l.b16 %v2036
        %v5670 = vunpack.c.l.b16 %v2037
        %v5671 = vpack.c.b16 %v5656, %v5655
        %v5672 = vpack.c.b16 %v5658, %v5657
        %v5673 = vpack.c.b16 %v5660, %v5659
        %v5674 = vpack.c.b16 %v5662, %v5661
        %v5675 = vpack.c.b16 %v5664, %v5663
        %v5676 = vpack.c.b16 %v5666, %v5665
        %v5677 = vpack.c.b16 %v5668, %v5667
        %v5678 = vpack.c.b16 %v5670, %v5669
        %5687 = vmatprep.subr.bf16.mxu0 0
        %5688 = vmatpush1.bf16.msra.mxu0 %v5678
        %5689 = vmatprep.subr.bf16.mxu0 0
        %5690 = vmatpush1.bf16.msra.mxu0 %v5677
        %5691 = vmatprep.subr.bf16.mxu0 0
        %5692 = vmatpush1.bf16.msra.mxu0 %v5676
        %5693 = vmatprep.subr.bf16.mxu0 0
        %5694 = vmatpush1.bf16.msra.mxu0 %v5675
        %5695 = vmatprep.subr.bf16.mxu0 0
        %5696 = vmatpush1.bf16.msra.mxu0 %v5674
        %5697 = vmatprep.subr.bf16.mxu0 0
        %5698 = vmatpush1.bf16.msra.mxu0 %v5673
        %5699 = vmatprep.subr.bf16.mxu0 0
        %5700 = vmatpush1.bf16.msra.mxu0 %v5672
        %5701 = vmatprep.subr.bf16.mxu0 0
        %5702 = vmatpush1.bf16.msra.mxu0 %v5671
        %5703 = vmatprep.subr.bf16.mxu0 0
        %5704 = vmatpush2.bf16.msra.mxu0 0
        %5705 = vmatprep.subr.bf16.mxu0 0
        %5706 = vmatpush2.bf16.msra.mxu0 0
        %5707 = vmatprep.subr.bf16.mxu0 0
        %5708 = vmatpush2.bf16.msra.mxu0 0
        %5709 = vmatprep.subr.bf16.mxu0 0
        %5710 = vmatpush2.bf16.msra.mxu0 0
        %5711 = vmatprep.subr.bf16.mxu0 0
        %5712 = vmatpush2.bf16.msra.mxu0 0
        %5713 = vmatprep.subr.bf16.mxu0 0
        %5714 = vmatpush2.bf16.msra.mxu0 0
        %5715 = vmatprep.subr.bf16.mxu0 0
        %5716 = vmatpush2.bf16.msra.mxu0 0
        %5717 = vmatprep.subr.bf16.mxu0 0
        %5718 = vmatpush2.bf16.msra.mxu0 0
        %5719 = vmatprep.mubr.bf16.mxu0 0
        %5720 = vmatmul.mubr.bf16.gmra.mxu0 %v5632
        %v5721 = vpop.f32.mrf.mxu0
        %v5722 = vadd.f32 %v5637, %v5721
        %v5723 = vpop.f32.mrf.mxu0
        %v5724 = vpop.f32.mrf.mxu0
        %v5725 = vpop.f32.mrf.mxu0
        %5726 = vdwg.mxu0
        %5727 = vst [vmem:[%s2019] sm:$0xff] %v5722
        %p5728 = scmp.lt.s32.totalorder %s133, 1
        %s5729 = scalar_select %p5728, %s133, 1
        %s5730 = smul.addr %s5729, 8
        %s5731 = scalar_lea.vmem %s103, %s5730
        // Predicated region
        $region373: #{_lambda_.1} parent=223 // pred_check
          %p5732 = pneg %p1227
        $region374: #{_lambda_.1} parent=223 // pred_check_branch
          %5734 = sbr.rel (%p5732) target = $region376
        $region375: #{_lambda_.1} parent=223 // pred_region
          _
        $region376: #{_lambda_.1} parent=223 // pred_fallthru
          _
      $region224: #{_lambda_.1} parent=5 // pred_fallthru
        _
      %p5735 = scmp.le.s32.totalorder 2, %s128
      // Predicated region
      $region377: #{_lambda_.1} parent=5 // pred_check
        %p5736 = pneg %p5735
      $region378: #{_lambda_.1} parent=5 // pred_check_branch
        %5738 = sbr.rel (%p5736) target = $region380
      $region379: #{_lambda_.1} parent=5 // pred_region
        %s5739 = ssub.s32 %s128, 2
        // Predicated region
        $region381: #{_lambda_.1} parent=379 // pred_check
          %p5740 = pneg %p1233
        $region382: #{_lambda_.1} parent=379 // pred_check_branch
          %5742 = sbr.rel (%p5740) target = $region384
        $region383: #{_lambda_.1} parent=379 // pred_region
          %p5743 = scmp.lt.s32.totalorder %s134, 1
          %s5744 = scalar_select %p5743, %s134, 1
          %s5745 = smul.addr %s5744, 8
          %s5746 = scalar_lea.vmem %s103, %s5745
        $region384: #{_lambda_.1} parent=379 // pred_fallthru
          _
      $region380: #{_lambda_.1} parent=5 // pred_fallthru
        _
    $region6: #{_lambda_.1} parent=1 // loop_footer
      %s132 = sadd.s32 1, %s128
    $region7: #{_lambda_.1} parent=1 // loop_footer_branch
      %127 = sbr.rel target = $region3
    $region8: #{_lambda_.1} parent=1 // loop_exit
      _
    %5747 = vsyncpa [#allocation3], 1
    %s5748 = scalar_lea.sflag [#allocation3], 1
    %5749 = vsyncpa %s5748, 1
    %5750 = vsyncpa [#allocation5], 1
    %5751 = vsyncpa [#allocation8], 1
    %5752 = vsyncpa [#allocation11], 1
    %5753 = vsyncpa [#allocation14], 1
    %5754 = vsyncpa [#allocation17], 1
    %5755 = vsyncpa [#allocation20], 1
    %5756 = vsyncpa [#allocation23], 1
    %5757 = vsyncpa [#allocation26], 1
    %5758 = vsyncpa [#allocation29], 1
    %5759 = vsyncpa [#allocation32], 1
    %5760 = vsyncpa [#allocation35], 1
    %5761 = vsyncpa [#allocation38], 1
    %5762 = vsyncpa [#allocation41], 1
    %5763 = vsyncpa [#allocation44], 1
    %5764 = vsyncpa [#allocation47], 1
    %5765 = vsyncpa [#allocation50], 1
    %5766 = vsyncpa [#allocation53], 1
    %5767 = vsyncpa [#allocation56], 1

</llo_original>
